<compile_context>
chip_gen: v7x
topology: tpu7x:2x2x1
jax: 0.10.0
libtpu: 0.0.40
codegen_flags: <defaults>
</compile_context>

<pallas_src>
import jax
import jax.numpy as jnp
from jax.experimental import pallas as pl
from jax.experimental.pallas import tpu as pltpu

BN_EPS = 1e-5
LANE = 128

_PARALLEL = pltpu.CompilerParams(dimension_semantics=("parallel",))


def _round_up(x, m):
    return (x + m - 1) // m * m


# ----------------------------- Pallas kernels --------------------------------

def _matmul_stats_kernel(p_ref, w_ref, y_ref, s_ref, ss_ref):
    # bf16 x bf16 -> f32 accumulate on the MXU; per-tile BN partial stats fused.
    y = jnp.dot(p_ref[...], w_ref[...], preferred_element_type=jnp.float32)
    y_ref[...] = y
    y3 = y.reshape(-1, 8, y.shape[-1])       # (TM/8, 8, Cout_pad), tile-aligned
    s_ref[...] = jnp.sum(y3, axis=0)         # (8, Cout_pad) partial sum
    ss_ref[...] = jnp.sum(y3 * y3, axis=0)   # (8, Cout_pad) partial sum of squares


def _scale_shift_relu_kernel(y_ref, sc_ref, sh_ref, o_ref):
    # BatchNorm pass 2 (pre-folded per-channel scale/shift) + ReLU, emit bf16.
    y = y_ref[...] * sc_ref[...] + sh_ref[...]
    o_ref[...] = jnp.maximum(y, 0.0).astype(o_ref.dtype)


def _matmul_tanh_kernel(p_ref, w_ref, o_ref):
    y = jnp.dot(p_ref[...], w_ref[...], preferred_element_type=jnp.float32)
    o_ref[...] = jnp.tanh(y)


# --------------------------- pallas_call wrappers -----------------------------

def _conv_matmul_stats(patches, w_mat, tm):
    mp, k = patches.shape
    cout_pad = w_mat.shape[1]
    nt = mp // tm
    return pl.pallas_call(
        _matmul_stats_kernel,
        out_shape=(
            jax.ShapeDtypeStruct((mp, cout_pad), jnp.float32),
            jax.ShapeDtypeStruct((nt * 8, cout_pad), jnp.float32),
            jax.ShapeDtypeStruct((nt * 8, cout_pad), jnp.float32),
        ),
        grid=(nt,),
        in_specs=[
            pl.BlockSpec((tm, k), lambda i: (i, 0)),
            pl.BlockSpec((k, cout_pad), lambda i: (0, 0)),
        ],
        out_specs=(
            pl.BlockSpec((tm, cout_pad), lambda i: (i, 0)),
            pl.BlockSpec((8, cout_pad), lambda i: (i, 0)),
            pl.BlockSpec((8, cout_pad), lambda i: (i, 0)),
        ),
        compiler_params=_PARALLEL,
    )(patches, w_mat)


def _bn_relu_apply(y, scale, shift, tm):
    mp, cout_pad = y.shape
    nt = mp // tm
    return pl.pallas_call(
        _scale_shift_relu_kernel,
        out_shape=jax.ShapeDtypeStruct((mp, cout_pad), jnp.bfloat16),
        grid=(nt,),
        in_specs=[
            pl.BlockSpec((tm, cout_pad), lambda i: (i, 0)),
            pl.BlockSpec((1, cout_pad), lambda i: (0, 0)),
            pl.BlockSpec((1, cout_pad), lambda i: (0, 0)),
        ],
        out_specs=pl.BlockSpec((tm, cout_pad), lambda i: (i, 0)),
        compiler_params=_PARALLEL,
    )(y, scale, shift)


def _conv_matmul_tanh(patches, w_mat, tm):
    mp, k = patches.shape
    cout_pad = w_mat.shape[1]
    nt = mp // tm
    return pl.pallas_call(
        _matmul_tanh_kernel,
        out_shape=jax.ShapeDtypeStruct((mp, cout_pad), jnp.float32),
        grid=(nt,),
        in_specs=[
            pl.BlockSpec((tm, k), lambda i: (i, 0)),
            pl.BlockSpec((k, cout_pad), lambda i: (0, 0)),
        ],
        out_specs=pl.BlockSpec((tm, cout_pad), lambda i: (i, 0)),
        compiler_params=_PARALLEL,
    )(patches, w_mat)


# ------------------------------- JAX glue -------------------------------------

def _dilate_pad_nhwc(x, stride, pad, k):
    n, h, w, c = x.shape
    if stride > 1:
        hd, wd = (h - 1) * stride + 1, (w - 1) * stride + 1
        xd = jnp.zeros((n, hd, wd, c), x.dtype)
        xd = xd.at[:, ::stride, ::stride, :].set(x)
    else:
        xd = x
    e = k - 1 - pad
    return jnp.pad(xd, ((0, 0), (e, e), (e, e), (0, 0)))


def _im2col_s1(xp, k):
    # TODO(synk): gather patches in-kernel (BlockSpec index_map over output rows)
    # instead of materializing the im2col matrix in HBM via XLA glue.
    n, hp, wp, c = xp.shape
    hout, wout = hp - k + 1, wp - k + 1
    cols = []
    for kh in range(k):
        for kw in range(k):
            cols.append(xp[:, kh:kh + hout, kw:kw + wout, :])
    p = jnp.stack(cols, axis=3)                       # (N, Hout, Wout, k*k, C)
    return p.reshape(n * hout * wout, k * k * c), (n, hout, wout)


def _convT_prep(x, w, stride, pad):
    """x: NHWC activation; w: PyTorch ConvTranspose2d weight (Cin, Cout, k, k)."""
    cin, cout, k, _ = w.shape
    cout_pad = _round_up(cout, LANE)
    # Equivalent regular conv: flip kernel spatially, rows ordered (kh, kw, cin).
    wf = w[:, :, ::-1, ::-1].transpose(2, 3, 0, 1).reshape(k * k * cin, cout)
    wf = jnp.pad(wf, ((0, 0), (0, cout_pad - cout))).astype(jnp.bfloat16)

    xp = _dilate_pad_nhwc(x, stride, pad, k)
    patches, (n, hout, wout) = _im2col_s1(xp, k)
    m = patches.shape[0]
    tm = 512 if m >= 512 else _round_up(m, 8)
    mp = _round_up(m, tm)
    patches = jnp.pad(patches, ((0, mp - m), (0, 0))).astype(jnp.bfloat16)
    return patches, wf, (n, hout, wout, cout, cout_pad, m, tm)


def _convT_bn_relu(x, w, gamma, beta, stride, pad):
    patches, w_mat, (n, hout, wout, cout, cout_pad, m, tm) = _convT_prep(
        x, w, stride, pad)
    y, s_part, ss_part = _conv_matmul_stats(patches, w_mat, tm)

    # Finalize biased batch stats (training-mode BatchNorm2d over N*H*W rows).
    # Zero-padded rows/channels contribute 0 to the partial sums; divide by the
    # true row count, and zero-padded gamma keeps padded channels at 0 (no nan).
    s_tot = jnp.sum(s_part, axis=0)
    ss_tot = jnp.sum(ss_part, axis=0)
    mean = s_tot / m
    var = jnp.maximum(ss_tot / m - mean * mean, 0.0)
    g = jnp.pad(gamma.astype(jnp.float32), (0, cout_pad - cout))
    b = jnp.pad(beta.astype(jnp.float32), (0, cout_pad - cout))
    scale = g * jax.lax.rsqrt(var + BN_EPS)
    shift = b - mean * scale

    h = _bn_relu_apply(y, scale.reshape(1, cout_pad), shift.reshape(1, cout_pad), tm)
    return h[:m, :cout].reshape(n, hout, wout, cout)


def _convT_tanh(x, w, stride, pad):
    patches, w_mat, (n, hout, wout, cout, cout_pad, m, tm) = _convT_prep(
        x, w, stride, pad)
    y = _conv_matmul_tanh(patches, w_mat, tm)
    return y[:m, :cout].reshape(n, hout, wout, cout)


# ----------------------------- Generator forward ------------------------------

def generator_forward(z, params):
    """z: (N, noise_dim, 1, 1) NCHW noise -> (N, channels, 64, 64) in [-1, 1]."""
    h = jnp.transpose(z, (0, 2, 3, 1)).astype(jnp.bfloat16)       # NHWC once
    h = _convT_bn_relu(h, params["w1"], params["g1"], params["b1"], 1, 0)  # 4x4
    h = _convT_bn_relu(h, params["w2"], params["g2"], params["b2"], 2, 1)  # 8x8
    h = _convT_bn_relu(h, params["w3"], params["g3"], params["b3"], 2, 1)  # 16x16
    h = _convT_bn_relu(h, params["w4"], params["g4"], params["b4"], 2, 1)  # 32x32
    h = _convT_tanh(h, params["w5"], 2, 1)                                 # 64x64
    return jnp.transpose(h, (0, 3, 1, 2))                          # back to NCHW


def init_params(key, noise_dim, channels, features):
    ks = jax.random.split(key, 13)
    f = features

    def wT(k, cin, cout):
        # PyTorch ConvTranspose2d weight layout: (Cin, Cout, kH, kW), bias=False.
        return 0.02 * jax.random.normal(k, (cin, cout, 4, 4), jnp.float32)

    def gb(kg, kb, c):
        return (1.0 + 0.1 * jax.random.normal(kg, (c,), jnp.float32),
                0.05 * jax.random.normal(kb, (c,), jnp.float32))

    g1, b1 = gb(ks[5], ks[6], 16 * f)
    g2, b2 = gb(ks[7], ks[8], 8 * f)
    g3, b3 = gb(ks[9], ks[10], 4 * f)
    g4, b4 = gb(ks[11], ks[12], 2 * f)
    return {
        "w1": wT(ks[0], noise_dim, 16 * f), "g1": g1, "b1": b1,
        "w2": wT(ks[1], 16 * f, 8 * f), "g2": g2, "b2": b2,
        "w3": wT(ks[2], 8 * f, 4 * f), "g3": g3, "b3": b3,
        "w4": wT(ks[3], 4 * f, 2 * f), "g4": g4, "b4": b4,
        "w5": wT(ks[4], 2 * f, channels),
    }


if __name__ == "__main__":
    key = jax.random.PRNGKey(0)
    k_z, k_p = jax.random.split(key)

    batch, noise_dim, channels, features = 2, 64, 3, 8
    z = jax.random.normal(k_z, (batch, noise_dim, 1, 1), jnp.float32)
    params = init_params(k_p, noise_dim, channels, features)

    fwd = jax.jit(generator_forward)
    out = jax.block_until_ready(fwd(z, params))

    assert out.shape == (batch, channels, 64, 64), out.shape
    assert bool(jnp.all(jnp.isfinite(out)))
    assert bool(jnp.all((out >= -1.0) & (out <= 1.0)))
    print("KERNEL_OK")
</pallas_src>

<mosaic_0001>
module attributes {stable_mosaic.version = 11 : i64} {
  func.func @_matmul_stats_kernel(%arg0: i32, %arg1: memref<32x1024xbf16, #tpu.memory_space<vmem>>, %arg2: memref<1024x128xbf16, #tpu.memory_space<vmem>>, %arg3: memref<32x128xf32, #tpu.memory_space<vmem>>, %arg4: memref<8x128xf32, #tpu.memory_space<vmem>>, %arg5: memref<8x128xf32, #tpu.memory_space<vmem>>) attributes {dimension_semantics = [#tpu.dimension_semantics<parallel>], iteration_bounds = array<i64: 1>, scalar_prefetch = 0 : i64, scratch_operands = 0 : i64, tpu.core_type = #tpu.core_type<tc>, window_params = [{transform_indices = @transform_0, window_bounds = array<i64: 32, 1024>}, {pipeline_mode = #tpu.pipeline_mode<synchronous>, transform_indices = @transform_1, window_bounds = array<i64: 1024, 128>}, {transform_indices = @transform_2, window_bounds = array<i64: 32, 128>}, {transform_indices = @transform_3, window_bounds = array<i64: 8, 128>}, {transform_indices = @transform_4, window_bounds = array<i64: 8, 128>}]} {
    %c0 = arith.constant 0 : index
    %c0_0 = arith.constant 0 : index
    %0 = vector.load %arg1[%c0, %c0_0] : memref<32x1024xbf16, #tpu.memory_space<vmem>>, vector<32x1024xbf16>
    %c0_1 = arith.constant 0 : index
    %c0_2 = arith.constant 0 : index
    %1 = vector.load %arg2[%c0_1, %c0_2] : memref<1024x128xbf16, #tpu.memory_space<vmem>>, vector<1024x128xbf16>
    %cst = arith.constant dense<0.000000e+00> : vector<32x128xf32>
    %2 = tpu.matmul %0, %1, %cst {dimension_numbers = #tpu.dot_dimension_numbers<[1], [0], [0], [1], [0, 0, 1, 1], [], []>} : vector<32x1024xbf16>, vector<1024x128xbf16>, vector<32x128xf32> -> vector<32x128xf32>
    %c0_3 = arith.constant 0 : index
    %c0_4 = arith.constant 0 : index
    %3 = vector.load %arg3[%c0_3, %c0_4] : memref<32x128xf32, #tpu.memory_space<vmem>>, vector<32x128xf32>
    tpu.vector_store %arg3[%c0_3, %c0_4], %2 {strides = array<i32>} : memref<32x128xf32, #tpu.memory_space<vmem>>, vector<32x128xf32>,
    %4 = vector.shape_cast %2 : vector<32x128xf32> to vector<4x8x128xf32>
    %cst_5 = arith.constant dense<0.000000e+00> : vector<8x128xf32>
    %5 = vector.multi_reduction <add>, %4, %cst_5 [0] : vector<4x8x128xf32> to vector<8x128xf32>
    %c0_6 = arith.constant 0 : index
    %c0_7 = arith.constant 0 : index
    %6 = vector.load %arg4[%c0_6, %c0_7] : memref<8x128xf32, #tpu.memory_space<vmem>>, vector<8x128xf32>
    tpu.vector_store %arg4[%c0_6, %c0_7], %5 {strides = array<i32>} : memref<8x128xf32, #tpu.memory_space<vmem>>, vector<8x128xf32>,
    %7 = arith.mulf %4, %4 : vector<4x8x128xf32>
    %cst_8 = arith.constant dense<0.000000e+00> : vector<8x128xf32>
    %8 = vector.multi_reduction <add>, %7, %cst_8 [0] : vector<4x8x128xf32> to vector<8x128xf32>
    %c0_9 = arith.constant 0 : index
    %c0_10 = arith.constant 0 : index
    %9 = vector.load %arg5[%c0_9, %c0_10] : memref<8x128xf32, #tpu.memory_space<vmem>>, vector<8x128xf32>
    tpu.vector_store %arg5[%c0_9, %c0_10], %8 {strides = array<i32>} : memref<8x128xf32, #tpu.memory_space<vmem>>, vector<8x128xf32>,
    return
  }
  func.func @transform_0(%arg0: i32) -> (i32, i32) {
    %c0_i32 = arith.constant 0 : i32
    %c0_i32_0 = arith.constant 0 : i32
    return %arg0, %c0_i32 : i32, i32
  }
  func.func @transform_1(%arg0: i32) -> (i32, i32) {
    %c0_i32 = arith.constant 0 : i32
    %c0_i32_0 = arith.constant 0 : i32
    %c0_i32_1 = arith.constant 0 : i32
    return %c0_i32, %c0_i32_0 : i32, i32
  }
  func.func @transform_2(%arg0: i32) -> (i32, i32) {
    %c0_i32 = arith.constant 0 : i32
    %c0_i32_0 = arith.constant 0 : i32
    return %arg0, %c0_i32 : i32, i32
  }
  func.func @transform_3(%arg0: i32) -> (i32, i32) {
    %c0_i32 = arith.constant 0 : i32
    %c0_i32_0 = arith.constant 0 : i32
    return %arg0, %c0_i32 : i32, i32
  }
  func.func @transform_4(%arg0: i32) -> (i32, i32) {
    %c0_i32 = arith.constant 0 : i32
    %c0_i32_0 = arith.constant 0 : i32
    return %arg0, %c0_i32 : i32, i32
  }
}

module attributes {stable_mosaic.version = 11 : i64} {
  func.func @_scale_shift_relu_kernel(%arg0: i32, %arg1: memref<32x128xf32, #tpu.memory_space<vmem>>, %arg2: memref<1x128xf32, #tpu.memory_space<vmem>>, %arg3: memref<1x128xf32, #tpu.memory_space<vmem>>, %arg4: memref<32x128xbf16, #tpu.memory_space<vmem>>) attributes {dimension_semantics = [#tpu.dimension_semantics<parallel>], iteration_bounds = array<i64: 1>, scalar_prefetch = 0 : i64, scratch_operands = 0 : i64, tpu.core_type = #tpu.core_type<tc>, window_params = [{transform_indices = @transform_0, window_bounds = array<i64: 32, 128>}, {pipeline_mode = #tpu.pipeline_mode<synchronous>, transform_indices = @transform_1, window_bounds = array<i64: 1, 128>}, {pipeline_mode = #tpu.pipeline_mode<synchronous>, transform_indices = @transform_2, window_bounds = array<i64: 1, 128>}, {transform_indices = @transform_3, window_bounds = array<i64: 32, 128>}]} {
    %c0 = arith.constant 0 : index
    %c0_0 = arith.constant 0 : index
    %0 = vector.load %arg1[%c0, %c0_0] : memref<32x128xf32, #tpu.memory_space<vmem>>, vector<32x128xf32>
    %c0_1 = arith.constant 0 : index
    %c0_2 = arith.constant 0 : index
    %1 = vector.load %arg2[%c0_1, %c0_2] : memref<1x128xf32, #tpu.memory_space<vmem>>, vector<1x128xf32>
    %2 = vector.broadcast %1 : vector<1x128xf32> to vector<32x128xf32>
    %3 = arith.mulf %0, %2 : vector<32x128xf32>
    %c0_3 = arith.constant 0 : index
    %c0_4 = arith.constant 0 : index
    %4 = vector.load %arg3[%c0_3, %c0_4] : memref<1x128xf32, #tpu.memory_space<vmem>>, vector<1x128xf32>
    %5 = vector.broadcast %4 : vector<1x128xf32> to vector<32x128xf32>
    %6 = arith.addf %3, %5 : vector<32x128xf32>
    %cst = arith.constant 0.000000e+00 : f32
    %7 = vector.broadcast %cst : f32 to vector<32x128xf32>
    %8 = arith.maximumf %6, %7 : vector<32x128xf32>
    %9 = arith.truncf %8 : vector<32x128xf32> to vector<32x128xbf16>
    %c0_5 = arith.constant 0 : index
    %c0_6 = arith.constant 0 : index
    %10 = vector.load %arg4[%c0_5, %c0_6] : memref<32x128xbf16, #tpu.memory_space<vmem>>, vector<32x128xbf16>
    tpu.vector_store %arg4[%c0_5, %c0_6], %9 {strides = array<i32>} : memref<32x128xbf16, #tpu.memory_space<vmem>>, vector<32x128xbf16>,
    return
  }
  func.func @transform_0(%arg0: i32) -> (i32, i32) {
    %c0_i32 = arith.constant 0 : i32
    %c0_i32_0 = arith.constant 0 : i32
    return %arg0, %c0_i32 : i32, i32
  }
  func.func @transform_1(%arg0: i32) -> (i32, i32) {
    %c0_i32 = arith.constant 0 : i32
    %c0_i32_0 = arith.constant 0 : i32
    %c0_i32_1 = arith.constant 0 : i32
    return %c0_i32, %c0_i32_0 : i32, i32
  }
  func.func @transform_2(%arg0: i32) -> (i32, i32) {
    %c0_i32 = arith.constant 0 : i32
    %c0_i32_0 = arith.constant 0 : i32
    %c0_i32_1 = arith.constant 0 : i32
    return %c0_i32, %c0_i32_0 : i32, i32
  }
  func.func @transform_3(%arg0: i32) -> (i32, i32) {
    %c0_i32 = arith.constant 0 : i32
    %c0_i32_0 = arith.constant 0 : i32
    return %arg0, %c0_i32 : i32, i32
  }
}

module attributes {stable_mosaic.version = 11 : i64} {
  func.func @_matmul_stats_kernel(%arg0: i32, %arg1: memref<128x2048xbf16, #tpu.memory_space<vmem>>, %arg2: memref<2048x128xbf16, #tpu.memory_space<vmem>>, %arg3: memref<128x128xf32, #tpu.memory_space<vmem>>, %arg4: memref<8x128xf32, #tpu.memory_space<vmem>>, %arg5: memref<8x128xf32, #tpu.memory_space<vmem>>) attributes {dimension_semantics = [#tpu.dimension_semantics<parallel>], iteration_bounds = array<i64: 1>, scalar_prefetch = 0 : i64, scratch_operands = 0 : i64, tpu.core_type = #tpu.core_type<tc>, window_params = [{transform_indices = @transform_0, window_bounds = array<i64: 128, 2048>}, {pipeline_mode = #tpu.pipeline_mode<synchronous>, transform_indices = @transform_1, window_bounds = array<i64: 2048, 128>}, {transform_indices = @transform_2, window_bounds = array<i64: 128, 128>}, {transform_indices = @transform_3, window_bounds = array<i64: 8, 128>}, {transform_indices = @transform_4, window_bounds = array<i64: 8, 128>}]} {
    %c0 = arith.constant 0 : index
    %c0_0 = arith.constant 0 : index
    %0 = vector.load %arg1[%c0, %c0_0] : memref<128x2048xbf16, #tpu.memory_space<vmem>>, vector<128x2048xbf16>
    %c0_1 = arith.constant 0 : index
    %c0_2 = arith.constant 0 : index
    %1 = vector.load %arg2[%c0_1, %c0_2] : memref<2048x128xbf16, #tpu.memory_space<vmem>>, vector<2048x128xbf16>
    %cst = arith.constant dense<0.000000e+00> : vector<128x128xf32>
    %2 = tpu.matmul %0, %1, %cst {dimension_numbers = #tpu.dot_dimension_numbers<[1], [0], [0], [1], [0, 0, 1, 1], [], []>} : vector<128x2048xbf16>, vector<2048x128xbf16>, vector<128x128xf32> -> vector<128x128xf32>
    %c0_3 = arith.constant 0 : index
    %c0_4 = arith.constant 0 : index
    %3 = vector.load %arg3[%c0_3, %c0_4] : memref<128x128xf32, #tpu.memory_space<vmem>>, vector<128x128xf32>
    tpu.vector_store %arg3[%c0_3, %c0_4], %2 {strides = array<i32>} : memref<128x128xf32, #tpu.memory_space<vmem>>, vector<128x128xf32>,
    %4 = vector.shape_cast %2 : vector<128x128xf32> to vector<16x8x128xf32>
    %cst_5 = arith.constant dense<0.000000e+00> : vector<8x128xf32>
    %5 = vector.multi_reduction <add>, %4, %cst_5 [0] : vector<16x8x128xf32> to vector<8x128xf32>
    %c0_6 = arith.constant 0 : index
    %c0_7 = arith.constant 0 : index
    %6 = vector.load %arg4[%c0_6, %c0_7] : memref<8x128xf32, #tpu.memory_space<vmem>>, vector<8x128xf32>
    tpu.vector_store %arg4[%c0_6, %c0_7], %5 {strides = array<i32>} : memref<8x128xf32, #tpu.memory_space<vmem>>, vector<8x128xf32>,
    %7 = arith.mulf %4, %4 : vector<16x8x128xf32>
    %cst_8 = arith.constant dense<0.000000e+00> : vector<8x128xf32>
    %8 = vector.multi_reduction <add>, %7, %cst_8 [0] : vector<16x8x128xf32> to vector<8x128xf32>
    %c0_9 = arith.constant 0 : index
    %c0_10 = arith.constant 0 : index
    %9 = vector.load %arg5[%c0_9, %c0_10] : memref<8x128xf32, #tpu.memory_space<vmem>>, vector<8x128xf32>
    tpu.vector_store %arg5[%c0_9, %c0_10], %8 {strides = array<i32>} : memref<8x128xf32, #tpu.memory_space<vmem>>, vector<8x128xf32>,
    return
  }
  func.func @transform_0(%arg0: i32) -> (i32, i32) {
    %c0_i32 = arith.constant 0 : i32
    %c0_i32_0 = arith.constant 0 : i32
    return %arg0, %c0_i32 : i32, i32
  }
  func.func @transform_1(%arg0: i32) -> (i32, i32) {
    %c0_i32 = arith.constant 0 : i32
    %c0_i32_0 = arith.constant 0 : i32
    %c0_i32_1 = arith.constant 0 : i32
    return %c0_i32, %c0_i32_0 : i32, i32
  }
  func.func @transform_2(%arg0: i32) -> (i32, i32) {
    %c0_i32 = arith.constant 0 : i32
    %c0_i32_0 = arith.constant 0 : i32
    return %arg0, %c0_i32 : i32, i32
  }
  func.func @transform_3(%arg0: i32) -> (i32, i32) {
    %c0_i32 = arith.constant 0 : i32
    %c0_i32_0 = arith.constant 0 : i32
    return %arg0, %c0_i32 : i32, i32
  }
  func.func @transform_4(%arg0: i32) -> (i32, i32) {
    %c0_i32 = arith.constant 0 : i32
    %c0_i32_0 = arith.constant 0 : i32
    return %arg0, %c0_i32 : i32, i32
  }
}

module attributes {stable_mosaic.version = 11 : i64} {
  func.func @_scale_shift_relu_kernel(%arg0: i32, %arg1: memref<128x128xf32, #tpu.memory_space<vmem>>, %arg2: memref<1x128xf32, #tpu.memory_space<vmem>>, %arg3: memref<1x128xf32, #tpu.memory_space<vmem>>, %arg4: memref<128x128xbf16, #tpu.memory_space<vmem>>) attributes {dimension_semantics = [#tpu.dimension_semantics<parallel>], iteration_bounds = array<i64: 1>, scalar_prefetch = 0 : i64, scratch_operands = 0 : i64, tpu.core_type = #tpu.core_type<tc>, window_params = [{transform_indices = @transform_0, window_bounds = array<i64: 128, 128>}, {pipeline_mode = #tpu.pipeline_mode<synchronous>, transform_indices = @transform_1, window_bounds = array<i64: 1, 128>}, {pipeline_mode = #tpu.pipeline_mode<synchronous>, transform_indices = @transform_2, window_bounds = array<i64: 1, 128>}, {transform_indices = @transform_3, window_bounds = array<i64: 128, 128>}]} {
    %c0 = arith.constant 0 : index
    %c0_0 = arith.constant 0 : index
    %0 = vector.load %arg1[%c0, %c0_0] : memref<128x128xf32, #tpu.memory_space<vmem>>, vector<128x128xf32>
    %c0_1 = arith.constant 0 : index
    %c0_2 = arith.constant 0 : index
    %1 = vector.load %arg2[%c0_1, %c0_2] : memref<1x128xf32, #tpu.memory_space<vmem>>, vector<1x128xf32>
    %2 = vector.broadcast %1 : vector<1x128xf32> to vector<128x128xf32>
    %3 = arith.mulf %0, %2 : vector<128x128xf32>
    %c0_3 = arith.constant 0 : index
    %c0_4 = arith.constant 0 : index
    %4 = vector.load %arg3[%c0_3, %c0_4] : memref<1x128xf32, #tpu.memory_space<vmem>>, vector<1x128xf32>
    %5 = vector.broadcast %4 : vector<1x128xf32> to vector<128x128xf32>
    %6 = arith.addf %3, %5 : vector<128x128xf32>
    %cst = arith.constant 0.000000e+00 : f32
    %7 = vector.broadcast %cst : f32 to vector<128x128xf32>
    %8 = arith.maximumf %6, %7 : vector<128x128xf32>
    %9 = arith.truncf %8 : vector<128x128xf32> to vector<128x128xbf16>
    %c0_5 = arith.constant 0 : index
    %c0_6 = arith.constant 0 : index
    %10 = vector.load %arg4[%c0_5, %c0_6] : memref<128x128xbf16, #tpu.memory_space<vmem>>, vector<128x128xbf16>
    tpu.vector_store %arg4[%c0_5, %c0_6], %9 {strides = array<i32>} : memref<128x128xbf16, #tpu.memory_space<vmem>>, vector<128x128xbf16>,
    return
  }
  func.func @transform_0(%arg0: i32) -> (i32, i32) {
    %c0_i32 = arith.constant 0 : i32
    %c0_i32_0 = arith.constant 0 : i32
    return %arg0, %c0_i32 : i32, i32
  }
  func.func @transform_1(%arg0: i32) -> (i32, i32) {
    %c0_i32 = arith.constant 0 : i32
    %c0_i32_0 = arith.constant 0 : i32
    %c0_i32_1 = arith.constant 0 : i32
    return %c0_i32, %c0_i32_0 : i32, i32
  }
  func.func @transform_2(%arg0: i32) -> (i32, i32) {
    %c0_i32 = arith.constant 0 : i32
    %c0_i32_0 = arith.constant 0 : i32
    %c0_i32_1 = arith.constant 0 : i32
    return %c0_i32, %c0_i32_0 : i32, i32
  }
  func.func @transform_3(%arg0: i32) -> (i32, i32) {
    %c0_i32 = arith.constant 0 : i32
    %c0_i32_0 = arith.constant 0 : i32
    return %arg0, %c0_i32 : i32, i32
  }
}

module attributes {stable_mosaic.version = 11 : i64} {
  func.func @_matmul_stats_kernel(%arg0: i32, %arg1: memref<512x1024xbf16, #tpu.memory_space<vmem>>, %arg2: memref<1024x128xbf16, #tpu.memory_space<vmem>>, %arg3: memref<512x128xf32, #tpu.memory_space<vmem>>, %arg4: memref<8x128xf32, #tpu.memory_space<vmem>>, %arg5: memref<8x128xf32, #tpu.memory_space<vmem>>) attributes {dimension_semantics = [#tpu.dimension_semantics<parallel>], iteration_bounds = array<i64: 1>, scalar_prefetch = 0 : i64, scratch_operands = 0 : i64, tpu.core_type = #tpu.core_type<tc>, window_params = [{transform_indices = @transform_0, window_bounds = array<i64: 512, 1024>}, {pipeline_mode = #tpu.pipeline_mode<synchronous>, transform_indices = @transform_1, window_bounds = array<i64: 1024, 128>}, {transform_indices = @transform_2, window_bounds = array<i64: 512, 128>}, {transform_indices = @transform_3, window_bounds = array<i64: 8, 128>}, {transform_indices = @transform_4, window_bounds = array<i64: 8, 128>}]} {
    %c0 = arith.constant 0 : index
    %c0_0 = arith.constant 0 : index
    %0 = vector.load %arg1[%c0, %c0_0] : memref<512x1024xbf16, #tpu.memory_space<vmem>>, vector<512x1024xbf16>
    %c0_1 = arith.constant 0 : index
    %c0_2 = arith.constant 0 : index
    %1 = vector.load %arg2[%c0_1, %c0_2] : memref<1024x128xbf16, #tpu.memory_space<vmem>>, vector<1024x128xbf16>
    %cst = arith.constant dense<0.000000e+00> : vector<512x128xf32>
    %2 = tpu.matmul %0, %1, %cst {dimension_numbers = #tpu.dot_dimension_numbers<[1], [0], [0], [1], [0, 0, 1, 1], [], []>} : vector<512x1024xbf16>, vector<1024x128xbf16>, vector<512x128xf32> -> vector<512x128xf32>
    %c0_3 = arith.constant 0 : index
    %c0_4 = arith.constant 0 : index
    %3 = vector.load %arg3[%c0_3, %c0_4] : memref<512x128xf32, #tpu.memory_space<vmem>>, vector<512x128xf32>
    tpu.vector_store %arg3[%c0_3, %c0_4], %2 {strides = array<i32>} : memref<512x128xf32, #tpu.memory_space<vmem>>, vector<512x128xf32>,
    %4 = vector.shape_cast %2 : vector<512x128xf32> to vector<64x8x128xf32>
    %cst_5 = arith.constant dense<0.000000e+00> : vector<8x128xf32>
    %5 = vector.multi_reduction <add>, %4, %cst_5 [0] : vector<64x8x128xf32> to vector<8x128xf32>
    %c0_6 = arith.constant 0 : index
    %c0_7 = arith.constant 0 : index
    %6 = vector.load %arg4[%c0_6, %c0_7] : memref<8x128xf32, #tpu.memory_space<vmem>>, vector<8x128xf32>
    tpu.vector_store %arg4[%c0_6, %c0_7], %5 {strides = array<i32>} : memref<8x128xf32, #tpu.memory_space<vmem>>, vector<8x128xf32>,
    %7 = arith.mulf %4, %4 : vector<64x8x128xf32>
    %cst_8 = arith.constant dense<0.000000e+00> : vector<8x128xf32>
    %8 = vector.multi_reduction <add>, %7, %cst_8 [0] : vector<64x8x128xf32> to vector<8x128xf32>
    %c0_9 = arith.constant 0 : index
    %c0_10 = arith.constant 0 : index
    %9 = vector.load %arg5[%c0_9, %c0_10] : memref<8x128xf32, #tpu.memory_space<vmem>>, vector<8x128xf32>
    tpu.vector_store %arg5[%c0_9, %c0_10], %8 {strides = array<i32>} : memref<8x128xf32, #tpu.memory_space<vmem>>, vector<8x128xf32>,
    return
  }
  func.func @transform_0(%arg0: i32) -> (i32, i32) {
    %c0_i32 = arith.constant 0 : i32
    %c0_i32_0 = arith.constant 0 : i32
    return %arg0, %c0_i32 : i32, i32
  }
  func.func @transform_1(%arg0: i32) -> (i32, i32) {
    %c0_i32 = arith.constant 0 : i32
    %c0_i32_0 = arith.constant 0 : i32
    %c0_i32_1 = arith.constant 0 : i32
    return %c0_i32, %c0_i32_0 : i32, i32
  }
  func.func @transform_2(%arg0: i32) -> (i32, i32) {
    %c0_i32 = arith.constant 0 : i32
    %c0_i32_0 = arith.constant 0 : i32
    return %arg0, %c0_i32 : i32, i32
  }
  func.func @transform_3(%arg0: i32) -> (i32, i32) {
    %c0_i32 = arith.constant 0 : i32
    %c0_i32_0 = arith.constant 0 : i32
    return %arg0, %c0_i32 : i32, i32
  }
  func.func @transform_4(%arg0: i32) -> (i32, i32) {
    %c0_i32 = arith.constant 0 : i32
    %c0_i32_0 = arith.constant 0 : i32
    return %arg0, %c0_i32 : i32, i32
  }
}

module attributes {stable_mosaic.version = 11 : i64} {
  func.func @_scale_shift_relu_kernel(%arg0: i32, %arg1: memref<512x128xf32, #tpu.memory_space<vmem>>, %arg2: memref<1x128xf32, #tpu.memory_space<vmem>>, %arg3: memref<1x128xf32, #tpu.memory_space<vmem>>, %arg4: memref<512x128xbf16, #tpu.memory_space<vmem>>) attributes {dimension_semantics = [#tpu.dimension_semantics<parallel>], iteration_bounds = array<i64: 1>, scalar_prefetch = 0 : i64, scratch_operands = 0 : i64, tpu.core_type = #tpu.core_type<tc>, window_params = [{transform_indices = @transform_0, window_bounds = array<i64: 512, 128>}, {pipeline_mode = #tpu.pipeline_mode<synchronous>, transform_indices = @transform_1, window_bounds = array<i64: 1, 128>}, {pipeline_mode = #tpu.pipeline_mode<synchronous>, transform_indices = @transform_2, window_bounds = array<i64: 1, 128>}, {transform_indices = @transform_3, window_bounds = array<i64: 512, 128>}]} {
    %c0 = arith.constant 0 : index
    %c0_0 = arith.constant 0 : index
    %0 = vector.load %arg1[%c0, %c0_0] : memref<512x128xf32, #tpu.memory_space<vmem>>, vector<512x128xf32>
    %c0_1 = arith.constant 0 : index
    %c0_2 = arith.constant 0 : index
    %1 = vector.load %arg2[%c0_1, %c0_2] : memref<1x128xf32, #tpu.memory_space<vmem>>, vector<1x128xf32>
    %2 = vector.broadcast %1 : vector<1x128xf32> to vector<512x128xf32>
    %3 = arith.mulf %0, %2 : vector<512x128xf32>
    %c0_3 = arith.constant 0 : index
    %c0_4 = arith.constant 0 : index
    %4 = vector.load %arg3[%c0_3, %c0_4] : memref<1x128xf32, #tpu.memory_space<vmem>>, vector<1x128xf32>
    %5 = vector.broadcast %4 : vector<1x128xf32> to vector<512x128xf32>
    %6 = arith.addf %3, %5 : vector<512x128xf32>
    %cst = arith.constant 0.000000e+00 : f32
    %7 = vector.broadcast %cst : f32 to vector<512x128xf32>
    %8 = arith.maximumf %6, %7 : vector<512x128xf32>
    %9 = arith.truncf %8 : vector<512x128xf32> to vector<512x128xbf16>
    %c0_5 = arith.constant 0 : index
    %c0_6 = arith.constant 0 : index
    %10 = vector.load %arg4[%c0_5, %c0_6] : memref<512x128xbf16, #tpu.memory_space<vmem>>, vector<512x128xbf16>
    tpu.vector_store %arg4[%c0_5, %c0_6], %9 {strides = array<i32>} : memref<512x128xbf16, #tpu.memory_space<vmem>>, vector<512x128xbf16>,
    return
  }
  func.func @transform_0(%arg0: i32) -> (i32, i32) {
    %c0_i32 = arith.constant 0 : i32
    %c0_i32_0 = arith.constant 0 : i32
    return %arg0, %c0_i32 : i32, i32
  }
  func.func @transform_1(%arg0: i32) -> (i32, i32) {
    %c0_i32 = arith.constant 0 : i32
    %c0_i32_0 = arith.constant 0 : i32
    %c0_i32_1 = arith.constant 0 : i32
    return %c0_i32, %c0_i32_0 : i32, i32
  }
  func.func @transform_2(%arg0: i32) -> (i32, i32) {
    %c0_i32 = arith.constant 0 : i32
    %c0_i32_0 = arith.constant 0 : i32
    %c0_i32_1 = arith.constant 0 : i32
    return %c0_i32, %c0_i32_0 : i32, i32
  }
  func.func @transform_3(%arg0: i32) -> (i32, i32) {
    %c0_i32 = arith.constant 0 : i32
    %c0_i32_0 = arith.constant 0 : i32
    return %arg0, %c0_i32 : i32, i32
  }
}

module attributes {stable_mosaic.version = 11 : i64} {
  func.func @_matmul_stats_kernel(%arg0: i32, %arg1: memref<512x512xbf16, #tpu.memory_space<vmem>>, %arg2: memref<512x128xbf16, #tpu.memory_space<vmem>>, %arg3: memref<512x128xf32, #tpu.memory_space<vmem>>, %arg4: memref<8x128xf32, #tpu.memory_space<vmem>>, %arg5: memref<8x128xf32, #tpu.memory_space<vmem>>) attributes {dimension_semantics = [#tpu.dimension_semantics<parallel>], iteration_bounds = array<i64: 4>, scalar_prefetch = 0 : i64, scratch_operands = 0 : i64, tpu.core_type = #tpu.core_type<tc>, window_params = [{transform_indices = @transform_0, window_bounds = array<i64: 512, 512>}, {pipeline_mode = #tpu.pipeline_mode<synchronous>, transform_indices = @transform_1, window_bounds = array<i64: 512, 128>}, {transform_indices = @transform_2, window_bounds = array<i64: 512, 128>}, {transform_indices = @transform_3, window_bounds = array<i64: 8, 128>}, {transform_indices = @transform_4, window_bounds = array<i64: 8, 128>}]} {
    %c0 = arith.constant 0 : index
    %c0_0 = arith.constant 0 : index
    %0 = vector.load %arg1[%c0, %c0_0] : memref<512x512xbf16, #tpu.memory_space<vmem>>, vector<512x512xbf16>
    %c0_1 = arith.constant 0 : index
    %c0_2 = arith.constant 0 : index
    %1 = vector.load %arg2[%c0_1, %c0_2] : memref<512x128xbf16, #tpu.memory_space<vmem>>, vector<512x128xbf16>
    %cst = arith.constant dense<0.000000e+00> : vector<512x128xf32>
    %2 = tpu.matmul %0, %1, %cst {dimension_numbers = #tpu.dot_dimension_numbers<[1], [0], [0], [1], [0, 0, 1, 1], [], []>} : vector<512x512xbf16>, vector<512x128xbf16>, vector<512x128xf32> -> vector<512x128xf32>
    %c0_3 = arith.constant 0 : index
    %c0_4 = arith.constant 0 : index
    %3 = vector.load %arg3[%c0_3, %c0_4] : memref<512x128xf32, #tpu.memory_space<vmem>>, vector<512x128xf32>
    tpu.vector_store %arg3[%c0_3, %c0_4], %2 {strides = array<i32>} : memref<512x128xf32, #tpu.memory_space<vmem>>, vector<512x128xf32>,
    %4 = vector.shape_cast %2 : vector<512x128xf32> to vector<64x8x128xf32>
    %cst_5 = arith.constant dense<0.000000e+00> : vector<8x128xf32>
    %5 = vector.multi_reduction <add>, %4, %cst_5 [0] : vector<64x8x128xf32> to vector<8x128xf32>
    %c0_6 = arith.constant 0 : index
    %c0_7 = arith.constant 0 : index
    %6 = vector.load %arg4[%c0_6, %c0_7] : memref<8x128xf32, #tpu.memory_space<vmem>>, vector<8x128xf32>
    tpu.vector_store %arg4[%c0_6, %c0_7], %5 {strides = array<i32>} : memref<8x128xf32, #tpu.memory_space<vmem>>, vector<8x128xf32>,
    %7 = arith.mulf %4, %4 : vector<64x8x128xf32>
    %cst_8 = arith.constant dense<0.000000e+00> : vector<8x128xf32>
    %8 = vector.multi_reduction <add>, %7, %cst_8 [0] : vector<64x8x128xf32> to vector<8x128xf32>
    %c0_9 = arith.constant 0 : index
    %c0_10 = arith.constant 0 : index
    %9 = vector.load %arg5[%c0_9, %c0_10] : memref<8x128xf32, #tpu.memory_space<vmem>>, vector<8x128xf32>
    tpu.vector_store %arg5[%c0_9, %c0_10], %8 {strides = array<i32>} : memref<8x128xf32, #tpu.memory_space<vmem>>, vector<8x128xf32>,
    return
  }
  func.func @transform_0(%arg0: i32) -> (i32, i32) {
    %c0_i32 = arith.constant 0 : i32
    %c0_i32_0 = arith.constant 0 : i32
    return %arg0, %c0_i32 : i32, i32
  }
  func.func @transform_1(%arg0: i32) -> (i32, i32) {
    %c0_i32 = arith.constant 0 : i32
    %c0_i32_0 = arith.constant 0 : i32
    %c0_i32_1 = arith.constant 0 : i32
    return %c0_i32, %c0_i32_0 : i32, i32
  }
  func.func @transform_2(%arg0: i32) -> (i32, i32) {
    %c0_i32 = arith.constant 0 : i32
    %c0_i32_0 = arith.constant 0 : i32
    return %arg0, %c0_i32 : i32, i32
  }
  func.func @transform_3(%arg0: i32) -> (i32, i32) {
    %c0_i32 = arith.constant 0 : i32
    %c0_i32_0 = arith.constant 0 : i32
    return %arg0, %c0_i32 : i32, i32
  }
  func.func @transform_4(%arg0: i32) -> (i32, i32) {
    %c0_i32 = arith.constant 0 : i32
    %c0_i32_0 = arith.constant 0 : i32
    return %arg0, %c0_i32 : i32, i32
  }
}

module attributes {stable_mosaic.version = 11 : i64} {
  func.func @_scale_shift_relu_kernel(%arg0: i32, %arg1: memref<512x128xf32, #tpu.memory_space<vmem>>, %arg2: memref<1x128xf32, #tpu.memory_space<vmem>>, %arg3: memref<1x128xf32, #tpu.memory_space<vmem>>, %arg4: memref<512x128xbf16, #tpu.memory_space<vmem>>) attributes {dimension_semantics = [#tpu.dimension_semantics<parallel>], iteration_bounds = array<i64: 4>, scalar_prefetch = 0 : i64, scratch_operands = 0 : i64, tpu.core_type = #tpu.core_type<tc>, window_params = [{transform_indices = @transform_0, window_bounds = array<i64: 512, 128>}, {pipeline_mode = #tpu.pipeline_mode<synchronous>, transform_indices = @transform_1, window_bounds = array<i64: 1, 128>}, {pipeline_mode = #tpu.pipeline_mode<synchronous>, transform_indices = @transform_2, window_bounds = array<i64: 1, 128>}, {transform_indices = @transform_3, window_bounds = array<i64: 512, 128>}]} {
    %c0 = arith.constant 0 : index
    %c0_0 = arith.constant 0 : index
    %0 = vector.load %arg1[%c0, %c0_0] : memref<512x128xf32, #tpu.memory_space<vmem>>, vector<512x128xf32>
    %c0_1 = arith.constant 0 : index
    %c0_2 = arith.constant 0 : index
    %1 = vector.load %arg2[%c0_1, %c0_2] : memref<1x128xf32, #tpu.memory_space<vmem>>, vector<1x128xf32>
    %2 = vector.broadcast %1 : vector<1x128xf32> to vector<512x128xf32>
    %3 = arith.mulf %0, %2 : vector<512x128xf32>
    %c0_3 = arith.constant 0 : index
    %c0_4 = arith.constant 0 : index
    %4 = vector.load %arg3[%c0_3, %c0_4] : memref<1x128xf32, #tpu.memory_space<vmem>>, vector<1x128xf32>
    %5 = vector.broadcast %4 : vector<1x128xf32> to vector<512x128xf32>
    %6 = arith.addf %3, %5 : vector<512x128xf32>
    %cst = arith.constant 0.000000e+00 : f32
    %7 = vector.broadcast %cst : f32 to vector<512x128xf32>
    %8 = arith.maximumf %6, %7 : vector<512x128xf32>
    %9 = arith.truncf %8 : vector<512x128xf32> to vector<512x128xbf16>
    %c0_5 = arith.constant 0 : index
    %c0_6 = arith.constant 0 : index
    %10 = vector.load %arg4[%c0_5, %c0_6] : memref<512x128xbf16, #tpu.memory_space<vmem>>, vector<512x128xbf16>
    tpu.vector_store %arg4[%c0_5, %c0_6], %9 {strides = array<i32>} : memref<512x128xbf16, #tpu.memory_space<vmem>>, vector<512x128xbf16>,
    return
  }
  func.func @transform_0(%arg0: i32) -> (i32, i32) {
    %c0_i32 = arith.constant 0 : i32
    %c0_i32_0 = arith.constant 0 : i32
    return %arg0, %c0_i32 : i32, i32
  }
  func.func @transform_1(%arg0: i32) -> (i32, i32) {
    %c0_i32 = arith.constant 0 : i32
    %c0_i32_0 = arith.constant 0 : i32
    %c0_i32_1 = arith.constant 0 : i32
    return %c0_i32, %c0_i32_0 : i32, i32
  }
  func.func @transform_2(%arg0: i32) -> (i32, i32) {
    %c0_i32 = arith.constant 0 : i32
    %c0_i32_0 = arith.constant 0 : i32
    %c0_i32_1 = arith.constant 0 : i32
    return %c0_i32, %c0_i32_0 : i32, i32
  }
  func.func @transform_3(%arg0: i32) -> (i32, i32) {
    %c0_i32 = arith.constant 0 : i32
    %c0_i32_0 = arith.constant 0 : i32
    return %arg0, %c0_i32 : i32, i32
  }
}

module attributes {stable_mosaic.version = 11 : i64} {
  func.func @_matmul_tanh_kernel(%arg0: i32, %arg1: memref<512x256xbf16, #tpu.memory_space<vmem>>, %arg2: memref<256x128xbf16, #tpu.memory_space<vmem>>, %arg3: memref<512x128xf32, #tpu.memory_space<vmem>>) attributes {dimension_semantics = [#tpu.dimension_semantics<parallel>], iteration_bounds = array<i64: 16>, scalar_prefetch = 0 : i64, scratch_operands = 0 : i64, tpu.core_type = #tpu.core_type<tc>, window_params = [{transform_indices = @transform_0, window_bounds = array<i64: 512, 256>}, {pipeline_mode = #tpu.pipeline_mode<synchronous>, transform_indices = @transform_1, window_bounds = array<i64: 256, 128>}, {transform_indices = @transform_2, window_bounds = array<i64: 512, 128>}]} {
    %c0 = arith.constant 0 : index
    %c0_0 = arith.constant 0 : index
    %0 = vector.load %arg1[%c0, %c0_0] : memref<512x256xbf16, #tpu.memory_space<vmem>>, vector<512x256xbf16>
    %c0_1 = arith.constant 0 : index
    %c0_2 = arith.constant 0 : index
    %1 = vector.load %arg2[%c0_1, %c0_2] : memref<256x128xbf16, #tpu.memory_space<vmem>>, vector<256x128xbf16>
    %cst = arith.constant dense<0.000000e+00> : vector<512x128xf32>
    %2 = tpu.matmul %0, %1, %cst {dimension_numbers = #tpu.dot_dimension_numbers<[1], [0], [0], [1], [0, 0, 1, 1], [], []>} : vector<512x256xbf16>, vector<256x128xbf16>, vector<512x128xf32> -> vector<512x128xf32>
    %3 = math.tanh %2 : vector<512x128xf32>
    %c0_3 = arith.constant 0 : index
    %c0_4 = arith.constant 0 : index
    %4 = vector.load %arg3[%c0_3, %c0_4] : memref<512x128xf32, #tpu.memory_space<vmem>>, vector<512x128xf32>
    tpu.vector_store %arg3[%c0_3, %c0_4], %3 {strides = array<i32>} : memref<512x128xf32, #tpu.memory_space<vmem>>, vector<512x128xf32>,
    return
  }
  func.func @transform_0(%arg0: i32) -> (i32, i32) {
    %c0_i32 = arith.constant 0 : i32
    %c0_i32_0 = arith.constant 0 : i32
    return %arg0, %c0_i32 : i32, i32
  }
  func.func @transform_1(%arg0: i32) -> (i32, i32) {
    %c0_i32 = arith.constant 0 : i32
    %c0_i32_0 = arith.constant 0 : i32
    %c0_i32_1 = arith.constant 0 : i32
    return %c0_i32, %c0_i32_0 : i32, i32
  }
  func.func @transform_2(%arg0: i32) -> (i32, i32) {
    %c0_i32 = arith.constant 0 : i32
    %c0_i32_0 = arith.constant 0 : i32
    return %arg0, %c0_i32 : i32, i32
  }
}

</mosaic_0001>

<llo_original>
// kernel: generator_forward.10
$region0: #{generator_forward.10}
  #allocation0 [shape = 'u32[]', space=smem, size = 0x4, offset = 0x4, fixed_abs, tag = 'smem constant byte address 0x4 - core index']
  #allocation1 [shape = 'u32[144,128]{1,0:T(1,128)}', space=vmem, size = 0x12000, scoped, tag = 'internal scratch']
  %s0 = inlined_call_operand.vmem [shape: f32[32,128], index: 0, kind: input, shape index: {}]
  %s1 = inlined_call_operand.vmem [shape: f32[1,128], index: 1, kind: input, shape index: {}]
  %s2 = inlined_call_operand.vmem [shape: f32[1,128], index: 2, kind: input, shape index: {}]
  %s3 = inlined_call_operand.vmem [shape: bf16[32,128], index: 3, kind: output, shape index: {}]
  %s4 = sld [smem:[#allocation0]]
  $region22: #{generator_forward.10} parent=0
    _
  %s6 = ssub.s32 1, %s4
  %s7 = scalar_select 0, %s6, %s4
  // Predicated region
  $region2: #{generator_forward.10} parent=0 // pred_check
    _
  $region3: #{generator_forward.10} parent=0 // pred_check_branch
    %9 = sbr.rel (0) target = $region5
  $region4: #{generator_forward.10} parent=0 // pred_region
    _
  $region5: #{generator_forward.10} parent=0 // pred_fallthru
    _
  // Predicated region
  $region6: #{generator_forward.10} parent=0 // pred_check
    _
  $region7: #{generator_forward.10} parent=0 // pred_check_branch
    %11 = sbr.rel (0) target = $region9
  $region8: #{generator_forward.10} parent=0 // pred_region
    _
  $region9: #{generator_forward.10} parent=0 // pred_fallthru
    _
  // Predicated region
  $region10: #{generator_forward.10} parent=0 // pred_check
    _
  $region11: #{generator_forward.10} parent=0 // pred_check_branch
    %13 = sbr.rel (0) target = $region13
  $region12: #{generator_forward.10} parent=0 // pred_region
    _
  $region13: #{generator_forward.10} parent=0 // pred_fallthru
    _
  %v14 = vld [vmem:[%s0] sm:$0xff]
  %v15 = vld [vmem:[%s0 + $0x8] sm:$0xff]
  %v16 = vld [vmem:[%s0 + $0x10] sm:$0xff]
  %v17 = vld [vmem:[%s0 + $0x18] sm:$0xff]
  %v18 = vld [vmem:[%s1] sm:$0x1]
  %v20 = vlaneseq
  %v21 = vshrl.u32 %v20, 7
  %v22 = vsub.s32 0, %v21
  %v23 = vrot.slane %v18, %v22
  %v25 = vmul.f32 %v14, %v23
  %v26 = vmul.f32 %v15, %v23
  %v27 = vmul.f32 %v16, %v23
  %v28 = vmul.f32 %v17, %v23
  %v29 = vld [vmem:[%s2] sm:$0x1]
  %v31 = vlaneseq
  %v32 = vshrl.u32 %v31, 7
  %v33 = vsub.s32 0, %v32
  %v34 = vrot.slane %v29, %v33
  %v36 = vadd.f32 %v25, %v34
  %v37 = vadd.f32 %v26, %v34
  %v38 = vadd.f32 %v27, %v34
  %v39 = vadd.f32 %v28, %v34
  %v40 = vmax.f32 %v36, 0.0
  %v41 = vmax.f32 %v37, 0.0
  %v42 = vmax.f32 %v38, 0.0
  %v43 = vmax.f32 %v39, 0.0
  %v44 = vpack.c.bf16 %v41, %v40
  %v45 = vpack.c.bf16 %v43, %v42
  %v48 = vunpack.c.l.b16 %v44
  %v49 = vunpack.c.h.b16 %v44
  %v50 = vunpack.c.l.b16 %v45
  %v51 = vunpack.c.h.b16 %v45
  %v52 = vpack.c.b16 %v48, %v48
  %v53 = vpack.c.b16 %v49, %v49
  %v54 = vpack.c.b16 %v50, %v50
  %v55 = vpack.c.b16 %v51, %v51
  %60 = vst [vmem:[%s3] sm:$0xf] %v52
  %61 = vst [vmem:[%s3 + $0x4] sm:$0xf] %v53
  %62 = vst [vmem:[%s3 + $0x8] sm:$0xf] %v54
  %63 = vst [vmem:[%s3 + $0xc] sm:$0xf] %v55
  // Predicated region
  $region14: #{generator_forward.10} parent=0 // pred_check
    _
  $region15: #{generator_forward.10} parent=0 // pred_check_branch
    %65 = sbr.rel (0) target = $region17
  $region16: #{generator_forward.10} parent=0 // pred_region
    _
  $region17: #{generator_forward.10} parent=0 // pred_fallthru
    _
  // Predicated region
  $region18: #{generator_forward.10} parent=0 // pred_check
    _
  $region19: #{generator_forward.10} parent=0 // pred_check_branch
    %67 = sbr.rel (0) target = $region21
  $region20: #{generator_forward.10} parent=0 // pred_region
    _
  $region21: #{generator_forward.10} parent=0 // pred_fallthru
    _

// kernel: generator_forward.9
$region0: #{generator_forward.9}
  #allocation0 [shape = 'u32[]', space=smem, size = 0x4, offset = 0x4, fixed_abs, tag = 'smem constant byte address 0x4 - core index']
  #allocation1 [shape = 'u32[144,128]{1,0:T(1,128)}', space=vmem, size = 0x12000, scoped, tag = 'internal scratch']
  %s0 = inlined_call_operand.vmem [shape: bf16[32,1024], index: 0, kind: input, shape index: {}]
  %s1 = inlined_call_operand.vmem [shape: bf16[1024,128], index: 1, kind: input, shape index: {}]
  %s2 = inlined_call_operand.vmem [shape: f32[32,128], index: 2, kind: output, shape index: {0}]
  %s3 = inlined_call_operand.vmem [shape: f32[8,128], index: 3, kind: output, shape index: {1}]
  %s4 = inlined_call_operand.vmem [shape: f32[8,128], index: 4, kind: output, shape index: {2}]
  %5 = xla_tuple %s2, %s3, %s4
  %s6 = sld [smem:[#allocation0]]
  $region34: #{generator_forward.9} parent=0
    _
  %s8 = ssub.s32 1, %s6
  %s9 = scalar_select 0, %s8, %s6
  // Predicated region
  $region2: #{generator_forward.9} parent=0 // pred_check
    _
  $region3: #{generator_forward.9} parent=0 // pred_check_branch
    %11 = sbr.rel (0) target = $region5
  $region4: #{generator_forward.9} parent=0 // pred_region
    _
  $region5: #{generator_forward.9} parent=0 // pred_fallthru
    _
  // Predicated region
  $region6: #{generator_forward.9} parent=0 // pred_check
    _
  $region7: #{generator_forward.9} parent=0 // pred_check_branch
    %13 = sbr.rel (0) target = $region9
  $region8: #{generator_forward.9} parent=0 // pred_region
    _
  $region9: #{generator_forward.9} parent=0 // pred_fallthru
    _
  %v15 = vld [vmem:[%s0] sm:$0xff]
  %v16 = vld [vmem:[%s0 + $0x8] sm:$0xff]
  %v17 = vld [vmem:[%s0 + $0x10] sm:$0xff]
  %v18 = vld [vmem:[%s0 + $0x18] sm:$0xff]
  %v19 = vld [vmem:[%s0 + $0x20] sm:$0xff]
  %v20 = vld [vmem:[%s0 + $0x28] sm:$0xff]
  %v21 = vld [vmem:[%s0 + $0x30] sm:$0xff]
  %v22 = vld [vmem:[%s0 + $0x38] sm:$0xff]
  %v23 = vld [vmem:[%s0 + $0x40] sm:$0xff]
  %v24 = vld [vmem:[%s0 + $0x48] sm:$0xff]
  %v25 = vld [vmem:[%s0 + $0x50] sm:$0xff]
  %v26 = vld [vmem:[%s0 + $0x58] sm:$0xff]
  %v27 = vld [vmem:[%s0 + $0x60] sm:$0xff]
  %v28 = vld [vmem:[%s0 + $0x68] sm:$0xff]
  %v29 = vld [vmem:[%s0 + $0x70] sm:$0xff]
  %v30 = vld [vmem:[%s0 + $0x78] sm:$0xff]
  %v31 = vld [vmem:[%s1] sm:$0xf]
  %v32 = vld [vmem:[%s1 + $0x4] sm:$0xf]
  %v33 = vld [vmem:[%s1 + $0x8] sm:$0xf]
  %v34 = vld [vmem:[%s1 + $0xc] sm:$0xf]
  %v35 = vld [vmem:[%s1 + $0x10] sm:$0xf]
  %v36 = vld [vmem:[%s1 + $0x14] sm:$0xf]
  %v37 = vld [vmem:[%s1 + $0x18] sm:$0xf]
  %v38 = vld [vmem:[%s1 + $0x1c] sm:$0xf]
  %v39 = vld [vmem:[%s1 + $0x20] sm:$0xf]
  %v40 = vld [vmem:[%s1 + $0x24] sm:$0xf]
  %v41 = vld [vmem:[%s1 + $0x28] sm:$0xf]
  %v42 = vld [vmem:[%s1 + $0x2c] sm:$0xf]
  %v43 = vld [vmem:[%s1 + $0x30] sm:$0xf]
  %v44 = vld [vmem:[%s1 + $0x34] sm:$0xf]
  %v45 = vld [vmem:[%s1 + $0x38] sm:$0xf]
  %v46 = vld [vmem:[%s1 + $0x3c] sm:$0xf]
  %v47 = vld [vmem:[%s1 + $0x40] sm:$0xf]
  %v48 = vld [vmem:[%s1 + $0x44] sm:$0xf]
  %v49 = vld [vmem:[%s1 + $0x48] sm:$0xf]
  %v50 = vld [vmem:[%s1 + $0x4c] sm:$0xf]
  %v51 = vld [vmem:[%s1 + $0x50] sm:$0xf]
  %v52 = vld [vmem:[%s1 + $0x54] sm:$0xf]
  %v53 = vld [vmem:[%s1 + $0x58] sm:$0xf]
  %v54 = vld [vmem:[%s1 + $0x5c] sm:$0xf]
  %v55 = vld [vmem:[%s1 + $0x60] sm:$0xf]
  %v56 = vld [vmem:[%s1 + $0x64] sm:$0xf]
  %v57 = vld [vmem:[%s1 + $0x68] sm:$0xf]
  %v58 = vld [vmem:[%s1 + $0x6c] sm:$0xf]
  %v59 = vld [vmem:[%s1 + $0x70] sm:$0xf]
  %v60 = vld [vmem:[%s1 + $0x74] sm:$0xf]
  %v61 = vld [vmem:[%s1 + $0x78] sm:$0xf]
  %v62 = vld [vmem:[%s1 + $0x7c] sm:$0xf]
  %v63 = vld [vmem:[%s1 + $0x80] sm:$0xf]
  %v64 = vld [vmem:[%s1 + $0x84] sm:$0xf]
  %v65 = vld [vmem:[%s1 + $0x88] sm:$0xf]
  %v66 = vld [vmem:[%s1 + $0x8c] sm:$0xf]
  %v67 = vld [vmem:[%s1 + $0x90] sm:$0xf]
  %v68 = vld [vmem:[%s1 + $0x94] sm:$0xf]
  %v69 = vld [vmem:[%s1 + $0x98] sm:$0xf]
  %v70 = vld [vmem:[%s1 + $0x9c] sm:$0xf]
  %v71 = vld [vmem:[%s1 + $0xa0] sm:$0xf]
  %v72 = vld [vmem:[%s1 + $0xa4] sm:$0xf]
  %v73 = vld [vmem:[%s1 + $0xa8] sm:$0xf]
  %v74 = vld [vmem:[%s1 + $0xac] sm:$0xf]
  %v75 = vld [vmem:[%s1 + $0xb0] sm:$0xf]
  %v76 = vld [vmem:[%s1 + $0xb4] sm:$0xf]
  %v77 = vld [vmem:[%s1 + $0xb8] sm:$0xf]
  %v78 = vld [vmem:[%s1 + $0xbc] sm:$0xf]
  %v79 = vld [vmem:[%s1 + $0xc0] sm:$0xf]
  %v80 = vld [vmem:[%s1 + $0xc4] sm:$0xf]
  %v81 = vld [vmem:[%s1 + $0xc8] sm:$0xf]
  %v82 = vld [vmem:[%s1 + $0xcc] sm:$0xf]
  %v83 = vld [vmem:[%s1 + $0xd0] sm:$0xf]
  %v84 = vld [vmem:[%s1 + $0xd4] sm:$0xf]
  %v85 = vld [vmem:[%s1 + $0xd8] sm:$0xf]
  %v86 = vld [vmem:[%s1 + $0xdc] sm:$0xf]
  %v87 = vld [vmem:[%s1 + $0xe0] sm:$0xf]
  %v88 = vld [vmem:[%s1 + $0xe4] sm:$0xf]
  %v89 = vld [vmem:[%s1 + $0xe8] sm:$0xf]
  %v90 = vld [vmem:[%s1 + $0xec] sm:$0xf]
  %v91 = vld [vmem:[%s1 + $0xf0] sm:$0xf]
  %v92 = vld [vmem:[%s1 + $0xf4] sm:$0xf]
  %v93 = vld [vmem:[%s1 + $0xf8] sm:$0xf]
  %v94 = vld [vmem:[%s1 + $0xfc] sm:$0xf]
  %v95 = vld [vmem:[%s1 + $0x100] sm:$0xf]
  %v96 = vld [vmem:[%s1 + $0x104] sm:$0xf]
  %v97 = vld [vmem:[%s1 + $0x108] sm:$0xf]
  %v98 = vld [vmem:[%s1 + $0x10c] sm:$0xf]
  %v99 = vld [vmem:[%s1 + $0x110] sm:$0xf]
  %v100 = vld [vmem:[%s1 + $0x114] sm:$0xf]
  %v101 = vld [vmem:[%s1 + $0x118] sm:$0xf]
  %v102 = vld [vmem:[%s1 + $0x11c] sm:$0xf]
  %v103 = vld [vmem:[%s1 + $0x120] sm:$0xf]
  %v104 = vld [vmem:[%s1 + $0x124] sm:$0xf]
  %v105 = vld [vmem:[%s1 + $0x128] sm:$0xf]
  %v106 = vld [vmem:[%s1 + $0x12c] sm:$0xf]
  %v107 = vld [vmem:[%s1 + $0x130] sm:$0xf]
  %v108 = vld [vmem:[%s1 + $0x134] sm:$0xf]
  %v109 = vld [vmem:[%s1 + $0x138] sm:$0xf]
  %v110 = vld [vmem:[%s1 + $0x13c] sm:$0xf]
  %v111 = vld [vmem:[%s1 + $0x140] sm:$0xf]
  %v112 = vld [vmem:[%s1 + $0x144] sm:$0xf]
  %v113 = vld [vmem:[%s1 + $0x148] sm:$0xf]
  %v114 = vld [vmem:[%s1 + $0x14c] sm:$0xf]
  %v115 = vld [vmem:[%s1 + $0x150] sm:$0xf]
  %v116 = vld [vmem:[%s1 + $0x154] sm:$0xf]
  %v117 = vld [vmem:[%s1 + $0x158] sm:$0xf]
  %v118 = vld [vmem:[%s1 + $0x15c] sm:$0xf]
  %v119 = vld [vmem:[%s1 + $0x160] sm:$0xf]
  %v120 = vld [vmem:[%s1 + $0x164] sm:$0xf]
  %v121 = vld [vmem:[%s1 + $0x168] sm:$0xf]
  %v122 = vld [vmem:[%s1 + $0x16c] sm:$0xf]
  %v123 = vld [vmem:[%s1 + $0x170] sm:$0xf]
  %v124 = vld [vmem:[%s1 + $0x174] sm:$0xf]
  %v125 = vld [vmem:[%s1 + $0x178] sm:$0xf]
  %v126 = vld [vmem:[%s1 + $0x17c] sm:$0xf]
  %v127 = vld [vmem:[%s1 + $0x180] sm:$0xf]
  %v128 = vld [vmem:[%s1 + $0x184] sm:$0xf]
  %v129 = vld [vmem:[%s1 + $0x188] sm:$0xf]
  %v130 = vld [vmem:[%s1 + $0x18c] sm:$0xf]
  %v131 = vld [vmem:[%s1 + $0x190] sm:$0xf]
  %v132 = vld [vmem:[%s1 + $0x194] sm:$0xf]
  %v133 = vld [vmem:[%s1 + $0x198] sm:$0xf]
  %v134 = vld [vmem:[%s1 + $0x19c] sm:$0xf]
  %v135 = vld [vmem:[%s1 + $0x1a0] sm:$0xf]
  %v136 = vld [vmem:[%s1 + $0x1a4] sm:$0xf]
  %v137 = vld [vmem:[%s1 + $0x1a8] sm:$0xf]
  %v138 = vld [vmem:[%s1 + $0x1ac] sm:$0xf]
  %v139 = vld [vmem:[%s1 + $0x1b0] sm:$0xf]
  %v140 = vld [vmem:[%s1 + $0x1b4] sm:$0xf]
  %v141 = vld [vmem:[%s1 + $0x1b8] sm:$0xf]
  %v142 = vld [vmem:[%s1 + $0x1bc] sm:$0xf]
  %v143 = vld [vmem:[%s1 + $0x1c0] sm:$0xf]
  %v144 = vld [vmem:[%s1 + $0x1c4] sm:$0xf]
  %v145 = vld [vmem:[%s1 + $0x1c8] sm:$0xf]
  %v146 = vld [vmem:[%s1 + $0x1cc] sm:$0xf]
  %v147 = vld [vmem:[%s1 + $0x1d0] sm:$0xf]
  %v148 = vld [vmem:[%s1 + $0x1d4] sm:$0xf]
  %v149 = vld [vmem:[%s1 + $0x1d8] sm:$0xf]
  %v150 = vld [vmem:[%s1 + $0x1dc] sm:$0xf]
  %v151 = vld [vmem:[%s1 + $0x1e0] sm:$0xf]
  %v152 = vld [vmem:[%s1 + $0x1e4] sm:$0xf]
  %v153 = vld [vmem:[%s1 + $0x1e8] sm:$0xf]
  %v154 = vld [vmem:[%s1 + $0x1ec] sm:$0xf]
  %v155 = vld [vmem:[%s1 + $0x1f0] sm:$0xf]
  %v156 = vld [vmem:[%s1 + $0x1f4] sm:$0xf]
  %v157 = vld [vmem:[%s1 + $0x1f8] sm:$0xf]
  %v158 = vld [vmem:[%s1 + $0x1fc] sm:$0xf]
  %v175 = vunpack.c.l.b16 %v15
  %v176 = vunpack.c.h.b16 %v15
  %v177 = vunpack.c.l.b16 %v16
  %v178 = vunpack.c.h.b16 %v16
  %v179 = vunpack.c.l.b16 %v17
  %v180 = vunpack.c.h.b16 %v17
  %v181 = vunpack.c.l.b16 %v18
  %v182 = vunpack.c.h.b16 %v18
  %v183 = vunpack.c.l.b16 %v19
  %v184 = vunpack.c.h.b16 %v19
  %v185 = vunpack.c.l.b16 %v20
  %v186 = vunpack.c.h.b16 %v20
  %v187 = vunpack.c.l.b16 %v21
  %v188 = vunpack.c.h.b16 %v21
  %v189 = vunpack.c.l.b16 %v22
  %v190 = vunpack.c.h.b16 %v22
  %v191 = vunpack.c.l.b16 %v23
  %v192 = vunpack.c.h.b16 %v23
  %v193 = vunpack.c.l.b16 %v24
  %v194 = vunpack.c.h.b16 %v24
  %v195 = vunpack.c.l.b16 %v25
  %v196 = vunpack.c.h.b16 %v25
  %v197 = vunpack.c.l.b16 %v26
  %v198 = vunpack.c.h.b16 %v26
  %v199 = vunpack.c.l.b16 %v27
  %v200 = vunpack.c.h.b16 %v27
  %v201 = vunpack.c.l.b16 %v28
  %v202 = vunpack.c.h.b16 %v28
  %v203 = vunpack.c.l.b16 %v29
  %v204 = vunpack.c.h.b16 %v29
  %v205 = vunpack.c.l.b16 %v30
  %v206 = vunpack.c.h.b16 %v30
  %v207 = vpack.c.b16 %v183, %v175
  %v208 = vpack.c.b16 %v184, %v176
  %v209 = vpack.c.b16 %v185, %v177
  %v210 = vpack.c.b16 %v186, %v178
  %v211 = vpack.c.b16 %v187, %v179
  %v212 = vpack.c.b16 %v188, %v180
  %v213 = vpack.c.b16 %v189, %v181
  %v214 = vpack.c.b16 %v190, %v182
  %v215 = vpack.c.b16 %v199, %v191
  %v216 = vpack.c.b16 %v200, %v192
  %v217 = vpack.c.b16 %v201, %v193
  %v218 = vpack.c.b16 %v202, %v194
  %v219 = vpack.c.b16 %v203, %v195
  %v220 = vpack.c.b16 %v204, %v196
  %v221 = vpack.c.b16 %v205, %v197
  %v222 = vpack.c.b16 %v206, %v198
  %v367 = vunpack.c.l.b16 %v31
  %v368 = vunpack.c.l.b16 %v32
  %v369 = vunpack.c.l.b16 %v33
  %v370 = vunpack.c.l.b16 %v34
  %v371 = vunpack.c.l.b16 %v35
  %v372 = vunpack.c.l.b16 %v36
  %v373 = vunpack.c.l.b16 %v37
  %v374 = vunpack.c.l.b16 %v38
  %v375 = vunpack.c.l.b16 %v39
  %v376 = vunpack.c.l.b16 %v40
  %v377 = vunpack.c.l.b16 %v41
  %v378 = vunpack.c.l.b16 %v42
  %v379 = vunpack.c.l.b16 %v43
  %v380 = vunpack.c.l.b16 %v44
  %v381 = vunpack.c.l.b16 %v45
  %v382 = vunpack.c.l.b16 %v46
  %v383 = vunpack.c.l.b16 %v47
  %v384 = vunpack.c.l.b16 %v48
  %v385 = vunpack.c.l.b16 %v49
  %v386 = vunpack.c.l.b16 %v50
  %v387 = vunpack.c.l.b16 %v51
  %v388 = vunpack.c.l.b16 %v52
  %v389 = vunpack.c.l.b16 %v53
  %v390 = vunpack.c.l.b16 %v54
  %v391 = vunpack.c.l.b16 %v55
  %v392 = vunpack.c.l.b16 %v56
  %v393 = vunpack.c.l.b16 %v57
  %v394 = vunpack.c.l.b16 %v58
  %v395 = vunpack.c.l.b16 %v59
  %v396 = vunpack.c.l.b16 %v60
  %v397 = vunpack.c.l.b16 %v61
  %v398 = vunpack.c.l.b16 %v62
  %v399 = vunpack.c.l.b16 %v63
  %v400 = vunpack.c.l.b16 %v64
  %v401 = vunpack.c.l.b16 %v65
  %v402 = vunpack.c.l.b16 %v66
  %v403 = vunpack.c.l.b16 %v67
  %v404 = vunpack.c.l.b16 %v68
  %v405 = vunpack.c.l.b16 %v69
  %v406 = vunpack.c.l.b16 %v70
  %v407 = vunpack.c.l.b16 %v71
  %v408 = vunpack.c.l.b16 %v72
  %v409 = vunpack.c.l.b16 %v73
  %v410 = vunpack.c.l.b16 %v74
  %v411 = vunpack.c.l.b16 %v75
  %v412 = vunpack.c.l.b16 %v76
  %v413 = vunpack.c.l.b16 %v77
  %v414 = vunpack.c.l.b16 %v78
  %v415 = vunpack.c.l.b16 %v79
  %v416 = vunpack.c.l.b16 %v80
  %v417 = vunpack.c.l.b16 %v81
  %v418 = vunpack.c.l.b16 %v82
  %v419 = vunpack.c.l.b16 %v83
  %v420 = vunpack.c.l.b16 %v84
  %v421 = vunpack.c.l.b16 %v85
  %v422 = vunpack.c.l.b16 %v86
  %v423 = vunpack.c.l.b16 %v87
  %v424 = vunpack.c.l.b16 %v88
  %v425 = vunpack.c.l.b16 %v89
  %v426 = vunpack.c.l.b16 %v90
  %v427 = vunpack.c.l.b16 %v91
  %v428 = vunpack.c.l.b16 %v92
  %v429 = vunpack.c.l.b16 %v93
  %v430 = vunpack.c.l.b16 %v94
  %v431 = vunpack.c.l.b16 %v95
  %v432 = vunpack.c.l.b16 %v96
  %v433 = vunpack.c.l.b16 %v97
  %v434 = vunpack.c.l.b16 %v98
  %v435 = vunpack.c.l.b16 %v99
  %v436 = vunpack.c.l.b16 %v100
  %v437 = vunpack.c.l.b16 %v101
  %v438 = vunpack.c.l.b16 %v102
  %v439 = vunpack.c.l.b16 %v103
  %v440 = vunpack.c.l.b16 %v104
  %v441 = vunpack.c.l.b16 %v105
  %v442 = vunpack.c.l.b16 %v106
  %v443 = vunpack.c.l.b16 %v107
  %v444 = vunpack.c.l.b16 %v108
  %v445 = vunpack.c.l.b16 %v109
  %v446 = vunpack.c.l.b16 %v110
  %v447 = vunpack.c.l.b16 %v111
  %v448 = vunpack.c.l.b16 %v112
  %v449 = vunpack.c.l.b16 %v113
  %v450 = vunpack.c.l.b16 %v114
  %v451 = vunpack.c.l.b16 %v115
  %v452 = vunpack.c.l.b16 %v116
  %v453 = vunpack.c.l.b16 %v117
  %v454 = vunpack.c.l.b16 %v118
  %v455 = vunpack.c.l.b16 %v119
  %v456 = vunpack.c.l.b16 %v120
  %v457 = vunpack.c.l.b16 %v121
  %v458 = vunpack.c.l.b16 %v122
  %v459 = vunpack.c.l.b16 %v123
  %v460 = vunpack.c.l.b16 %v124
  %v461 = vunpack.c.l.b16 %v125
  %v462 = vunpack.c.l.b16 %v126
  %v463 = vunpack.c.l.b16 %v127
  %v464 = vunpack.c.l.b16 %v128
  %v465 = vunpack.c.l.b16 %v129
  %v466 = vunpack.c.l.b16 %v130
  %v467 = vunpack.c.l.b16 %v131
  %v468 = vunpack.c.l.b16 %v132
  %v469 = vunpack.c.l.b16 %v133
  %v470 = vunpack.c.l.b16 %v134
  %v471 = vunpack.c.l.b16 %v135
  %v472 = vunpack.c.l.b16 %v136
  %v473 = vunpack.c.l.b16 %v137
  %v474 = vunpack.c.l.b16 %v138
  %v475 = vunpack.c.l.b16 %v139
  %v476 = vunpack.c.l.b16 %v140
  %v477 = vunpack.c.l.b16 %v141
  %v478 = vunpack.c.l.b16 %v142
  %v479 = vunpack.c.l.b16 %v143
  %v480 = vunpack.c.l.b16 %v144
  %v481 = vunpack.c.l.b16 %v145
  %v482 = vunpack.c.l.b16 %v146
  %v483 = vunpack.c.l.b16 %v147
  %v484 = vunpack.c.l.b16 %v148
  %v485 = vunpack.c.l.b16 %v149
  %v486 = vunpack.c.l.b16 %v150
  %v487 = vunpack.c.l.b16 %v151
  %v488 = vunpack.c.l.b16 %v152
  %v489 = vunpack.c.l.b16 %v153
  %v490 = vunpack.c.l.b16 %v154
  %v491 = vunpack.c.l.b16 %v155
  %v492 = vunpack.c.l.b16 %v156
  %v493 = vunpack.c.l.b16 %v157
  %v494 = vunpack.c.l.b16 %v158
  %v495 = vpack.c.b16 %v368, %v367
  %v496 = vpack.c.b16 %v370, %v369
  %v497 = vpack.c.b16 %v372, %v371
  %v498 = vpack.c.b16 %v374, %v373
  %v499 = vpack.c.b16 %v376, %v375
  %v500 = vpack.c.b16 %v378, %v377
  %v501 = vpack.c.b16 %v380, %v379
  %v502 = vpack.c.b16 %v382, %v381
  %v503 = vpack.c.b16 %v384, %v383
  %v504 = vpack.c.b16 %v386, %v385
  %v505 = vpack.c.b16 %v388, %v387
  %v506 = vpack.c.b16 %v390, %v389
  %v507 = vpack.c.b16 %v392, %v391
  %v508 = vpack.c.b16 %v394, %v393
  %v509 = vpack.c.b16 %v396, %v395
  %v510 = vpack.c.b16 %v398, %v397
  %v511 = vpack.c.b16 %v400, %v399
  %v512 = vpack.c.b16 %v402, %v401
  %v513 = vpack.c.b16 %v404, %v403
  %v514 = vpack.c.b16 %v406, %v405
  %v515 = vpack.c.b16 %v408, %v407
  %v516 = vpack.c.b16 %v410, %v409
  %v517 = vpack.c.b16 %v412, %v411
  %v518 = vpack.c.b16 %v414, %v413
  %v519 = vpack.c.b16 %v416, %v415
  %v520 = vpack.c.b16 %v418, %v417
  %v521 = vpack.c.b16 %v420, %v419
  %v522 = vpack.c.b16 %v422, %v421
  %v523 = vpack.c.b16 %v424, %v423
  %v524 = vpack.c.b16 %v426, %v425
  %v525 = vpack.c.b16 %v428, %v427
  %v526 = vpack.c.b16 %v430, %v429
  %v527 = vpack.c.b16 %v432, %v431
  %v528 = vpack.c.b16 %v434, %v433
  %v529 = vpack.c.b16 %v436, %v435
  %v530 = vpack.c.b16 %v438, %v437
  %v531 = vpack.c.b16 %v440, %v439
  %v532 = vpack.c.b16 %v442, %v441
  %v533 = vpack.c.b16 %v444, %v443
  %v534 = vpack.c.b16 %v446, %v445
  %v535 = vpack.c.b16 %v448, %v447
  %v536 = vpack.c.b16 %v450, %v449
  %v537 = vpack.c.b16 %v452, %v451
  %v538 = vpack.c.b16 %v454, %v453
  %v539 = vpack.c.b16 %v456, %v455
  %v540 = vpack.c.b16 %v458, %v457
  %v541 = vpack.c.b16 %v460, %v459
  %v542 = vpack.c.b16 %v462, %v461
  %v543 = vpack.c.b16 %v464, %v463
  %v544 = vpack.c.b16 %v466, %v465
  %v545 = vpack.c.b16 %v468, %v467
  %v546 = vpack.c.b16 %v470, %v469
  %v547 = vpack.c.b16 %v472, %v471
  %v548 = vpack.c.b16 %v474, %v473
  %v549 = vpack.c.b16 %v476, %v475
  %v550 = vpack.c.b16 %v478, %v477
  %v551 = vpack.c.b16 %v480, %v479
  %v552 = vpack.c.b16 %v482, %v481
  %v553 = vpack.c.b16 %v484, %v483
  %v554 = vpack.c.b16 %v486, %v485
  %v555 = vpack.c.b16 %v488, %v487
  %v556 = vpack.c.b16 %v490, %v489
  %v557 = vpack.c.b16 %v492, %v491
  %v558 = vpack.c.b16 %v494, %v493
  %623 = vmatprep.subr.bf16.mxu0 0
  %624 = vmatpush1.bf16.msra.mxu0 %v495
  %625 = vmatprep.subr.bf16.mxu0 0
  %626 = vmatpush1.bf16.msra.mxu0 %v496
  %627 = vmatprep.subr.bf16.mxu0 0
  %628 = vmatpush1.bf16.msra.mxu0 %v497
  %629 = vmatprep.subr.bf16.mxu0 0
  %630 = vmatpush1.bf16.msra.mxu0 %v498
  %631 = vmatprep.subr.bf16.mxu0 0
  %632 = vmatpush1.bf16.msra.mxu0 %v499
  %633 = vmatprep.subr.bf16.mxu0 0
  %634 = vmatpush1.bf16.msra.mxu0 %v500
  %635 = vmatprep.subr.bf16.mxu0 0
  %636 = vmatpush1.bf16.msra.mxu0 %v501
  %637 = vmatprep.subr.bf16.mxu0 0
  %638 = vmatpush1.bf16.msra.mxu0 %v502
  %639 = vmatprep.subr.bf16.mxu0 0
  %640 = vmatpush1.bf16.msra.mxu0 %v503
  %641 = vmatprep.subr.bf16.mxu0 0
  %642 = vmatpush1.bf16.msra.mxu0 %v504
  %643 = vmatprep.subr.bf16.mxu0 0
  %644 = vmatpush1.bf16.msra.mxu0 %v505
  %645 = vmatprep.subr.bf16.mxu0 0
  %646 = vmatpush1.bf16.msra.mxu0 %v506
  %647 = vmatprep.subr.bf16.mxu0 0
  %648 = vmatpush1.bf16.msra.mxu0 %v507
  %649 = vmatprep.subr.bf16.mxu0 0
  %650 = vmatpush1.bf16.msra.mxu0 %v508
  %651 = vmatprep.subr.bf16.mxu0 0
  %652 = vmatpush1.bf16.msra.mxu0 %v509
  %653 = vmatprep.subr.bf16.mxu0 0
  %654 = vmatpush1.bf16.msra.mxu0 %v510
  %655 = vmatprep.mubr.bf16.mxu0 %v208
  %656 = vmatmul.mubr.bf16.gmra.mrb[0].mxu0 %v207
  %v657 = vpop.f32.mrb[0].mxu0
  %v658 = vadd.f32 0.0, %v657
  %v659 = vpop.f32.mrb[0].mxu0
  %v660 = vpop.f32.mrb[0].mxu0
  %v661 = vadd.f32 0.0, %v660
  %v662 = vpop.f32.mrb[0].mxu0
  %663 = vmatprep.mubr.bf16.mxu0 %v216
  %664 = vmatmul.mubr.bf16.gmra.mrb[0].mxu0 %v215
  %v665 = vpop.f32.mrb[0].mxu0
  %v666 = vadd.f32 0.0, %v665
  %v667 = vpop.f32.mrb[0].mxu0
  %v668 = vpop.f32.mrb[0].mxu0
  %v669 = vadd.f32 0.0, %v668
  %v670 = vpop.f32.mrb[0].mxu0
  %671 = vdwg.mxu0
  %672 = vmatprep.subr.bf16.mxu0 0
  %673 = vmatpush1.bf16.msra.mxu0 %v511
  %674 = vmatprep.subr.bf16.mxu0 0
  %675 = vmatpush1.bf16.msra.mxu0 %v512
  %676 = vmatprep.subr.bf16.mxu0 0
  %677 = vmatpush1.bf16.msra.mxu0 %v513
  %678 = vmatprep.subr.bf16.mxu0 0
  %679 = vmatpush1.bf16.msra.mxu0 %v514
  %680 = vmatprep.subr.bf16.mxu0 0
  %681 = vmatpush1.bf16.msra.mxu0 %v515
  %682 = vmatprep.subr.bf16.mxu0 0
  %683 = vmatpush1.bf16.msra.mxu0 %v516
  %684 = vmatprep.subr.bf16.mxu0 0
  %685 = vmatpush1.bf16.msra.mxu0 %v517
  %686 = vmatprep.subr.bf16.mxu0 0
  %687 = vmatpush1.bf16.msra.mxu0 %v518
  %688 = vmatprep.subr.bf16.mxu0 0
  %689 = vmatpush1.bf16.msra.mxu0 %v519
  %690 = vmatprep.subr.bf16.mxu0 0
  %691 = vmatpush1.bf16.msra.mxu0 %v520
  %692 = vmatprep.subr.bf16.mxu0 0
  %693 = vmatpush1.bf16.msra.mxu0 %v521
  %694 = vmatprep.subr.bf16.mxu0 0
  %695 = vmatpush1.bf16.msra.mxu0 %v522
  %696 = vmatprep.subr.bf16.mxu0 0
  %697 = vmatpush1.bf16.msra.mxu0 %v523
  %698 = vmatprep.subr.bf16.mxu0 0
  %699 = vmatpush1.bf16.msra.mxu0 %v524
  %700 = vmatprep.subr.bf16.mxu0 0
  %701 = vmatpush1.bf16.msra.mxu0 %v525
  %702 = vmatprep.subr.bf16.mxu0 0
  %703 = vmatpush1.bf16.msra.mxu0 %v526
  %704 = vmatprep.mubr.bf16.mxu0 %v210
  %705 = vmatmul.mubr.bf16.gmra.mrb[0].mxu0 %v209
  %v706 = vpop.f32.mrb[0].mxu0
  %v707 = vadd.f32 %v658, %v706
  %v708 = vpop.f32.mrb[0].mxu0
  %v709 = vpop.f32.mrb[0].mxu0
  %v710 = vadd.f32 %v661, %v709
  %v711 = vpop.f32.mrb[0].mxu0
  %712 = vmatprep.mubr.bf16.mxu0 %v218
  %713 = vmatmul.mubr.bf16.gmra.mrb[0].mxu0 %v217
  %v714 = vpop.f32.mrb[0].mxu0
  %v715 = vadd.f32 %v666, %v714
  %v716 = vpop.f32.mrb[0].mxu0
  %v717 = vpop.f32.mrb[0].mxu0
  %v718 = vadd.f32 %v669, %v717
  %v719 = vpop.f32.mrb[0].mxu0
  %720 = vdwg.mxu0
  %721 = vmatprep.subr.bf16.mxu0 0
  %722 = vmatpush1.bf16.msra.mxu0 %v527
  %723 = vmatprep.subr.bf16.mxu0 0
  %724 = vmatpush1.bf16.msra.mxu0 %v528
  %725 = vmatprep.subr.bf16.mxu0 0
  %726 = vmatpush1.bf16.msra.mxu0 %v529
  %727 = vmatprep.subr.bf16.mxu0 0
  %728 = vmatpush1.bf16.msra.mxu0 %v530
  %729 = vmatprep.subr.bf16.mxu0 0
  %730 = vmatpush1.bf16.msra.mxu0 %v531
  %731 = vmatprep.subr.bf16.mxu0 0
  %732 = vmatpush1.bf16.msra.mxu0 %v532
  %733 = vmatprep.subr.bf16.mxu0 0
  %734 = vmatpush1.bf16.msra.mxu0 %v533
  %735 = vmatprep.subr.bf16.mxu0 0
  %736 = vmatpush1.bf16.msra.mxu0 %v534
  %737 = vmatprep.subr.bf16.mxu0 0
  %738 = vmatpush1.bf16.msra.mxu0 %v535
  %739 = vmatprep.subr.bf16.mxu0 0
  %740 = vmatpush1.bf16.msra.mxu0 %v536
  %741 = vmatprep.subr.bf16.mxu0 0
  %742 = vmatpush1.bf16.msra.mxu0 %v537
  %743 = vmatprep.subr.bf16.mxu0 0
  %744 = vmatpush1.bf16.msra.mxu0 %v538
  %745 = vmatprep.subr.bf16.mxu0 0
  %746 = vmatpush1.bf16.msra.mxu0 %v539
  %747 = vmatprep.subr.bf16.mxu0 0
  %748 = vmatpush1.bf16.msra.mxu0 %v540
  %749 = vmatprep.subr.bf16.mxu0 0
  %750 = vmatpush1.bf16.msra.mxu0 %v541
  %751 = vmatprep.subr.bf16.mxu0 0
  %752 = vmatpush1.bf16.msra.mxu0 %v542
  %753 = vmatprep.mubr.bf16.mxu0 %v212
  %754 = vmatmul.mubr.bf16.gmra.mrb[0].mxu0 %v211
  %v755 = vpop.f32.mrb[0].mxu0
  %v756 = vadd.f32 %v707, %v755
  %v757 = vpop.f32.mrb[0].mxu0
  %v758 = vpop.f32.mrb[0].mxu0
  %v759 = vadd.f32 %v710, %v758
  %v760 = vpop.f32.mrb[0].mxu0
  %761 = vmatprep.mubr.bf16.mxu0 %v220
  %762 = vmatmul.mubr.bf16.gmra.mrb[0].mxu0 %v219
  %v763 = vpop.f32.mrb[0].mxu0
  %v764 = vadd.f32 %v715, %v763
  %v765 = vpop.f32.mrb[0].mxu0
  %v766 = vpop.f32.mrb[0].mxu0
  %v767 = vadd.f32 %v718, %v766
  %v768 = vpop.f32.mrb[0].mxu0
  %769 = vdwg.mxu0
  %770 = vmatprep.subr.bf16.mxu0 0
  %771 = vmatpush1.bf16.msra.mxu0 %v543
  %772 = vmatprep.subr.bf16.mxu0 0
  %773 = vmatpush1.bf16.msra.mxu0 %v544
  %774 = vmatprep.subr.bf16.mxu0 0
  %775 = vmatpush1.bf16.msra.mxu0 %v545
  %776 = vmatprep.subr.bf16.mxu0 0
  %777 = vmatpush1.bf16.msra.mxu0 %v546
  %778 = vmatprep.subr.bf16.mxu0 0
  %779 = vmatpush1.bf16.msra.mxu0 %v547
  %780 = vmatprep.subr.bf16.mxu0 0
  %781 = vmatpush1.bf16.msra.mxu0 %v548
  %782 = vmatprep.subr.bf16.mxu0 0
  %783 = vmatpush1.bf16.msra.mxu0 %v549
  %784 = vmatprep.subr.bf16.mxu0 0
  %785 = vmatpush1.bf16.msra.mxu0 %v550
  %786 = vmatprep.subr.bf16.mxu0 0
  %787 = vmatpush1.bf16.msra.mxu0 %v551
  %788 = vmatprep.subr.bf16.mxu0 0
  %789 = vmatpush1.bf16.msra.mxu0 %v552
  %790 = vmatprep.subr.bf16.mxu0 0
  %791 = vmatpush1.bf16.msra.mxu0 %v553
  %792 = vmatprep.subr.bf16.mxu0 0
  %793 = vmatpush1.bf16.msra.mxu0 %v554
  %794 = vmatprep.subr.bf16.mxu0 0
  %795 = vmatpush1.bf16.msra.mxu0 %v555
  %796 = vmatprep.subr.bf16.mxu0 0
  %797 = vmatpush1.bf16.msra.mxu0 %v556
  %798 = vmatprep.subr.bf16.mxu0 0
  %799 = vmatpush1.bf16.msra.mxu0 %v557
  %800 = vmatprep.subr.bf16.mxu0 0
  %801 = vmatpush1.bf16.msra.mxu0 %v558
  %802 = vmatprep.mubr.bf16.mxu0 %v214
  %803 = vmatmul.mubr.bf16.gmra.mrb[0].mxu0 %v213
  %v804 = vpop.f32.mrb[0].mxu0
  %v805 = vadd.f32 %v756, %v804
  %v806 = vpop.f32.mrb[0].mxu0
  %v807 = vpop.f32.mrb[0].mxu0
  %v808 = vadd.f32 %v759, %v807
  %v809 = vpop.f32.mrb[0].mxu0
  %810 = vmatprep.mubr.bf16.mxu0 %v222
  %811 = vmatmul.mubr.bf16.gmra.mrb[0].mxu0 %v221
  %v812 = vpop.f32.mrb[0].mxu0
  %v813 = vadd.f32 %v764, %v812
  %v814 = vpop.f32.mrb[0].mxu0
  %v815 = vpop.f32.mrb[0].mxu0
  %v816 = vadd.f32 %v767, %v815
  %v817 = vpop.f32.mrb[0].mxu0
  %818 = vdwg.mxu0
  %819 = vst [vmem:[%s2] sm:$0xff] %v805
  %820 = vst [vmem:[%s2 + $0x8] sm:$0xff] %v808
  %821 = vst [vmem:[%s2 + $0x10] sm:$0xff] %v813
  %822 = vst [vmem:[%s2 + $0x18] sm:$0xff] %v816
  %v823 = vadd.f32 %v805, %v808
  %v824 = vadd.f32 %v823, %v813
  %v825 = vadd.f32 %v824, %v816
  %826 = vst [vmem:[%s3] sm:$0xff] %v825
  %v827 = vmul.f32 %v805, %v805
  %v828 = vmul.f32 %v808, %v808
  %v829 = vmul.f32 %v813, %v813
  %v830 = vmul.f32 %v816, %v816
  %v831 = vadd.f32 %v827, %v828
  %v832 = vadd.f32 %v831, %v829
  %v833 = vadd.f32 %v832, %v830
  %834 = vst [vmem:[%s4] sm:$0xff] %v833
  // Predicated region
  $region10: #{generator_forward.9} parent=0 // pred_check
    _
  $region11: #{generator_forward.9} parent=0 // pred_check_branch
    %836 = sbr.rel (0) target = $region13
  $region12: #{generator_forward.9} parent=0 // pred_region
    _
  $region13: #{generator_forward.9} parent=0 // pred_fallthru
    _
  // Predicated region
  $region14: #{generator_forward.9} parent=0 // pred_check
    _
  $region15: #{generator_forward.9} parent=0 // pred_check_branch
    %838 = sbr.rel (0) target = $region17
  $region16: #{generator_forward.9} parent=0 // pred_region
    _
  $region17: #{generator_forward.9} parent=0 // pred_fallthru
    _
  // Predicated region
  $region18: #{generator_forward.9} parent=0 // pred_check
    _
  $region19: #{generator_forward.9} parent=0 // pred_check_branch
    %840 = sbr.rel (0) target = $region21
  $region20: #{generator_forward.9} parent=0 // pred_region
    _
  $region21: #{generator_forward.9} parent=0 // pred_fallthru
    _
  // Predicated region
  $region22: #{generator_forward.9} parent=0 // pred_check
    _
  $region23: #{generator_forward.9} parent=0 // pred_check_branch
    %842 = sbr.rel (0) target = $region25
  $region24: #{generator_forward.9} parent=0 // pred_region
    _
  $region25: #{generator_forward.9} parent=0 // pred_fallthru
    _
  // Predicated region
  $region26: #{generator_forward.9} parent=0 // pred_check
    _
  $region27: #{generator_forward.9} parent=0 // pred_check_branch
    %844 = sbr.rel (0) target = $region29
  $region28: #{generator_forward.9} parent=0 // pred_region
    _
  $region29: #{generator_forward.9} parent=0 // pred_fallthru
    _
  // Predicated region
  $region30: #{generator_forward.9} parent=0 // pred_check
    _
  $region31: #{generator_forward.9} parent=0 // pred_check_branch
    %846 = sbr.rel (0) target = $region33
  $region32: #{generator_forward.9} parent=0 // pred_region
    _
  $region33: #{generator_forward.9} parent=0 // pred_fallthru
    _

// kernel: generator_forward.12
$region0: #{generator_forward.12}
  #allocation0 [shape = 'u32[]', space=smem, size = 0x4, offset = 0x4, fixed_abs, tag = 'smem constant byte address 0x4 - core index']
  #allocation1 [shape = 'u32[144,128]{1,0:T(1,128)}', space=vmem, size = 0x12000, scoped, tag = 'internal scratch']
  %s0 = inlined_call_operand.vmem [shape: f32[128,128], index: 0, kind: input, shape index: {}]
  %s1 = inlined_call_operand.vmem [shape: f32[1,128], index: 1, kind: input, shape index: {}]
  %s2 = inlined_call_operand.vmem [shape: f32[1,128], index: 2, kind: input, shape index: {}]
  %s3 = inlined_call_operand.vmem [shape: bf16[128,128], index: 3, kind: output, shape index: {}]
  %s4 = sld [smem:[#allocation0]]
  $region22: #{generator_forward.12} parent=0
    _
  %s6 = ssub.s32 1, %s4
  %s7 = scalar_select 0, %s6, %s4
  // Predicated region
  $region2: #{generator_forward.12} parent=0 // pred_check
    _
  $region3: #{generator_forward.12} parent=0 // pred_check_branch
    %9 = sbr.rel (0) target = $region5
  $region4: #{generator_forward.12} parent=0 // pred_region
    _
  $region5: #{generator_forward.12} parent=0 // pred_fallthru
    _
  // Predicated region
  $region6: #{generator_forward.12} parent=0 // pred_check
    _
  $region7: #{generator_forward.12} parent=0 // pred_check_branch
    %11 = sbr.rel (0) target = $region9
  $region8: #{generator_forward.12} parent=0 // pred_region
    _
  $region9: #{generator_forward.12} parent=0 // pred_fallthru
    _
  // Predicated region
  $region10: #{generator_forward.12} parent=0 // pred_check
    _
  $region11: #{generator_forward.12} parent=0 // pred_check_branch
    %13 = sbr.rel (0) target = $region13
  $region12: #{generator_forward.12} parent=0 // pred_region
    _
  $region13: #{generator_forward.12} parent=0 // pred_fallthru
    _
  %v14 = vld [vmem:[%s0] sm:$0xff]
  %v15 = vld [vmem:[%s0 + $0x8] sm:$0xff]
  %v16 = vld [vmem:[%s0 + $0x10] sm:$0xff]
  %v17 = vld [vmem:[%s0 + $0x18] sm:$0xff]
  %v18 = vld [vmem:[%s0 + $0x20] sm:$0xff]
  %v19 = vld [vmem:[%s0 + $0x28] sm:$0xff]
  %v20 = vld [vmem:[%s0 + $0x30] sm:$0xff]
  %v21 = vld [vmem:[%s0 + $0x38] sm:$0xff]
  %v22 = vld [vmem:[%s0 + $0x40] sm:$0xff]
  %v23 = vld [vmem:[%s0 + $0x48] sm:$0xff]
  %v24 = vld [vmem:[%s0 + $0x50] sm:$0xff]
  %v25 = vld [vmem:[%s0 + $0x58] sm:$0xff]
  %v26 = vld [vmem:[%s0 + $0x60] sm:$0xff]
  %v27 = vld [vmem:[%s0 + $0x68] sm:$0xff]
  %v28 = vld [vmem:[%s0 + $0x70] sm:$0xff]
  %v29 = vld [vmem:[%s0 + $0x78] sm:$0xff]
  %v30 = vld [vmem:[%s1] sm:$0x1]
  %v32 = vlaneseq
  %v33 = vshrl.u32 %v32, 7
  %v34 = vsub.s32 0, %v33
  %v35 = vrot.slane %v30, %v34
  %v37 = vmul.f32 %v14, %v35
  %v38 = vmul.f32 %v15, %v35
  %v39 = vmul.f32 %v16, %v35
  %v40 = vmul.f32 %v17, %v35
  %v41 = vmul.f32 %v18, %v35
  %v42 = vmul.f32 %v19, %v35
  %v43 = vmul.f32 %v20, %v35
  %v44 = vmul.f32 %v21, %v35
  %v45 = vmul.f32 %v22, %v35
  %v46 = vmul.f32 %v23, %v35
  %v47 = vmul.f32 %v24, %v35
  %v48 = vmul.f32 %v25, %v35
  %v49 = vmul.f32 %v26, %v35
  %v50 = vmul.f32 %v27, %v35
  %v51 = vmul.f32 %v28, %v35
  %v52 = vmul.f32 %v29, %v35
  %v53 = vld [vmem:[%s2] sm:$0x1]
  %v55 = vlaneseq
  %v56 = vshrl.u32 %v55, 7
  %v57 = vsub.s32 0, %v56
  %v58 = vrot.slane %v53, %v57
  %v60 = vadd.f32 %v37, %v58
  %v61 = vadd.f32 %v38, %v58
  %v62 = vadd.f32 %v39, %v58
  %v63 = vadd.f32 %v40, %v58
  %v64 = vadd.f32 %v41, %v58
  %v65 = vadd.f32 %v42, %v58
  %v66 = vadd.f32 %v43, %v58
  %v67 = vadd.f32 %v44, %v58
  %v68 = vadd.f32 %v45, %v58
  %v69 = vadd.f32 %v46, %v58
  %v70 = vadd.f32 %v47, %v58
  %v71 = vadd.f32 %v48, %v58
  %v72 = vadd.f32 %v49, %v58
  %v73 = vadd.f32 %v50, %v58
  %v74 = vadd.f32 %v51, %v58
  %v75 = vadd.f32 %v52, %v58
  %v76 = vmax.f32 %v60, 0.0
  %v77 = vmax.f32 %v61, 0.0
  %v78 = vmax.f32 %v62, 0.0
  %v79 = vmax.f32 %v63, 0.0
  %v80 = vmax.f32 %v64, 0.0
  %v81 = vmax.f32 %v65, 0.0
  %v82 = vmax.f32 %v66, 0.0
  %v83 = vmax.f32 %v67, 0.0
  %v84 = vmax.f32 %v68, 0.0
  %v85 = vmax.f32 %v69, 0.0
  %v86 = vmax.f32 %v70, 0.0
  %v87 = vmax.f32 %v71, 0.0
  %v88 = vmax.f32 %v72, 0.0
  %v89 = vmax.f32 %v73, 0.0
  %v90 = vmax.f32 %v74, 0.0
  %v91 = vmax.f32 %v75, 0.0
  %v92 = vpack.c.bf16 %v77, %v76
  %v93 = vpack.c.bf16 %v79, %v78
  %v94 = vpack.c.bf16 %v81, %v80
  %v95 = vpack.c.bf16 %v83, %v82
  %v96 = vpack.c.bf16 %v85, %v84
  %v97 = vpack.c.bf16 %v87, %v86
  %v98 = vpack.c.bf16 %v89, %v88
  %v99 = vpack.c.bf16 %v91, %v90
  %v108 = vunpack.c.l.b16 %v92
  %v109 = vunpack.c.h.b16 %v92
  %v110 = vunpack.c.l.b16 %v93
  %v111 = vunpack.c.h.b16 %v93
  %v112 = vunpack.c.l.b16 %v94
  %v113 = vunpack.c.h.b16 %v94
  %v114 = vunpack.c.l.b16 %v95
  %v115 = vunpack.c.h.b16 %v95
  %v116 = vunpack.c.l.b16 %v96
  %v117 = vunpack.c.h.b16 %v96
  %v118 = vunpack.c.l.b16 %v97
  %v119 = vunpack.c.h.b16 %v97
  %v120 = vunpack.c.l.b16 %v98
  %v121 = vunpack.c.h.b16 %v98
  %v122 = vunpack.c.l.b16 %v99
  %v123 = vunpack.c.h.b16 %v99
  %v124 = vpack.c.b16 %v108, %v108
  %v125 = vpack.c.b16 %v109, %v109
  %v126 = vpack.c.b16 %v110, %v110
  %v127 = vpack.c.b16 %v111, %v111
  %v128 = vpack.c.b16 %v112, %v112
  %v129 = vpack.c.b16 %v113, %v113
  %v130 = vpack.c.b16 %v114, %v114
  %v131 = vpack.c.b16 %v115, %v115
  %v132 = vpack.c.b16 %v116, %v116
  %v133 = vpack.c.b16 %v117, %v117
  %v134 = vpack.c.b16 %v118, %v118
  %v135 = vpack.c.b16 %v119, %v119
  %v136 = vpack.c.b16 %v120, %v120
  %v137 = vpack.c.b16 %v121, %v121
  %v138 = vpack.c.b16 %v122, %v122
  %v139 = vpack.c.b16 %v123, %v123
  %156 = vst [vmem:[%s3] sm:$0xf] %v124
  %157 = vst [vmem:[%s3 + $0x4] sm:$0xf] %v125
  %158 = vst [vmem:[%s3 + $0x8] sm:$0xf] %v126
  %159 = vst [vmem:[%s3 + $0xc] sm:$0xf] %v127
  %160 = vst [vmem:[%s3 + $0x10] sm:$0xf] %v128
  %161 = vst [vmem:[%s3 + $0x14] sm:$0xf] %v129
  %162 = vst [vmem:[%s3 + $0x18] sm:$0xf] %v130
  %163 = vst [vmem:[%s3 + $0x1c] sm:$0xf] %v131
  %164 = vst [vmem:[%s3 + $0x20] sm:$0xf] %v132
  %165 = vst [vmem:[%s3 + $0x24] sm:$0xf] %v133
  %166 = vst [vmem:[%s3 + $0x28] sm:$0xf] %v134
  %167 = vst [vmem:[%s3 + $0x2c] sm:$0xf] %v135
  %168 = vst [vmem:[%s3 + $0x30] sm:$0xf] %v136
  %169 = vst [vmem:[%s3 + $0x34] sm:$0xf] %v137
  %170 = vst [vmem:[%s3 + $0x38] sm:$0xf] %v138
  %171 = vst [vmem:[%s3 + $0x3c] sm:$0xf] %v139
  // Predicated region
  $region14: #{generator_forward.12} parent=0 // pred_check
    _
  $region15: #{generator_forward.12} parent=0 // pred_check_branch
    %173 = sbr.rel (0) target = $region17
  $region16: #{generator_forward.12} parent=0 // pred_region
    _
  $region17: #{generator_forward.12} parent=0 // pred_fallthru
    _
  // Predicated region
  $region18: #{generator_forward.12} parent=0 // pred_check
    _
  $region19: #{generator_forward.12} parent=0 // pred_check_branch
    %175 = sbr.rel (0) target = $region21
  $region20: #{generator_forward.12} parent=0 // pred_region
    _
  $region21: #{generator_forward.12} parent=0 // pred_fallthru
    _

// kernel: generator_forward.11
$region0: #{generator_forward.11}
  #allocation0 [shape = 'u32[]', space=smem, size = 0x4, offset = 0x4, fixed_abs, tag = 'smem constant byte address 0x4 - core index']
  #allocation1 [shape = 'u32[144,128]{1,0:T(1,128)}', space=vmem, size = 0x12000, scoped, tag = 'internal scratch']
  %s0 = inlined_call_operand.vmem [shape: bf16[128,2048], index: 0, kind: input, shape index: {}]
  %s1 = inlined_call_operand.vmem [shape: bf16[2048,128], index: 1, kind: input, shape index: {}]
  %s2 = inlined_call_operand.vmem [shape: f32[128,128], index: 2, kind: output, shape index: {0}]
  %s3 = inlined_call_operand.vmem [shape: f32[8,128], index: 3, kind: output, shape index: {1}]
  %s4 = inlined_call_operand.vmem [shape: f32[8,128], index: 4, kind: output, shape index: {2}]
  %5 = xla_tuple %s2, %s3, %s4
  %s6 = sld [smem:[#allocation0]]
  $region34: #{generator_forward.11} parent=0
    _
  %s8 = ssub.s32 1, %s6
  %s9 = scalar_select 0, %s8, %s6
  // Predicated region
  $region2: #{generator_forward.11} parent=0 // pred_check
    _
  $region3: #{generator_forward.11} parent=0 // pred_check_branch
    %11 = sbr.rel (0) target = $region5
  $region4: #{generator_forward.11} parent=0 // pred_region
    _
  $region5: #{generator_forward.11} parent=0 // pred_fallthru
    _
  // Predicated region
  $region6: #{generator_forward.11} parent=0 // pred_check
    _
  $region7: #{generator_forward.11} parent=0 // pred_check_branch
    %13 = sbr.rel (0) target = $region9
  $region8: #{generator_forward.11} parent=0 // pred_region
    _
  $region9: #{generator_forward.11} parent=0 // pred_fallthru
    _
  %v15 = vld [vmem:[%s0] sm:$0xff]
  %v16 = vld [vmem:[%s0 + $0x8] sm:$0xff]
  %v17 = vld [vmem:[%s0 + $0x10] sm:$0xff]
  %v18 = vld [vmem:[%s0 + $0x18] sm:$0xff]
  %v19 = vld [vmem:[%s0 + $0x20] sm:$0xff]
  %v20 = vld [vmem:[%s0 + $0x28] sm:$0xff]
  %v21 = vld [vmem:[%s0 + $0x30] sm:$0xff]
  %v22 = vld [vmem:[%s0 + $0x38] sm:$0xff]
  %v23 = vld [vmem:[%s0 + $0x40] sm:$0xff]
  %v24 = vld [vmem:[%s0 + $0x48] sm:$0xff]
  %v25 = vld [vmem:[%s0 + $0x50] sm:$0xff]
  %v26 = vld [vmem:[%s0 + $0x58] sm:$0xff]
  %v27 = vld [vmem:[%s0 + $0x60] sm:$0xff]
  %v28 = vld [vmem:[%s0 + $0x68] sm:$0xff]
  %v29 = vld [vmem:[%s0 + $0x70] sm:$0xff]
  %v30 = vld [vmem:[%s0 + $0x78] sm:$0xff]
  %v31 = vld [vmem:[%s0 + $0x80] sm:$0xff]
  %v32 = vld [vmem:[%s0 + $0x88] sm:$0xff]
  %v33 = vld [vmem:[%s0 + $0x90] sm:$0xff]
  %v34 = vld [vmem:[%s0 + $0x98] sm:$0xff]
  %v35 = vld [vmem:[%s0 + $0xa0] sm:$0xff]
  %v36 = vld [vmem:[%s0 + $0xa8] sm:$0xff]
  %v37 = vld [vmem:[%s0 + $0xb0] sm:$0xff]
  %v38 = vld [vmem:[%s0 + $0xb8] sm:$0xff]
  %v39 = vld [vmem:[%s0 + $0xc0] sm:$0xff]
  %v40 = vld [vmem:[%s0 + $0xc8] sm:$0xff]
  %v41 = vld [vmem:[%s0 + $0xd0] sm:$0xff]
  %v42 = vld [vmem:[%s0 + $0xd8] sm:$0xff]
  %v43 = vld [vmem:[%s0 + $0xe0] sm:$0xff]
  %v44 = vld [vmem:[%s0 + $0xe8] sm:$0xff]
  %v45 = vld [vmem:[%s0 + $0xf0] sm:$0xff]
  %v46 = vld [vmem:[%s0 + $0xf8] sm:$0xff]
  %v47 = vld [vmem:[%s0 + $0x100] sm:$0xff]
  %v48 = vld [vmem:[%s0 + $0x108] sm:$0xff]
  %v49 = vld [vmem:[%s0 + $0x110] sm:$0xff]
  %v50 = vld [vmem:[%s0 + $0x118] sm:$0xff]
  %v51 = vld [vmem:[%s0 + $0x120] sm:$0xff]
  %v52 = vld [vmem:[%s0 + $0x128] sm:$0xff]
  %v53 = vld [vmem:[%s0 + $0x130] sm:$0xff]
  %v54 = vld [vmem:[%s0 + $0x138] sm:$0xff]
  %v55 = vld [vmem:[%s0 + $0x140] sm:$0xff]
  %v56 = vld [vmem:[%s0 + $0x148] sm:$0xff]
  %v57 = vld [vmem:[%s0 + $0x150] sm:$0xff]
  %v58 = vld [vmem:[%s0 + $0x158] sm:$0xff]
  %v59 = vld [vmem:[%s0 + $0x160] sm:$0xff]
  %v60 = vld [vmem:[%s0 + $0x168] sm:$0xff]
  %v61 = vld [vmem:[%s0 + $0x170] sm:$0xff]
  %v62 = vld [vmem:[%s0 + $0x178] sm:$0xff]
  %v63 = vld [vmem:[%s0 + $0x180] sm:$0xff]
  %v64 = vld [vmem:[%s0 + $0x188] sm:$0xff]
  %v65 = vld [vmem:[%s0 + $0x190] sm:$0xff]
  %v66 = vld [vmem:[%s0 + $0x198] sm:$0xff]
  %v67 = vld [vmem:[%s0 + $0x1a0] sm:$0xff]
  %v68 = vld [vmem:[%s0 + $0x1a8] sm:$0xff]
  %v69 = vld [vmem:[%s0 + $0x1b0] sm:$0xff]
  %v70 = vld [vmem:[%s0 + $0x1b8] sm:$0xff]
  %v71 = vld [vmem:[%s0 + $0x1c0] sm:$0xff]
  %v72 = vld [vmem:[%s0 + $0x1c8] sm:$0xff]
  %v73 = vld [vmem:[%s0 + $0x1d0] sm:$0xff]
  %v74 = vld [vmem:[%s0 + $0x1d8] sm:$0xff]
  %v75 = vld [vmem:[%s0 + $0x1e0] sm:$0xff]
  %v76 = vld [vmem:[%s0 + $0x1e8] sm:$0xff]
  %v77 = vld [vmem:[%s0 + $0x1f0] sm:$0xff]
  %v78 = vld [vmem:[%s0 + $0x1f8] sm:$0xff]
  %v79 = vld [vmem:[%s0 + $0x200] sm:$0xff]
  %v80 = vld [vmem:[%s0 + $0x208] sm:$0xff]
  %v81 = vld [vmem:[%s0 + $0x210] sm:$0xff]
  %v82 = vld [vmem:[%s0 + $0x218] sm:$0xff]
  %v83 = vld [vmem:[%s0 + $0x220] sm:$0xff]
  %v84 = vld [vmem:[%s0 + $0x228] sm:$0xff]
  %v85 = vld [vmem:[%s0 + $0x230] sm:$0xff]
  %v86 = vld [vmem:[%s0 + $0x238] sm:$0xff]
  %v87 = vld [vmem:[%s0 + $0x240] sm:$0xff]
  %v88 = vld [vmem:[%s0 + $0x248] sm:$0xff]
  %v89 = vld [vmem:[%s0 + $0x250] sm:$0xff]
  %v90 = vld [vmem:[%s0 + $0x258] sm:$0xff]
  %v91 = vld [vmem:[%s0 + $0x260] sm:$0xff]
  %v92 = vld [vmem:[%s0 + $0x268] sm:$0xff]
  %v93 = vld [vmem:[%s0 + $0x270] sm:$0xff]
  %v94 = vld [vmem:[%s0 + $0x278] sm:$0xff]
  %v95 = vld [vmem:[%s0 + $0x280] sm:$0xff]
  %v96 = vld [vmem:[%s0 + $0x288] sm:$0xff]
  %v97 = vld [vmem:[%s0 + $0x290] sm:$0xff]
  %v98 = vld [vmem:[%s0 + $0x298] sm:$0xff]
  %v99 = vld [vmem:[%s0 + $0x2a0] sm:$0xff]
  %v100 = vld [vmem:[%s0 + $0x2a8] sm:$0xff]
  %v101 = vld [vmem:[%s0 + $0x2b0] sm:$0xff]
  %v102 = vld [vmem:[%s0 + $0x2b8] sm:$0xff]
  %v103 = vld [vmem:[%s0 + $0x2c0] sm:$0xff]
  %v104 = vld [vmem:[%s0 + $0x2c8] sm:$0xff]
  %v105 = vld [vmem:[%s0 + $0x2d0] sm:$0xff]
  %v106 = vld [vmem:[%s0 + $0x2d8] sm:$0xff]
  %v107 = vld [vmem:[%s0 + $0x2e0] sm:$0xff]
  %v108 = vld [vmem:[%s0 + $0x2e8] sm:$0xff]
  %v109 = vld [vmem:[%s0 + $0x2f0] sm:$0xff]
  %v110 = vld [vmem:[%s0 + $0x2f8] sm:$0xff]
  %v111 = vld [vmem:[%s0 + $0x300] sm:$0xff]
  %v112 = vld [vmem:[%s0 + $0x308] sm:$0xff]
  %v113 = vld [vmem:[%s0 + $0x310] sm:$0xff]
  %v114 = vld [vmem:[%s0 + $0x318] sm:$0xff]
  %v115 = vld [vmem:[%s0 + $0x320] sm:$0xff]
  %v116 = vld [vmem:[%s0 + $0x328] sm:$0xff]
  %v117 = vld [vmem:[%s0 + $0x330] sm:$0xff]
  %v118 = vld [vmem:[%s0 + $0x338] sm:$0xff]
  %v119 = vld [vmem:[%s0 + $0x340] sm:$0xff]
  %v120 = vld [vmem:[%s0 + $0x348] sm:$0xff]
  %v121 = vld [vmem:[%s0 + $0x350] sm:$0xff]
  %v122 = vld [vmem:[%s0 + $0x358] sm:$0xff]
  %v123 = vld [vmem:[%s0 + $0x360] sm:$0xff]
  %v124 = vld [vmem:[%s0 + $0x368] sm:$0xff]
  %v125 = vld [vmem:[%s0 + $0x370] sm:$0xff]
  %v126 = vld [vmem:[%s0 + $0x378] sm:$0xff]
  %v127 = vld [vmem:[%s0 + $0x380] sm:$0xff]
  %v128 = vld [vmem:[%s0 + $0x388] sm:$0xff]
  %v129 = vld [vmem:[%s0 + $0x390] sm:$0xff]
  %v130 = vld [vmem:[%s0 + $0x398] sm:$0xff]
  %v131 = vld [vmem:[%s0 + $0x3a0] sm:$0xff]
  %v132 = vld [vmem:[%s0 + $0x3a8] sm:$0xff]
  %v133 = vld [vmem:[%s0 + $0x3b0] sm:$0xff]
  %v134 = vld [vmem:[%s0 + $0x3b8] sm:$0xff]
  %v135 = vld [vmem:[%s0 + $0x3c0] sm:$0xff]
  %v136 = vld [vmem:[%s0 + $0x3c8] sm:$0xff]
  %v137 = vld [vmem:[%s0 + $0x3d0] sm:$0xff]
  %v138 = vld [vmem:[%s0 + $0x3d8] sm:$0xff]
  %v139 = vld [vmem:[%s0 + $0x3e0] sm:$0xff]
  %v140 = vld [vmem:[%s0 + $0x3e8] sm:$0xff]
  %v141 = vld [vmem:[%s0 + $0x3f0] sm:$0xff]
  %v142 = vld [vmem:[%s0 + $0x3f8] sm:$0xff]
  %v143 = vld [vmem:[%s1] sm:$0xf]
  %v144 = vld [vmem:[%s1 + $0x4] sm:$0xf]
  %v145 = vld [vmem:[%s1 + $0x8] sm:$0xf]
  %v146 = vld [vmem:[%s1 + $0xc] sm:$0xf]
  %v147 = vld [vmem:[%s1 + $0x10] sm:$0xf]
  %v148 = vld [vmem:[%s1 + $0x14] sm:$0xf]
  %v149 = vld [vmem:[%s1 + $0x18] sm:$0xf]
  %v150 = vld [vmem:[%s1 + $0x1c] sm:$0xf]
  %v151 = vld [vmem:[%s1 + $0x20] sm:$0xf]
  %v152 = vld [vmem:[%s1 + $0x24] sm:$0xf]
  %v153 = vld [vmem:[%s1 + $0x28] sm:$0xf]
  %v154 = vld [vmem:[%s1 + $0x2c] sm:$0xf]
  %v155 = vld [vmem:[%s1 + $0x30] sm:$0xf]
  %v156 = vld [vmem:[%s1 + $0x34] sm:$0xf]
  %v157 = vld [vmem:[%s1 + $0x38] sm:$0xf]
  %v158 = vld [vmem:[%s1 + $0x3c] sm:$0xf]
  %v159 = vld [vmem:[%s1 + $0x40] sm:$0xf]
  %v160 = vld [vmem:[%s1 + $0x44] sm:$0xf]
  %v161 = vld [vmem:[%s1 + $0x48] sm:$0xf]
  %v162 = vld [vmem:[%s1 + $0x4c] sm:$0xf]
  %v163 = vld [vmem:[%s1 + $0x50] sm:$0xf]
  %v164 = vld [vmem:[%s1 + $0x54] sm:$0xf]
  %v165 = vld [vmem:[%s1 + $0x58] sm:$0xf]
  %v166 = vld [vmem:[%s1 + $0x5c] sm:$0xf]
  %v167 = vld [vmem:[%s1 + $0x60] sm:$0xf]
  %v168 = vld [vmem:[%s1 + $0x64] sm:$0xf]
  %v169 = vld [vmem:[%s1 + $0x68] sm:$0xf]
  %v170 = vld [vmem:[%s1 + $0x6c] sm:$0xf]
  %v171 = vld [vmem:[%s1 + $0x70] sm:$0xf]
  %v172 = vld [vmem:[%s1 + $0x74] sm:$0xf]
  %v173 = vld [vmem:[%s1 + $0x78] sm:$0xf]
  %v174 = vld [vmem:[%s1 + $0x7c] sm:$0xf]
  %v175 = vld [vmem:[%s1 + $0x80] sm:$0xf]
  %v176 = vld [vmem:[%s1 + $0x84] sm:$0xf]
  %v177 = vld [vmem:[%s1 + $0x88] sm:$0xf]
  %v178 = vld [vmem:[%s1 + $0x8c] sm:$0xf]
  %v179 = vld [vmem:[%s1 + $0x90] sm:$0xf]
  %v180 = vld [vmem:[%s1 + $0x94] sm:$0xf]
  %v181 = vld [vmem:[%s1 + $0x98] sm:$0xf]
  %v182 = vld [vmem:[%s1 + $0x9c] sm:$0xf]
  %v183 = vld [vmem:[%s1 + $0xa0] sm:$0xf]
  %v184 = vld [vmem:[%s1 + $0xa4] sm:$0xf]
  %v185 = vld [vmem:[%s1 + $0xa8] sm:$0xf]
  %v186 = vld [vmem:[%s1 + $0xac] sm:$0xf]
  %v187 = vld [vmem:[%s1 + $0xb0] sm:$0xf]
  %v188 = vld [vmem:[%s1 + $0xb4] sm:$0xf]
  %v189 = vld [vmem:[%s1 + $0xb8] sm:$0xf]
  %v190 = vld [vmem:[%s1 + $0xbc] sm:$0xf]
  %v191 = vld [vmem:[%s1 + $0xc0] sm:$0xf]
  %v192 = vld [vmem:[%s1 + $0xc4] sm:$0xf]
  %v193 = vld [vmem:[%s1 + $0xc8] sm:$0xf]
  %v194 = vld [vmem:[%s1 + $0xcc] sm:$0xf]
  %v195 = vld [vmem:[%s1 + $0xd0] sm:$0xf]
  %v196 = vld [vmem:[%s1 + $0xd4] sm:$0xf]
  %v197 = vld [vmem:[%s1 + $0xd8] sm:$0xf]
  %v198 = vld [vmem:[%s1 + $0xdc] sm:$0xf]
  %v199 = vld [vmem:[%s1 + $0xe0] sm:$0xf]
  %v200 = vld [vmem:[%s1 + $0xe4] sm:$0xf]
  %v201 = vld [vmem:[%s1 + $0xe8] sm:$0xf]
  %v202 = vld [vmem:[%s1 + $0xec] sm:$0xf]
  %v203 = vld [vmem:[%s1 + $0xf0] sm:$0xf]
  %v204 = vld [vmem:[%s1 + $0xf4] sm:$0xf]
  %v205 = vld [vmem:[%s1 + $0xf8] sm:$0xf]
  %v206 = vld [vmem:[%s1 + $0xfc] sm:$0xf]
  %v207 = vld [vmem:[%s1 + $0x100] sm:$0xf]
  %v208 = vld [vmem:[%s1 + $0x104] sm:$0xf]
  %v209 = vld [vmem:[%s1 + $0x108] sm:$0xf]
  %v210 = vld [vmem:[%s1 + $0x10c] sm:$0xf]
  %v211 = vld [vmem:[%s1 + $0x110] sm:$0xf]
  %v212 = vld [vmem:[%s1 + $0x114] sm:$0xf]
  %v213 = vld [vmem:[%s1 + $0x118] sm:$0xf]
  %v214 = vld [vmem:[%s1 + $0x11c] sm:$0xf]
  %v215 = vld [vmem:[%s1 + $0x120] sm:$0xf]
  %v216 = vld [vmem:[%s1 + $0x124] sm:$0xf]
  %v217 = vld [vmem:[%s1 + $0x128] sm:$0xf]
  %v218 = vld [vmem:[%s1 + $0x12c] sm:$0xf]
  %v219 = vld [vmem:[%s1 + $0x130] sm:$0xf]
  %v220 = vld [vmem:[%s1 + $0x134] sm:$0xf]
  %v221 = vld [vmem:[%s1 + $0x138] sm:$0xf]
  %v222 = vld [vmem:[%s1 + $0x13c] sm:$0xf]
  %v223 = vld [vmem:[%s1 + $0x140] sm:$0xf]
  %v224 = vld [vmem:[%s1 + $0x144] sm:$0xf]
  %v225 = vld [vmem:[%s1 + $0x148] sm:$0xf]
  %v226 = vld [vmem:[%s1 + $0x14c] sm:$0xf]
  %v227 = vld [vmem:[%s1 + $0x150] sm:$0xf]
  %v228 = vld [vmem:[%s1 + $0x154] sm:$0xf]
  %v229 = vld [vmem:[%s1 + $0x158] sm:$0xf]
  %v230 = vld [vmem:[%s1 + $0x15c] sm:$0xf]
  %v231 = vld [vmem:[%s1 + $0x160] sm:$0xf]
  %v232 = vld [vmem:[%s1 + $0x164] sm:$0xf]
  %v233 = vld [vmem:[%s1 + $0x168] sm:$0xf]
  %v234 = vld [vmem:[%s1 + $0x16c] sm:$0xf]
  %v235 = vld [vmem:[%s1 + $0x170] sm:$0xf]
  %v236 = vld [vmem:[%s1 + $0x174] sm:$0xf]
  %v237 = vld [vmem:[%s1 + $0x178] sm:$0xf]
  %v238 = vld [vmem:[%s1 + $0x17c] sm:$0xf]
  %v239 = vld [vmem:[%s1 + $0x180] sm:$0xf]
  %v240 = vld [vmem:[%s1 + $0x184] sm:$0xf]
  %v241 = vld [vmem:[%s1 + $0x188] sm:$0xf]
  %v242 = vld [vmem:[%s1 + $0x18c] sm:$0xf]
  %v243 = vld [vmem:[%s1 + $0x190] sm:$0xf]
  %v244 = vld [vmem:[%s1 + $0x194] sm:$0xf]
  %v245 = vld [vmem:[%s1 + $0x198] sm:$0xf]
  %v246 = vld [vmem:[%s1 + $0x19c] sm:$0xf]
  %v247 = vld [vmem:[%s1 + $0x1a0] sm:$0xf]
  %v248 = vld [vmem:[%s1 + $0x1a4] sm:$0xf]
  %v249 = vld [vmem:[%s1 + $0x1a8] sm:$0xf]
  %v250 = vld [vmem:[%s1 + $0x1ac] sm:$0xf]
  %v251 = vld [vmem:[%s1 + $0x1b0] sm:$0xf]
  %v252 = vld [vmem:[%s1 + $0x1b4] sm:$0xf]
  %v253 = vld [vmem:[%s1 + $0x1b8] sm:$0xf]
  %v254 = vld [vmem:[%s1 + $0x1bc] sm:$0xf]
  %v255 = vld [vmem:[%s1 + $0x1c0] sm:$0xf]
  %v256 = vld [vmem:[%s1 + $0x1c4] sm:$0xf]
  %v257 = vld [vmem:[%s1 + $0x1c8] sm:$0xf]
  %v258 = vld [vmem:[%s1 + $0x1cc] sm:$0xf]
  %v259 = vld [vmem:[%s1 + $0x1d0] sm:$0xf]
  %v260 = vld [vmem:[%s1 + $0x1d4] sm:$0xf]
  %v261 = vld [vmem:[%s1 + $0x1d8] sm:$0xf]
  %v262 = vld [vmem:[%s1 + $0x1dc] sm:$0xf]
  %v263 = vld [vmem:[%s1 + $0x1e0] sm:$0xf]
  %v264 = vld [vmem:[%s1 + $0x1e4] sm:$0xf]
  %v265 = vld [vmem:[%s1 + $0x1e8] sm:$0xf]
  %v266 = vld [vmem:[%s1 + $0x1ec] sm:$0xf]
  %v267 = vld [vmem:[%s1 + $0x1f0] sm:$0xf]
  %v268 = vld [vmem:[%s1 + $0x1f4] sm:$0xf]
  %v269 = vld [vmem:[%s1 + $0x1f8] sm:$0xf]
  %v270 = vld [vmem:[%s1 + $0x1fc] sm:$0xf]
  %v271 = vld [vmem:[%s1 + $0x200] sm:$0xf]
  %v272 = vld [vmem:[%s1 + $0x204] sm:$0xf]
  %v273 = vld [vmem:[%s1 + $0x208] sm:$0xf]
  %v274 = vld [vmem:[%s1 + $0x20c] sm:$0xf]
  %v275 = vld [vmem:[%s1 + $0x210] sm:$0xf]
  %v276 = vld [vmem:[%s1 + $0x214] sm:$0xf]
  %v277 = vld [vmem:[%s1 + $0x218] sm:$0xf]
  %v278 = vld [vmem:[%s1 + $0x21c] sm:$0xf]
  %v279 = vld [vmem:[%s1 + $0x220] sm:$0xf]
  %v280 = vld [vmem:[%s1 + $0x224] sm:$0xf]
  %v281 = vld [vmem:[%s1 + $0x228] sm:$0xf]
  %v282 = vld [vmem:[%s1 + $0x22c] sm:$0xf]
  %v283 = vld [vmem:[%s1 + $0x230] sm:$0xf]
  %v284 = vld [vmem:[%s1 + $0x234] sm:$0xf]
  %v285 = vld [vmem:[%s1 + $0x238] sm:$0xf]
  %v286 = vld [vmem:[%s1 + $0x23c] sm:$0xf]
  %v287 = vld [vmem:[%s1 + $0x240] sm:$0xf]
  %v288 = vld [vmem:[%s1 + $0x244] sm:$0xf]
  %v289 = vld [vmem:[%s1 + $0x248] sm:$0xf]
  %v290 = vld [vmem:[%s1 + $0x24c] sm:$0xf]
  %v291 = vld [vmem:[%s1 + $0x250] sm:$0xf]
  %v292 = vld [vmem:[%s1 + $0x254] sm:$0xf]
  %v293 = vld [vmem:[%s1 + $0x258] sm:$0xf]
  %v294 = vld [vmem:[%s1 + $0x25c] sm:$0xf]
  %v295 = vld [vmem:[%s1 + $0x260] sm:$0xf]
  %v296 = vld [vmem:[%s1 + $0x264] sm:$0xf]
  %v297 = vld [vmem:[%s1 + $0x268] sm:$0xf]
  %v298 = vld [vmem:[%s1 + $0x26c] sm:$0xf]
  %v299 = vld [vmem:[%s1 + $0x270] sm:$0xf]
  %v300 = vld [vmem:[%s1 + $0x274] sm:$0xf]
  %v301 = vld [vmem:[%s1 + $0x278] sm:$0xf]
  %v302 = vld [vmem:[%s1 + $0x27c] sm:$0xf]
  %v303 = vld [vmem:[%s1 + $0x280] sm:$0xf]
  %v304 = vld [vmem:[%s1 + $0x284] sm:$0xf]
  %v305 = vld [vmem:[%s1 + $0x288] sm:$0xf]
  %v306 = vld [vmem:[%s1 + $0x28c] sm:$0xf]
  %v307 = vld [vmem:[%s1 + $0x290] sm:$0xf]
  %v308 = vld [vmem:[%s1 + $0x294] sm:$0xf]
  %v309 = vld [vmem:[%s1 + $0x298] sm:$0xf]
  %v310 = vld [vmem:[%s1 + $0x29c] sm:$0xf]
  %v311 = vld [vmem:[%s1 + $0x2a0] sm:$0xf]
  %v312 = vld [vmem:[%s1 + $0x2a4] sm:$0xf]
  %v313 = vld [vmem:[%s1 + $0x2a8] sm:$0xf]
  %v314 = vld [vmem:[%s1 + $0x2ac] sm:$0xf]
  %v315 = vld [vmem:[%s1 + $0x2b0] sm:$0xf]
  %v316 = vld [vmem:[%s1 + $0x2b4] sm:$0xf]
  %v317 = vld [vmem:[%s1 + $0x2b8] sm:$0xf]
  %v318 = vld [vmem:[%s1 + $0x2bc] sm:$0xf]
  %v319 = vld [vmem:[%s1 + $0x2c0] sm:$0xf]
  %v320 = vld [vmem:[%s1 + $0x2c4] sm:$0xf]
  %v321 = vld [vmem:[%s1 + $0x2c8] sm:$0xf]
  %v322 = vld [vmem:[%s1 + $0x2cc] sm:$0xf]
  %v323 = vld [vmem:[%s1 + $0x2d0] sm:$0xf]
  %v324 = vld [vmem:[%s1 + $0x2d4] sm:$0xf]
  %v325 = vld [vmem:[%s1 + $0x2d8] sm:$0xf]
  %v326 = vld [vmem:[%s1 + $0x2dc] sm:$0xf]
  %v327 = vld [vmem:[%s1 + $0x2e0] sm:$0xf]
  %v328 = vld [vmem:[%s1 + $0x2e4] sm:$0xf]
  %v329 = vld [vmem:[%s1 + $0x2e8] sm:$0xf]
  %v330 = vld [vmem:[%s1 + $0x2ec] sm:$0xf]
  %v331 = vld [vmem:[%s1 + $0x2f0] sm:$0xf]
  %v332 = vld [vmem:[%s1 + $0x2f4] sm:$0xf]
  %v333 = vld [vmem:[%s1 + $0x2f8] sm:$0xf]
  %v334 = vld [vmem:[%s1 + $0x2fc] sm:$0xf]
  %v335 = vld [vmem:[%s1 + $0x300] sm:$0xf]
  %v336 = vld [vmem:[%s1 + $0x304] sm:$0xf]
  %v337 = vld [vmem:[%s1 + $0x308] sm:$0xf]
  %v338 = vld [vmem:[%s1 + $0x30c] sm:$0xf]
  %v339 = vld [vmem:[%s1 + $0x310] sm:$0xf]
  %v340 = vld [vmem:[%s1 + $0x314] sm:$0xf]
  %v341 = vld [vmem:[%s1 + $0x318] sm:$0xf]
  %v342 = vld [vmem:[%s1 + $0x31c] sm:$0xf]
  %v343 = vld [vmem:[%s1 + $0x320] sm:$0xf]
  %v344 = vld [vmem:[%s1 + $0x324] sm:$0xf]
  %v345 = vld [vmem:[%s1 + $0x328] sm:$0xf]
  %v346 = vld [vmem:[%s1 + $0x32c] sm:$0xf]
  %v347 = vld [vmem:[%s1 + $0x330] sm:$0xf]
  %v348 = vld [vmem:[%s1 + $0x334] sm:$0xf]
  %v349 = vld [vmem:[%s1 + $0x338] sm:$0xf]
  %v350 = vld [vmem:[%s1 + $0x33c] sm:$0xf]
  %v351 = vld [vmem:[%s1 + $0x340] sm:$0xf]
  %v352 = vld [vmem:[%s1 + $0x344] sm:$0xf]
  %v353 = vld [vmem:[%s1 + $0x348] sm:$0xf]
  %v354 = vld [vmem:[%s1 + $0x34c] sm:$0xf]
  %v355 = vld [vmem:[%s1 + $0x350] sm:$0xf]
  %v356 = vld [vmem:[%s1 + $0x354] sm:$0xf]
  %v357 = vld [vmem:[%s1 + $0x358] sm:$0xf]
  %v358 = vld [vmem:[%s1 + $0x35c] sm:$0xf]
  %v359 = vld [vmem:[%s1 + $0x360] sm:$0xf]
  %v360 = vld [vmem:[%s1 + $0x364] sm:$0xf]
  %v361 = vld [vmem:[%s1 + $0x368] sm:$0xf]
  %v362 = vld [vmem:[%s1 + $0x36c] sm:$0xf]
  %v363 = vld [vmem:[%s1 + $0x370] sm:$0xf]
  %v364 = vld [vmem:[%s1 + $0x374] sm:$0xf]
  %v365 = vld [vmem:[%s1 + $0x378] sm:$0xf]
  %v366 = vld [vmem:[%s1 + $0x37c] sm:$0xf]
  %v367 = vld [vmem:[%s1 + $0x380] sm:$0xf]
  %v368 = vld [vmem:[%s1 + $0x384] sm:$0xf]
  %v369 = vld [vmem:[%s1 + $0x388] sm:$0xf]
  %v370 = vld [vmem:[%s1 + $0x38c] sm:$0xf]
  %v371 = vld [vmem:[%s1 + $0x390] sm:$0xf]
  %v372 = vld [vmem:[%s1 + $0x394] sm:$0xf]
  %v373 = vld [vmem:[%s1 + $0x398] sm:$0xf]
  %v374 = vld [vmem:[%s1 + $0x39c] sm:$0xf]
  %v375 = vld [vmem:[%s1 + $0x3a0] sm:$0xf]
  %v376 = vld [vmem:[%s1 + $0x3a4] sm:$0xf]
  %v377 = vld [vmem:[%s1 + $0x3a8] sm:$0xf]
  %v378 = vld [vmem:[%s1 + $0x3ac] sm:$0xf]
  %v379 = vld [vmem:[%s1 + $0x3b0] sm:$0xf]
  %v380 = vld [vmem:[%s1 + $0x3b4] sm:$0xf]
  %v381 = vld [vmem:[%s1 + $0x3b8] sm:$0xf]
  %v382 = vld [vmem:[%s1 + $0x3bc] sm:$0xf]
  %v383 = vld [vmem:[%s1 + $0x3c0] sm:$0xf]
  %v384 = vld [vmem:[%s1 + $0x3c4] sm:$0xf]
  %v385 = vld [vmem:[%s1 + $0x3c8] sm:$0xf]
  %v386 = vld [vmem:[%s1 + $0x3cc] sm:$0xf]
  %v387 = vld [vmem:[%s1 + $0x3d0] sm:$0xf]
  %v388 = vld [vmem:[%s1 + $0x3d4] sm:$0xf]
  %v389 = vld [vmem:[%s1 + $0x3d8] sm:$0xf]
  %v390 = vld [vmem:[%s1 + $0x3dc] sm:$0xf]
  %v391 = vld [vmem:[%s1 + $0x3e0] sm:$0xf]
  %v392 = vld [vmem:[%s1 + $0x3e4] sm:$0xf]
  %v393 = vld [vmem:[%s1 + $0x3e8] sm:$0xf]
  %v394 = vld [vmem:[%s1 + $0x3ec] sm:$0xf]
  %v395 = vld [vmem:[%s1 + $0x3f0] sm:$0xf]
  %v396 = vld [vmem:[%s1 + $0x3f4] sm:$0xf]
  %v397 = vld [vmem:[%s1 + $0x3f8] sm:$0xf]
  %v398 = vld [vmem:[%s1 + $0x3fc] sm:$0xf]
  %v527 = vunpack.c.l.b16 %v15
  %v528 = vunpack.c.h.b16 %v15
  %v529 = vunpack.c.l.b16 %v16
  %v530 = vunpack.c.h.b16 %v16
  %v531 = vunpack.c.l.b16 %v17
  %v532 = vunpack.c.h.b16 %v17
  %v533 = vunpack.c.l.b16 %v18
  %v534 = vunpack.c.h.b16 %v18
  %v535 = vunpack.c.l.b16 %v19
  %v536 = vunpack.c.h.b16 %v19
  %v537 = vunpack.c.l.b16 %v20
  %v538 = vunpack.c.h.b16 %v20
  %v539 = vunpack.c.l.b16 %v21
  %v540 = vunpack.c.h.b16 %v21
  %v541 = vunpack.c.l.b16 %v22
  %v542 = vunpack.c.h.b16 %v22
  %v543 = vunpack.c.l.b16 %v23
  %v544 = vunpack.c.h.b16 %v23
  %v545 = vunpack.c.l.b16 %v24
  %v546 = vunpack.c.h.b16 %v24
  %v547 = vunpack.c.l.b16 %v25
  %v548 = vunpack.c.h.b16 %v25
  %v549 = vunpack.c.l.b16 %v26
  %v550 = vunpack.c.h.b16 %v26
  %v551 = vunpack.c.l.b16 %v27
  %v552 = vunpack.c.h.b16 %v27
  %v553 = vunpack.c.l.b16 %v28
  %v554 = vunpack.c.h.b16 %v28
  %v555 = vunpack.c.l.b16 %v29
  %v556 = vunpack.c.h.b16 %v29
  %v557 = vunpack.c.l.b16 %v30
  %v558 = vunpack.c.h.b16 %v30
  %v559 = vunpack.c.l.b16 %v31
  %v560 = vunpack.c.h.b16 %v31
  %v561 = vunpack.c.l.b16 %v32
  %v562 = vunpack.c.h.b16 %v32
  %v563 = vunpack.c.l.b16 %v33
  %v564 = vunpack.c.h.b16 %v33
  %v565 = vunpack.c.l.b16 %v34
  %v566 = vunpack.c.h.b16 %v34
  %v567 = vunpack.c.l.b16 %v35
  %v568 = vunpack.c.h.b16 %v35
  %v569 = vunpack.c.l.b16 %v36
  %v570 = vunpack.c.h.b16 %v36
  %v571 = vunpack.c.l.b16 %v37
  %v572 = vunpack.c.h.b16 %v37
  %v573 = vunpack.c.l.b16 %v38
  %v574 = vunpack.c.h.b16 %v38
  %v575 = vunpack.c.l.b16 %v39
  %v576 = vunpack.c.h.b16 %v39
  %v577 = vunpack.c.l.b16 %v40
  %v578 = vunpack.c.h.b16 %v40
  %v579 = vunpack.c.l.b16 %v41
  %v580 = vunpack.c.h.b16 %v41
  %v581 = vunpack.c.l.b16 %v42
  %v582 = vunpack.c.h.b16 %v42
  %v583 = vunpack.c.l.b16 %v43
  %v584 = vunpack.c.h.b16 %v43
  %v585 = vunpack.c.l.b16 %v44
  %v586 = vunpack.c.h.b16 %v44
  %v587 = vunpack.c.l.b16 %v45
  %v588 = vunpack.c.h.b16 %v45
  %v589 = vunpack.c.l.b16 %v46
  %v590 = vunpack.c.h.b16 %v46
  %v591 = vunpack.c.l.b16 %v47
  %v592 = vunpack.c.h.b16 %v47
  %v593 = vunpack.c.l.b16 %v48
  %v594 = vunpack.c.h.b16 %v48
  %v595 = vunpack.c.l.b16 %v49
  %v596 = vunpack.c.h.b16 %v49
  %v597 = vunpack.c.l.b16 %v50
  %v598 = vunpack.c.h.b16 %v50
  %v599 = vunpack.c.l.b16 %v51
  %v600 = vunpack.c.h.b16 %v51
  %v601 = vunpack.c.l.b16 %v52
  %v602 = vunpack.c.h.b16 %v52
  %v603 = vunpack.c.l.b16 %v53
  %v604 = vunpack.c.h.b16 %v53
  %v605 = vunpack.c.l.b16 %v54
  %v606 = vunpack.c.h.b16 %v54
  %v607 = vunpack.c.l.b16 %v55
  %v608 = vunpack.c.h.b16 %v55
  %v609 = vunpack.c.l.b16 %v56
  %v610 = vunpack.c.h.b16 %v56
  %v611 = vunpack.c.l.b16 %v57
  %v612 = vunpack.c.h.b16 %v57
  %v613 = vunpack.c.l.b16 %v58
  %v614 = vunpack.c.h.b16 %v58
  %v615 = vunpack.c.l.b16 %v59
  %v616 = vunpack.c.h.b16 %v59
  %v617 = vunpack.c.l.b16 %v60
  %v618 = vunpack.c.h.b16 %v60
  %v619 = vunpack.c.l.b16 %v61
  %v620 = vunpack.c.h.b16 %v61
  %v621 = vunpack.c.l.b16 %v62
  %v622 = vunpack.c.h.b16 %v62
  %v623 = vunpack.c.l.b16 %v63
  %v624 = vunpack.c.h.b16 %v63
  %v625 = vunpack.c.l.b16 %v64
  %v626 = vunpack.c.h.b16 %v64
  %v627 = vunpack.c.l.b16 %v65
  %v628 = vunpack.c.h.b16 %v65
  %v629 = vunpack.c.l.b16 %v66
  %v630 = vunpack.c.h.b16 %v66
  %v631 = vunpack.c.l.b16 %v67
  %v632 = vunpack.c.h.b16 %v67
  %v633 = vunpack.c.l.b16 %v68
  %v634 = vunpack.c.h.b16 %v68
  %v635 = vunpack.c.l.b16 %v69
  %v636 = vunpack.c.h.b16 %v69
  %v637 = vunpack.c.l.b16 %v70
  %v638 = vunpack.c.h.b16 %v70
  %v639 = vunpack.c.l.b16 %v71
  %v640 = vunpack.c.h.b16 %v71
  %v641 = vunpack.c.l.b16 %v72
  %v642 = vunpack.c.h.b16 %v72
  %v643 = vunpack.c.l.b16 %v73
  %v644 = vunpack.c.h.b16 %v73
  %v645 = vunpack.c.l.b16 %v74
  %v646 = vunpack.c.h.b16 %v74
  %v647 = vunpack.c.l.b16 %v75
  %v648 = vunpack.c.h.b16 %v75
  %v649 = vunpack.c.l.b16 %v76
  %v650 = vunpack.c.h.b16 %v76
  %v651 = vunpack.c.l.b16 %v77
  %v652 = vunpack.c.h.b16 %v77
  %v653 = vunpack.c.l.b16 %v78
  %v654 = vunpack.c.h.b16 %v78
  %v655 = vunpack.c.l.b16 %v79
  %v656 = vunpack.c.h.b16 %v79
  %v657 = vunpack.c.l.b16 %v80
  %v658 = vunpack.c.h.b16 %v80
  %v659 = vunpack.c.l.b16 %v81
  %v660 = vunpack.c.h.b16 %v81
  %v661 = vunpack.c.l.b16 %v82
  %v662 = vunpack.c.h.b16 %v82
  %v663 = vunpack.c.l.b16 %v83
  %v664 = vunpack.c.h.b16 %v83
  %v665 = vunpack.c.l.b16 %v84
  %v666 = vunpack.c.h.b16 %v84
  %v667 = vunpack.c.l.b16 %v85
  %v668 = vunpack.c.h.b16 %v85
  %v669 = vunpack.c.l.b16 %v86
  %v670 = vunpack.c.h.b16 %v86
  %v671 = vunpack.c.l.b16 %v87
  %v672 = vunpack.c.h.b16 %v87
  %v673 = vunpack.c.l.b16 %v88
  %v674 = vunpack.c.h.b16 %v88
  %v675 = vunpack.c.l.b16 %v89
  %v676 = vunpack.c.h.b16 %v89
  %v677 = vunpack.c.l.b16 %v90
  %v678 = vunpack.c.h.b16 %v90
  %v679 = vunpack.c.l.b16 %v91
  %v680 = vunpack.c.h.b16 %v91
  %v681 = vunpack.c.l.b16 %v92
  %v682 = vunpack.c.h.b16 %v92
  %v683 = vunpack.c.l.b16 %v93
  %v684 = vunpack.c.h.b16 %v93
  %v685 = vunpack.c.l.b16 %v94
  %v686 = vunpack.c.h.b16 %v94
  %v687 = vunpack.c.l.b16 %v95
  %v688 = vunpack.c.h.b16 %v95
  %v689 = vunpack.c.l.b16 %v96
  %v690 = vunpack.c.h.b16 %v96
  %v691 = vunpack.c.l.b16 %v97
  %v692 = vunpack.c.h.b16 %v97
  %v693 = vunpack.c.l.b16 %v98
  %v694 = vunpack.c.h.b16 %v98
  %v695 = vunpack.c.l.b16 %v99
  %v696 = vunpack.c.h.b16 %v99
  %v697 = vunpack.c.l.b16 %v100
  %v698 = vunpack.c.h.b16 %v100
  %v699 = vunpack.c.l.b16 %v101
  %v700 = vunpack.c.h.b16 %v101
  %v701 = vunpack.c.l.b16 %v102
  %v702 = vunpack.c.h.b16 %v102
  %v703 = vunpack.c.l.b16 %v103
  %v704 = vunpack.c.h.b16 %v103
  %v705 = vunpack.c.l.b16 %v104
  %v706 = vunpack.c.h.b16 %v104
  %v707 = vunpack.c.l.b16 %v105
  %v708 = vunpack.c.h.b16 %v105
  %v709 = vunpack.c.l.b16 %v106
  %v710 = vunpack.c.h.b16 %v106
  %v711 = vunpack.c.l.b16 %v107
  %v712 = vunpack.c.h.b16 %v107
  %v713 = vunpack.c.l.b16 %v108
  %v714 = vunpack.c.h.b16 %v108
  %v715 = vunpack.c.l.b16 %v109
  %v716 = vunpack.c.h.b16 %v109
  %v717 = vunpack.c.l.b16 %v110
  %v718 = vunpack.c.h.b16 %v110
  %v719 = vunpack.c.l.b16 %v111
  %v720 = vunpack.c.h.b16 %v111
  %v721 = vunpack.c.l.b16 %v112
  %v722 = vunpack.c.h.b16 %v112
  %v723 = vunpack.c.l.b16 %v113
  %v724 = vunpack.c.h.b16 %v113
  %v725 = vunpack.c.l.b16 %v114
  %v726 = vunpack.c.h.b16 %v114
  %v727 = vunpack.c.l.b16 %v115
  %v728 = vunpack.c.h.b16 %v115
  %v729 = vunpack.c.l.b16 %v116
  %v730 = vunpack.c.h.b16 %v116
  %v731 = vunpack.c.l.b16 %v117
  %v732 = vunpack.c.h.b16 %v117
  %v733 = vunpack.c.l.b16 %v118
  %v734 = vunpack.c.h.b16 %v118
  %v735 = vunpack.c.l.b16 %v119
  %v736 = vunpack.c.h.b16 %v119
  %v737 = vunpack.c.l.b16 %v120
  %v738 = vunpack.c.h.b16 %v120
  %v739 = vunpack.c.l.b16 %v121
  %v740 = vunpack.c.h.b16 %v121
  %v741 = vunpack.c.l.b16 %v122
  %v742 = vunpack.c.h.b16 %v122
  %v743 = vunpack.c.l.b16 %v123
  %v744 = vunpack.c.h.b16 %v123
  %v745 = vunpack.c.l.b16 %v124
  %v746 = vunpack.c.h.b16 %v124
  %v747 = vunpack.c.l.b16 %v125
  %v748 = vunpack.c.h.b16 %v125
  %v749 = vunpack.c.l.b16 %v126
  %v750 = vunpack.c.h.b16 %v126
  %v751 = vunpack.c.l.b16 %v127
  %v752 = vunpack.c.h.b16 %v127
  %v753 = vunpack.c.l.b16 %v128
  %v754 = vunpack.c.h.b16 %v128
  %v755 = vunpack.c.l.b16 %v129
  %v756 = vunpack.c.h.b16 %v129
  %v757 = vunpack.c.l.b16 %v130
  %v758 = vunpack.c.h.b16 %v130
  %v759 = vunpack.c.l.b16 %v131
  %v760 = vunpack.c.h.b16 %v131
  %v761 = vunpack.c.l.b16 %v132
  %v762 = vunpack.c.h.b16 %v132
  %v763 = vunpack.c.l.b16 %v133
  %v764 = vunpack.c.h.b16 %v133
  %v765 = vunpack.c.l.b16 %v134
  %v766 = vunpack.c.h.b16 %v134
  %v767 = vunpack.c.l.b16 %v135
  %v768 = vunpack.c.h.b16 %v135
  %v769 = vunpack.c.l.b16 %v136
  %v770 = vunpack.c.h.b16 %v136
  %v771 = vunpack.c.l.b16 %v137
  %v772 = vunpack.c.h.b16 %v137
  %v773 = vunpack.c.l.b16 %v138
  %v774 = vunpack.c.h.b16 %v138
  %v775 = vunpack.c.l.b16 %v139
  %v776 = vunpack.c.h.b16 %v139
  %v777 = vunpack.c.l.b16 %v140
  %v778 = vunpack.c.h.b16 %v140
  %v779 = vunpack.c.l.b16 %v141
  %v780 = vunpack.c.h.b16 %v141
  %v781 = vunpack.c.l.b16 %v142
  %v782 = vunpack.c.h.b16 %v142
  %v783 = vpack.c.b16 %v543, %v527
  %v784 = vpack.c.b16 %v544, %v528
  %v785 = vpack.c.b16 %v545, %v529
  %v786 = vpack.c.b16 %v546, %v530
  %v787 = vpack.c.b16 %v547, %v531
  %v788 = vpack.c.b16 %v548, %v532
  %v789 = vpack.c.b16 %v549, %v533
  %v790 = vpack.c.b16 %v550, %v534
  %v791 = vpack.c.b16 %v551, %v535
  %v792 = vpack.c.b16 %v552, %v536
  %v793 = vpack.c.b16 %v553, %v537
  %v794 = vpack.c.b16 %v554, %v538
  %v795 = vpack.c.b16 %v555, %v539
  %v796 = vpack.c.b16 %v556, %v540
  %v797 = vpack.c.b16 %v557, %v541
  %v798 = vpack.c.b16 %v558, %v542
  %v799 = vpack.c.b16 %v575, %v559
  %v800 = vpack.c.b16 %v576, %v560
  %v801 = vpack.c.b16 %v577, %v561
  %v802 = vpack.c.b16 %v578, %v562
  %v803 = vpack.c.b16 %v579, %v563
  %v804 = vpack.c.b16 %v580, %v564
  %v805 = vpack.c.b16 %v581, %v565
  %v806 = vpack.c.b16 %v582, %v566
  %v807 = vpack.c.b16 %v583, %v567
  %v808 = vpack.c.b16 %v584, %v568
  %v809 = vpack.c.b16 %v585, %v569
  %v810 = vpack.c.b16 %v586, %v570
  %v811 = vpack.c.b16 %v587, %v571
  %v812 = vpack.c.b16 %v588, %v572
  %v813 = vpack.c.b16 %v589, %v573
  %v814 = vpack.c.b16 %v590, %v574
  %v815 = vpack.c.b16 %v607, %v591
  %v816 = vpack.c.b16 %v608, %v592
  %v817 = vpack.c.b16 %v609, %v593
  %v818 = vpack.c.b16 %v610, %v594
  %v819 = vpack.c.b16 %v611, %v595
  %v820 = vpack.c.b16 %v612, %v596
  %v821 = vpack.c.b16 %v613, %v597
  %v822 = vpack.c.b16 %v614, %v598
  %v823 = vpack.c.b16 %v615, %v599
  %v824 = vpack.c.b16 %v616, %v600
  %v825 = vpack.c.b16 %v617, %v601
  %v826 = vpack.c.b16 %v618, %v602
  %v827 = vpack.c.b16 %v619, %v603
  %v828 = vpack.c.b16 %v620, %v604
  %v829 = vpack.c.b16 %v621, %v605
  %v830 = vpack.c.b16 %v622, %v606
  %v831 = vpack.c.b16 %v639, %v623
  %v832 = vpack.c.b16 %v640, %v624
  %v833 = vpack.c.b16 %v641, %v625
  %v834 = vpack.c.b16 %v642, %v626
  %v835 = vpack.c.b16 %v643, %v627
  %v836 = vpack.c.b16 %v644, %v628
  %v837 = vpack.c.b16 %v645, %v629
  %v838 = vpack.c.b16 %v646, %v630
  %v839 = vpack.c.b16 %v647, %v631
  %v840 = vpack.c.b16 %v648, %v632
  %v841 = vpack.c.b16 %v649, %v633
  %v842 = vpack.c.b16 %v650, %v634
  %v843 = vpack.c.b16 %v651, %v635
  %v844 = vpack.c.b16 %v652, %v636
  %v845 = vpack.c.b16 %v653, %v637
  %v846 = vpack.c.b16 %v654, %v638
  %v847 = vpack.c.b16 %v671, %v655
  %v848 = vpack.c.b16 %v672, %v656
  %v849 = vpack.c.b16 %v673, %v657
  %v850 = vpack.c.b16 %v674, %v658
  %v851 = vpack.c.b16 %v675, %v659
  %v852 = vpack.c.b16 %v676, %v660
  %v853 = vpack.c.b16 %v677, %v661
  %v854 = vpack.c.b16 %v678, %v662
  %v855 = vpack.c.b16 %v679, %v663
  %v856 = vpack.c.b16 %v680, %v664
  %v857 = vpack.c.b16 %v681, %v665
  %v858 = vpack.c.b16 %v682, %v666
  %v859 = vpack.c.b16 %v683, %v667
  %v860 = vpack.c.b16 %v684, %v668
  %v861 = vpack.c.b16 %v685, %v669
  %v862 = vpack.c.b16 %v686, %v670
  %v863 = vpack.c.b16 %v703, %v687
  %v864 = vpack.c.b16 %v704, %v688
  %v865 = vpack.c.b16 %v705, %v689
  %v866 = vpack.c.b16 %v706, %v690
  %v867 = vpack.c.b16 %v707, %v691
  %v868 = vpack.c.b16 %v708, %v692
  %v869 = vpack.c.b16 %v709, %v693
  %v870 = vpack.c.b16 %v710, %v694
  %v871 = vpack.c.b16 %v711, %v695
  %v872 = vpack.c.b16 %v712, %v696
  %v873 = vpack.c.b16 %v713, %v697
  %v874 = vpack.c.b16 %v714, %v698
  %v875 = vpack.c.b16 %v715, %v699
  %v876 = vpack.c.b16 %v716, %v700
  %v877 = vpack.c.b16 %v717, %v701
  %v878 = vpack.c.b16 %v718, %v702
  %v879 = vpack.c.b16 %v735, %v719
  %v880 = vpack.c.b16 %v736, %v720
  %v881 = vpack.c.b16 %v737, %v721
  %v882 = vpack.c.b16 %v738, %v722
  %v883 = vpack.c.b16 %v739, %v723
  %v884 = vpack.c.b16 %v740, %v724
  %v885 = vpack.c.b16 %v741, %v725
  %v886 = vpack.c.b16 %v742, %v726
  %v887 = vpack.c.b16 %v743, %v727
  %v888 = vpack.c.b16 %v744, %v728
  %v889 = vpack.c.b16 %v745, %v729
  %v890 = vpack.c.b16 %v746, %v730
  %v891 = vpack.c.b16 %v747, %v731
  %v892 = vpack.c.b16 %v748, %v732
  %v893 = vpack.c.b16 %v749, %v733
  %v894 = vpack.c.b16 %v750, %v734
  %v895 = vpack.c.b16 %v767, %v751
  %v896 = vpack.c.b16 %v768, %v752
  %v897 = vpack.c.b16 %v769, %v753
  %v898 = vpack.c.b16 %v770, %v754
  %v899 = vpack.c.b16 %v771, %v755
  %v900 = vpack.c.b16 %v772, %v756
  %v901 = vpack.c.b16 %v773, %v757
  %v902 = vpack.c.b16 %v774, %v758
  %v903 = vpack.c.b16 %v775, %v759
  %v904 = vpack.c.b16 %v776, %v760
  %v905 = vpack.c.b16 %v777, %v761
  %v906 = vpack.c.b16 %v778, %v762
  %v907 = vpack.c.b16 %v779, %v763
  %v908 = vpack.c.b16 %v780, %v764
  %v909 = vpack.c.b16 %v781, %v765
  %v910 = vpack.c.b16 %v782, %v766
  %v1295 = vunpack.c.l.b16 %v143
  %v1296 = vunpack.c.l.b16 %v144
  %v1297 = vunpack.c.l.b16 %v145
  %v1298 = vunpack.c.l.b16 %v146
  %v1299 = vunpack.c.l.b16 %v147
  %v1300 = vunpack.c.l.b16 %v148
  %v1301 = vunpack.c.l.b16 %v149
  %v1302 = vunpack.c.l.b16 %v150
  %v1303 = vunpack.c.l.b16 %v151
  %v1304 = vunpack.c.l.b16 %v152
  %v1305 = vunpack.c.l.b16 %v153
  %v1306 = vunpack.c.l.b16 %v154
  %v1307 = vunpack.c.l.b16 %v155
  %v1308 = vunpack.c.l.b16 %v156
  %v1309 = vunpack.c.l.b16 %v157
  %v1310 = vunpack.c.l.b16 %v158
  %v1311 = vunpack.c.l.b16 %v159
  %v1312 = vunpack.c.l.b16 %v160
  %v1313 = vunpack.c.l.b16 %v161
  %v1314 = vunpack.c.l.b16 %v162
  %v1315 = vunpack.c.l.b16 %v163
  %v1316 = vunpack.c.l.b16 %v164
  %v1317 = vunpack.c.l.b16 %v165
  %v1318 = vunpack.c.l.b16 %v166
  %v1319 = vunpack.c.l.b16 %v167
  %v1320 = vunpack.c.l.b16 %v168
  %v1321 = vunpack.c.l.b16 %v169
  %v1322 = vunpack.c.l.b16 %v170
  %v1323 = vunpack.c.l.b16 %v171
  %v1324 = vunpack.c.l.b16 %v172
  %v1325 = vunpack.c.l.b16 %v173
  %v1326 = vunpack.c.l.b16 %v174
  %v1327 = vunpack.c.l.b16 %v175
  %v1328 = vunpack.c.l.b16 %v176
  %v1329 = vunpack.c.l.b16 %v177
  %v1330 = vunpack.c.l.b16 %v178
  %v1331 = vunpack.c.l.b16 %v179
  %v1332 = vunpack.c.l.b16 %v180
  %v1333 = vunpack.c.l.b16 %v181
  %v1334 = vunpack.c.l.b16 %v182
  %v1335 = vunpack.c.l.b16 %v183
  %v1336 = vunpack.c.l.b16 %v184
  %v1337 = vunpack.c.l.b16 %v185
  %v1338 = vunpack.c.l.b16 %v186
  %v1339 = vunpack.c.l.b16 %v187
  %v1340 = vunpack.c.l.b16 %v188
  %v1341 = vunpack.c.l.b16 %v189
  %v1342 = vunpack.c.l.b16 %v190
  %v1343 = vunpack.c.l.b16 %v191
  %v1344 = vunpack.c.l.b16 %v192
  %v1345 = vunpack.c.l.b16 %v193
  %v1346 = vunpack.c.l.b16 %v194
  %v1347 = vunpack.c.l.b16 %v195
  %v1348 = vunpack.c.l.b16 %v196
  %v1349 = vunpack.c.l.b16 %v197
  %v1350 = vunpack.c.l.b16 %v198
  %v1351 = vunpack.c.l.b16 %v199
  %v1352 = vunpack.c.l.b16 %v200
  %v1353 = vunpack.c.l.b16 %v201
  %v1354 = vunpack.c.l.b16 %v202
  %v1355 = vunpack.c.l.b16 %v203
  %v1356 = vunpack.c.l.b16 %v204
  %v1357 = vunpack.c.l.b16 %v205
  %v1358 = vunpack.c.l.b16 %v206
  %v1359 = vunpack.c.l.b16 %v207
  %v1360 = vunpack.c.l.b16 %v208
  %v1361 = vunpack.c.l.b16 %v209
  %v1362 = vunpack.c.l.b16 %v210
  %v1363 = vunpack.c.l.b16 %v211
  %v1364 = vunpack.c.l.b16 %v212
  %v1365 = vunpack.c.l.b16 %v213
  %v1366 = vunpack.c.l.b16 %v214
  %v1367 = vunpack.c.l.b16 %v215
  %v1368 = vunpack.c.l.b16 %v216
  %v1369 = vunpack.c.l.b16 %v217
  %v1370 = vunpack.c.l.b16 %v218
  %v1371 = vunpack.c.l.b16 %v219
  %v1372 = vunpack.c.l.b16 %v220
  %v1373 = vunpack.c.l.b16 %v221
  %v1374 = vunpack.c.l.b16 %v222
  %v1375 = vunpack.c.l.b16 %v223
  %v1376 = vunpack.c.l.b16 %v224
  %v1377 = vunpack.c.l.b16 %v225
  %v1378 = vunpack.c.l.b16 %v226
  %v1379 = vunpack.c.l.b16 %v227
  %v1380 = vunpack.c.l.b16 %v228
  %v1381 = vunpack.c.l.b16 %v229
  %v1382 = vunpack.c.l.b16 %v230
  %v1383 = vunpack.c.l.b16 %v231
  %v1384 = vunpack.c.l.b16 %v232
  %v1385 = vunpack.c.l.b16 %v233
  %v1386 = vunpack.c.l.b16 %v234
  %v1387 = vunpack.c.l.b16 %v235
  %v1388 = vunpack.c.l.b16 %v236
  %v1389 = vunpack.c.l.b16 %v237
  %v1390 = vunpack.c.l.b16 %v238
  %v1391 = vunpack.c.l.b16 %v239
  %v1392 = vunpack.c.l.b16 %v240
  %v1393 = vunpack.c.l.b16 %v241
  %v1394 = vunpack.c.l.b16 %v242
  %v1395 = vunpack.c.l.b16 %v243
  %v1396 = vunpack.c.l.b16 %v244
  %v1397 = vunpack.c.l.b16 %v245
  %v1398 = vunpack.c.l.b16 %v246
  %v1399 = vunpack.c.l.b16 %v247
  %v1400 = vunpack.c.l.b16 %v248
  %v1401 = vunpack.c.l.b16 %v249
  %v1402 = vunpack.c.l.b16 %v250
  %v1403 = vunpack.c.l.b16 %v251
  %v1404 = vunpack.c.l.b16 %v252
  %v1405 = vunpack.c.l.b16 %v253
  %v1406 = vunpack.c.l.b16 %v254
  %v1407 = vunpack.c.l.b16 %v255
  %v1408 = vunpack.c.l.b16 %v256
  %v1409 = vunpack.c.l.b16 %v257
  %v1410 = vunpack.c.l.b16 %v258
  %v1411 = vunpack.c.l.b16 %v259
  %v1412 = vunpack.c.l.b16 %v260
  %v1413 = vunpack.c.l.b16 %v261
  %v1414 = vunpack.c.l.b16 %v262
  %v1415 = vunpack.c.l.b16 %v263
  %v1416 = vunpack.c.l.b16 %v264
  %v1417 = vunpack.c.l.b16 %v265
  %v1418 = vunpack.c.l.b16 %v266
  %v1419 = vunpack.c.l.b16 %v267
  %v1420 = vunpack.c.l.b16 %v268
  %v1421 = vunpack.c.l.b16 %v269
  %v1422 = vunpack.c.l.b16 %v270
  %v1423 = vunpack.c.l.b16 %v271
  %v1424 = vunpack.c.l.b16 %v272
  %v1425 = vunpack.c.l.b16 %v273
  %v1426 = vunpack.c.l.b16 %v274
  %v1427 = vunpack.c.l.b16 %v275
  %v1428 = vunpack.c.l.b16 %v276
  %v1429 = vunpack.c.l.b16 %v277
  %v1430 = vunpack.c.l.b16 %v278
  %v1431 = vunpack.c.l.b16 %v279
  %v1432 = vunpack.c.l.b16 %v280
  %v1433 = vunpack.c.l.b16 %v281
  %v1434 = vunpack.c.l.b16 %v282
  %v1435 = vunpack.c.l.b16 %v283
  %v1436 = vunpack.c.l.b16 %v284
  %v1437 = vunpack.c.l.b16 %v285
  %v1438 = vunpack.c.l.b16 %v286
  %v1439 = vunpack.c.l.b16 %v287
  %v1440 = vunpack.c.l.b16 %v288
  %v1441 = vunpack.c.l.b16 %v289
  %v1442 = vunpack.c.l.b16 %v290
  %v1443 = vunpack.c.l.b16 %v291
  %v1444 = vunpack.c.l.b16 %v292
  %v1445 = vunpack.c.l.b16 %v293
  %v1446 = vunpack.c.l.b16 %v294
  %v1447 = vunpack.c.l.b16 %v295
  %v1448 = vunpack.c.l.b16 %v296
  %v1449 = vunpack.c.l.b16 %v297
  %v1450 = vunpack.c.l.b16 %v298
  %v1451 = vunpack.c.l.b16 %v299
  %v1452 = vunpack.c.l.b16 %v300
  %v1453 = vunpack.c.l.b16 %v301
  %v1454 = vunpack.c.l.b16 %v302
  %v1455 = vunpack.c.l.b16 %v303
  %v1456 = vunpack.c.l.b16 %v304
  %v1457 = vunpack.c.l.b16 %v305
  %v1458 = vunpack.c.l.b16 %v306
  %v1459 = vunpack.c.l.b16 %v307
  %v1460 = vunpack.c.l.b16 %v308
  %v1461 = vunpack.c.l.b16 %v309
  %v1462 = vunpack.c.l.b16 %v310
  %v1463 = vunpack.c.l.b16 %v311
  %v1464 = vunpack.c.l.b16 %v312
  %v1465 = vunpack.c.l.b16 %v313
  %v1466 = vunpack.c.l.b16 %v314
  %v1467 = vunpack.c.l.b16 %v315
  %v1468 = vunpack.c.l.b16 %v316
  %v1469 = vunpack.c.l.b16 %v317
  %v1470 = vunpack.c.l.b16 %v318
  %v1471 = vunpack.c.l.b16 %v319
  %v1472 = vunpack.c.l.b16 %v320
  %v1473 = vunpack.c.l.b16 %v321
  %v1474 = vunpack.c.l.b16 %v322
  %v1475 = vunpack.c.l.b16 %v323
  %v1476 = vunpack.c.l.b16 %v324
  %v1477 = vunpack.c.l.b16 %v325
  %v1478 = vunpack.c.l.b16 %v326
  %v1479 = vunpack.c.l.b16 %v327
  %v1480 = vunpack.c.l.b16 %v328
  %v1481 = vunpack.c.l.b16 %v329
  %v1482 = vunpack.c.l.b16 %v330
  %v1483 = vunpack.c.l.b16 %v331
  %v1484 = vunpack.c.l.b16 %v332
  %v1485 = vunpack.c.l.b16 %v333
  %v1486 = vunpack.c.l.b16 %v334
  %v1487 = vunpack.c.l.b16 %v335
  %v1488 = vunpack.c.l.b16 %v336
  %v1489 = vunpack.c.l.b16 %v337
  %v1490 = vunpack.c.l.b16 %v338
  %v1491 = vunpack.c.l.b16 %v339
  %v1492 = vunpack.c.l.b16 %v340
  %v1493 = vunpack.c.l.b16 %v341
  %v1494 = vunpack.c.l.b16 %v342
  %v1495 = vunpack.c.l.b16 %v343
  %v1496 = vunpack.c.l.b16 %v344
  %v1497 = vunpack.c.l.b16 %v345
  %v1498 = vunpack.c.l.b16 %v346
  %v1499 = vunpack.c.l.b16 %v347
  %v1500 = vunpack.c.l.b16 %v348
  %v1501 = vunpack.c.l.b16 %v349
  %v1502 = vunpack.c.l.b16 %v350
  %v1503 = vunpack.c.l.b16 %v351
  %v1504 = vunpack.c.l.b16 %v352
  %v1505 = vunpack.c.l.b16 %v353
  %v1506 = vunpack.c.l.b16 %v354
  %v1507 = vunpack.c.l.b16 %v355
  %v1508 = vunpack.c.l.b16 %v356
  %v1509 = vunpack.c.l.b16 %v357
  %v1510 = vunpack.c.l.b16 %v358
  %v1511 = vunpack.c.l.b16 %v359
  %v1512 = vunpack.c.l.b16 %v360
  %v1513 = vunpack.c.l.b16 %v361
  %v1514 = vunpack.c.l.b16 %v362
  %v1515 = vunpack.c.l.b16 %v363
  %v1516 = vunpack.c.l.b16 %v364
  %v1517 = vunpack.c.l.b16 %v365
  %v1518 = vunpack.c.l.b16 %v366
  %v1519 = vunpack.c.l.b16 %v367
  %v1520 = vunpack.c.l.b16 %v368
  %v1521 = vunpack.c.l.b16 %v369
  %v1522 = vunpack.c.l.b16 %v370
  %v1523 = vunpack.c.l.b16 %v371
  %v1524 = vunpack.c.l.b16 %v372
  %v1525 = vunpack.c.l.b16 %v373
  %v1526 = vunpack.c.l.b16 %v374
  %v1527 = vunpack.c.l.b16 %v375
  %v1528 = vunpack.c.l.b16 %v376
  %v1529 = vunpack.c.l.b16 %v377
  %v1530 = vunpack.c.l.b16 %v378
  %v1531 = vunpack.c.l.b16 %v379
  %v1532 = vunpack.c.l.b16 %v380
  %v1533 = vunpack.c.l.b16 %v381
  %v1534 = vunpack.c.l.b16 %v382
  %v1535 = vunpack.c.l.b16 %v383
  %v1536 = vunpack.c.l.b16 %v384
  %v1537 = vunpack.c.l.b16 %v385
  %v1538 = vunpack.c.l.b16 %v386
  %v1539 = vunpack.c.l.b16 %v387
  %v1540 = vunpack.c.l.b16 %v388
  %v1541 = vunpack.c.l.b16 %v389
  %v1542 = vunpack.c.l.b16 %v390
  %v1543 = vunpack.c.l.b16 %v391
  %v1544 = vunpack.c.l.b16 %v392
  %v1545 = vunpack.c.l.b16 %v393
  %v1546 = vunpack.c.l.b16 %v394
  %v1547 = vunpack.c.l.b16 %v395
  %v1548 = vunpack.c.l.b16 %v396
  %v1549 = vunpack.c.l.b16 %v397
  %v1550 = vunpack.c.l.b16 %v398
  %v1551 = vpack.c.b16 %v1296, %v1295
  %v1552 = vpack.c.b16 %v1298, %v1297
  %v1553 = vpack.c.b16 %v1300, %v1299
  %v1554 = vpack.c.b16 %v1302, %v1301
  %v1555 = vpack.c.b16 %v1304, %v1303
  %v1556 = vpack.c.b16 %v1306, %v1305
  %v1557 = vpack.c.b16 %v1308, %v1307
  %v1558 = vpack.c.b16 %v1310, %v1309
  %v1559 = vpack.c.b16 %v1312, %v1311
  %v1560 = vpack.c.b16 %v1314, %v1313
  %v1561 = vpack.c.b16 %v1316, %v1315
  %v1562 = vpack.c.b16 %v1318, %v1317
  %v1563 = vpack.c.b16 %v1320, %v1319
  %v1564 = vpack.c.b16 %v1322, %v1321
  %v1565 = vpack.c.b16 %v1324, %v1323
  %v1566 = vpack.c.b16 %v1326, %v1325
  %v1567 = vpack.c.b16 %v1328, %v1327
  %v1568 = vpack.c.b16 %v1330, %v1329
  %v1569 = vpack.c.b16 %v1332, %v1331
  %v1570 = vpack.c.b16 %v1334, %v1333
  %v1571 = vpack.c.b16 %v1336, %v1335
  %v1572 = vpack.c.b16 %v1338, %v1337
  %v1573 = vpack.c.b16 %v1340, %v1339
  %v1574 = vpack.c.b16 %v1342, %v1341
  %v1575 = vpack.c.b16 %v1344, %v1343
  %v1576 = vpack.c.b16 %v1346, %v1345
  %v1577 = vpack.c.b16 %v1348, %v1347
  %v1578 = vpack.c.b16 %v1350, %v1349
  %v1579 = vpack.c.b16 %v1352, %v1351
  %v1580 = vpack.c.b16 %v1354, %v1353
  %v1581 = vpack.c.b16 %v1356, %v1355
  %v1582 = vpack.c.b16 %v1358, %v1357
  %v1583 = vpack.c.b16 %v1360, %v1359
  %v1584 = vpack.c.b16 %v1362, %v1361
  %v1585 = vpack.c.b16 %v1364, %v1363
  %v1586 = vpack.c.b16 %v1366, %v1365
  %v1587 = vpack.c.b16 %v1368, %v1367
  %v1588 = vpack.c.b16 %v1370, %v1369
  %v1589 = vpack.c.b16 %v1372, %v1371
  %v1590 = vpack.c.b16 %v1374, %v1373
  %v1591 = vpack.c.b16 %v1376, %v1375
  %v1592 = vpack.c.b16 %v1378, %v1377
  %v1593 = vpack.c.b16 %v1380, %v1379
  %v1594 = vpack.c.b16 %v1382, %v1381
  %v1595 = vpack.c.b16 %v1384, %v1383
  %v1596 = vpack.c.b16 %v1386, %v1385
  %v1597 = vpack.c.b16 %v1388, %v1387
  %v1598 = vpack.c.b16 %v1390, %v1389
  %v1599 = vpack.c.b16 %v1392, %v1391
  %v1600 = vpack.c.b16 %v1394, %v1393
  %v1601 = vpack.c.b16 %v1396, %v1395
  %v1602 = vpack.c.b16 %v1398, %v1397
  %v1603 = vpack.c.b16 %v1400, %v1399
  %v1604 = vpack.c.b16 %v1402, %v1401
  %v1605 = vpack.c.b16 %v1404, %v1403
  %v1606 = vpack.c.b16 %v1406, %v1405
  %v1607 = vpack.c.b16 %v1408, %v1407
  %v1608 = vpack.c.b16 %v1410, %v1409
  %v1609 = vpack.c.b16 %v1412, %v1411
  %v1610 = vpack.c.b16 %v1414, %v1413
  %v1611 = vpack.c.b16 %v1416, %v1415
  %v1612 = vpack.c.b16 %v1418, %v1417
  %v1613 = vpack.c.b16 %v1420, %v1419
  %v1614 = vpack.c.b16 %v1422, %v1421
  %v1615 = vpack.c.b16 %v1424, %v1423
  %v1616 = vpack.c.b16 %v1426, %v1425
  %v1617 = vpack.c.b16 %v1428, %v1427
  %v1618 = vpack.c.b16 %v1430, %v1429
  %v1619 = vpack.c.b16 %v1432, %v1431
  %v1620 = vpack.c.b16 %v1434, %v1433
  %v1621 = vpack.c.b16 %v1436, %v1435
  %v1622 = vpack.c.b16 %v1438, %v1437
  %v1623 = vpack.c.b16 %v1440, %v1439
  %v1624 = vpack.c.b16 %v1442, %v1441
  %v1625 = vpack.c.b16 %v1444, %v1443
  %v1626 = vpack.c.b16 %v1446, %v1445
  %v1627 = vpack.c.b16 %v1448, %v1447
  %v1628 = vpack.c.b16 %v1450, %v1449
  %v1629 = vpack.c.b16 %v1452, %v1451
  %v1630 = vpack.c.b16 %v1454, %v1453
  %v1631 = vpack.c.b16 %v1456, %v1455
  %v1632 = vpack.c.b16 %v1458, %v1457
  %v1633 = vpack.c.b16 %v1460, %v1459
  %v1634 = vpack.c.b16 %v1462, %v1461
  %v1635 = vpack.c.b16 %v1464, %v1463
  %v1636 = vpack.c.b16 %v1466, %v1465
  %v1637 = vpack.c.b16 %v1468, %v1467
  %v1638 = vpack.c.b16 %v1470, %v1469
  %v1639 = vpack.c.b16 %v1472, %v1471
  %v1640 = vpack.c.b16 %v1474, %v1473
  %v1641 = vpack.c.b16 %v1476, %v1475
  %v1642 = vpack.c.b16 %v1478, %v1477
  %v1643 = vpack.c.b16 %v1480, %v1479
  %v1644 = vpack.c.b16 %v1482, %v1481
  %v1645 = vpack.c.b16 %v1484, %v1483
  %v1646 = vpack.c.b16 %v1486, %v1485
  %v1647 = vpack.c.b16 %v1488, %v1487
  %v1648 = vpack.c.b16 %v1490, %v1489
  %v1649 = vpack.c.b16 %v1492, %v1491
  %v1650 = vpack.c.b16 %v1494, %v1493
  %v1651 = vpack.c.b16 %v1496, %v1495
  %v1652 = vpack.c.b16 %v1498, %v1497
  %v1653 = vpack.c.b16 %v1500, %v1499
  %v1654 = vpack.c.b16 %v1502, %v1501
  %v1655 = vpack.c.b16 %v1504, %v1503
  %v1656 = vpack.c.b16 %v1506, %v1505
  %v1657 = vpack.c.b16 %v1508, %v1507
  %v1658 = vpack.c.b16 %v1510, %v1509
  %v1659 = vpack.c.b16 %v1512, %v1511
  %v1660 = vpack.c.b16 %v1514, %v1513
  %v1661 = vpack.c.b16 %v1516, %v1515
  %v1662 = vpack.c.b16 %v1518, %v1517
  %v1663 = vpack.c.b16 %v1520, %v1519
  %v1664 = vpack.c.b16 %v1522, %v1521
  %v1665 = vpack.c.b16 %v1524, %v1523
  %v1666 = vpack.c.b16 %v1526, %v1525
  %v1667 = vpack.c.b16 %v1528, %v1527
  %v1668 = vpack.c.b16 %v1530, %v1529
  %v1669 = vpack.c.b16 %v1532, %v1531
  %v1670 = vpack.c.b16 %v1534, %v1533
  %v1671 = vpack.c.b16 %v1536, %v1535
  %v1672 = vpack.c.b16 %v1538, %v1537
  %v1673 = vpack.c.b16 %v1540, %v1539
  %v1674 = vpack.c.b16 %v1542, %v1541
  %v1675 = vpack.c.b16 %v1544, %v1543
  %v1676 = vpack.c.b16 %v1546, %v1545
  %v1677 = vpack.c.b16 %v1548, %v1547
  %v1678 = vpack.c.b16 %v1550, %v1549
  %1807 = vmatprep.subr.bf16.mxu0 0
  %1808 = vmatpush1.bf16.msra.mxu0 %v1551
  %1809 = vmatprep.subr.bf16.mxu0 0
  %1810 = vmatpush1.bf16.msra.mxu0 %v1552
  %1811 = vmatprep.subr.bf16.mxu0 0
  %1812 = vmatpush1.bf16.msra.mxu0 %v1553
  %1813 = vmatprep.subr.bf16.mxu0 0
  %1814 = vmatpush1.bf16.msra.mxu0 %v1554
  %1815 = vmatprep.subr.bf16.mxu0 0
  %1816 = vmatpush1.bf16.msra.mxu0 %v1555
  %1817 = vmatprep.subr.bf16.mxu0 0
  %1818 = vmatpush1.bf16.msra.mxu0 %v1556
  %1819 = vmatprep.subr.bf16.mxu0 0
  %1820 = vmatpush1.bf16.msra.mxu0 %v1557
  %1821 = vmatprep.subr.bf16.mxu0 0
  %1822 = vmatpush1.bf16.msra.mxu0 %v1558
  %1823 = vmatprep.subr.bf16.mxu0 0
  %1824 = vmatpush1.bf16.msra.mxu0 %v1559
  %1825 = vmatprep.subr.bf16.mxu0 0
  %1826 = vmatpush1.bf16.msra.mxu0 %v1560
  %1827 = vmatprep.subr.bf16.mxu0 0
  %1828 = vmatpush1.bf16.msra.mxu0 %v1561
  %1829 = vmatprep.subr.bf16.mxu0 0
  %1830 = vmatpush1.bf16.msra.mxu0 %v1562
  %1831 = vmatprep.subr.bf16.mxu0 0
  %1832 = vmatpush1.bf16.msra.mxu0 %v1563
  %1833 = vmatprep.subr.bf16.mxu0 0
  %1834 = vmatpush1.bf16.msra.mxu0 %v1564
  %1835 = vmatprep.subr.bf16.mxu0 0
  %1836 = vmatpush1.bf16.msra.mxu0 %v1565
  %1837 = vmatprep.subr.bf16.mxu0 0
  %1838 = vmatpush1.bf16.msra.mxu0 %v1566
  %1839 = vmatprep.mubr.bf16.mxu0 %v784
  %1840 = vmatmul.mubr.bf16.gmra.mrb[0].mxu0 %v783
  %v1841 = vpop.f32.mrb[0].mxu0
  %v1842 = vadd.f32 0.0, %v1841
  %v1843 = vpop.f32.mrb[0].mxu0
  %v1844 = vpop.f32.mrb[0].mxu0
  %v1845 = vadd.f32 0.0, %v1844
  %v1846 = vpop.f32.mrb[0].mxu0
  %1847 = vmatprep.mubr.bf16.mxu0 %v800
  %1848 = vmatmul.mubr.bf16.gmra.mrb[0].mxu0 %v799
  %v1849 = vpop.f32.mrb[0].mxu0
  %v1850 = vadd.f32 0.0, %v1849
  %v1851 = vpop.f32.mrb[0].mxu0
  %v1852 = vpop.f32.mrb[0].mxu0
  %v1853 = vadd.f32 0.0, %v1852
  %v1854 = vpop.f32.mrb[0].mxu0
  %1855 = vmatprep.mubr.bf16.mxu0 %v816
  %1856 = vmatmul.mubr.bf16.gmra.mrb[0].mxu0 %v815
  %v1857 = vpop.f32.mrb[0].mxu0
  %v1858 = vadd.f32 0.0, %v1857
  %v1859 = vpop.f32.mrb[0].mxu0
  %v1860 = vpop.f32.mrb[0].mxu0
  %v1861 = vadd.f32 0.0, %v1860
  %v1862 = vpop.f32.mrb[0].mxu0
  %1863 = vmatprep.mubr.bf16.mxu0 %v832
  %1864 = vmatmul.mubr.bf16.gmra.mrb[0].mxu0 %v831
  %v1865 = vpop.f32.mrb[0].mxu0
  %v1866 = vadd.f32 0.0, %v1865
  %v1867 = vpop.f32.mrb[0].mxu0
  %v1868 = vpop.f32.mrb[0].mxu0
  %v1869 = vadd.f32 0.0, %v1868
  %v1870 = vpop.f32.mrb[0].mxu0
  %1871 = vmatprep.mubr.bf16.mxu0 %v848
  %1872 = vmatmul.mubr.bf16.gmra.mrb[0].mxu0 %v847
  %v1873 = vpop.f32.mrb[0].mxu0
  %v1874 = vadd.f32 0.0, %v1873
  %v1875 = vpop.f32.mrb[0].mxu0
  %v1876 = vpop.f32.mrb[0].mxu0
  %v1877 = vadd.f32 0.0, %v1876
  %v1878 = vpop.f32.mrb[0].mxu0
  %1879 = vmatprep.mubr.bf16.mxu0 %v864
  %1880 = vmatmul.mubr.bf16.gmra.mrb[0].mxu0 %v863
  %v1881 = vpop.f32.mrb[0].mxu0
  %v1882 = vadd.f32 0.0, %v1881
  %v1883 = vpop.f32.mrb[0].mxu0
  %v1884 = vpop.f32.mrb[0].mxu0
  %v1885 = vadd.f32 0.0, %v1884
  %v1886 = vpop.f32.mrb[0].mxu0
  %1887 = vmatprep.mubr.bf16.mxu0 %v880
  %1888 = vmatmul.mubr.bf16.gmra.mrb[0].mxu0 %v879
  %v1889 = vpop.f32.mrb[0].mxu0
  %v1890 = vadd.f32 0.0, %v1889
  %v1891 = vpop.f32.mrb[0].mxu0
  %v1892 = vpop.f32.mrb[0].mxu0
  %v1893 = vadd.f32 0.0, %v1892
  %v1894 = vpop.f32.mrb[0].mxu0
  %1895 = vmatprep.mubr.bf16.mxu0 %v896
  %1896 = vmatmul.mubr.bf16.gmra.mrb[0].mxu0 %v895
  %v1897 = vpop.f32.mrb[0].mxu0
  %v1898 = vadd.f32 0.0, %v1897
  %v1899 = vpop.f32.mrb[0].mxu0
  %v1900 = vpop.f32.mrb[0].mxu0
  %v1901 = vadd.f32 0.0, %v1900
  %v1902 = vpop.f32.mrb[0].mxu0
  %1903 = vdwg.mxu0
  %1904 = vmatprep.subr.bf16.mxu0 0
  %1905 = vmatpush1.bf16.msra.mxu0 %v1567
  %1906 = vmatprep.subr.bf16.mxu0 0
  %1907 = vmatpush1.bf16.msra.mxu0 %v1568
  %1908 = vmatprep.subr.bf16.mxu0 0
  %1909 = vmatpush1.bf16.msra.mxu0 %v1569
  %1910 = vmatprep.subr.bf16.mxu0 0
  %1911 = vmatpush1.bf16.msra.mxu0 %v1570
  %1912 = vmatprep.subr.bf16.mxu0 0
  %1913 = vmatpush1.bf16.msra.mxu0 %v1571
  %1914 = vmatprep.subr.bf16.mxu0 0
  %1915 = vmatpush1.bf16.msra.mxu0 %v1572
  %1916 = vmatprep.subr.bf16.mxu0 0
  %1917 = vmatpush1.bf16.msra.mxu0 %v1573
  %1918 = vmatprep.subr.bf16.mxu0 0
  %1919 = vmatpush1.bf16.msra.mxu0 %v1574
  %1920 = vmatprep.subr.bf16.mxu0 0
  %1921 = vmatpush1.bf16.msra.mxu0 %v1575
  %1922 = vmatprep.subr.bf16.mxu0 0
  %1923 = vmatpush1.bf16.msra.mxu0 %v1576
  %1924 = vmatprep.subr.bf16.mxu0 0
  %1925 = vmatpush1.bf16.msra.mxu0 %v1577
  %1926 = vmatprep.subr.bf16.mxu0 0
  %1927 = vmatpush1.bf16.msra.mxu0 %v1578
  %1928 = vmatprep.subr.bf16.mxu0 0
  %1929 = vmatpush1.bf16.msra.mxu0 %v1579
  %1930 = vmatprep.subr.bf16.mxu0 0
  %1931 = vmatpush1.bf16.msra.mxu0 %v1580
  %1932 = vmatprep.subr.bf16.mxu0 0
  %1933 = vmatpush1.bf16.msra.mxu0 %v1581
  %1934 = vmatprep.subr.bf16.mxu0 0
  %1935 = vmatpush1.bf16.msra.mxu0 %v1582
  %1936 = vmatprep.mubr.bf16.mxu0 %v786
  %1937 = vmatmul.mubr.bf16.gmra.mrb[0].mxu0 %v785
  %v1938 = vpop.f32.mrb[0].mxu0
  %v1939 = vadd.f32 %v1842, %v1938
  %v1940 = vpop.f32.mrb[0].mxu0
  %v1941 = vpop.f32.mrb[0].mxu0
  %v1942 = vadd.f32 %v1845, %v1941
  %v1943 = vpop.f32.mrb[0].mxu0
  %1944 = vmatprep.mubr.bf16.mxu0 %v802
  %1945 = vmatmul.mubr.bf16.gmra.mrb[0].mxu0 %v801
  %v1946 = vpop.f32.mrb[0].mxu0
  %v1947 = vadd.f32 %v1850, %v1946
  %v1948 = vpop.f32.mrb[0].mxu0
  %v1949 = vpop.f32.mrb[0].mxu0
  %v1950 = vadd.f32 %v1853, %v1949
  %v1951 = vpop.f32.mrb[0].mxu0
  %1952 = vmatprep.mubr.bf16.mxu0 %v818
  %1953 = vmatmul.mubr.bf16.gmra.mrb[0].mxu0 %v817
  %v1954 = vpop.f32.mrb[0].mxu0
  %v1955 = vadd.f32 %v1858, %v1954
  %v1956 = vpop.f32.mrb[0].mxu0
  %v1957 = vpop.f32.mrb[0].mxu0
  %v1958 = vadd.f32 %v1861, %v1957
  %v1959 = vpop.f32.mrb[0].mxu0
  %1960 = vmatprep.mubr.bf16.mxu0 %v834
  %1961 = vmatmul.mubr.bf16.gmra.mrb[0].mxu0 %v833
  %v1962 = vpop.f32.mrb[0].mxu0
  %v1963 = vadd.f32 %v1866, %v1962
  %v1964 = vpop.f32.mrb[0].mxu0
  %v1965 = vpop.f32.mrb[0].mxu0
  %v1966 = vadd.f32 %v1869, %v1965
  %v1967 = vpop.f32.mrb[0].mxu0
  %1968 = vmatprep.mubr.bf16.mxu0 %v850
  %1969 = vmatmul.mubr.bf16.gmra.mrb[0].mxu0 %v849
  %v1970 = vpop.f32.mrb[0].mxu0
  %v1971 = vadd.f32 %v1874, %v1970
  %v1972 = vpop.f32.mrb[0].mxu0
  %v1973 = vpop.f32.mrb[0].mxu0
  %v1974 = vadd.f32 %v1877, %v1973
  %v1975 = vpop.f32.mrb[0].mxu0
  %1976 = vmatprep.mubr.bf16.mxu0 %v866
  %1977 = vmatmul.mubr.bf16.gmra.mrb[0].mxu0 %v865
  %v1978 = vpop.f32.mrb[0].mxu0
  %v1979 = vadd.f32 %v1882, %v1978
  %v1980 = vpop.f32.mrb[0].mxu0
  %v1981 = vpop.f32.mrb[0].mxu0
  %v1982 = vadd.f32 %v1885, %v1981
  %v1983 = vpop.f32.mrb[0].mxu0
  %1984 = vmatprep.mubr.bf16.mxu0 %v882
  %1985 = vmatmul.mubr.bf16.gmra.mrb[0].mxu0 %v881
  %v1986 = vpop.f32.mrb[0].mxu0
  %v1987 = vadd.f32 %v1890, %v1986
  %v1988 = vpop.f32.mrb[0].mxu0
  %v1989 = vpop.f32.mrb[0].mxu0
  %v1990 = vadd.f32 %v1893, %v1989
  %v1991 = vpop.f32.mrb[0].mxu0
  %1992 = vmatprep.mubr.bf16.mxu0 %v898
  %1993 = vmatmul.mubr.bf16.gmra.mrb[0].mxu0 %v897
  %v1994 = vpop.f32.mrb[0].mxu0
  %v1995 = vadd.f32 %v1898, %v1994
  %v1996 = vpop.f32.mrb[0].mxu0
  %v1997 = vpop.f32.mrb[0].mxu0
  %v1998 = vadd.f32 %v1901, %v1997
  %v1999 = vpop.f32.mrb[0].mxu0
  %2000 = vdwg.mxu0
  %2001 = vmatprep.subr.bf16.mxu0 0
  %2002 = vmatpush1.bf16.msra.mxu0 %v1583
  %2003 = vmatprep.subr.bf16.mxu0 0
  %2004 = vmatpush1.bf16.msra.mxu0 %v1584
  %2005 = vmatprep.subr.bf16.mxu0 0
  %2006 = vmatpush1.bf16.msra.mxu0 %v1585
  %2007 = vmatprep.subr.bf16.mxu0 0
  %2008 = vmatpush1.bf16.msra.mxu0 %v1586
  %2009 = vmatprep.subr.bf16.mxu0 0
  %2010 = vmatpush1.bf16.msra.mxu0 %v1587
  %2011 = vmatprep.subr.bf16.mxu0 0
  %2012 = vmatpush1.bf16.msra.mxu0 %v1588
  %2013 = vmatprep.subr.bf16.mxu0 0
  %2014 = vmatpush1.bf16.msra.mxu0 %v1589
  %2015 = vmatprep.subr.bf16.mxu0 0
  %2016 = vmatpush1.bf16.msra.mxu0 %v1590
  %2017 = vmatprep.subr.bf16.mxu0 0
  %2018 = vmatpush1.bf16.msra.mxu0 %v1591
  %2019 = vmatprep.subr.bf16.mxu0 0
  %2020 = vmatpush1.bf16.msra.mxu0 %v1592
  %2021 = vmatprep.subr.bf16.mxu0 0
  %2022 = vmatpush1.bf16.msra.mxu0 %v1593
  %2023 = vmatprep.subr.bf16.mxu0 0
  %2024 = vmatpush1.bf16.msra.mxu0 %v1594
  %2025 = vmatprep.subr.bf16.mxu0 0
  %2026 = vmatpush1.bf16.msra.mxu0 %v1595
  %2027 = vmatprep.subr.bf16.mxu0 0
  %2028 = vmatpush1.bf16.msra.mxu0 %v1596
  %2029 = vmatprep.subr.bf16.mxu0 0
  %2030 = vmatpush1.bf16.msra.mxu0 %v1597
  %2031 = vmatprep.subr.bf16.mxu0 0
  %2032 = vmatpush1.bf16.msra.mxu0 %v1598
  %2033 = vmatprep.mubr.bf16.mxu0 %v788
  %2034 = vmatmul.mubr.bf16.gmra.mrb[0].mxu0 %v787
  %v2035 = vpop.f32.mrb[0].mxu0
  %v2036 = vadd.f32 %v1939, %v2035
  %v2037 = vpop.f32.mrb[0].mxu0
  %v2038 = vpop.f32.mrb[0].mxu0
  %v2039 = vadd.f32 %v1942, %v2038
  %v2040 = vpop.f32.mrb[0].mxu0
  %2041 = vmatprep.mubr.bf16.mxu0 %v804
  %2042 = vmatmul.mubr.bf16.gmra.mrb[0].mxu0 %v803
  %v2043 = vpop.f32.mrb[0].mxu0
  %v2044 = vadd.f32 %v1947, %v2043
  %v2045 = vpop.f32.mrb[0].mxu0
  %v2046 = vpop.f32.mrb[0].mxu0
  %v2047 = vadd.f32 %v1950, %v2046
  %v2048 = vpop.f32.mrb[0].mxu0
  %2049 = vmatprep.mubr.bf16.mxu0 %v820
  %2050 = vmatmul.mubr.bf16.gmra.mrb[0].mxu0 %v819
  %v2051 = vpop.f32.mrb[0].mxu0
  %v2052 = vadd.f32 %v1955, %v2051
  %v2053 = vpop.f32.mrb[0].mxu0
  %v2054 = vpop.f32.mrb[0].mxu0
  %v2055 = vadd.f32 %v1958, %v2054
  %v2056 = vpop.f32.mrb[0].mxu0
  %2057 = vmatprep.mubr.bf16.mxu0 %v836
  %2058 = vmatmul.mubr.bf16.gmra.mrb[0].mxu0 %v835
  %v2059 = vpop.f32.mrb[0].mxu0
  %v2060 = vadd.f32 %v1963, %v2059
  %v2061 = vpop.f32.mrb[0].mxu0
  %v2062 = vpop.f32.mrb[0].mxu0
  %v2063 = vadd.f32 %v1966, %v2062
  %v2064 = vpop.f32.mrb[0].mxu0
  %2065 = vmatprep.mubr.bf16.mxu0 %v852
  %2066 = vmatmul.mubr.bf16.gmra.mrb[0].mxu0 %v851
  %v2067 = vpop.f32.mrb[0].mxu0
  %v2068 = vadd.f32 %v1971, %v2067
  %v2069 = vpop.f32.mrb[0].mxu0
  %v2070 = vpop.f32.mrb[0].mxu0
  %v2071 = vadd.f32 %v1974, %v2070
  %v2072 = vpop.f32.mrb[0].mxu0
  %2073 = vmatprep.mubr.bf16.mxu0 %v868
  %2074 = vmatmul.mubr.bf16.gmra.mrb[0].mxu0 %v867
  %v2075 = vpop.f32.mrb[0].mxu0
  %v2076 = vadd.f32 %v1979, %v2075
  %v2077 = vpop.f32.mrb[0].mxu0
  %v2078 = vpop.f32.mrb[0].mxu0
  %v2079 = vadd.f32 %v1982, %v2078
  %v2080 = vpop.f32.mrb[0].mxu0
  %2081 = vmatprep.mubr.bf16.mxu0 %v884
  %2082 = vmatmul.mubr.bf16.gmra.mrb[0].mxu0 %v883
  %v2083 = vpop.f32.mrb[0].mxu0
  %v2084 = vadd.f32 %v1987, %v2083
  %v2085 = vpop.f32.mrb[0].mxu0
  %v2086 = vpop.f32.mrb[0].mxu0
  %v2087 = vadd.f32 %v1990, %v2086
  %v2088 = vpop.f32.mrb[0].mxu0
  %2089 = vmatprep.mubr.bf16.mxu0 %v900
  %2090 = vmatmul.mubr.bf16.gmra.mrb[0].mxu0 %v899
  %v2091 = vpop.f32.mrb[0].mxu0
  %v2092 = vadd.f32 %v1995, %v2091
  %v2093 = vpop.f32.mrb[0].mxu0
  %v2094 = vpop.f32.mrb[0].mxu0
  %v2095 = vadd.f32 %v1998, %v2094
  %v2096 = vpop.f32.mrb[0].mxu0
  %2097 = vdwg.mxu0
  %2098 = vmatprep.subr.bf16.mxu0 0
  %2099 = vmatpush1.bf16.msra.mxu0 %v1599
  %2100 = vmatprep.subr.bf16.mxu0 0
  %2101 = vmatpush1.bf16.msra.mxu0 %v1600
  %2102 = vmatprep.subr.bf16.mxu0 0
  %2103 = vmatpush1.bf16.msra.mxu0 %v1601
  %2104 = vmatprep.subr.bf16.mxu0 0
  %2105 = vmatpush1.bf16.msra.mxu0 %v1602
  %2106 = vmatprep.subr.bf16.mxu0 0
  %2107 = vmatpush1.bf16.msra.mxu0 %v1603
  %2108 = vmatprep.subr.bf16.mxu0 0
  %2109 = vmatpush1.bf16.msra.mxu0 %v1604
  %2110 = vmatprep.subr.bf16.mxu0 0
  %2111 = vmatpush1.bf16.msra.mxu0 %v1605
  %2112 = vmatprep.subr.bf16.mxu0 0
  %2113 = vmatpush1.bf16.msra.mxu0 %v1606
  %2114 = vmatprep.subr.bf16.mxu0 0
  %2115 = vmatpush1.bf16.msra.mxu0 %v1607
  %2116 = vmatprep.subr.bf16.mxu0 0
  %2117 = vmatpush1.bf16.msra.mxu0 %v1608
  %2118 = vmatprep.subr.bf16.mxu0 0
  %2119 = vmatpush1.bf16.msra.mxu0 %v1609
  %2120 = vmatprep.subr.bf16.mxu0 0
  %2121 = vmatpush1.bf16.msra.mxu0 %v1610
  %2122 = vmatprep.subr.bf16.mxu0 0
  %2123 = vmatpush1.bf16.msra.mxu0 %v1611
  %2124 = vmatprep.subr.bf16.mxu0 0
  %2125 = vmatpush1.bf16.msra.mxu0 %v1612
  %2126 = vmatprep.subr.bf16.mxu0 0
  %2127 = vmatpush1.bf16.msra.mxu0 %v1613
  %2128 = vmatprep.subr.bf16.mxu0 0
  %2129 = vmatpush1.bf16.msra.mxu0 %v1614
  %2130 = vmatprep.mubr.bf16.mxu0 %v790
  %2131 = vmatmul.mubr.bf16.gmra.mrb[0].mxu0 %v789
  %v2132 = vpop.f32.mrb[0].mxu0
  %v2133 = vadd.f32 %v2036, %v2132
  %v2134 = vpop.f32.mrb[0].mxu0
  %v2135 = vpop.f32.mrb[0].mxu0
  %v2136 = vadd.f32 %v2039, %v2135
  %v2137 = vpop.f32.mrb[0].mxu0
  %2138 = vmatprep.mubr.bf16.mxu0 %v806
  %2139 = vmatmul.mubr.bf16.gmra.mrb[0].mxu0 %v805
  %v2140 = vpop.f32.mrb[0].mxu0
  %v2141 = vadd.f32 %v2044, %v2140
  %v2142 = vpop.f32.mrb[0].mxu0
  %v2143 = vpop.f32.mrb[0].mxu0
  %v2144 = vadd.f32 %v2047, %v2143
  %v2145 = vpop.f32.mrb[0].mxu0
  %2146 = vmatprep.mubr.bf16.mxu0 %v822
  %2147 = vmatmul.mubr.bf16.gmra.mrb[0].mxu0 %v821
  %v2148 = vpop.f32.mrb[0].mxu0
  %v2149 = vadd.f32 %v2052, %v2148
  %v2150 = vpop.f32.mrb[0].mxu0
  %v2151 = vpop.f32.mrb[0].mxu0
  %v2152 = vadd.f32 %v2055, %v2151
  %v2153 = vpop.f32.mrb[0].mxu0
  %2154 = vmatprep.mubr.bf16.mxu0 %v838
  %2155 = vmatmul.mubr.bf16.gmra.mrb[0].mxu0 %v837
  %v2156 = vpop.f32.mrb[0].mxu0
  %v2157 = vadd.f32 %v2060, %v2156
  %v2158 = vpop.f32.mrb[0].mxu0
  %v2159 = vpop.f32.mrb[0].mxu0
  %v2160 = vadd.f32 %v2063, %v2159
  %v2161 = vpop.f32.mrb[0].mxu0
  %2162 = vmatprep.mubr.bf16.mxu0 %v854
  %2163 = vmatmul.mubr.bf16.gmra.mrb[0].mxu0 %v853
  %v2164 = vpop.f32.mrb[0].mxu0
  %v2165 = vadd.f32 %v2068, %v2164
  %v2166 = vpop.f32.mrb[0].mxu0
  %v2167 = vpop.f32.mrb[0].mxu0
  %v2168 = vadd.f32 %v2071, %v2167
  %v2169 = vpop.f32.mrb[0].mxu0
  %2170 = vmatprep.mubr.bf16.mxu0 %v870
  %2171 = vmatmul.mubr.bf16.gmra.mrb[0].mxu0 %v869
  %v2172 = vpop.f32.mrb[0].mxu0
  %v2173 = vadd.f32 %v2076, %v2172
  %v2174 = vpop.f32.mrb[0].mxu0
  %v2175 = vpop.f32.mrb[0].mxu0
  %v2176 = vadd.f32 %v2079, %v2175
  %v2177 = vpop.f32.mrb[0].mxu0
  %2178 = vmatprep.mubr.bf16.mxu0 %v886
  %2179 = vmatmul.mubr.bf16.gmra.mrb[0].mxu0 %v885
  %v2180 = vpop.f32.mrb[0].mxu0
  %v2181 = vadd.f32 %v2084, %v2180
  %v2182 = vpop.f32.mrb[0].mxu0
  %v2183 = vpop.f32.mrb[0].mxu0
  %v2184 = vadd.f32 %v2087, %v2183
  %v2185 = vpop.f32.mrb[0].mxu0
  %2186 = vmatprep.mubr.bf16.mxu0 %v902
  %2187 = vmatmul.mubr.bf16.gmra.mrb[0].mxu0 %v901
  %v2188 = vpop.f32.mrb[0].mxu0
  %v2189 = vadd.f32 %v2092, %v2188
  %v2190 = vpop.f32.mrb[0].mxu0
  %v2191 = vpop.f32.mrb[0].mxu0
  %v2192 = vadd.f32 %v2095, %v2191
  %v2193 = vpop.f32.mrb[0].mxu0
  %2194 = vdwg.mxu0
  %2195 = vmatprep.subr.bf16.mxu0 0
  %2196 = vmatpush1.bf16.msra.mxu0 %v1615
  %2197 = vmatprep.subr.bf16.mxu0 0
  %2198 = vmatpush1.bf16.msra.mxu0 %v1616
  %2199 = vmatprep.subr.bf16.mxu0 0
  %2200 = vmatpush1.bf16.msra.mxu0 %v1617
  %2201 = vmatprep.subr.bf16.mxu0 0
  %2202 = vmatpush1.bf16.msra.mxu0 %v1618
  %2203 = vmatprep.subr.bf16.mxu0 0
  %2204 = vmatpush1.bf16.msra.mxu0 %v1619
  %2205 = vmatprep.subr.bf16.mxu0 0
  %2206 = vmatpush1.bf16.msra.mxu0 %v1620
  %2207 = vmatprep.subr.bf16.mxu0 0
  %2208 = vmatpush1.bf16.msra.mxu0 %v1621
  %2209 = vmatprep.subr.bf16.mxu0 0
  %2210 = vmatpush1.bf16.msra.mxu0 %v1622
  %2211 = vmatprep.subr.bf16.mxu0 0
  %2212 = vmatpush1.bf16.msra.mxu0 %v1623
  %2213 = vmatprep.subr.bf16.mxu0 0
  %2214 = vmatpush1.bf16.msra.mxu0 %v1624
  %2215 = vmatprep.subr.bf16.mxu0 0
  %2216 = vmatpush1.bf16.msra.mxu0 %v1625
  %2217 = vmatprep.subr.bf16.mxu0 0
  %2218 = vmatpush1.bf16.msra.mxu0 %v1626
  %2219 = vmatprep.subr.bf16.mxu0 0
  %2220 = vmatpush1.bf16.msra.mxu0 %v1627
  %2221 = vmatprep.subr.bf16.mxu0 0
  %2222 = vmatpush1.bf16.msra.mxu0 %v1628
  %2223 = vmatprep.subr.bf16.mxu0 0
  %2224 = vmatpush1.bf16.msra.mxu0 %v1629
  %2225 = vmatprep.subr.bf16.mxu0 0
  %2226 = vmatpush1.bf16.msra.mxu0 %v1630
  %2227 = vmatprep.mubr.bf16.mxu0 %v792
  %2228 = vmatmul.mubr.bf16.gmra.mrb[0].mxu0 %v791
  %v2229 = vpop.f32.mrb[0].mxu0
  %v2230 = vadd.f32 %v2133, %v2229
  %v2231 = vpop.f32.mrb[0].mxu0
  %v2232 = vpop.f32.mrb[0].mxu0
  %v2233 = vadd.f32 %v2136, %v2232
  %v2234 = vpop.f32.mrb[0].mxu0
  %2235 = vmatprep.mubr.bf16.mxu0 %v808
  %2236 = vmatmul.mubr.bf16.gmra.mrb[0].mxu0 %v807
  %v2237 = vpop.f32.mrb[0].mxu0
  %v2238 = vadd.f32 %v2141, %v2237
  %v2239 = vpop.f32.mrb[0].mxu0
  %v2240 = vpop.f32.mrb[0].mxu0
  %v2241 = vadd.f32 %v2144, %v2240
  %v2242 = vpop.f32.mrb[0].mxu0
  %2243 = vmatprep.mubr.bf16.mxu0 %v824
  %2244 = vmatmul.mubr.bf16.gmra.mrb[0].mxu0 %v823
  %v2245 = vpop.f32.mrb[0].mxu0
  %v2246 = vadd.f32 %v2149, %v2245
  %v2247 = vpop.f32.mrb[0].mxu0
  %v2248 = vpop.f32.mrb[0].mxu0
  %v2249 = vadd.f32 %v2152, %v2248
  %v2250 = vpop.f32.mrb[0].mxu0
  %2251 = vmatprep.mubr.bf16.mxu0 %v840
  %2252 = vmatmul.mubr.bf16.gmra.mrb[0].mxu0 %v839
  %v2253 = vpop.f32.mrb[0].mxu0
  %v2254 = vadd.f32 %v2157, %v2253
  %v2255 = vpop.f32.mrb[0].mxu0
  %v2256 = vpop.f32.mrb[0].mxu0
  %v2257 = vadd.f32 %v2160, %v2256
  %v2258 = vpop.f32.mrb[0].mxu0
  %2259 = vmatprep.mubr.bf16.mxu0 %v856
  %2260 = vmatmul.mubr.bf16.gmra.mrb[0].mxu0 %v855
  %v2261 = vpop.f32.mrb[0].mxu0
  %v2262 = vadd.f32 %v2165, %v2261
  %v2263 = vpop.f32.mrb[0].mxu0
  %v2264 = vpop.f32.mrb[0].mxu0
  %v2265 = vadd.f32 %v2168, %v2264
  %v2266 = vpop.f32.mrb[0].mxu0
  %2267 = vmatprep.mubr.bf16.mxu0 %v872
  %2268 = vmatmul.mubr.bf16.gmra.mrb[0].mxu0 %v871
  %v2269 = vpop.f32.mrb[0].mxu0
  %v2270 = vadd.f32 %v2173, %v2269
  %v2271 = vpop.f32.mrb[0].mxu0
  %v2272 = vpop.f32.mrb[0].mxu0
  %v2273 = vadd.f32 %v2176, %v2272
  %v2274 = vpop.f32.mrb[0].mxu0
  %2275 = vmatprep.mubr.bf16.mxu0 %v888
  %2276 = vmatmul.mubr.bf16.gmra.mrb[0].mxu0 %v887
  %v2277 = vpop.f32.mrb[0].mxu0
  %v2278 = vadd.f32 %v2181, %v2277
  %v2279 = vpop.f32.mrb[0].mxu0
  %v2280 = vpop.f32.mrb[0].mxu0
  %v2281 = vadd.f32 %v2184, %v2280
  %v2282 = vpop.f32.mrb[0].mxu0
  %2283 = vmatprep.mubr.bf16.mxu0 %v904
  %2284 = vmatmul.mubr.bf16.gmra.mrb[0].mxu0 %v903
  %v2285 = vpop.f32.mrb[0].mxu0
  %v2286 = vadd.f32 %v2189, %v2285
  %v2287 = vpop.f32.mrb[0].mxu0
  %v2288 = vpop.f32.mrb[0].mxu0
  %v2289 = vadd.f32 %v2192, %v2288
  %v2290 = vpop.f32.mrb[0].mxu0
  %2291 = vdwg.mxu0
  %2292 = vmatprep.subr.bf16.mxu0 0
  %2293 = vmatpush1.bf16.msra.mxu0 %v1631
  %2294 = vmatprep.subr.bf16.mxu0 0
  %2295 = vmatpush1.bf16.msra.mxu0 %v1632
  %2296 = vmatprep.subr.bf16.mxu0 0
  %2297 = vmatpush1.bf16.msra.mxu0 %v1633
  %2298 = vmatprep.subr.bf16.mxu0 0
  %2299 = vmatpush1.bf16.msra.mxu0 %v1634
  %2300 = vmatprep.subr.bf16.mxu0 0
  %2301 = vmatpush1.bf16.msra.mxu0 %v1635
  %2302 = vmatprep.subr.bf16.mxu0 0
  %2303 = vmatpush1.bf16.msra.mxu0 %v1636
  %2304 = vmatprep.subr.bf16.mxu0 0
  %2305 = vmatpush1.bf16.msra.mxu0 %v1637
  %2306 = vmatprep.subr.bf16.mxu0 0
  %2307 = vmatpush1.bf16.msra.mxu0 %v1638
  %2308 = vmatprep.subr.bf16.mxu0 0
  %2309 = vmatpush1.bf16.msra.mxu0 %v1639
  %2310 = vmatprep.subr.bf16.mxu0 0
  %2311 = vmatpush1.bf16.msra.mxu0 %v1640
  %2312 = vmatprep.subr.bf16.mxu0 0
  %2313 = vmatpush1.bf16.msra.mxu0 %v1641
  %2314 = vmatprep.subr.bf16.mxu0 0
  %2315 = vmatpush1.bf16.msra.mxu0 %v1642
  %2316 = vmatprep.subr.bf16.mxu0 0
  %2317 = vmatpush1.bf16.msra.mxu0 %v1643
  %2318 = vmatprep.subr.bf16.mxu0 0
  %2319 = vmatpush1.bf16.msra.mxu0 %v1644
  %2320 = vmatprep.subr.bf16.mxu0 0
  %2321 = vmatpush1.bf16.msra.mxu0 %v1645
  %2322 = vmatprep.subr.bf16.mxu0 0
  %2323 = vmatpush1.bf16.msra.mxu0 %v1646
  %2324 = vmatprep.mubr.bf16.mxu0 %v794
  %2325 = vmatmul.mubr.bf16.gmra.mrb[0].mxu0 %v793
  %v2326 = vpop.f32.mrb[0].mxu0
  %v2327 = vadd.f32 %v2230, %v2326
  %v2328 = vpop.f32.mrb[0].mxu0
  %v2329 = vpop.f32.mrb[0].mxu0
  %v2330 = vadd.f32 %v2233, %v2329
  %v2331 = vpop.f32.mrb[0].mxu0
  %2332 = vmatprep.mubr.bf16.mxu0 %v810
  %2333 = vmatmul.mubr.bf16.gmra.mrb[0].mxu0 %v809
  %v2334 = vpop.f32.mrb[0].mxu0
  %v2335 = vadd.f32 %v2238, %v2334
  %v2336 = vpop.f32.mrb[0].mxu0
  %v2337 = vpop.f32.mrb[0].mxu0
  %v2338 = vadd.f32 %v2241, %v2337
  %v2339 = vpop.f32.mrb[0].mxu0
  %2340 = vmatprep.mubr.bf16.mxu0 %v826
  %2341 = vmatmul.mubr.bf16.gmra.mrb[0].mxu0 %v825
  %v2342 = vpop.f32.mrb[0].mxu0
  %v2343 = vadd.f32 %v2246, %v2342
  %v2344 = vpop.f32.mrb[0].mxu0
  %v2345 = vpop.f32.mrb[0].mxu0
  %v2346 = vadd.f32 %v2249, %v2345
  %v2347 = vpop.f32.mrb[0].mxu0
  %2348 = vmatprep.mubr.bf16.mxu0 %v842
  %2349 = vmatmul.mubr.bf16.gmra.mrb[0].mxu0 %v841
  %v2350 = vpop.f32.mrb[0].mxu0
  %v2351 = vadd.f32 %v2254, %v2350
  %v2352 = vpop.f32.mrb[0].mxu0
  %v2353 = vpop.f32.mrb[0].mxu0
  %v2354 = vadd.f32 %v2257, %v2353
  %v2355 = vpop.f32.mrb[0].mxu0
  %2356 = vmatprep.mubr.bf16.mxu0 %v858
  %2357 = vmatmul.mubr.bf16.gmra.mrb[0].mxu0 %v857
  %v2358 = vpop.f32.mrb[0].mxu0
  %v2359 = vadd.f32 %v2262, %v2358
  %v2360 = vpop.f32.mrb[0].mxu0
  %v2361 = vpop.f32.mrb[0].mxu0
  %v2362 = vadd.f32 %v2265, %v2361
  %v2363 = vpop.f32.mrb[0].mxu0
  %2364 = vmatprep.mubr.bf16.mxu0 %v874
  %2365 = vmatmul.mubr.bf16.gmra.mrb[0].mxu0 %v873
  %v2366 = vpop.f32.mrb[0].mxu0
  %v2367 = vadd.f32 %v2270, %v2366
  %v2368 = vpop.f32.mrb[0].mxu0
  %v2369 = vpop.f32.mrb[0].mxu0
  %v2370 = vadd.f32 %v2273, %v2369
  %v2371 = vpop.f32.mrb[0].mxu0
  %2372 = vmatprep.mubr.bf16.mxu0 %v890
  %2373 = vmatmul.mubr.bf16.gmra.mrb[0].mxu0 %v889
  %v2374 = vpop.f32.mrb[0].mxu0
  %v2375 = vadd.f32 %v2278, %v2374
  %v2376 = vpop.f32.mrb[0].mxu0
  %v2377 = vpop.f32.mrb[0].mxu0
  %v2378 = vadd.f32 %v2281, %v2377
  %v2379 = vpop.f32.mrb[0].mxu0
  %2380 = vmatprep.mubr.bf16.mxu0 %v906
  %2381 = vmatmul.mubr.bf16.gmra.mrb[0].mxu0 %v905
  %v2382 = vpop.f32.mrb[0].mxu0
  %v2383 = vadd.f32 %v2286, %v2382
  %v2384 = vpop.f32.mrb[0].mxu0
  %v2385 = vpop.f32.mrb[0].mxu0
  %v2386 = vadd.f32 %v2289, %v2385
  %v2387 = vpop.f32.mrb[0].mxu0
  %2388 = vdwg.mxu0
  %2389 = vmatprep.subr.bf16.mxu0 0
  %2390 = vmatpush1.bf16.msra.mxu0 %v1647
  %2391 = vmatprep.subr.bf16.mxu0 0
  %2392 = vmatpush1.bf16.msra.mxu0 %v1648
  %2393 = vmatprep.subr.bf16.mxu0 0
  %2394 = vmatpush1.bf16.msra.mxu0 %v1649
  %2395 = vmatprep.subr.bf16.mxu0 0
  %2396 = vmatpush1.bf16.msra.mxu0 %v1650
  %2397 = vmatprep.subr.bf16.mxu0 0
  %2398 = vmatpush1.bf16.msra.mxu0 %v1651
  %2399 = vmatprep.subr.bf16.mxu0 0
  %2400 = vmatpush1.bf16.msra.mxu0 %v1652
  %2401 = vmatprep.subr.bf16.mxu0 0
  %2402 = vmatpush1.bf16.msra.mxu0 %v1653
  %2403 = vmatprep.subr.bf16.mxu0 0
  %2404 = vmatpush1.bf16.msra.mxu0 %v1654
  %2405 = vmatprep.subr.bf16.mxu0 0
  %2406 = vmatpush1.bf16.msra.mxu0 %v1655
  %2407 = vmatprep.subr.bf16.mxu0 0
  %2408 = vmatpush1.bf16.msra.mxu0 %v1656
  %2409 = vmatprep.subr.bf16.mxu0 0
  %2410 = vmatpush1.bf16.msra.mxu0 %v1657
  %2411 = vmatprep.subr.bf16.mxu0 0
  %2412 = vmatpush1.bf16.msra.mxu0 %v1658
  %2413 = vmatprep.subr.bf16.mxu0 0
  %2414 = vmatpush1.bf16.msra.mxu0 %v1659
  %2415 = vmatprep.subr.bf16.mxu0 0
  %2416 = vmatpush1.bf16.msra.mxu0 %v1660
  %2417 = vmatprep.subr.bf16.mxu0 0
  %2418 = vmatpush1.bf16.msra.mxu0 %v1661
  %2419 = vmatprep.subr.bf16.mxu0 0
  %2420 = vmatpush1.bf16.msra.mxu0 %v1662
  %2421 = vmatprep.mubr.bf16.mxu0 %v796
  %2422 = vmatmul.mubr.bf16.gmra.mrb[0].mxu0 %v795
  %v2423 = vpop.f32.mrb[0].mxu0
  %v2424 = vadd.f32 %v2327, %v2423
  %v2425 = vpop.f32.mrb[0].mxu0
  %v2426 = vpop.f32.mrb[0].mxu0
  %v2427 = vadd.f32 %v2330, %v2426
  %v2428 = vpop.f32.mrb[0].mxu0
  %2429 = vmatprep.mubr.bf16.mxu0 %v812
  %2430 = vmatmul.mubr.bf16.gmra.mrb[0].mxu0 %v811
  %v2431 = vpop.f32.mrb[0].mxu0
  %v2432 = vadd.f32 %v2335, %v2431
  %v2433 = vpop.f32.mrb[0].mxu0
  %v2434 = vpop.f32.mrb[0].mxu0
  %v2435 = vadd.f32 %v2338, %v2434
  %v2436 = vpop.f32.mrb[0].mxu0
  %2437 = vmatprep.mubr.bf16.mxu0 %v828
  %2438 = vmatmul.mubr.bf16.gmra.mrb[0].mxu0 %v827
  %v2439 = vpop.f32.mrb[0].mxu0
  %v2440 = vadd.f32 %v2343, %v2439
  %v2441 = vpop.f32.mrb[0].mxu0
  %v2442 = vpop.f32.mrb[0].mxu0
  %v2443 = vadd.f32 %v2346, %v2442
  %v2444 = vpop.f32.mrb[0].mxu0
  %2445 = vmatprep.mubr.bf16.mxu0 %v844
  %2446 = vmatmul.mubr.bf16.gmra.mrb[0].mxu0 %v843
  %v2447 = vpop.f32.mrb[0].mxu0
  %v2448 = vadd.f32 %v2351, %v2447
  %v2449 = vpop.f32.mrb[0].mxu0
  %v2450 = vpop.f32.mrb[0].mxu0
  %v2451 = vadd.f32 %v2354, %v2450
  %v2452 = vpop.f32.mrb[0].mxu0
  %2453 = vmatprep.mubr.bf16.mxu0 %v860
  %2454 = vmatmul.mubr.bf16.gmra.mrb[0].mxu0 %v859
  %v2455 = vpop.f32.mrb[0].mxu0
  %v2456 = vadd.f32 %v2359, %v2455
  %v2457 = vpop.f32.mrb[0].mxu0
  %v2458 = vpop.f32.mrb[0].mxu0
  %v2459 = vadd.f32 %v2362, %v2458
  %v2460 = vpop.f32.mrb[0].mxu0
  %2461 = vmatprep.mubr.bf16.mxu0 %v876
  %2462 = vmatmul.mubr.bf16.gmra.mrb[0].mxu0 %v875
  %v2463 = vpop.f32.mrb[0].mxu0
  %v2464 = vadd.f32 %v2367, %v2463
  %v2465 = vpop.f32.mrb[0].mxu0
  %v2466 = vpop.f32.mrb[0].mxu0
  %v2467 = vadd.f32 %v2370, %v2466
  %v2468 = vpop.f32.mrb[0].mxu0
  %2469 = vmatprep.mubr.bf16.mxu0 %v892
  %2470 = vmatmul.mubr.bf16.gmra.mrb[0].mxu0 %v891
  %v2471 = vpop.f32.mrb[0].mxu0
  %v2472 = vadd.f32 %v2375, %v2471
  %v2473 = vpop.f32.mrb[0].mxu0
  %v2474 = vpop.f32.mrb[0].mxu0
  %v2475 = vadd.f32 %v2378, %v2474
  %v2476 = vpop.f32.mrb[0].mxu0
  %2477 = vmatprep.mubr.bf16.mxu0 %v908
  %2478 = vmatmul.mubr.bf16.gmra.mrb[0].mxu0 %v907
  %v2479 = vpop.f32.mrb[0].mxu0
  %v2480 = vadd.f32 %v2383, %v2479
  %v2481 = vpop.f32.mrb[0].mxu0
  %v2482 = vpop.f32.mrb[0].mxu0
  %v2483 = vadd.f32 %v2386, %v2482
  %v2484 = vpop.f32.mrb[0].mxu0
  %2485 = vdwg.mxu0
  %2486 = vmatprep.subr.bf16.mxu0 0
  %2487 = vmatpush1.bf16.msra.mxu0 %v1663
  %2488 = vmatprep.subr.bf16.mxu0 0
  %2489 = vmatpush1.bf16.msra.mxu0 %v1664
  %2490 = vmatprep.subr.bf16.mxu0 0
  %2491 = vmatpush1.bf16.msra.mxu0 %v1665
  %2492 = vmatprep.subr.bf16.mxu0 0
  %2493 = vmatpush1.bf16.msra.mxu0 %v1666
  %2494 = vmatprep.subr.bf16.mxu0 0
  %2495 = vmatpush1.bf16.msra.mxu0 %v1667
  %2496 = vmatprep.subr.bf16.mxu0 0
  %2497 = vmatpush1.bf16.msra.mxu0 %v1668
  %2498 = vmatprep.subr.bf16.mxu0 0
  %2499 = vmatpush1.bf16.msra.mxu0 %v1669
  %2500 = vmatprep.subr.bf16.mxu0 0
  %2501 = vmatpush1.bf16.msra.mxu0 %v1670
  %2502 = vmatprep.subr.bf16.mxu0 0
  %2503 = vmatpush1.bf16.msra.mxu0 %v1671
  %2504 = vmatprep.subr.bf16.mxu0 0
  %2505 = vmatpush1.bf16.msra.mxu0 %v1672
  %2506 = vmatprep.subr.bf16.mxu0 0
  %2507 = vmatpush1.bf16.msra.mxu0 %v1673
  %2508 = vmatprep.subr.bf16.mxu0 0
  %2509 = vmatpush1.bf16.msra.mxu0 %v1674
  %2510 = vmatprep.subr.bf16.mxu0 0
  %2511 = vmatpush1.bf16.msra.mxu0 %v1675
  %2512 = vmatprep.subr.bf16.mxu0 0
  %2513 = vmatpush1.bf16.msra.mxu0 %v1676
  %2514 = vmatprep.subr.bf16.mxu0 0
  %2515 = vmatpush1.bf16.msra.mxu0 %v1677
  %2516 = vmatprep.subr.bf16.mxu0 0
  %2517 = vmatpush1.bf16.msra.mxu0 %v1678
  %2518 = vmatprep.mubr.bf16.mxu0 %v798
  %2519 = vmatmul.mubr.bf16.gmra.mrb[0].mxu0 %v797
  %v2520 = vpop.f32.mrb[0].mxu0
  %v2521 = vadd.f32 %v2424, %v2520
  %v2522 = vpop.f32.mrb[0].mxu0
  %v2523 = vpop.f32.mrb[0].mxu0
  %v2524 = vadd.f32 %v2427, %v2523
  %v2525 = vpop.f32.mrb[0].mxu0
  %2526 = vmatprep.mubr.bf16.mxu0 %v814
  %2527 = vmatmul.mubr.bf16.gmra.mrb[0].mxu0 %v813
  %v2528 = vpop.f32.mrb[0].mxu0
  %v2529 = vadd.f32 %v2432, %v2528
  %v2530 = vpop.f32.mrb[0].mxu0
  %v2531 = vpop.f32.mrb[0].mxu0
  %v2532 = vadd.f32 %v2435, %v2531
  %v2533 = vpop.f32.mrb[0].mxu0
  %2534 = vmatprep.mubr.bf16.mxu0 %v830
  %2535 = vmatmul.mubr.bf16.gmra.mrb[0].mxu0 %v829
  %v2536 = vpop.f32.mrb[0].mxu0
  %v2537 = vadd.f32 %v2440, %v2536
  %v2538 = vpop.f32.mrb[0].mxu0
  %v2539 = vpop.f32.mrb[0].mxu0
  %v2540 = vadd.f32 %v2443, %v2539
  %v2541 = vpop.f32.mrb[0].mxu0
  %2542 = vmatprep.mubr.bf16.mxu0 %v846
  %2543 = vmatmul.mubr.bf16.gmra.mrb[0].mxu0 %v845
  %v2544 = vpop.f32.mrb[0].mxu0
  %v2545 = vadd.f32 %v2448, %v2544
  %v2546 = vpop.f32.mrb[0].mxu0
  %v2547 = vpop.f32.mrb[0].mxu0
  %v2548 = vadd.f32 %v2451, %v2547
  %v2549 = vpop.f32.mrb[0].mxu0
  %2550 = vmatprep.mubr.bf16.mxu0 %v862
  %2551 = vmatmul.mubr.bf16.gmra.mrb[0].mxu0 %v861
  %v2552 = vpop.f32.mrb[0].mxu0
  %v2553 = vadd.f32 %v2456, %v2552
  %v2554 = vpop.f32.mrb[0].mxu0
  %v2555 = vpop.f32.mrb[0].mxu0
  %v2556 = vadd.f32 %v2459, %v2555
  %v2557 = vpop.f32.mrb[0].mxu0
  %2558 = vmatprep.mubr.bf16.mxu0 %v878
  %2559 = vmatmul.mubr.bf16.gmra.mrb[0].mxu0 %v877
  %v2560 = vpop.f32.mrb[0].mxu0
  %v2561 = vadd.f32 %v2464, %v2560
  %v2562 = vpop.f32.mrb[0].mxu0
  %v2563 = vpop.f32.mrb[0].mxu0
  %v2564 = vadd.f32 %v2467, %v2563
  %v2565 = vpop.f32.mrb[0].mxu0
  %2566 = vmatprep.mubr.bf16.mxu0 %v894
  %2567 = vmatmul.mubr.bf16.gmra.mrb[0].mxu0 %v893
  %v2568 = vpop.f32.mrb[0].mxu0
  %v2569 = vadd.f32 %v2472, %v2568
  %v2570 = vpop.f32.mrb[0].mxu0
  %v2571 = vpop.f32.mrb[0].mxu0
  %v2572 = vadd.f32 %v2475, %v2571
  %v2573 = vpop.f32.mrb[0].mxu0
  %2574 = vmatprep.mubr.bf16.mxu0 %v910
  %2575 = vmatmul.mubr.bf16.gmra.mrb[0].mxu0 %v909
  %v2576 = vpop.f32.mrb[0].mxu0
  %v2577 = vadd.f32 %v2480, %v2576
  %v2578 = vpop.f32.mrb[0].mxu0
  %v2579 = vpop.f32.mrb[0].mxu0
  %v2580 = vadd.f32 %v2483, %v2579
  %v2581 = vpop.f32.mrb[0].mxu0
  %2582 = vdwg.mxu0
  %2583 = vst [vmem:[%s2] sm:$0xff] %v2521
  %2584 = vst [vmem:[%s2 + $0x8] sm:$0xff] %v2524
  %2585 = vst [vmem:[%s2 + $0x10] sm:$0xff] %v2529
  %2586 = vst [vmem:[%s2 + $0x18] sm:$0xff] %v2532
  %2587 = vst [vmem:[%s2 + $0x20] sm:$0xff] %v2537
  %2588 = vst [vmem:[%s2 + $0x28] sm:$0xff] %v2540
  %2589 = vst [vmem:[%s2 + $0x30] sm:$0xff] %v2545
  %2590 = vst [vmem:[%s2 + $0x38] sm:$0xff] %v2548
  %2591 = vst [vmem:[%s2 + $0x40] sm:$0xff] %v2553
  %2592 = vst [vmem:[%s2 + $0x48] sm:$0xff] %v2556
  %2593 = vst [vmem:[%s2 + $0x50] sm:$0xff] %v2561
  %2594 = vst [vmem:[%s2 + $0x58] sm:$0xff] %v2564
  %2595 = vst [vmem:[%s2 + $0x60] sm:$0xff] %v2569
  %2596 = vst [vmem:[%s2 + $0x68] sm:$0xff] %v2572
  %2597 = vst [vmem:[%s2 + $0x70] sm:$0xff] %v2577
  %2598 = vst [vmem:[%s2 + $0x78] sm:$0xff] %v2580
  %v2599 = vadd.f32 %v2521, %v2524
  %v2600 = vadd.f32 %v2599, %v2529
  %v2601 = vadd.f32 %v2600, %v2532
  %v2602 = vadd.f32 %v2601, %v2537
  %v2603 = vadd.f32 %v2602, %v2540
  %v2604 = vadd.f32 %v2603, %v2545
  %v2605 = vadd.f32 %v2604, %v2548
  %v2606 = vadd.f32 %v2605, %v2553
  %v2607 = vadd.f32 %v2606, %v2556
  %v2608 = vadd.f32 %v2607, %v2561
  %v2609 = vadd.f32 %v2608, %v2564
  %v2610 = vadd.f32 %v2609, %v2569
  %v2611 = vadd.f32 %v2610, %v2572
  %v2612 = vadd.f32 %v2611, %v2577
  %v2613 = vadd.f32 %v2612, %v2580
  %2614 = vst [vmem:[%s3] sm:$0xff] %v2613
  %v2615 = vmul.f32 %v2521, %v2521
  %v2616 = vmul.f32 %v2524, %v2524
  %v2617 = vmul.f32 %v2529, %v2529
  %v2618 = vmul.f32 %v2532, %v2532
  %v2619 = vmul.f32 %v2537, %v2537
  %v2620 = vmul.f32 %v2540, %v2540
  %v2621 = vmul.f32 %v2545, %v2545
  %v2622 = vmul.f32 %v2548, %v2548
  %v2623 = vmul.f32 %v2553, %v2553
  %v2624 = vmul.f32 %v2556, %v2556
  %v2625 = vmul.f32 %v2561, %v2561
  %v2626 = vmul.f32 %v2564, %v2564
  %v2627 = vmul.f32 %v2569, %v2569
  %v2628 = vmul.f32 %v2572, %v2572
  %v2629 = vmul.f32 %v2577, %v2577
  %v2630 = vmul.f32 %v2580, %v2580
  %v2631 = vadd.f32 %v2615, %v2616
  %v2632 = vadd.f32 %v2631, %v2617
  %v2633 = vadd.f32 %v2632, %v2618
  %v2634 = vadd.f32 %v2633, %v2619
  %v2635 = vadd.f32 %v2634, %v2620
  %v2636 = vadd.f32 %v2635, %v2621
  %v2637 = vadd.f32 %v2636, %v2622
  %v2638 = vadd.f32 %v2637, %v2623
  %v2639 = vadd.f32 %v2638, %v2624
  %v2640 = vadd.f32 %v2639, %v2625
  %v2641 = vadd.f32 %v2640, %v2626
  %v2642 = vadd.f32 %v2641, %v2627
  %v2643 = vadd.f32 %v2642, %v2628
  %v2644 = vadd.f32 %v2643, %v2629
  %v2645 = vadd.f32 %v2644, %v2630
  %2646 = vst [vmem:[%s4] sm:$0xff] %v2645
  // Predicated region
  $region10: #{generator_forward.11} parent=0 // pred_check
    _
  $region11: #{generator_forward.11} parent=0 // pred_check_branch
    %2648 = sbr.rel (0) target = $region13
  $region12: #{generator_forward.11} parent=0 // pred_region
    _
  $region13: #{generator_forward.11} parent=0 // pred_fallthru
    _
  // Predicated region
  $region14: #{generator_forward.11} parent=0 // pred_check
    _
  $region15: #{generator_forward.11} parent=0 // pred_check_branch
    %2650 = sbr.rel (0) target = $region17
  $region16: #{generator_forward.11} parent=0 // pred_region
    _
  $region17: #{generator_forward.11} parent=0 // pred_fallthru
    _
  // Predicated region
  $region18: #{generator_forward.11} parent=0 // pred_check
    _
  $region19: #{generator_forward.11} parent=0 // pred_check_branch
    %2652 = sbr.rel (0) target = $region21
  $region20: #{generator_forward.11} parent=0 // pred_region
    _
  $region21: #{generator_forward.11} parent=0 // pred_fallthru
    _
  // Predicated region
  $region22: #{generator_forward.11} parent=0 // pred_check
    _
  $region23: #{generator_forward.11} parent=0 // pred_check_branch
    %2654 = sbr.rel (0) target = $region25
  $region24: #{generator_forward.11} parent=0 // pred_region
    _
  $region25: #{generator_forward.11} parent=0 // pred_fallthru
    _
  // Predicated region
  $region26: #{generator_forward.11} parent=0 // pred_check
    _
  $region27: #{generator_forward.11} parent=0 // pred_check_branch
    %2656 = sbr.rel (0) target = $region29
  $region28: #{generator_forward.11} parent=0 // pred_region
    _
  $region29: #{generator_forward.11} parent=0 // pred_fallthru
    _
  // Predicated region
  $region30: #{generator_forward.11} parent=0 // pred_check
    _
  $region31: #{generator_forward.11} parent=0 // pred_check_branch
    %2658 = sbr.rel (0) target = $region33
  $region32: #{generator_forward.11} parent=0 // pred_region
    _
  $region33: #{generator_forward.11} parent=0 // pred_fallthru
    _

// kernel: generator_forward.14
$region0: #{generator_forward.14}
  #allocation0 [shape = 'u32[]', space=smem, size = 0x4, offset = 0x4, fixed_abs, tag = 'smem constant byte address 0x4 - core index']
  #allocation1 [shape = 'u32[144,128]{1,0:T(1,128)}', space=vmem, size = 0x12000, scoped, tag = 'internal scratch']
  %s0 = inlined_call_operand.vmem [shape: f32[512,128], index: 0, kind: input, shape index: {}]
  %s1 = inlined_call_operand.vmem [shape: f32[1,128], index: 1, kind: input, shape index: {}]
  %s2 = inlined_call_operand.vmem [shape: f32[1,128], index: 2, kind: input, shape index: {}]
  %s3 = inlined_call_operand.vmem [shape: bf16[512,128], index: 3, kind: output, shape index: {}]
  %s4 = sld [smem:[#allocation0]]
  $region22: #{generator_forward.14} parent=0
    _
  %s6 = ssub.s32 1, %s4
  %s7 = scalar_select 0, %s6, %s4
  // Predicated region
  $region2: #{generator_forward.14} parent=0 // pred_check
    _
  $region3: #{generator_forward.14} parent=0 // pred_check_branch
    %9 = sbr.rel (0) target = $region5
  $region4: #{generator_forward.14} parent=0 // pred_region
    _
  $region5: #{generator_forward.14} parent=0 // pred_fallthru
    _
  // Predicated region
  $region6: #{generator_forward.14} parent=0 // pred_check
    _
  $region7: #{generator_forward.14} parent=0 // pred_check_branch
    %11 = sbr.rel (0) target = $region9
  $region8: #{generator_forward.14} parent=0 // pred_region
    _
  $region9: #{generator_forward.14} parent=0 // pred_fallthru
    _
  // Predicated region
  $region10: #{generator_forward.14} parent=0 // pred_check
    _
  $region11: #{generator_forward.14} parent=0 // pred_check_branch
    %13 = sbr.rel (0) target = $region13
  $region12: #{generator_forward.14} parent=0 // pred_region
    _
  $region13: #{generator_forward.14} parent=0 // pred_fallthru
    _
  %v14 = vld [vmem:[%s0] sm:$0xff]
  %v15 = vld [vmem:[%s0 + $0x8] sm:$0xff]
  %v16 = vld [vmem:[%s0 + $0x10] sm:$0xff]
  %v17 = vld [vmem:[%s0 + $0x18] sm:$0xff]
  %v18 = vld [vmem:[%s0 + $0x20] sm:$0xff]
  %v19 = vld [vmem:[%s0 + $0x28] sm:$0xff]
  %v20 = vld [vmem:[%s0 + $0x30] sm:$0xff]
  %v21 = vld [vmem:[%s0 + $0x38] sm:$0xff]
  %v22 = vld [vmem:[%s0 + $0x40] sm:$0xff]
  %v23 = vld [vmem:[%s0 + $0x48] sm:$0xff]
  %v24 = vld [vmem:[%s0 + $0x50] sm:$0xff]
  %v25 = vld [vmem:[%s0 + $0x58] sm:$0xff]
  %v26 = vld [vmem:[%s0 + $0x60] sm:$0xff]
  %v27 = vld [vmem:[%s0 + $0x68] sm:$0xff]
  %v28 = vld [vmem:[%s0 + $0x70] sm:$0xff]
  %v29 = vld [vmem:[%s0 + $0x78] sm:$0xff]
  %v30 = vld [vmem:[%s0 + $0x80] sm:$0xff]
  %v31 = vld [vmem:[%s0 + $0x88] sm:$0xff]
  %v32 = vld [vmem:[%s0 + $0x90] sm:$0xff]
  %v33 = vld [vmem:[%s0 + $0x98] sm:$0xff]
  %v34 = vld [vmem:[%s0 + $0xa0] sm:$0xff]
  %v35 = vld [vmem:[%s0 + $0xa8] sm:$0xff]
  %v36 = vld [vmem:[%s0 + $0xb0] sm:$0xff]
  %v37 = vld [vmem:[%s0 + $0xb8] sm:$0xff]
  %v38 = vld [vmem:[%s0 + $0xc0] sm:$0xff]
  %v39 = vld [vmem:[%s0 + $0xc8] sm:$0xff]
  %v40 = vld [vmem:[%s0 + $0xd0] sm:$0xff]
  %v41 = vld [vmem:[%s0 + $0xd8] sm:$0xff]
  %v42 = vld [vmem:[%s0 + $0xe0] sm:$0xff]
  %v43 = vld [vmem:[%s0 + $0xe8] sm:$0xff]
  %v44 = vld [vmem:[%s0 + $0xf0] sm:$0xff]
  %v45 = vld [vmem:[%s0 + $0xf8] sm:$0xff]
  %v46 = vld [vmem:[%s0 + $0x100] sm:$0xff]
  %v47 = vld [vmem:[%s0 + $0x108] sm:$0xff]
  %v48 = vld [vmem:[%s0 + $0x110] sm:$0xff]
  %v49 = vld [vmem:[%s0 + $0x118] sm:$0xff]
  %v50 = vld [vmem:[%s0 + $0x120] sm:$0xff]
  %v51 = vld [vmem:[%s0 + $0x128] sm:$0xff]
  %v52 = vld [vmem:[%s0 + $0x130] sm:$0xff]
  %v53 = vld [vmem:[%s0 + $0x138] sm:$0xff]
  %v54 = vld [vmem:[%s0 + $0x140] sm:$0xff]
  %v55 = vld [vmem:[%s0 + $0x148] sm:$0xff]
  %v56 = vld [vmem:[%s0 + $0x150] sm:$0xff]
  %v57 = vld [vmem:[%s0 + $0x158] sm:$0xff]
  %v58 = vld [vmem:[%s0 + $0x160] sm:$0xff]
  %v59 = vld [vmem:[%s0 + $0x168] sm:$0xff]
  %v60 = vld [vmem:[%s0 + $0x170] sm:$0xff]
  %v61 = vld [vmem:[%s0 + $0x178] sm:$0xff]
  %v62 = vld [vmem:[%s0 + $0x180] sm:$0xff]
  %v63 = vld [vmem:[%s0 + $0x188] sm:$0xff]
  %v64 = vld [vmem:[%s0 + $0x190] sm:$0xff]
  %v65 = vld [vmem:[%s0 + $0x198] sm:$0xff]
  %v66 = vld [vmem:[%s0 + $0x1a0] sm:$0xff]
  %v67 = vld [vmem:[%s0 + $0x1a8] sm:$0xff]
  %v68 = vld [vmem:[%s0 + $0x1b0] sm:$0xff]
  %v69 = vld [vmem:[%s0 + $0x1b8] sm:$0xff]
  %v70 = vld [vmem:[%s0 + $0x1c0] sm:$0xff]
  %v71 = vld [vmem:[%s0 + $0x1c8] sm:$0xff]
  %v72 = vld [vmem:[%s0 + $0x1d0] sm:$0xff]
  %v73 = vld [vmem:[%s0 + $0x1d8] sm:$0xff]
  %v74 = vld [vmem:[%s0 + $0x1e0] sm:$0xff]
  %v75 = vld [vmem:[%s0 + $0x1e8] sm:$0xff]
  %v76 = vld [vmem:[%s0 + $0x1f0] sm:$0xff]
  %v77 = vld [vmem:[%s0 + $0x1f8] sm:$0xff]
  %v78 = vld [vmem:[%s1] sm:$0x1]
  %v80 = vlaneseq
  %v81 = vshrl.u32 %v80, 7
  %v82 = vsub.s32 0, %v81
  %v83 = vrot.slane %v78, %v82
  %v85 = vmul.f32 %v14, %v83
  %v86 = vmul.f32 %v15, %v83
  %v87 = vmul.f32 %v16, %v83
  %v88 = vmul.f32 %v17, %v83
  %v89 = vmul.f32 %v18, %v83
  %v90 = vmul.f32 %v19, %v83
  %v91 = vmul.f32 %v20, %v83
  %v92 = vmul.f32 %v21, %v83
  %v93 = vmul.f32 %v22, %v83
  %v94 = vmul.f32 %v23, %v83
  %v95 = vmul.f32 %v24, %v83
  %v96 = vmul.f32 %v25, %v83
  %v97 = vmul.f32 %v26, %v83
  %v98 = vmul.f32 %v27, %v83
  %v99 = vmul.f32 %v28, %v83
  %v100 = vmul.f32 %v29, %v83
  %v101 = vmul.f32 %v30, %v83
  %v102 = vmul.f32 %v31, %v83
  %v103 = vmul.f32 %v32, %v83
  %v104 = vmul.f32 %v33, %v83
  %v105 = vmul.f32 %v34, %v83
  %v106 = vmul.f32 %v35, %v83
  %v107 = vmul.f32 %v36, %v83
  %v108 = vmul.f32 %v37, %v83
  %v109 = vmul.f32 %v38, %v83
  %v110 = vmul.f32 %v39, %v83
  %v111 = vmul.f32 %v40, %v83
  %v112 = vmul.f32 %v41, %v83
  %v113 = vmul.f32 %v42, %v83
  %v114 = vmul.f32 %v43, %v83
  %v115 = vmul.f32 %v44, %v83
  %v116 = vmul.f32 %v45, %v83
  %v117 = vmul.f32 %v46, %v83
  %v118 = vmul.f32 %v47, %v83
  %v119 = vmul.f32 %v48, %v83
  %v120 = vmul.f32 %v49, %v83
  %v121 = vmul.f32 %v50, %v83
  %v122 = vmul.f32 %v51, %v83
  %v123 = vmul.f32 %v52, %v83
  %v124 = vmul.f32 %v53, %v83
  %v125 = vmul.f32 %v54, %v83
  %v126 = vmul.f32 %v55, %v83
  %v127 = vmul.f32 %v56, %v83
  %v128 = vmul.f32 %v57, %v83
  %v129 = vmul.f32 %v58, %v83
  %v130 = vmul.f32 %v59, %v83
  %v131 = vmul.f32 %v60, %v83
  %v132 = vmul.f32 %v61, %v83
  %v133 = vmul.f32 %v62, %v83
  %v134 = vmul.f32 %v63, %v83
  %v135 = vmul.f32 %v64, %v83
  %v136 = vmul.f32 %v65, %v83
  %v137 = vmul.f32 %v66, %v83
  %v138 = vmul.f32 %v67, %v83
  %v139 = vmul.f32 %v68, %v83
  %v140 = vmul.f32 %v69, %v83
  %v141 = vmul.f32 %v70, %v83
  %v142 = vmul.f32 %v71, %v83
  %v143 = vmul.f32 %v72, %v83
  %v144 = vmul.f32 %v73, %v83
  %v145 = vmul.f32 %v74, %v83
  %v146 = vmul.f32 %v75, %v83
  %v147 = vmul.f32 %v76, %v83
  %v148 = vmul.f32 %v77, %v83
  %v149 = vld [vmem:[%s2] sm:$0x1]
  %v151 = vlaneseq
  %v152 = vshrl.u32 %v151, 7
  %v153 = vsub.s32 0, %v152
  %v154 = vrot.slane %v149, %v153
  %v156 = vadd.f32 %v85, %v154
  %v157 = vadd.f32 %v86, %v154
  %v158 = vadd.f32 %v87, %v154
  %v159 = vadd.f32 %v88, %v154
  %v160 = vadd.f32 %v89, %v154
  %v161 = vadd.f32 %v90, %v154
  %v162 = vadd.f32 %v91, %v154
  %v163 = vadd.f32 %v92, %v154
  %v164 = vadd.f32 %v93, %v154
  %v165 = vadd.f32 %v94, %v154
  %v166 = vadd.f32 %v95, %v154
  %v167 = vadd.f32 %v96, %v154
  %v168 = vadd.f32 %v97, %v154
  %v169 = vadd.f32 %v98, %v154
  %v170 = vadd.f32 %v99, %v154
  %v171 = vadd.f32 %v100, %v154
  %v172 = vadd.f32 %v101, %v154
  %v173 = vadd.f32 %v102, %v154
  %v174 = vadd.f32 %v103, %v154
  %v175 = vadd.f32 %v104, %v154
  %v176 = vadd.f32 %v105, %v154
  %v177 = vadd.f32 %v106, %v154
  %v178 = vadd.f32 %v107, %v154
  %v179 = vadd.f32 %v108, %v154
  %v180 = vadd.f32 %v109, %v154
  %v181 = vadd.f32 %v110, %v154
  %v182 = vadd.f32 %v111, %v154
  %v183 = vadd.f32 %v112, %v154
  %v184 = vadd.f32 %v113, %v154
  %v185 = vadd.f32 %v114, %v154
  %v186 = vadd.f32 %v115, %v154
  %v187 = vadd.f32 %v116, %v154
  %v188 = vadd.f32 %v117, %v154
  %v189 = vadd.f32 %v118, %v154
  %v190 = vadd.f32 %v119, %v154
  %v191 = vadd.f32 %v120, %v154
  %v192 = vadd.f32 %v121, %v154
  %v193 = vadd.f32 %v122, %v154
  %v194 = vadd.f32 %v123, %v154
  %v195 = vadd.f32 %v124, %v154
  %v196 = vadd.f32 %v125, %v154
  %v197 = vadd.f32 %v126, %v154
  %v198 = vadd.f32 %v127, %v154
  %v199 = vadd.f32 %v128, %v154
  %v200 = vadd.f32 %v129, %v154
  %v201 = vadd.f32 %v130, %v154
  %v202 = vadd.f32 %v131, %v154
  %v203 = vadd.f32 %v132, %v154
  %v204 = vadd.f32 %v133, %v154
  %v205 = vadd.f32 %v134, %v154
  %v206 = vadd.f32 %v135, %v154
  %v207 = vadd.f32 %v136, %v154
  %v208 = vadd.f32 %v137, %v154
  %v209 = vadd.f32 %v138, %v154
  %v210 = vadd.f32 %v139, %v154
  %v211 = vadd.f32 %v140, %v154
  %v212 = vadd.f32 %v141, %v154
  %v213 = vadd.f32 %v142, %v154
  %v214 = vadd.f32 %v143, %v154
  %v215 = vadd.f32 %v144, %v154
  %v216 = vadd.f32 %v145, %v154
  %v217 = vadd.f32 %v146, %v154
  %v218 = vadd.f32 %v147, %v154
  %v219 = vadd.f32 %v148, %v154
  %v220 = vmax.f32 %v156, 0.0
  %v221 = vmax.f32 %v157, 0.0
  %v222 = vmax.f32 %v158, 0.0
  %v223 = vmax.f32 %v159, 0.0
  %v224 = vmax.f32 %v160, 0.0
  %v225 = vmax.f32 %v161, 0.0
  %v226 = vmax.f32 %v162, 0.0
  %v227 = vmax.f32 %v163, 0.0
  %v228 = vmax.f32 %v164, 0.0
  %v229 = vmax.f32 %v165, 0.0
  %v230 = vmax.f32 %v166, 0.0
  %v231 = vmax.f32 %v167, 0.0
  %v232 = vmax.f32 %v168, 0.0
  %v233 = vmax.f32 %v169, 0.0
  %v234 = vmax.f32 %v170, 0.0
  %v235 = vmax.f32 %v171, 0.0
  %v236 = vmax.f32 %v172, 0.0
  %v237 = vmax.f32 %v173, 0.0
  %v238 = vmax.f32 %v174, 0.0
  %v239 = vmax.f32 %v175, 0.0
  %v240 = vmax.f32 %v176, 0.0
  %v241 = vmax.f32 %v177, 0.0
  %v242 = vmax.f32 %v178, 0.0
  %v243 = vmax.f32 %v179, 0.0
  %v244 = vmax.f32 %v180, 0.0
  %v245 = vmax.f32 %v181, 0.0
  %v246 = vmax.f32 %v182, 0.0
  %v247 = vmax.f32 %v183, 0.0
  %v248 = vmax.f32 %v184, 0.0
  %v249 = vmax.f32 %v185, 0.0
  %v250 = vmax.f32 %v186, 0.0
  %v251 = vmax.f32 %v187, 0.0
  %v252 = vmax.f32 %v188, 0.0
  %v253 = vmax.f32 %v189, 0.0
  %v254 = vmax.f32 %v190, 0.0
  %v255 = vmax.f32 %v191, 0.0
  %v256 = vmax.f32 %v192, 0.0
  %v257 = vmax.f32 %v193, 0.0
  %v258 = vmax.f32 %v194, 0.0
  %v259 = vmax.f32 %v195, 0.0
  %v260 = vmax.f32 %v196, 0.0
  %v261 = vmax.f32 %v197, 0.0
  %v262 = vmax.f32 %v198, 0.0
  %v263 = vmax.f32 %v199, 0.0
  %v264 = vmax.f32 %v200, 0.0
  %v265 = vmax.f32 %v201, 0.0
  %v266 = vmax.f32 %v202, 0.0
  %v267 = vmax.f32 %v203, 0.0
  %v268 = vmax.f32 %v204, 0.0
  %v269 = vmax.f32 %v205, 0.0
  %v270 = vmax.f32 %v206, 0.0
  %v271 = vmax.f32 %v207, 0.0
  %v272 = vmax.f32 %v208, 0.0
  %v273 = vmax.f32 %v209, 0.0
  %v274 = vmax.f32 %v210, 0.0
  %v275 = vmax.f32 %v211, 0.0
  %v276 = vmax.f32 %v212, 0.0
  %v277 = vmax.f32 %v213, 0.0
  %v278 = vmax.f32 %v214, 0.0
  %v279 = vmax.f32 %v215, 0.0
  %v280 = vmax.f32 %v216, 0.0
  %v281 = vmax.f32 %v217, 0.0
  %v282 = vmax.f32 %v218, 0.0
  %v283 = vmax.f32 %v219, 0.0
  %v284 = vpack.c.bf16 %v221, %v220
  %v285 = vpack.c.bf16 %v223, %v222
  %v286 = vpack.c.bf16 %v225, %v224
  %v287 = vpack.c.bf16 %v227, %v226
  %v288 = vpack.c.bf16 %v229, %v228
  %v289 = vpack.c.bf16 %v231, %v230
  %v290 = vpack.c.bf16 %v233, %v232
  %v291 = vpack.c.bf16 %v235, %v234
  %v292 = vpack.c.bf16 %v237, %v236
  %v293 = vpack.c.bf16 %v239, %v238
  %v294 = vpack.c.bf16 %v241, %v240
  %v295 = vpack.c.bf16 %v243, %v242
  %v296 = vpack.c.bf16 %v245, %v244
  %v297 = vpack.c.bf16 %v247, %v246
  %v298 = vpack.c.bf16 %v249, %v248
  %v299 = vpack.c.bf16 %v251, %v250
  %v300 = vpack.c.bf16 %v253, %v252
  %v301 = vpack.c.bf16 %v255, %v254
  %v302 = vpack.c.bf16 %v257, %v256
  %v303 = vpack.c.bf16 %v259, %v258
  %v304 = vpack.c.bf16 %v261, %v260
  %v305 = vpack.c.bf16 %v263, %v262
  %v306 = vpack.c.bf16 %v265, %v264
  %v307 = vpack.c.bf16 %v267, %v266
  %v308 = vpack.c.bf16 %v269, %v268
  %v309 = vpack.c.bf16 %v271, %v270
  %v310 = vpack.c.bf16 %v273, %v272
  %v311 = vpack.c.bf16 %v275, %v274
  %v312 = vpack.c.bf16 %v277, %v276
  %v313 = vpack.c.bf16 %v279, %v278
  %v314 = vpack.c.bf16 %v281, %v280
  %v315 = vpack.c.bf16 %v283, %v282
  %v348 = vunpack.c.l.b16 %v284
  %v349 = vunpack.c.h.b16 %v284
  %v350 = vunpack.c.l.b16 %v285
  %v351 = vunpack.c.h.b16 %v285
  %v352 = vunpack.c.l.b16 %v286
  %v353 = vunpack.c.h.b16 %v286
  %v354 = vunpack.c.l.b16 %v287
  %v355 = vunpack.c.h.b16 %v287
  %v356 = vunpack.c.l.b16 %v288
  %v357 = vunpack.c.h.b16 %v288
  %v358 = vunpack.c.l.b16 %v289
  %v359 = vunpack.c.h.b16 %v289
  %v360 = vunpack.c.l.b16 %v290
  %v361 = vunpack.c.h.b16 %v290
  %v362 = vunpack.c.l.b16 %v291
  %v363 = vunpack.c.h.b16 %v291
  %v364 = vunpack.c.l.b16 %v292
  %v365 = vunpack.c.h.b16 %v292
  %v366 = vunpack.c.l.b16 %v293
  %v367 = vunpack.c.h.b16 %v293
  %v368 = vunpack.c.l.b16 %v294
  %v369 = vunpack.c.h.b16 %v294
  %v370 = vunpack.c.l.b16 %v295
  %v371 = vunpack.c.h.b16 %v295
  %v372 = vunpack.c.l.b16 %v296
  %v373 = vunpack.c.h.b16 %v296
  %v374 = vunpack.c.l.b16 %v297
  %v375 = vunpack.c.h.b16 %v297
  %v376 = vunpack.c.l.b16 %v298
  %v377 = vunpack.c.h.b16 %v298
  %v378 = vunpack.c.l.b16 %v299
  %v379 = vunpack.c.h.b16 %v299
  %v380 = vunpack.c.l.b16 %v300
  %v381 = vunpack.c.h.b16 %v300
  %v382 = vunpack.c.l.b16 %v301
  %v383 = vunpack.c.h.b16 %v301
  %v384 = vunpack.c.l.b16 %v302
  %v385 = vunpack.c.h.b16 %v302
  %v386 = vunpack.c.l.b16 %v303
  %v387 = vunpack.c.h.b16 %v303
  %v388 = vunpack.c.l.b16 %v304
  %v389 = vunpack.c.h.b16 %v304
  %v390 = vunpack.c.l.b16 %v305
  %v391 = vunpack.c.h.b16 %v305
  %v392 = vunpack.c.l.b16 %v306
  %v393 = vunpack.c.h.b16 %v306
  %v394 = vunpack.c.l.b16 %v307
  %v395 = vunpack.c.h.b16 %v307
  %v396 = vunpack.c.l.b16 %v308
  %v397 = vunpack.c.h.b16 %v308
  %v398 = vunpack.c.l.b16 %v309
  %v399 = vunpack.c.h.b16 %v309
  %v400 = vunpack.c.l.b16 %v310
  %v401 = vunpack.c.h.b16 %v310
  %v402 = vunpack.c.l.b16 %v311
  %v403 = vunpack.c.h.b16 %v311
  %v404 = vunpack.c.l.b16 %v312
  %v405 = vunpack.c.h.b16 %v312
  %v406 = vunpack.c.l.b16 %v313
  %v407 = vunpack.c.h.b16 %v313
  %v408 = vunpack.c.l.b16 %v314
  %v409 = vunpack.c.h.b16 %v314
  %v410 = vunpack.c.l.b16 %v315
  %v411 = vunpack.c.h.b16 %v315
  %v412 = vpack.c.b16 %v348, %v348
  %v413 = vpack.c.b16 %v349, %v349
  %v414 = vpack.c.b16 %v350, %v350
  %v415 = vpack.c.b16 %v351, %v351
  %v416 = vpack.c.b16 %v352, %v352
  %v417 = vpack.c.b16 %v353, %v353
  %v418 = vpack.c.b16 %v354, %v354
  %v419 = vpack.c.b16 %v355, %v355
  %v420 = vpack.c.b16 %v356, %v356
  %v421 = vpack.c.b16 %v357, %v357
  %v422 = vpack.c.b16 %v358, %v358
  %v423 = vpack.c.b16 %v359, %v359
  %v424 = vpack.c.b16 %v360, %v360
  %v425 = vpack.c.b16 %v361, %v361
  %v426 = vpack.c.b16 %v362, %v362
  %v427 = vpack.c.b16 %v363, %v363
  %v428 = vpack.c.b16 %v364, %v364
  %v429 = vpack.c.b16 %v365, %v365
  %v430 = vpack.c.b16 %v366, %v366
  %v431 = vpack.c.b16 %v367, %v367
  %v432 = vpack.c.b16 %v368, %v368
  %v433 = vpack.c.b16 %v369, %v369
  %v434 = vpack.c.b16 %v370, %v370
  %v435 = vpack.c.b16 %v371, %v371
  %v436 = vpack.c.b16 %v372, %v372
  %v437 = vpack.c.b16 %v373, %v373
  %v438 = vpack.c.b16 %v374, %v374
  %v439 = vpack.c.b16 %v375, %v375
  %v440 = vpack.c.b16 %v376, %v376
  %v441 = vpack.c.b16 %v377, %v377
  %v442 = vpack.c.b16 %v378, %v378
  %v443 = vpack.c.b16 %v379, %v379
  %v444 = vpack.c.b16 %v380, %v380
  %v445 = vpack.c.b16 %v381, %v381
  %v446 = vpack.c.b16 %v382, %v382
  %v447 = vpack.c.b16 %v383, %v383
  %v448 = vpack.c.b16 %v384, %v384
  %v449 = vpack.c.b16 %v385, %v385
  %v450 = vpack.c.b16 %v386, %v386
  %v451 = vpack.c.b16 %v387, %v387
  %v452 = vpack.c.b16 %v388, %v388
  %v453 = vpack.c.b16 %v389, %v389
  %v454 = vpack.c.b16 %v390, %v390
  %v455 = vpack.c.b16 %v391, %v391
  %v456 = vpack.c.b16 %v392, %v392
  %v457 = vpack.c.b16 %v393, %v393
  %v458 = vpack.c.b16 %v394, %v394
  %v459 = vpack.c.b16 %v395, %v395
  %v460 = vpack.c.b16 %v396, %v396
  %v461 = vpack.c.b16 %v397, %v397
  %v462 = vpack.c.b16 %v398, %v398
  %v463 = vpack.c.b16 %v399, %v399
  %v464 = vpack.c.b16 %v400, %v400
  %v465 = vpack.c.b16 %v401, %v401
  %v466 = vpack.c.b16 %v402, %v402
  %v467 = vpack.c.b16 %v403, %v403
  %v468 = vpack.c.b16 %v404, %v404
  %v469 = vpack.c.b16 %v405, %v405
  %v470 = vpack.c.b16 %v406, %v406
  %v471 = vpack.c.b16 %v407, %v407
  %v472 = vpack.c.b16 %v408, %v408
  %v473 = vpack.c.b16 %v409, %v409
  %v474 = vpack.c.b16 %v410, %v410
  %v475 = vpack.c.b16 %v411, %v411
  %540 = vst [vmem:[%s3] sm:$0xf] %v412
  %541 = vst [vmem:[%s3 + $0x4] sm:$0xf] %v413
  %542 = vst [vmem:[%s3 + $0x8] sm:$0xf] %v414
  %543 = vst [vmem:[%s3 + $0xc] sm:$0xf] %v415
  %544 = vst [vmem:[%s3 + $0x10] sm:$0xf] %v416
  %545 = vst [vmem:[%s3 + $0x14] sm:$0xf] %v417
  %546 = vst [vmem:[%s3 + $0x18] sm:$0xf] %v418
  %547 = vst [vmem:[%s3 + $0x1c] sm:$0xf] %v419
  %548 = vst [vmem:[%s3 + $0x20] sm:$0xf] %v420
  %549 = vst [vmem:[%s3 + $0x24] sm:$0xf] %v421
  %550 = vst [vmem:[%s3 + $0x28] sm:$0xf] %v422
  %551 = vst [vmem:[%s3 + $0x2c] sm:$0xf] %v423
  %552 = vst [vmem:[%s3 + $0x30] sm:$0xf] %v424
  %553 = vst [vmem:[%s3 + $0x34] sm:$0xf] %v425
  %554 = vst [vmem:[%s3 + $0x38] sm:$0xf] %v426
  %555 = vst [vmem:[%s3 + $0x3c] sm:$0xf] %v427
  %556 = vst [vmem:[%s3 + $0x40] sm:$0xf] %v428
  %557 = vst [vmem:[%s3 + $0x44] sm:$0xf] %v429
  %558 = vst [vmem:[%s3 + $0x48] sm:$0xf] %v430
  %559 = vst [vmem:[%s3 + $0x4c] sm:$0xf] %v431
  %560 = vst [vmem:[%s3 + $0x50] sm:$0xf] %v432
  %561 = vst [vmem:[%s3 + $0x54] sm:$0xf] %v433
  %562 = vst [vmem:[%s3 + $0x58] sm:$0xf] %v434
  %563 = vst [vmem:[%s3 + $0x5c] sm:$0xf] %v435
  %564 = vst [vmem:[%s3 + $0x60] sm:$0xf] %v436
  %565 = vst [vmem:[%s3 + $0x64] sm:$0xf] %v437
  %566 = vst [vmem:[%s3 + $0x68] sm:$0xf] %v438
  %567 = vst [vmem:[%s3 + $0x6c] sm:$0xf] %v439
  %568 = vst [vmem:[%s3 + $0x70] sm:$0xf] %v440
  %569 = vst [vmem:[%s3 + $0x74] sm:$0xf] %v441
  %570 = vst [vmem:[%s3 + $0x78] sm:$0xf] %v442
  %571 = vst [vmem:[%s3 + $0x7c] sm:$0xf] %v443
  %572 = vst [vmem:[%s3 + $0x80] sm:$0xf] %v444
  %573 = vst [vmem:[%s3 + $0x84] sm:$0xf] %v445
  %574 = vst [vmem:[%s3 + $0x88] sm:$0xf] %v446
  %575 = vst [vmem:[%s3 + $0x8c] sm:$0xf] %v447
  %576 = vst [vmem:[%s3 + $0x90] sm:$0xf] %v448
  %577 = vst [vmem:[%s3 + $0x94] sm:$0xf] %v449
  %578 = vst [vmem:[%s3 + $0x98] sm:$0xf] %v450
  %579 = vst [vmem:[%s3 + $0x9c] sm:$0xf] %v451
  %580 = vst [vmem:[%s3 + $0xa0] sm:$0xf] %v452
  %581 = vst [vmem:[%s3 + $0xa4] sm:$0xf] %v453
  %582 = vst [vmem:[%s3 + $0xa8] sm:$0xf] %v454
  %583 = vst [vmem:[%s3 + $0xac] sm:$0xf] %v455
  %584 = vst [vmem:[%s3 + $0xb0] sm:$0xf] %v456
  %585 = vst [vmem:[%s3 + $0xb4] sm:$0xf] %v457
  %586 = vst [vmem:[%s3 + $0xb8] sm:$0xf] %v458
  %587 = vst [vmem:[%s3 + $0xbc] sm:$0xf] %v459
  %588 = vst [vmem:[%s3 + $0xc0] sm:$0xf] %v460
  %589 = vst [vmem:[%s3 + $0xc4] sm:$0xf] %v461
  %590 = vst [vmem:[%s3 + $0xc8] sm:$0xf] %v462
  %591 = vst [vmem:[%s3 + $0xcc] sm:$0xf] %v463
  %592 = vst [vmem:[%s3 + $0xd0] sm:$0xf] %v464
  %593 = vst [vmem:[%s3 + $0xd4] sm:$0xf] %v465
  %594 = vst [vmem:[%s3 + $0xd8] sm:$0xf] %v466
  %595 = vst [vmem:[%s3 + $0xdc] sm:$0xf] %v467
  %596 = vst [vmem:[%s3 + $0xe0] sm:$0xf] %v468
  %597 = vst [vmem:[%s3 + $0xe4] sm:$0xf] %v469
  %598 = vst [vmem:[%s3 + $0xe8] sm:$0xf] %v470
  %599 = vst [vmem:[%s3 + $0xec] sm:$0xf] %v471
  %600 = vst [vmem:[%s3 + $0xf0] sm:$0xf] %v472
  %601 = vst [vmem:[%s3 + $0xf4] sm:$0xf] %v473
  %602 = vst [vmem:[%s3 + $0xf8] sm:$0xf] %v474
  %603 = vst [vmem:[%s3 + $0xfc] sm:$0xf] %v475
  // Predicated region
  $region14: #{generator_forward.14} parent=0 // pred_check
    _
  $region15: #{generator_forward.14} parent=0 // pred_check_branch
    %605 = sbr.rel (0) target = $region17
  $region16: #{generator_forward.14} parent=0 // pred_region
    _
  $region17: #{generator_forward.14} parent=0 // pred_fallthru
    _
  // Predicated region
  $region18: #{generator_forward.14} parent=0 // pred_check
    _
  $region19: #{generator_forward.14} parent=0 // pred_check_branch
    %607 = sbr.rel (0) target = $region21
  $region20: #{generator_forward.14} parent=0 // pred_region
    _
  $region21: #{generator_forward.14} parent=0 // pred_fallthru
    _

// kernel: generator_forward.13
$region0: #{generator_forward.13}
  #allocation0 [shape = 'u32[]', space=smem, size = 0x4, offset = 0x4, fixed_abs, tag = 'smem constant byte address 0x4 - core index']
  #allocation1 [shape = 'u32[144,128]{1,0:T(1,128)}', space=vmem, size = 0x12000, scoped, tag = 'internal scratch']
  %s0 = inlined_call_operand.vmem [shape: bf16[512,1024], index: 0, kind: input, shape index: {}]
  %s1 = inlined_call_operand.vmem [shape: bf16[1024,128], index: 1, kind: input, shape index: {}]
  %s2 = inlined_call_operand.vmem [shape: f32[512,128], index: 2, kind: output, shape index: {0}]
  %s3 = inlined_call_operand.vmem [shape: f32[8,128], index: 3, kind: output, shape index: {1}]
  %s4 = inlined_call_operand.vmem [shape: f32[8,128], index: 4, kind: output, shape index: {2}]
  %5 = xla_tuple %s2, %s3, %s4
  %s6 = sld [smem:[#allocation0]]
  $region34: #{generator_forward.13} parent=0
    _
  %s8 = ssub.s32 1, %s6
  %s9 = scalar_select 0, %s8, %s6
  // Predicated region
  $region2: #{generator_forward.13} parent=0 // pred_check
    _
  $region3: #{generator_forward.13} parent=0 // pred_check_branch
    %11 = sbr.rel (0) target = $region5
  $region4: #{generator_forward.13} parent=0 // pred_region
    _
  $region5: #{generator_forward.13} parent=0 // pred_fallthru
    _
  // Predicated region
  $region6: #{generator_forward.13} parent=0 // pred_check
    _
  $region7: #{generator_forward.13} parent=0 // pred_check_branch
    %13 = sbr.rel (0) target = $region9
  $region8: #{generator_forward.13} parent=0 // pred_region
    _
  $region9: #{generator_forward.13} parent=0 // pred_fallthru
    _
  %v15 = vld [vmem:[%s0] sm:$0xff]
  %v16 = vld [vmem:[%s0 + $0x8] sm:$0xff]
  %v17 = vld [vmem:[%s0 + $0x10] sm:$0xff]
  %v18 = vld [vmem:[%s0 + $0x18] sm:$0xff]
  %v19 = vld [vmem:[%s0 + $0x20] sm:$0xff]
  %v20 = vld [vmem:[%s0 + $0x28] sm:$0xff]
  %v21 = vld [vmem:[%s0 + $0x30] sm:$0xff]
  %v22 = vld [vmem:[%s0 + $0x38] sm:$0xff]
  %v23 = vld [vmem:[%s0 + $0x40] sm:$0xff]
  %v24 = vld [vmem:[%s0 + $0x48] sm:$0xff]
  %v25 = vld [vmem:[%s0 + $0x50] sm:$0xff]
  %v26 = vld [vmem:[%s0 + $0x58] sm:$0xff]
  %v27 = vld [vmem:[%s0 + $0x60] sm:$0xff]
  %v28 = vld [vmem:[%s0 + $0x68] sm:$0xff]
  %v29 = vld [vmem:[%s0 + $0x70] sm:$0xff]
  %v30 = vld [vmem:[%s0 + $0x78] sm:$0xff]
  %v31 = vld [vmem:[%s0 + $0x80] sm:$0xff]
  %v32 = vld [vmem:[%s0 + $0x88] sm:$0xff]
  %v33 = vld [vmem:[%s0 + $0x90] sm:$0xff]
  %v34 = vld [vmem:[%s0 + $0x98] sm:$0xff]
  %v35 = vld [vmem:[%s0 + $0xa0] sm:$0xff]
  %v36 = vld [vmem:[%s0 + $0xa8] sm:$0xff]
  %v37 = vld [vmem:[%s0 + $0xb0] sm:$0xff]
  %v38 = vld [vmem:[%s0 + $0xb8] sm:$0xff]
  %v39 = vld [vmem:[%s0 + $0xc0] sm:$0xff]
  %v40 = vld [vmem:[%s0 + $0xc8] sm:$0xff]
  %v41 = vld [vmem:[%s0 + $0xd0] sm:$0xff]
  %v42 = vld [vmem:[%s0 + $0xd8] sm:$0xff]
  %v43 = vld [vmem:[%s0 + $0xe0] sm:$0xff]
  %v44 = vld [vmem:[%s0 + $0xe8] sm:$0xff]
  %v45 = vld [vmem:[%s0 + $0xf0] sm:$0xff]
  %v46 = vld [vmem:[%s0 + $0xf8] sm:$0xff]
  %v47 = vld [vmem:[%s0 + $0x100] sm:$0xff]
  %v48 = vld [vmem:[%s0 + $0x108] sm:$0xff]
  %v49 = vld [vmem:[%s0 + $0x110] sm:$0xff]
  %v50 = vld [vmem:[%s0 + $0x118] sm:$0xff]
  %v51 = vld [vmem:[%s0 + $0x120] sm:$0xff]
  %v52 = vld [vmem:[%s0 + $0x128] sm:$0xff]
  %v53 = vld [vmem:[%s0 + $0x130] sm:$0xff]
  %v54 = vld [vmem:[%s0 + $0x138] sm:$0xff]
  %v55 = vld [vmem:[%s0 + $0x140] sm:$0xff]
  %v56 = vld [vmem:[%s0 + $0x148] sm:$0xff]
  %v57 = vld [vmem:[%s0 + $0x150] sm:$0xff]
  %v58 = vld [vmem:[%s0 + $0x158] sm:$0xff]
  %v59 = vld [vmem:[%s0 + $0x160] sm:$0xff]
  %v60 = vld [vmem:[%s0 + $0x168] sm:$0xff]
  %v61 = vld [vmem:[%s0 + $0x170] sm:$0xff]
  %v62 = vld [vmem:[%s0 + $0x178] sm:$0xff]
  %v63 = vld [vmem:[%s0 + $0x180] sm:$0xff]
  %v64 = vld [vmem:[%s0 + $0x188] sm:$0xff]
  %v65 = vld [vmem:[%s0 + $0x190] sm:$0xff]
  %v66 = vld [vmem:[%s0 + $0x198] sm:$0xff]
  %v67 = vld [vmem:[%s0 + $0x1a0] sm:$0xff]
  %v68 = vld [vmem:[%s0 + $0x1a8] sm:$0xff]
  %v69 = vld [vmem:[%s0 + $0x1b0] sm:$0xff]
  %v70 = vld [vmem:[%s0 + $0x1b8] sm:$0xff]
  %v71 = vld [vmem:[%s0 + $0x1c0] sm:$0xff]
  %v72 = vld [vmem:[%s0 + $0x1c8] sm:$0xff]
  %v73 = vld [vmem:[%s0 + $0x1d0] sm:$0xff]
  %v74 = vld [vmem:[%s0 + $0x1d8] sm:$0xff]
  %v75 = vld [vmem:[%s0 + $0x1e0] sm:$0xff]
  %v76 = vld [vmem:[%s0 + $0x1e8] sm:$0xff]
  %v77 = vld [vmem:[%s0 + $0x1f0] sm:$0xff]
  %v78 = vld [vmem:[%s0 + $0x1f8] sm:$0xff]
  %v79 = vld [vmem:[%s0 + $0x200] sm:$0xff]
  %v80 = vld [vmem:[%s0 + $0x208] sm:$0xff]
  %v81 = vld [vmem:[%s0 + $0x210] sm:$0xff]
  %v82 = vld [vmem:[%s0 + $0x218] sm:$0xff]
  %v83 = vld [vmem:[%s0 + $0x220] sm:$0xff]
  %v84 = vld [vmem:[%s0 + $0x228] sm:$0xff]
  %v85 = vld [vmem:[%s0 + $0x230] sm:$0xff]
  %v86 = vld [vmem:[%s0 + $0x238] sm:$0xff]
  %v87 = vld [vmem:[%s0 + $0x240] sm:$0xff]
  %v88 = vld [vmem:[%s0 + $0x248] sm:$0xff]
  %v89 = vld [vmem:[%s0 + $0x250] sm:$0xff]
  %v90 = vld [vmem:[%s0 + $0x258] sm:$0xff]
  %v91 = vld [vmem:[%s0 + $0x260] sm:$0xff]
  %v92 = vld [vmem:[%s0 + $0x268] sm:$0xff]
  %v93 = vld [vmem:[%s0 + $0x270] sm:$0xff]
  %v94 = vld [vmem:[%s0 + $0x278] sm:$0xff]
  %v95 = vld [vmem:[%s0 + $0x280] sm:$0xff]
  %v96 = vld [vmem:[%s0 + $0x288] sm:$0xff]
  %v97 = vld [vmem:[%s0 + $0x290] sm:$0xff]
  %v98 = vld [vmem:[%s0 + $0x298] sm:$0xff]
  %v99 = vld [vmem:[%s0 + $0x2a0] sm:$0xff]
  %v100 = vld [vmem:[%s0 + $0x2a8] sm:$0xff]
  %v101 = vld [vmem:[%s0 + $0x2b0] sm:$0xff]
  %v102 = vld [vmem:[%s0 + $0x2b8] sm:$0xff]
  %v103 = vld [vmem:[%s0 + $0x2c0] sm:$0xff]
  %v104 = vld [vmem:[%s0 + $0x2c8] sm:$0xff]
  %v105 = vld [vmem:[%s0 + $0x2d0] sm:$0xff]
  %v106 = vld [vmem:[%s0 + $0x2d8] sm:$0xff]
  %v107 = vld [vmem:[%s0 + $0x2e0] sm:$0xff]
  %v108 = vld [vmem:[%s0 + $0x2e8] sm:$0xff]
  %v109 = vld [vmem:[%s0 + $0x2f0] sm:$0xff]
  %v110 = vld [vmem:[%s0 + $0x2f8] sm:$0xff]
  %v111 = vld [vmem:[%s0 + $0x300] sm:$0xff]
  %v112 = vld [vmem:[%s0 + $0x308] sm:$0xff]
  %v113 = vld [vmem:[%s0 + $0x310] sm:$0xff]
  %v114 = vld [vmem:[%s0 + $0x318] sm:$0xff]
  %v115 = vld [vmem:[%s0 + $0x320] sm:$0xff]
  %v116 = vld [vmem:[%s0 + $0x328] sm:$0xff]
  %v117 = vld [vmem:[%s0 + $0x330] sm:$0xff]
  %v118 = vld [vmem:[%s0 + $0x338] sm:$0xff]
  %v119 = vld [vmem:[%s0 + $0x340] sm:$0xff]
  %v120 = vld [vmem:[%s0 + $0x348] sm:$0xff]
  %v121 = vld [vmem:[%s0 + $0x350] sm:$0xff]
  %v122 = vld [vmem:[%s0 + $0x358] sm:$0xff]
  %v123 = vld [vmem:[%s0 + $0x360] sm:$0xff]
  %v124 = vld [vmem:[%s0 + $0x368] sm:$0xff]
  %v125 = vld [vmem:[%s0 + $0x370] sm:$0xff]
  %v126 = vld [vmem:[%s0 + $0x378] sm:$0xff]
  %v127 = vld [vmem:[%s0 + $0x380] sm:$0xff]
  %v128 = vld [vmem:[%s0 + $0x388] sm:$0xff]
  %v129 = vld [vmem:[%s0 + $0x390] sm:$0xff]
  %v130 = vld [vmem:[%s0 + $0x398] sm:$0xff]
  %v131 = vld [vmem:[%s0 + $0x3a0] sm:$0xff]
  %v132 = vld [vmem:[%s0 + $0x3a8] sm:$0xff]
  %v133 = vld [vmem:[%s0 + $0x3b0] sm:$0xff]
  %v134 = vld [vmem:[%s0 + $0x3b8] sm:$0xff]
  %v135 = vld [vmem:[%s0 + $0x3c0] sm:$0xff]
  %v136 = vld [vmem:[%s0 + $0x3c8] sm:$0xff]
  %v137 = vld [vmem:[%s0 + $0x3d0] sm:$0xff]
  %v138 = vld [vmem:[%s0 + $0x3d8] sm:$0xff]
  %v139 = vld [vmem:[%s0 + $0x3e0] sm:$0xff]
  %v140 = vld [vmem:[%s0 + $0x3e8] sm:$0xff]
  %v141 = vld [vmem:[%s0 + $0x3f0] sm:$0xff]
  %v142 = vld [vmem:[%s0 + $0x3f8] sm:$0xff]
  %v143 = vld [vmem:[%s0 + $0x400] sm:$0xff]
  %v144 = vld [vmem:[%s0 + $0x408] sm:$0xff]
  %v145 = vld [vmem:[%s0 + $0x410] sm:$0xff]
  %v146 = vld [vmem:[%s0 + $0x418] sm:$0xff]
  %v147 = vld [vmem:[%s0 + $0x420] sm:$0xff]
  %v148 = vld [vmem:[%s0 + $0x428] sm:$0xff]
  %v149 = vld [vmem:[%s0 + $0x430] sm:$0xff]
  %v150 = vld [vmem:[%s0 + $0x438] sm:$0xff]
  %v151 = vld [vmem:[%s0 + $0x440] sm:$0xff]
  %v152 = vld [vmem:[%s0 + $0x448] sm:$0xff]
  %v153 = vld [vmem:[%s0 + $0x450] sm:$0xff]
  %v154 = vld [vmem:[%s0 + $0x458] sm:$0xff]
  %v155 = vld [vmem:[%s0 + $0x460] sm:$0xff]
  %v156 = vld [vmem:[%s0 + $0x468] sm:$0xff]
  %v157 = vld [vmem:[%s0 + $0x470] sm:$0xff]
  %v158 = vld [vmem:[%s0 + $0x478] sm:$0xff]
  %v159 = vld [vmem:[%s0 + $0x480] sm:$0xff]
  %v160 = vld [vmem:[%s0 + $0x488] sm:$0xff]
  %v161 = vld [vmem:[%s0 + $0x490] sm:$0xff]
  %v162 = vld [vmem:[%s0 + $0x498] sm:$0xff]
  %v163 = vld [vmem:[%s0 + $0x4a0] sm:$0xff]
  %v164 = vld [vmem:[%s0 + $0x4a8] sm:$0xff]
  %v165 = vld [vmem:[%s0 + $0x4b0] sm:$0xff]
  %v166 = vld [vmem:[%s0 + $0x4b8] sm:$0xff]
  %v167 = vld [vmem:[%s0 + $0x4c0] sm:$0xff]
  %v168 = vld [vmem:[%s0 + $0x4c8] sm:$0xff]
  %v169 = vld [vmem:[%s0 + $0x4d0] sm:$0xff]
  %v170 = vld [vmem:[%s0 + $0x4d8] sm:$0xff]
  %v171 = vld [vmem:[%s0 + $0x4e0] sm:$0xff]
  %v172 = vld [vmem:[%s0 + $0x4e8] sm:$0xff]
  %v173 = vld [vmem:[%s0 + $0x4f0] sm:$0xff]
  %v174 = vld [vmem:[%s0 + $0x4f8] sm:$0xff]
  %v175 = vld [vmem:[%s0 + $0x500] sm:$0xff]
  %v176 = vld [vmem:[%s0 + $0x508] sm:$0xff]
  %v177 = vld [vmem:[%s0 + $0x510] sm:$0xff]
  %v178 = vld [vmem:[%s0 + $0x518] sm:$0xff]
  %v179 = vld [vmem:[%s0 + $0x520] sm:$0xff]
  %v180 = vld [vmem:[%s0 + $0x528] sm:$0xff]
  %v181 = vld [vmem:[%s0 + $0x530] sm:$0xff]
  %v182 = vld [vmem:[%s0 + $0x538] sm:$0xff]
  %v183 = vld [vmem:[%s0 + $0x540] sm:$0xff]
  %v184 = vld [vmem:[%s0 + $0x548] sm:$0xff]
  %v185 = vld [vmem:[%s0 + $0x550] sm:$0xff]
  %v186 = vld [vmem:[%s0 + $0x558] sm:$0xff]
  %v187 = vld [vmem:[%s0 + $0x560] sm:$0xff]
  %v188 = vld [vmem:[%s0 + $0x568] sm:$0xff]
  %v189 = vld [vmem:[%s0 + $0x570] sm:$0xff]
  %v190 = vld [vmem:[%s0 + $0x578] sm:$0xff]
  %v191 = vld [vmem:[%s0 + $0x580] sm:$0xff]
  %v192 = vld [vmem:[%s0 + $0x588] sm:$0xff]
  %v193 = vld [vmem:[%s0 + $0x590] sm:$0xff]
  %v194 = vld [vmem:[%s0 + $0x598] sm:$0xff]
  %v195 = vld [vmem:[%s0 + $0x5a0] sm:$0xff]
  %v196 = vld [vmem:[%s0 + $0x5a8] sm:$0xff]
  %v197 = vld [vmem:[%s0 + $0x5b0] sm:$0xff]
  %v198 = vld [vmem:[%s0 + $0x5b8] sm:$0xff]
  %v199 = vld [vmem:[%s0 + $0x5c0] sm:$0xff]
  %v200 = vld [vmem:[%s0 + $0x5c8] sm:$0xff]
  %v201 = vld [vmem:[%s0 + $0x5d0] sm:$0xff]
  %v202 = vld [vmem:[%s0 + $0x5d8] sm:$0xff]
  %v203 = vld [vmem:[%s0 + $0x5e0] sm:$0xff]
  %v204 = vld [vmem:[%s0 + $0x5e8] sm:$0xff]
  %v205 = vld [vmem:[%s0 + $0x5f0] sm:$0xff]
  %v206 = vld [vmem:[%s0 + $0x5f8] sm:$0xff]
  %v207 = vld [vmem:[%s0 + $0x600] sm:$0xff]
  %v208 = vld [vmem:[%s0 + $0x608] sm:$0xff]
  %v209 = vld [vmem:[%s0 + $0x610] sm:$0xff]
  %v210 = vld [vmem:[%s0 + $0x618] sm:$0xff]
  %v211 = vld [vmem:[%s0 + $0x620] sm:$0xff]
  %v212 = vld [vmem:[%s0 + $0x628] sm:$0xff]
  %v213 = vld [vmem:[%s0 + $0x630] sm:$0xff]
  %v214 = vld [vmem:[%s0 + $0x638] sm:$0xff]
  %v215 = vld [vmem:[%s0 + $0x640] sm:$0xff]
  %v216 = vld [vmem:[%s0 + $0x648] sm:$0xff]
  %v217 = vld [vmem:[%s0 + $0x650] sm:$0xff]
  %v218 = vld [vmem:[%s0 + $0x658] sm:$0xff]
  %v219 = vld [vmem:[%s0 + $0x660] sm:$0xff]
  %v220 = vld [vmem:[%s0 + $0x668] sm:$0xff]
  %v221 = vld [vmem:[%s0 + $0x670] sm:$0xff]
  %v222 = vld [vmem:[%s0 + $0x678] sm:$0xff]
  %v223 = vld [vmem:[%s0 + $0x680] sm:$0xff]
  %v224 = vld [vmem:[%s0 + $0x688] sm:$0xff]
  %v225 = vld [vmem:[%s0 + $0x690] sm:$0xff]
  %v226 = vld [vmem:[%s0 + $0x698] sm:$0xff]
  %v227 = vld [vmem:[%s0 + $0x6a0] sm:$0xff]
  %v228 = vld [vmem:[%s0 + $0x6a8] sm:$0xff]
  %v229 = vld [vmem:[%s0 + $0x6b0] sm:$0xff]
  %v230 = vld [vmem:[%s0 + $0x6b8] sm:$0xff]
  %v231 = vld [vmem:[%s0 + $0x6c0] sm:$0xff]
  %v232 = vld [vmem:[%s0 + $0x6c8] sm:$0xff]
  %v233 = vld [vmem:[%s0 + $0x6d0] sm:$0xff]
  %v234 = vld [vmem:[%s0 + $0x6d8] sm:$0xff]
  %v235 = vld [vmem:[%s0 + $0x6e0] sm:$0xff]
  %v236 = vld [vmem:[%s0 + $0x6e8] sm:$0xff]
  %v237 = vld [vmem:[%s0 + $0x6f0] sm:$0xff]
  %v238 = vld [vmem:[%s0 + $0x6f8] sm:$0xff]
  %v239 = vld [vmem:[%s0 + $0x700] sm:$0xff]
  %v240 = vld [vmem:[%s0 + $0x708] sm:$0xff]
  %v241 = vld [vmem:[%s0 + $0x710] sm:$0xff]
  %v242 = vld [vmem:[%s0 + $0x718] sm:$0xff]
  %v243 = vld [vmem:[%s0 + $0x720] sm:$0xff]
  %v244 = vld [vmem:[%s0 + $0x728] sm:$0xff]
  %v245 = vld [vmem:[%s0 + $0x730] sm:$0xff]
  %v246 = vld [vmem:[%s0 + $0x738] sm:$0xff]
  %v247 = vld [vmem:[%s0 + $0x740] sm:$0xff]
  %v248 = vld [vmem:[%s0 + $0x748] sm:$0xff]
  %v249 = vld [vmem:[%s0 + $0x750] sm:$0xff]
  %v250 = vld [vmem:[%s0 + $0x758] sm:$0xff]
  %v251 = vld [vmem:[%s0 + $0x760] sm:$0xff]
  %v252 = vld [vmem:[%s0 + $0x768] sm:$0xff]
  %v253 = vld [vmem:[%s0 + $0x770] sm:$0xff]
  %v254 = vld [vmem:[%s0 + $0x778] sm:$0xff]
  %v255 = vld [vmem:[%s0 + $0x780] sm:$0xff]
  %v256 = vld [vmem:[%s0 + $0x788] sm:$0xff]
  %v257 = vld [vmem:[%s0 + $0x790] sm:$0xff]
  %v258 = vld [vmem:[%s0 + $0x798] sm:$0xff]
  %v259 = vld [vmem:[%s0 + $0x7a0] sm:$0xff]
  %v260 = vld [vmem:[%s0 + $0x7a8] sm:$0xff]
  %v261 = vld [vmem:[%s0 + $0x7b0] sm:$0xff]
  %v262 = vld [vmem:[%s0 + $0x7b8] sm:$0xff]
  %v263 = vld [vmem:[%s0 + $0x7c0] sm:$0xff]
  %v264 = vld [vmem:[%s0 + $0x7c8] sm:$0xff]
  %v265 = vld [vmem:[%s0 + $0x7d0] sm:$0xff]
  %v266 = vld [vmem:[%s0 + $0x7d8] sm:$0xff]
  %v267 = vld [vmem:[%s0 + $0x7e0] sm:$0xff]
  %v268 = vld [vmem:[%s0 + $0x7e8] sm:$0xff]
  %v269 = vld [vmem:[%s0 + $0x7f0] sm:$0xff]
  %v270 = vld [vmem:[%s0 + $0x7f8] sm:$0xff]
  %v271 = vld [vmem:[%s1] sm:$0xf]
  %v272 = vld [vmem:[%s1 + $0x4] sm:$0xf]
  %v273 = vld [vmem:[%s1 + $0x8] sm:$0xf]
  %v274 = vld [vmem:[%s1 + $0xc] sm:$0xf]
  %v275 = vld [vmem:[%s1 + $0x10] sm:$0xf]
  %v276 = vld [vmem:[%s1 + $0x14] sm:$0xf]
  %v277 = vld [vmem:[%s1 + $0x18] sm:$0xf]
  %v278 = vld [vmem:[%s1 + $0x1c] sm:$0xf]
  %v279 = vld [vmem:[%s1 + $0x20] sm:$0xf]
  %v280 = vld [vmem:[%s1 + $0x24] sm:$0xf]
  %v281 = vld [vmem:[%s1 + $0x28] sm:$0xf]
  %v282 = vld [vmem:[%s1 + $0x2c] sm:$0xf]
  %v283 = vld [vmem:[%s1 + $0x30] sm:$0xf]
  %v284 = vld [vmem:[%s1 + $0x34] sm:$0xf]
  %v285 = vld [vmem:[%s1 + $0x38] sm:$0xf]
  %v286 = vld [vmem:[%s1 + $0x3c] sm:$0xf]
  %v287 = vld [vmem:[%s1 + $0x40] sm:$0xf]
  %v288 = vld [vmem:[%s1 + $0x44] sm:$0xf]
  %v289 = vld [vmem:[%s1 + $0x48] sm:$0xf]
  %v290 = vld [vmem:[%s1 + $0x4c] sm:$0xf]
  %v291 = vld [vmem:[%s1 + $0x50] sm:$0xf]
  %v292 = vld [vmem:[%s1 + $0x54] sm:$0xf]
  %v293 = vld [vmem:[%s1 + $0x58] sm:$0xf]
  %v294 = vld [vmem:[%s1 + $0x5c] sm:$0xf]
  %v295 = vld [vmem:[%s1 + $0x60] sm:$0xf]
  %v296 = vld [vmem:[%s1 + $0x64] sm:$0xf]
  %v297 = vld [vmem:[%s1 + $0x68] sm:$0xf]
  %v298 = vld [vmem:[%s1 + $0x6c] sm:$0xf]
  %v299 = vld [vmem:[%s1 + $0x70] sm:$0xf]
  %v300 = vld [vmem:[%s1 + $0x74] sm:$0xf]
  %v301 = vld [vmem:[%s1 + $0x78] sm:$0xf]
  %v302 = vld [vmem:[%s1 + $0x7c] sm:$0xf]
  %v303 = vld [vmem:[%s1 + $0x80] sm:$0xf]
  %v304 = vld [vmem:[%s1 + $0x84] sm:$0xf]
  %v305 = vld [vmem:[%s1 + $0x88] sm:$0xf]
  %v306 = vld [vmem:[%s1 + $0x8c] sm:$0xf]
  %v307 = vld [vmem:[%s1 + $0x90] sm:$0xf]
  %v308 = vld [vmem:[%s1 + $0x94] sm:$0xf]
  %v309 = vld [vmem:[%s1 + $0x98] sm:$0xf]
  %v310 = vld [vmem:[%s1 + $0x9c] sm:$0xf]
  %v311 = vld [vmem:[%s1 + $0xa0] sm:$0xf]
  %v312 = vld [vmem:[%s1 + $0xa4] sm:$0xf]
  %v313 = vld [vmem:[%s1 + $0xa8] sm:$0xf]
  %v314 = vld [vmem:[%s1 + $0xac] sm:$0xf]
  %v315 = vld [vmem:[%s1 + $0xb0] sm:$0xf]
  %v316 = vld [vmem:[%s1 + $0xb4] sm:$0xf]
  %v317 = vld [vmem:[%s1 + $0xb8] sm:$0xf]
  %v318 = vld [vmem:[%s1 + $0xbc] sm:$0xf]
  %v319 = vld [vmem:[%s1 + $0xc0] sm:$0xf]
  %v320 = vld [vmem:[%s1 + $0xc4] sm:$0xf]
  %v321 = vld [vmem:[%s1 + $0xc8] sm:$0xf]
  %v322 = vld [vmem:[%s1 + $0xcc] sm:$0xf]
  %v323 = vld [vmem:[%s1 + $0xd0] sm:$0xf]
  %v324 = vld [vmem:[%s1 + $0xd4] sm:$0xf]
  %v325 = vld [vmem:[%s1 + $0xd8] sm:$0xf]
  %v326 = vld [vmem:[%s1 + $0xdc] sm:$0xf]
  %v327 = vld [vmem:[%s1 + $0xe0] sm:$0xf]
  %v328 = vld [vmem:[%s1 + $0xe4] sm:$0xf]
  %v329 = vld [vmem:[%s1 + $0xe8] sm:$0xf]
  %v330 = vld [vmem:[%s1 + $0xec] sm:$0xf]
  %v331 = vld [vmem:[%s1 + $0xf0] sm:$0xf]
  %v332 = vld [vmem:[%s1 + $0xf4] sm:$0xf]
  %v333 = vld [vmem:[%s1 + $0xf8] sm:$0xf]
  %v334 = vld [vmem:[%s1 + $0xfc] sm:$0xf]
  %v335 = vld [vmem:[%s1 + $0x100] sm:$0xf]
  %v336 = vld [vmem:[%s1 + $0x104] sm:$0xf]
  %v337 = vld [vmem:[%s1 + $0x108] sm:$0xf]
  %v338 = vld [vmem:[%s1 + $0x10c] sm:$0xf]
  %v339 = vld [vmem:[%s1 + $0x110] sm:$0xf]
  %v340 = vld [vmem:[%s1 + $0x114] sm:$0xf]
  %v341 = vld [vmem:[%s1 + $0x118] sm:$0xf]
  %v342 = vld [vmem:[%s1 + $0x11c] sm:$0xf]
  %v343 = vld [vmem:[%s1 + $0x120] sm:$0xf]
  %v344 = vld [vmem:[%s1 + $0x124] sm:$0xf]
  %v345 = vld [vmem:[%s1 + $0x128] sm:$0xf]
  %v346 = vld [vmem:[%s1 + $0x12c] sm:$0xf]
  %v347 = vld [vmem:[%s1 + $0x130] sm:$0xf]
  %v348 = vld [vmem:[%s1 + $0x134] sm:$0xf]
  %v349 = vld [vmem:[%s1 + $0x138] sm:$0xf]
  %v350 = vld [vmem:[%s1 + $0x13c] sm:$0xf]
  %v351 = vld [vmem:[%s1 + $0x140] sm:$0xf]
  %v352 = vld [vmem:[%s1 + $0x144] sm:$0xf]
  %v353 = vld [vmem:[%s1 + $0x148] sm:$0xf]
  %v354 = vld [vmem:[%s1 + $0x14c] sm:$0xf]
  %v355 = vld [vmem:[%s1 + $0x150] sm:$0xf]
  %v356 = vld [vmem:[%s1 + $0x154] sm:$0xf]
  %v357 = vld [vmem:[%s1 + $0x158] sm:$0xf]
  %v358 = vld [vmem:[%s1 + $0x15c] sm:$0xf]
  %v359 = vld [vmem:[%s1 + $0x160] sm:$0xf]
  %v360 = vld [vmem:[%s1 + $0x164] sm:$0xf]
  %v361 = vld [vmem:[%s1 + $0x168] sm:$0xf]
  %v362 = vld [vmem:[%s1 + $0x16c] sm:$0xf]
  %v363 = vld [vmem:[%s1 + $0x170] sm:$0xf]
  %v364 = vld [vmem:[%s1 + $0x174] sm:$0xf]
  %v365 = vld [vmem:[%s1 + $0x178] sm:$0xf]
  %v366 = vld [vmem:[%s1 + $0x17c] sm:$0xf]
  %v367 = vld [vmem:[%s1 + $0x180] sm:$0xf]
  %v368 = vld [vmem:[%s1 + $0x184] sm:$0xf]
  %v369 = vld [vmem:[%s1 + $0x188] sm:$0xf]
  %v370 = vld [vmem:[%s1 + $0x18c] sm:$0xf]
  %v371 = vld [vmem:[%s1 + $0x190] sm:$0xf]
  %v372 = vld [vmem:[%s1 + $0x194] sm:$0xf]
  %v373 = vld [vmem:[%s1 + $0x198] sm:$0xf]
  %v374 = vld [vmem:[%s1 + $0x19c] sm:$0xf]
  %v375 = vld [vmem:[%s1 + $0x1a0] sm:$0xf]
  %v376 = vld [vmem:[%s1 + $0x1a4] sm:$0xf]
  %v377 = vld [vmem:[%s1 + $0x1a8] sm:$0xf]
  %v378 = vld [vmem:[%s1 + $0x1ac] sm:$0xf]
  %v379 = vld [vmem:[%s1 + $0x1b0] sm:$0xf]
  %v380 = vld [vmem:[%s1 + $0x1b4] sm:$0xf]
  %v381 = vld [vmem:[%s1 + $0x1b8] sm:$0xf]
  %v382 = vld [vmem:[%s1 + $0x1bc] sm:$0xf]
  %v383 = vld [vmem:[%s1 + $0x1c0] sm:$0xf]
  %v384 = vld [vmem:[%s1 + $0x1c4] sm:$0xf]
  %v385 = vld [vmem:[%s1 + $0x1c8] sm:$0xf]
  %v386 = vld [vmem:[%s1 + $0x1cc] sm:$0xf]
  %v387 = vld [vmem:[%s1 + $0x1d0] sm:$0xf]
  %v388 = vld [vmem:[%s1 + $0x1d4] sm:$0xf]
  %v389 = vld [vmem:[%s1 + $0x1d8] sm:$0xf]
  %v390 = vld [vmem:[%s1 + $0x1dc] sm:$0xf]
  %v391 = vld [vmem:[%s1 + $0x1e0] sm:$0xf]
  %v392 = vld [vmem:[%s1 + $0x1e4] sm:$0xf]
  %v393 = vld [vmem:[%s1 + $0x1e8] sm:$0xf]
  %v394 = vld [vmem:[%s1 + $0x1ec] sm:$0xf]
  %v395 = vld [vmem:[%s1 + $0x1f0] sm:$0xf]
  %v396 = vld [vmem:[%s1 + $0x1f4] sm:$0xf]
  %v397 = vld [vmem:[%s1 + $0x1f8] sm:$0xf]
  %v398 = vld [vmem:[%s1 + $0x1fc] sm:$0xf]
  %v655 = vunpack.c.l.b16 %v15
  %v656 = vunpack.c.h.b16 %v15
  %v657 = vunpack.c.l.b16 %v16
  %v658 = vunpack.c.h.b16 %v16
  %v659 = vunpack.c.l.b16 %v17
  %v660 = vunpack.c.h.b16 %v17
  %v661 = vunpack.c.l.b16 %v18
  %v662 = vunpack.c.h.b16 %v18
  %v663 = vunpack.c.l.b16 %v19
  %v664 = vunpack.c.h.b16 %v19
  %v665 = vunpack.c.l.b16 %v20
  %v666 = vunpack.c.h.b16 %v20
  %v667 = vunpack.c.l.b16 %v21
  %v668 = vunpack.c.h.b16 %v21
  %v669 = vunpack.c.l.b16 %v22
  %v670 = vunpack.c.h.b16 %v22
  %v671 = vunpack.c.l.b16 %v23
  %v672 = vunpack.c.h.b16 %v23
  %v673 = vunpack.c.l.b16 %v24
  %v674 = vunpack.c.h.b16 %v24
  %v675 = vunpack.c.l.b16 %v25
  %v676 = vunpack.c.h.b16 %v25
  %v677 = vunpack.c.l.b16 %v26
  %v678 = vunpack.c.h.b16 %v26
  %v679 = vunpack.c.l.b16 %v27
  %v680 = vunpack.c.h.b16 %v27
  %v681 = vunpack.c.l.b16 %v28
  %v682 = vunpack.c.h.b16 %v28
  %v683 = vunpack.c.l.b16 %v29
  %v684 = vunpack.c.h.b16 %v29
  %v685 = vunpack.c.l.b16 %v30
  %v686 = vunpack.c.h.b16 %v30
  %v687 = vunpack.c.l.b16 %v31
  %v688 = vunpack.c.h.b16 %v31
  %v689 = vunpack.c.l.b16 %v32
  %v690 = vunpack.c.h.b16 %v32
  %v691 = vunpack.c.l.b16 %v33
  %v692 = vunpack.c.h.b16 %v33
  %v693 = vunpack.c.l.b16 %v34
  %v694 = vunpack.c.h.b16 %v34
  %v695 = vunpack.c.l.b16 %v35
  %v696 = vunpack.c.h.b16 %v35
  %v697 = vunpack.c.l.b16 %v36
  %v698 = vunpack.c.h.b16 %v36
  %v699 = vunpack.c.l.b16 %v37
  %v700 = vunpack.c.h.b16 %v37
  %v701 = vunpack.c.l.b16 %v38
  %v702 = vunpack.c.h.b16 %v38
  %v703 = vunpack.c.l.b16 %v39
  %v704 = vunpack.c.h.b16 %v39
  %v705 = vunpack.c.l.b16 %v40
  %v706 = vunpack.c.h.b16 %v40
  %v707 = vunpack.c.l.b16 %v41
  %v708 = vunpack.c.h.b16 %v41
  %v709 = vunpack.c.l.b16 %v42
  %v710 = vunpack.c.h.b16 %v42
  %v711 = vunpack.c.l.b16 %v43
  %v712 = vunpack.c.h.b16 %v43
  %v713 = vunpack.c.l.b16 %v44
  %v714 = vunpack.c.h.b16 %v44
  %v715 = vunpack.c.l.b16 %v45
  %v716 = vunpack.c.h.b16 %v45
  %v717 = vunpack.c.l.b16 %v46
  %v718 = vunpack.c.h.b16 %v46
  %v719 = vunpack.c.l.b16 %v47
  %v720 = vunpack.c.h.b16 %v47
  %v721 = vunpack.c.l.b16 %v48
  %v722 = vunpack.c.h.b16 %v48
  %v723 = vunpack.c.l.b16 %v49
  %v724 = vunpack.c.h.b16 %v49
  %v725 = vunpack.c.l.b16 %v50
  %v726 = vunpack.c.h.b16 %v50
  %v727 = vunpack.c.l.b16 %v51
  %v728 = vunpack.c.h.b16 %v51
  %v729 = vunpack.c.l.b16 %v52
  %v730 = vunpack.c.h.b16 %v52
  %v731 = vunpack.c.l.b16 %v53
  %v732 = vunpack.c.h.b16 %v53
  %v733 = vunpack.c.l.b16 %v54
  %v734 = vunpack.c.h.b16 %v54
  %v735 = vunpack.c.l.b16 %v55
  %v736 = vunpack.c.h.b16 %v55
  %v737 = vunpack.c.l.b16 %v56
  %v738 = vunpack.c.h.b16 %v56
  %v739 = vunpack.c.l.b16 %v57
  %v740 = vunpack.c.h.b16 %v57
  %v741 = vunpack.c.l.b16 %v58
  %v742 = vunpack.c.h.b16 %v58
  %v743 = vunpack.c.l.b16 %v59
  %v744 = vunpack.c.h.b16 %v59
  %v745 = vunpack.c.l.b16 %v60
  %v746 = vunpack.c.h.b16 %v60
  %v747 = vunpack.c.l.b16 %v61
  %v748 = vunpack.c.h.b16 %v61
  %v749 = vunpack.c.l.b16 %v62
  %v750 = vunpack.c.h.b16 %v62
  %v751 = vunpack.c.l.b16 %v63
  %v752 = vunpack.c.h.b16 %v63
  %v753 = vunpack.c.l.b16 %v64
  %v754 = vunpack.c.h.b16 %v64
  %v755 = vunpack.c.l.b16 %v65
  %v756 = vunpack.c.h.b16 %v65
  %v757 = vunpack.c.l.b16 %v66
  %v758 = vunpack.c.h.b16 %v66
  %v759 = vunpack.c.l.b16 %v67
  %v760 = vunpack.c.h.b16 %v67
  %v761 = vunpack.c.l.b16 %v68
  %v762 = vunpack.c.h.b16 %v68
  %v763 = vunpack.c.l.b16 %v69
  %v764 = vunpack.c.h.b16 %v69
  %v765 = vunpack.c.l.b16 %v70
  %v766 = vunpack.c.h.b16 %v70
  %v767 = vunpack.c.l.b16 %v71
  %v768 = vunpack.c.h.b16 %v71
  %v769 = vunpack.c.l.b16 %v72
  %v770 = vunpack.c.h.b16 %v72
  %v771 = vunpack.c.l.b16 %v73
  %v772 = vunpack.c.h.b16 %v73
  %v773 = vunpack.c.l.b16 %v74
  %v774 = vunpack.c.h.b16 %v74
  %v775 = vunpack.c.l.b16 %v75
  %v776 = vunpack.c.h.b16 %v75
  %v777 = vunpack.c.l.b16 %v76
  %v778 = vunpack.c.h.b16 %v76
  %v779 = vunpack.c.l.b16 %v77
  %v780 = vunpack.c.h.b16 %v77
  %v781 = vunpack.c.l.b16 %v78
  %v782 = vunpack.c.h.b16 %v78
  %v783 = vunpack.c.l.b16 %v79
  %v784 = vunpack.c.h.b16 %v79
  %v785 = vunpack.c.l.b16 %v80
  %v786 = vunpack.c.h.b16 %v80
  %v787 = vunpack.c.l.b16 %v81
  %v788 = vunpack.c.h.b16 %v81
  %v789 = vunpack.c.l.b16 %v82
  %v790 = vunpack.c.h.b16 %v82
  %v791 = vunpack.c.l.b16 %v83
  %v792 = vunpack.c.h.b16 %v83
  %v793 = vunpack.c.l.b16 %v84
  %v794 = vunpack.c.h.b16 %v84
  %v795 = vunpack.c.l.b16 %v85
  %v796 = vunpack.c.h.b16 %v85
  %v797 = vunpack.c.l.b16 %v86
  %v798 = vunpack.c.h.b16 %v86
  %v799 = vunpack.c.l.b16 %v87
  %v800 = vunpack.c.h.b16 %v87
  %v801 = vunpack.c.l.b16 %v88
  %v802 = vunpack.c.h.b16 %v88
  %v803 = vunpack.c.l.b16 %v89
  %v804 = vunpack.c.h.b16 %v89
  %v805 = vunpack.c.l.b16 %v90
  %v806 = vunpack.c.h.b16 %v90
  %v807 = vunpack.c.l.b16 %v91
  %v808 = vunpack.c.h.b16 %v91
  %v809 = vunpack.c.l.b16 %v92
  %v810 = vunpack.c.h.b16 %v92
  %v811 = vunpack.c.l.b16 %v93
  %v812 = vunpack.c.h.b16 %v93
  %v813 = vunpack.c.l.b16 %v94
  %v814 = vunpack.c.h.b16 %v94
  %v815 = vunpack.c.l.b16 %v95
  %v816 = vunpack.c.h.b16 %v95
  %v817 = vunpack.c.l.b16 %v96
  %v818 = vunpack.c.h.b16 %v96
  %v819 = vunpack.c.l.b16 %v97
  %v820 = vunpack.c.h.b16 %v97
  %v821 = vunpack.c.l.b16 %v98
  %v822 = vunpack.c.h.b16 %v98
  %v823 = vunpack.c.l.b16 %v99
  %v824 = vunpack.c.h.b16 %v99
  %v825 = vunpack.c.l.b16 %v100
  %v826 = vunpack.c.h.b16 %v100
  %v827 = vunpack.c.l.b16 %v101
  %v828 = vunpack.c.h.b16 %v101
  %v829 = vunpack.c.l.b16 %v102
  %v830 = vunpack.c.h.b16 %v102
  %v831 = vunpack.c.l.b16 %v103
  %v832 = vunpack.c.h.b16 %v103
  %v833 = vunpack.c.l.b16 %v104
  %v834 = vunpack.c.h.b16 %v104
  %v835 = vunpack.c.l.b16 %v105
  %v836 = vunpack.c.h.b16 %v105
  %v837 = vunpack.c.l.b16 %v106
  %v838 = vunpack.c.h.b16 %v106
  %v839 = vunpack.c.l.b16 %v107
  %v840 = vunpack.c.h.b16 %v107
  %v841 = vunpack.c.l.b16 %v108
  %v842 = vunpack.c.h.b16 %v108
  %v843 = vunpack.c.l.b16 %v109
  %v844 = vunpack.c.h.b16 %v109
  %v845 = vunpack.c.l.b16 %v110
  %v846 = vunpack.c.h.b16 %v110
  %v847 = vunpack.c.l.b16 %v111
  %v848 = vunpack.c.h.b16 %v111
  %v849 = vunpack.c.l.b16 %v112
  %v850 = vunpack.c.h.b16 %v112
  %v851 = vunpack.c.l.b16 %v113
  %v852 = vunpack.c.h.b16 %v113
  %v853 = vunpack.c.l.b16 %v114
  %v854 = vunpack.c.h.b16 %v114
  %v855 = vunpack.c.l.b16 %v115
  %v856 = vunpack.c.h.b16 %v115
  %v857 = vunpack.c.l.b16 %v116
  %v858 = vunpack.c.h.b16 %v116
  %v859 = vunpack.c.l.b16 %v117
  %v860 = vunpack.c.h.b16 %v117
  %v861 = vunpack.c.l.b16 %v118
  %v862 = vunpack.c.h.b16 %v118
  %v863 = vunpack.c.l.b16 %v119
  %v864 = vunpack.c.h.b16 %v119
  %v865 = vunpack.c.l.b16 %v120
  %v866 = vunpack.c.h.b16 %v120
  %v867 = vunpack.c.l.b16 %v121
  %v868 = vunpack.c.h.b16 %v121
  %v869 = vunpack.c.l.b16 %v122
  %v870 = vunpack.c.h.b16 %v122
  %v871 = vunpack.c.l.b16 %v123
  %v872 = vunpack.c.h.b16 %v123
  %v873 = vunpack.c.l.b16 %v124
  %v874 = vunpack.c.h.b16 %v124
  %v875 = vunpack.c.l.b16 %v125
  %v876 = vunpack.c.h.b16 %v125
  %v877 = vunpack.c.l.b16 %v126
  %v878 = vunpack.c.h.b16 %v126
  %v879 = vunpack.c.l.b16 %v127
  %v880 = vunpack.c.h.b16 %v127
  %v881 = vunpack.c.l.b16 %v128
  %v882 = vunpack.c.h.b16 %v128
  %v883 = vunpack.c.l.b16 %v129
  %v884 = vunpack.c.h.b16 %v129
  %v885 = vunpack.c.l.b16 %v130
  %v886 = vunpack.c.h.b16 %v130
  %v887 = vunpack.c.l.b16 %v131
  %v888 = vunpack.c.h.b16 %v131
  %v889 = vunpack.c.l.b16 %v132
  %v890 = vunpack.c.h.b16 %v132
  %v891 = vunpack.c.l.b16 %v133
  %v892 = vunpack.c.h.b16 %v133
  %v893 = vunpack.c.l.b16 %v134
  %v894 = vunpack.c.h.b16 %v134
  %v895 = vunpack.c.l.b16 %v135
  %v896 = vunpack.c.h.b16 %v135
  %v897 = vunpack.c.l.b16 %v136
  %v898 = vunpack.c.h.b16 %v136
  %v899 = vunpack.c.l.b16 %v137
  %v900 = vunpack.c.h.b16 %v137
  %v901 = vunpack.c.l.b16 %v138
  %v902 = vunpack.c.h.b16 %v138
  %v903 = vunpack.c.l.b16 %v139
  %v904 = vunpack.c.h.b16 %v139
  %v905 = vunpack.c.l.b16 %v140
  %v906 = vunpack.c.h.b16 %v140
  %v907 = vunpack.c.l.b16 %v141
  %v908 = vunpack.c.h.b16 %v141
  %v909 = vunpack.c.l.b16 %v142
  %v910 = vunpack.c.h.b16 %v142
  %v911 = vunpack.c.l.b16 %v143
  %v912 = vunpack.c.h.b16 %v143
  %v913 = vunpack.c.l.b16 %v144
  %v914 = vunpack.c.h.b16 %v144
  %v915 = vunpack.c.l.b16 %v145
  %v916 = vunpack.c.h.b16 %v145
  %v917 = vunpack.c.l.b16 %v146
  %v918 = vunpack.c.h.b16 %v146
  %v919 = vunpack.c.l.b16 %v147
  %v920 = vunpack.c.h.b16 %v147
  %v921 = vunpack.c.l.b16 %v148
  %v922 = vunpack.c.h.b16 %v148
  %v923 = vunpack.c.l.b16 %v149
  %v924 = vunpack.c.h.b16 %v149
  %v925 = vunpack.c.l.b16 %v150
  %v926 = vunpack.c.h.b16 %v150
  %v927 = vunpack.c.l.b16 %v151
  %v928 = vunpack.c.h.b16 %v151
  %v929 = vunpack.c.l.b16 %v152
  %v930 = vunpack.c.h.b16 %v152
  %v931 = vunpack.c.l.b16 %v153
  %v932 = vunpack.c.h.b16 %v153
  %v933 = vunpack.c.l.b16 %v154
  %v934 = vunpack.c.h.b16 %v154
  %v935 = vunpack.c.l.b16 %v155
  %v936 = vunpack.c.h.b16 %v155
  %v937 = vunpack.c.l.b16 %v156
  %v938 = vunpack.c.h.b16 %v156
  %v939 = vunpack.c.l.b16 %v157
  %v940 = vunpack.c.h.b16 %v157
  %v941 = vunpack.c.l.b16 %v158
  %v942 = vunpack.c.h.b16 %v158
  %v943 = vunpack.c.l.b16 %v159
  %v944 = vunpack.c.h.b16 %v159
  %v945 = vunpack.c.l.b16 %v160
  %v946 = vunpack.c.h.b16 %v160
  %v947 = vunpack.c.l.b16 %v161
  %v948 = vunpack.c.h.b16 %v161
  %v949 = vunpack.c.l.b16 %v162
  %v950 = vunpack.c.h.b16 %v162
  %v951 = vunpack.c.l.b16 %v163
  %v952 = vunpack.c.h.b16 %v163
  %v953 = vunpack.c.l.b16 %v164
  %v954 = vunpack.c.h.b16 %v164
  %v955 = vunpack.c.l.b16 %v165
  %v956 = vunpack.c.h.b16 %v165
  %v957 = vunpack.c.l.b16 %v166
  %v958 = vunpack.c.h.b16 %v166
  %v959 = vunpack.c.l.b16 %v167
  %v960 = vunpack.c.h.b16 %v167
  %v961 = vunpack.c.l.b16 %v168
  %v962 = vunpack.c.h.b16 %v168
  %v963 = vunpack.c.l.b16 %v169
  %v964 = vunpack.c.h.b16 %v169
  %v965 = vunpack.c.l.b16 %v170
  %v966 = vunpack.c.h.b16 %v170
  %v967 = vunpack.c.l.b16 %v171
  %v968 = vunpack.c.h.b16 %v171
  %v969 = vunpack.c.l.b16 %v172
  %v970 = vunpack.c.h.b16 %v172
  %v971 = vunpack.c.l.b16 %v173
  %v972 = vunpack.c.h.b16 %v173
  %v973 = vunpack.c.l.b16 %v174
  %v974 = vunpack.c.h.b16 %v174
  %v975 = vunpack.c.l.b16 %v175
  %v976 = vunpack.c.h.b16 %v175
  %v977 = vunpack.c.l.b16 %v176
  %v978 = vunpack.c.h.b16 %v176
  %v979 = vunpack.c.l.b16 %v177
  %v980 = vunpack.c.h.b16 %v177
  %v981 = vunpack.c.l.b16 %v178
  %v982 = vunpack.c.h.b16 %v178
  %v983 = vunpack.c.l.b16 %v179
  %v984 = vunpack.c.h.b16 %v179
  %v985 = vunpack.c.l.b16 %v180
  %v986 = vunpack.c.h.b16 %v180
  %v987 = vunpack.c.l.b16 %v181
  %v988 = vunpack.c.h.b16 %v181
  %v989 = vunpack.c.l.b16 %v182
  %v990 = vunpack.c.h.b16 %v182
  %v991 = vunpack.c.l.b16 %v183
  %v992 = vunpack.c.h.b16 %v183
  %v993 = vunpack.c.l.b16 %v184
  %v994 = vunpack.c.h.b16 %v184
  %v995 = vunpack.c.l.b16 %v185
  %v996 = vunpack.c.h.b16 %v185
  %v997 = vunpack.c.l.b16 %v186
  %v998 = vunpack.c.h.b16 %v186
  %v999 = vunpack.c.l.b16 %v187
  %v1000 = vunpack.c.h.b16 %v187
  %v1001 = vunpack.c.l.b16 %v188
  %v1002 = vunpack.c.h.b16 %v188
  %v1003 = vunpack.c.l.b16 %v189
  %v1004 = vunpack.c.h.b16 %v189
  %v1005 = vunpack.c.l.b16 %v190
  %v1006 = vunpack.c.h.b16 %v190
  %v1007 = vunpack.c.l.b16 %v191
  %v1008 = vunpack.c.h.b16 %v191
  %v1009 = vunpack.c.l.b16 %v192
  %v1010 = vunpack.c.h.b16 %v192
  %v1011 = vunpack.c.l.b16 %v193
  %v1012 = vunpack.c.h.b16 %v193
  %v1013 = vunpack.c.l.b16 %v194
  %v1014 = vunpack.c.h.b16 %v194
  %v1015 = vunpack.c.l.b16 %v195
  %v1016 = vunpack.c.h.b16 %v195
  %v1017 = vunpack.c.l.b16 %v196
  %v1018 = vunpack.c.h.b16 %v196
  %v1019 = vunpack.c.l.b16 %v197
  %v1020 = vunpack.c.h.b16 %v197
  %v1021 = vunpack.c.l.b16 %v198
  %v1022 = vunpack.c.h.b16 %v198
  %v1023 = vunpack.c.l.b16 %v199
  %v1024 = vunpack.c.h.b16 %v199
  %v1025 = vunpack.c.l.b16 %v200
  %v1026 = vunpack.c.h.b16 %v200
  %v1027 = vunpack.c.l.b16 %v201
  %v1028 = vunpack.c.h.b16 %v201
  %v1029 = vunpack.c.l.b16 %v202
  %v1030 = vunpack.c.h.b16 %v202
  %v1031 = vunpack.c.l.b16 %v203
  %v1032 = vunpack.c.h.b16 %v203
  %v1033 = vunpack.c.l.b16 %v204
  %v1034 = vunpack.c.h.b16 %v204
  %v1035 = vunpack.c.l.b16 %v205
  %v1036 = vunpack.c.h.b16 %v205
  %v1037 = vunpack.c.l.b16 %v206
  %v1038 = vunpack.c.h.b16 %v206
  %v1039 = vunpack.c.l.b16 %v207
  %v1040 = vunpack.c.h.b16 %v207
  %v1041 = vunpack.c.l.b16 %v208
  %v1042 = vunpack.c.h.b16 %v208
  %v1043 = vunpack.c.l.b16 %v209
  %v1044 = vunpack.c.h.b16 %v209
  %v1045 = vunpack.c.l.b16 %v210
  %v1046 = vunpack.c.h.b16 %v210
  %v1047 = vunpack.c.l.b16 %v211
  %v1048 = vunpack.c.h.b16 %v211
  %v1049 = vunpack.c.l.b16 %v212
  %v1050 = vunpack.c.h.b16 %v212
  %v1051 = vunpack.c.l.b16 %v213
  %v1052 = vunpack.c.h.b16 %v213
  %v1053 = vunpack.c.l.b16 %v214
  %v1054 = vunpack.c.h.b16 %v214
  %v1055 = vunpack.c.l.b16 %v215
  %v1056 = vunpack.c.h.b16 %v215
  %v1057 = vunpack.c.l.b16 %v216
  %v1058 = vunpack.c.h.b16 %v216
  %v1059 = vunpack.c.l.b16 %v217
  %v1060 = vunpack.c.h.b16 %v217
  %v1061 = vunpack.c.l.b16 %v218
  %v1062 = vunpack.c.h.b16 %v218
  %v1063 = vunpack.c.l.b16 %v219
  %v1064 = vunpack.c.h.b16 %v219
  %v1065 = vunpack.c.l.b16 %v220
  %v1066 = vunpack.c.h.b16 %v220
  %v1067 = vunpack.c.l.b16 %v221
  %v1068 = vunpack.c.h.b16 %v221
  %v1069 = vunpack.c.l.b16 %v222
  %v1070 = vunpack.c.h.b16 %v222
  %v1071 = vunpack.c.l.b16 %v223
  %v1072 = vunpack.c.h.b16 %v223
  %v1073 = vunpack.c.l.b16 %v224
  %v1074 = vunpack.c.h.b16 %v224
  %v1075 = vunpack.c.l.b16 %v225
  %v1076 = vunpack.c.h.b16 %v225
  %v1077 = vunpack.c.l.b16 %v226
  %v1078 = vunpack.c.h.b16 %v226
  %v1079 = vunpack.c.l.b16 %v227
  %v1080 = vunpack.c.h.b16 %v227
  %v1081 = vunpack.c.l.b16 %v228
  %v1082 = vunpack.c.h.b16 %v228
  %v1083 = vunpack.c.l.b16 %v229
  %v1084 = vunpack.c.h.b16 %v229
  %v1085 = vunpack.c.l.b16 %v230
  %v1086 = vunpack.c.h.b16 %v230
  %v1087 = vunpack.c.l.b16 %v231
  %v1088 = vunpack.c.h.b16 %v231
  %v1089 = vunpack.c.l.b16 %v232
  %v1090 = vunpack.c.h.b16 %v232
  %v1091 = vunpack.c.l.b16 %v233
  %v1092 = vunpack.c.h.b16 %v233
  %v1093 = vunpack.c.l.b16 %v234
  %v1094 = vunpack.c.h.b16 %v234
  %v1095 = vunpack.c.l.b16 %v235
  %v1096 = vunpack.c.h.b16 %v235
  %v1097 = vunpack.c.l.b16 %v236
  %v1098 = vunpack.c.h.b16 %v236
  %v1099 = vunpack.c.l.b16 %v237
  %v1100 = vunpack.c.h.b16 %v237
  %v1101 = vunpack.c.l.b16 %v238
  %v1102 = vunpack.c.h.b16 %v238
  %v1103 = vunpack.c.l.b16 %v239
  %v1104 = vunpack.c.h.b16 %v239
  %v1105 = vunpack.c.l.b16 %v240
  %v1106 = vunpack.c.h.b16 %v240
  %v1107 = vunpack.c.l.b16 %v241
  %v1108 = vunpack.c.h.b16 %v241
  %v1109 = vunpack.c.l.b16 %v242
  %v1110 = vunpack.c.h.b16 %v242
  %v1111 = vunpack.c.l.b16 %v243
  %v1112 = vunpack.c.h.b16 %v243
  %v1113 = vunpack.c.l.b16 %v244
  %v1114 = vunpack.c.h.b16 %v244
  %v1115 = vunpack.c.l.b16 %v245
  %v1116 = vunpack.c.h.b16 %v245
  %v1117 = vunpack.c.l.b16 %v246
  %v1118 = vunpack.c.h.b16 %v246
  %v1119 = vunpack.c.l.b16 %v247
  %v1120 = vunpack.c.h.b16 %v247
  %v1121 = vunpack.c.l.b16 %v248
  %v1122 = vunpack.c.h.b16 %v248
  %v1123 = vunpack.c.l.b16 %v249
  %v1124 = vunpack.c.h.b16 %v249
  %v1125 = vunpack.c.l.b16 %v250
  %v1126 = vunpack.c.h.b16 %v250
  %v1127 = vunpack.c.l.b16 %v251
  %v1128 = vunpack.c.h.b16 %v251
  %v1129 = vunpack.c.l.b16 %v252
  %v1130 = vunpack.c.h.b16 %v252
  %v1131 = vunpack.c.l.b16 %v253
  %v1132 = vunpack.c.h.b16 %v253
  %v1133 = vunpack.c.l.b16 %v254
  %v1134 = vunpack.c.h.b16 %v254
  %v1135 = vunpack.c.l.b16 %v255
  %v1136 = vunpack.c.h.b16 %v255
  %v1137 = vunpack.c.l.b16 %v256
  %v1138 = vunpack.c.h.b16 %v256
  %v1139 = vunpack.c.l.b16 %v257
  %v1140 = vunpack.c.h.b16 %v257
  %v1141 = vunpack.c.l.b16 %v258
  %v1142 = vunpack.c.h.b16 %v258
  %v1143 = vunpack.c.l.b16 %v259
  %v1144 = vunpack.c.h.b16 %v259
  %v1145 = vunpack.c.l.b16 %v260
  %v1146 = vunpack.c.h.b16 %v260
  %v1147 = vunpack.c.l.b16 %v261
  %v1148 = vunpack.c.h.b16 %v261
  %v1149 = vunpack.c.l.b16 %v262
  %v1150 = vunpack.c.h.b16 %v262
  %v1151 = vunpack.c.l.b16 %v263
  %v1152 = vunpack.c.h.b16 %v263
  %v1153 = vunpack.c.l.b16 %v264
  %v1154 = vunpack.c.h.b16 %v264
  %v1155 = vunpack.c.l.b16 %v265
  %v1156 = vunpack.c.h.b16 %v265
  %v1157 = vunpack.c.l.b16 %v266
  %v1158 = vunpack.c.h.b16 %v266
  %v1159 = vunpack.c.l.b16 %v267
  %v1160 = vunpack.c.h.b16 %v267
  %v1161 = vunpack.c.l.b16 %v268
  %v1162 = vunpack.c.h.b16 %v268
  %v1163 = vunpack.c.l.b16 %v269
  %v1164 = vunpack.c.h.b16 %v269
  %v1165 = vunpack.c.l.b16 %v270
  %v1166 = vunpack.c.h.b16 %v270
  %v1167 = vpack.c.b16 %v663, %v655
  %v1168 = vpack.c.b16 %v664, %v656
  %v1169 = vpack.c.b16 %v665, %v657
  %v1170 = vpack.c.b16 %v666, %v658
  %v1171 = vpack.c.b16 %v667, %v659
  %v1172 = vpack.c.b16 %v668, %v660
  %v1173 = vpack.c.b16 %v669, %v661
  %v1174 = vpack.c.b16 %v670, %v662
  %v1175 = vpack.c.b16 %v679, %v671
  %v1176 = vpack.c.b16 %v680, %v672
  %v1177 = vpack.c.b16 %v681, %v673
  %v1178 = vpack.c.b16 %v682, %v674
  %v1179 = vpack.c.b16 %v683, %v675
  %v1180 = vpack.c.b16 %v684, %v676
  %v1181 = vpack.c.b16 %v685, %v677
  %v1182 = vpack.c.b16 %v686, %v678
  %v1183 = vpack.c.b16 %v695, %v687
  %v1184 = vpack.c.b16 %v696, %v688
  %v1185 = vpack.c.b16 %v697, %v689
  %v1186 = vpack.c.b16 %v698, %v690
  %v1187 = vpack.c.b16 %v699, %v691
  %v1188 = vpack.c.b16 %v700, %v692
  %v1189 = vpack.c.b16 %v701, %v693
  %v1190 = vpack.c.b16 %v702, %v694
  %v1191 = vpack.c.b16 %v711, %v703
  %v1192 = vpack.c.b16 %v712, %v704
  %v1193 = vpack.c.b16 %v713, %v705
  %v1194 = vpack.c.b16 %v714, %v706
  %v1195 = vpack.c.b16 %v715, %v707
  %v1196 = vpack.c.b16 %v716, %v708
  %v1197 = vpack.c.b16 %v717, %v709
  %v1198 = vpack.c.b16 %v718, %v710
  %v1199 = vpack.c.b16 %v727, %v719
  %v1200 = vpack.c.b16 %v728, %v720
  %v1201 = vpack.c.b16 %v729, %v721
  %v1202 = vpack.c.b16 %v730, %v722
  %v1203 = vpack.c.b16 %v731, %v723
  %v1204 = vpack.c.b16 %v732, %v724
  %v1205 = vpack.c.b16 %v733, %v725
  %v1206 = vpack.c.b16 %v734, %v726
  %v1207 = vpack.c.b16 %v743, %v735
  %v1208 = vpack.c.b16 %v744, %v736
  %v1209 = vpack.c.b16 %v745, %v737
  %v1210 = vpack.c.b16 %v746, %v738
  %v1211 = vpack.c.b16 %v747, %v739
  %v1212 = vpack.c.b16 %v748, %v740
  %v1213 = vpack.c.b16 %v749, %v741
  %v1214 = vpack.c.b16 %v750, %v742
  %v1215 = vpack.c.b16 %v759, %v751
  %v1216 = vpack.c.b16 %v760, %v752
  %v1217 = vpack.c.b16 %v761, %v753
  %v1218 = vpack.c.b16 %v762, %v754
  %v1219 = vpack.c.b16 %v763, %v755
  %v1220 = vpack.c.b16 %v764, %v756
  %v1221 = vpack.c.b16 %v765, %v757
  %v1222 = vpack.c.b16 %v766, %v758
  %v1223 = vpack.c.b16 %v775, %v767
  %v1224 = vpack.c.b16 %v776, %v768
  %v1225 = vpack.c.b16 %v777, %v769
  %v1226 = vpack.c.b16 %v778, %v770
  %v1227 = vpack.c.b16 %v779, %v771
  %v1228 = vpack.c.b16 %v780, %v772
  %v1229 = vpack.c.b16 %v781, %v773
  %v1230 = vpack.c.b16 %v782, %v774
  %v1231 = vpack.c.b16 %v791, %v783
  %v1232 = vpack.c.b16 %v792, %v784
  %v1233 = vpack.c.b16 %v793, %v785
  %v1234 = vpack.c.b16 %v794, %v786
  %v1235 = vpack.c.b16 %v795, %v787
  %v1236 = vpack.c.b16 %v796, %v788
  %v1237 = vpack.c.b16 %v797, %v789
  %v1238 = vpack.c.b16 %v798, %v790
  %v1239 = vpack.c.b16 %v807, %v799
  %v1240 = vpack.c.b16 %v808, %v800
  %v1241 = vpack.c.b16 %v809, %v801
  %v1242 = vpack.c.b16 %v810, %v802
  %v1243 = vpack.c.b16 %v811, %v803
  %v1244 = vpack.c.b16 %v812, %v804
  %v1245 = vpack.c.b16 %v813, %v805
  %v1246 = vpack.c.b16 %v814, %v806
  %v1247 = vpack.c.b16 %v823, %v815
  %v1248 = vpack.c.b16 %v824, %v816
  %v1249 = vpack.c.b16 %v825, %v817
  %v1250 = vpack.c.b16 %v826, %v818
  %v1251 = vpack.c.b16 %v827, %v819
  %v1252 = vpack.c.b16 %v828, %v820
  %v1253 = vpack.c.b16 %v829, %v821
  %v1254 = vpack.c.b16 %v830, %v822
  %v1255 = vpack.c.b16 %v839, %v831
  %v1256 = vpack.c.b16 %v840, %v832
  %v1257 = vpack.c.b16 %v841, %v833
  %v1258 = vpack.c.b16 %v842, %v834
  %v1259 = vpack.c.b16 %v843, %v835
  %v1260 = vpack.c.b16 %v844, %v836
  %v1261 = vpack.c.b16 %v845, %v837
  %v1262 = vpack.c.b16 %v846, %v838
  %v1263 = vpack.c.b16 %v855, %v847
  %v1264 = vpack.c.b16 %v856, %v848
  %v1265 = vpack.c.b16 %v857, %v849
  %v1266 = vpack.c.b16 %v858, %v850
  %v1267 = vpack.c.b16 %v859, %v851
  %v1268 = vpack.c.b16 %v860, %v852
  %v1269 = vpack.c.b16 %v861, %v853
  %v1270 = vpack.c.b16 %v862, %v854
  %v1271 = vpack.c.b16 %v871, %v863
  %v1272 = vpack.c.b16 %v872, %v864
  %v1273 = vpack.c.b16 %v873, %v865
  %v1274 = vpack.c.b16 %v874, %v866
  %v1275 = vpack.c.b16 %v875, %v867
  %v1276 = vpack.c.b16 %v876, %v868
  %v1277 = vpack.c.b16 %v877, %v869
  %v1278 = vpack.c.b16 %v878, %v870
  %v1279 = vpack.c.b16 %v887, %v879
  %v1280 = vpack.c.b16 %v888, %v880
  %v1281 = vpack.c.b16 %v889, %v881
  %v1282 = vpack.c.b16 %v890, %v882
  %v1283 = vpack.c.b16 %v891, %v883
  %v1284 = vpack.c.b16 %v892, %v884
  %v1285 = vpack.c.b16 %v893, %v885
  %v1286 = vpack.c.b16 %v894, %v886
  %v1287 = vpack.c.b16 %v903, %v895
  %v1288 = vpack.c.b16 %v904, %v896
  %v1289 = vpack.c.b16 %v905, %v897
  %v1290 = vpack.c.b16 %v906, %v898
  %v1291 = vpack.c.b16 %v907, %v899
  %v1292 = vpack.c.b16 %v908, %v900
  %v1293 = vpack.c.b16 %v909, %v901
  %v1294 = vpack.c.b16 %v910, %v902
  %v1295 = vpack.c.b16 %v919, %v911
  %v1296 = vpack.c.b16 %v920, %v912
  %v1297 = vpack.c.b16 %v921, %v913
  %v1298 = vpack.c.b16 %v922, %v914
  %v1299 = vpack.c.b16 %v923, %v915
  %v1300 = vpack.c.b16 %v924, %v916
  %v1301 = vpack.c.b16 %v925, %v917
  %v1302 = vpack.c.b16 %v926, %v918
  %v1303 = vpack.c.b16 %v935, %v927
  %v1304 = vpack.c.b16 %v936, %v928
  %v1305 = vpack.c.b16 %v937, %v929
  %v1306 = vpack.c.b16 %v938, %v930
  %v1307 = vpack.c.b16 %v939, %v931
  %v1308 = vpack.c.b16 %v940, %v932
  %v1309 = vpack.c.b16 %v941, %v933
  %v1310 = vpack.c.b16 %v942, %v934
  %v1311 = vpack.c.b16 %v951, %v943
  %v1312 = vpack.c.b16 %v952, %v944
  %v1313 = vpack.c.b16 %v953, %v945
  %v1314 = vpack.c.b16 %v954, %v946
  %v1315 = vpack.c.b16 %v955, %v947
  %v1316 = vpack.c.b16 %v956, %v948
  %v1317 = vpack.c.b16 %v957, %v949
  %v1318 = vpack.c.b16 %v958, %v950
  %v1319 = vpack.c.b16 %v967, %v959
  %v1320 = vpack.c.b16 %v968, %v960
  %v1321 = vpack.c.b16 %v969, %v961
  %v1322 = vpack.c.b16 %v970, %v962
  %v1323 = vpack.c.b16 %v971, %v963
  %v1324 = vpack.c.b16 %v972, %v964
  %v1325 = vpack.c.b16 %v973, %v965
  %v1326 = vpack.c.b16 %v974, %v966
  %v1327 = vpack.c.b16 %v983, %v975
  %v1328 = vpack.c.b16 %v984, %v976
  %v1329 = vpack.c.b16 %v985, %v977
  %v1330 = vpack.c.b16 %v986, %v978
  %v1331 = vpack.c.b16 %v987, %v979
  %v1332 = vpack.c.b16 %v988, %v980
  %v1333 = vpack.c.b16 %v989, %v981
  %v1334 = vpack.c.b16 %v990, %v982
  %v1335 = vpack.c.b16 %v999, %v991
  %v1336 = vpack.c.b16 %v1000, %v992
  %v1337 = vpack.c.b16 %v1001, %v993
  %v1338 = vpack.c.b16 %v1002, %v994
  %v1339 = vpack.c.b16 %v1003, %v995
  %v1340 = vpack.c.b16 %v1004, %v996
  %v1341 = vpack.c.b16 %v1005, %v997
  %v1342 = vpack.c.b16 %v1006, %v998
  %v1343 = vpack.c.b16 %v1015, %v1007
  %v1344 = vpack.c.b16 %v1016, %v1008
  %v1345 = vpack.c.b16 %v1017, %v1009
  %v1346 = vpack.c.b16 %v1018, %v1010
  %v1347 = vpack.c.b16 %v1019, %v1011
  %v1348 = vpack.c.b16 %v1020, %v1012
  %v1349 = vpack.c.b16 %v1021, %v1013
  %v1350 = vpack.c.b16 %v1022, %v1014
  %v1351 = vpack.c.b16 %v1031, %v1023
  %v1352 = vpack.c.b16 %v1032, %v1024
  %v1353 = vpack.c.b16 %v1033, %v1025
  %v1354 = vpack.c.b16 %v1034, %v1026
  %v1355 = vpack.c.b16 %v1035, %v1027
  %v1356 = vpack.c.b16 %v1036, %v1028
  %v1357 = vpack.c.b16 %v1037, %v1029
  %v1358 = vpack.c.b16 %v1038, %v1030
  %v1359 = vpack.c.b16 %v1047, %v1039
  %v1360 = vpack.c.b16 %v1048, %v1040
  %v1361 = vpack.c.b16 %v1049, %v1041
  %v1362 = vpack.c.b16 %v1050, %v1042
  %v1363 = vpack.c.b16 %v1051, %v1043
  %v1364 = vpack.c.b16 %v1052, %v1044
  %v1365 = vpack.c.b16 %v1053, %v1045
  %v1366 = vpack.c.b16 %v1054, %v1046
  %v1367 = vpack.c.b16 %v1063, %v1055
  %v1368 = vpack.c.b16 %v1064, %v1056
  %v1369 = vpack.c.b16 %v1065, %v1057
  %v1370 = vpack.c.b16 %v1066, %v1058
  %v1371 = vpack.c.b16 %v1067, %v1059
  %v1372 = vpack.c.b16 %v1068, %v1060
  %v1373 = vpack.c.b16 %v1069, %v1061
  %v1374 = vpack.c.b16 %v1070, %v1062
  %v1375 = vpack.c.b16 %v1079, %v1071
  %v1376 = vpack.c.b16 %v1080, %v1072
  %v1377 = vpack.c.b16 %v1081, %v1073
  %v1378 = vpack.c.b16 %v1082, %v1074
  %v1379 = vpack.c.b16 %v1083, %v1075
  %v1380 = vpack.c.b16 %v1084, %v1076
  %v1381 = vpack.c.b16 %v1085, %v1077
  %v1382 = vpack.c.b16 %v1086, %v1078
  %v1383 = vpack.c.b16 %v1095, %v1087
  %v1384 = vpack.c.b16 %v1096, %v1088
  %v1385 = vpack.c.b16 %v1097, %v1089
  %v1386 = vpack.c.b16 %v1098, %v1090
  %v1387 = vpack.c.b16 %v1099, %v1091
  %v1388 = vpack.c.b16 %v1100, %v1092
  %v1389 = vpack.c.b16 %v1101, %v1093
  %v1390 = vpack.c.b16 %v1102, %v1094
  %v1391 = vpack.c.b16 %v1111, %v1103
  %v1392 = vpack.c.b16 %v1112, %v1104
  %v1393 = vpack.c.b16 %v1113, %v1105
  %v1394 = vpack.c.b16 %v1114, %v1106
  %v1395 = vpack.c.b16 %v1115, %v1107
  %v1396 = vpack.c.b16 %v1116, %v1108
  %v1397 = vpack.c.b16 %v1117, %v1109
  %v1398 = vpack.c.b16 %v1118, %v1110
  %v1399 = vpack.c.b16 %v1127, %v1119
  %v1400 = vpack.c.b16 %v1128, %v1120
  %v1401 = vpack.c.b16 %v1129, %v1121
  %v1402 = vpack.c.b16 %v1130, %v1122
  %v1403 = vpack.c.b16 %v1131, %v1123
  %v1404 = vpack.c.b16 %v1132, %v1124
  %v1405 = vpack.c.b16 %v1133, %v1125
  %v1406 = vpack.c.b16 %v1134, %v1126
  %v1407 = vpack.c.b16 %v1143, %v1135
  %v1408 = vpack.c.b16 %v1144, %v1136
  %v1409 = vpack.c.b16 %v1145, %v1137
  %v1410 = vpack.c.b16 %v1146, %v1138
  %v1411 = vpack.c.b16 %v1147, %v1139
  %v1412 = vpack.c.b16 %v1148, %v1140
  %v1413 = vpack.c.b16 %v1149, %v1141
  %v1414 = vpack.c.b16 %v1150, %v1142
  %v1415 = vpack.c.b16 %v1159, %v1151
  %v1416 = vpack.c.b16 %v1160, %v1152
  %v1417 = vpack.c.b16 %v1161, %v1153
  %v1418 = vpack.c.b16 %v1162, %v1154
  %v1419 = vpack.c.b16 %v1163, %v1155
  %v1420 = vpack.c.b16 %v1164, %v1156
  %v1421 = vpack.c.b16 %v1165, %v1157
  %v1422 = vpack.c.b16 %v1166, %v1158
  %v1807 = vunpack.c.l.b16 %v271
  %v1808 = vunpack.c.l.b16 %v272
  %v1809 = vunpack.c.l.b16 %v273
  %v1810 = vunpack.c.l.b16 %v274
  %v1811 = vunpack.c.l.b16 %v275
  %v1812 = vunpack.c.l.b16 %v276
  %v1813 = vunpack.c.l.b16 %v277
  %v1814 = vunpack.c.l.b16 %v278
  %v1815 = vunpack.c.l.b16 %v279
  %v1816 = vunpack.c.l.b16 %v280
  %v1817 = vunpack.c.l.b16 %v281
  %v1818 = vunpack.c.l.b16 %v282
  %v1819 = vunpack.c.l.b16 %v283
  %v1820 = vunpack.c.l.b16 %v284
  %v1821 = vunpack.c.l.b16 %v285
  %v1822 = vunpack.c.l.b16 %v286
  %v1823 = vunpack.c.l.b16 %v287
  %v1824 = vunpack.c.l.b16 %v288
  %v1825 = vunpack.c.l.b16 %v289
  %v1826 = vunpack.c.l.b16 %v290
  %v1827 = vunpack.c.l.b16 %v291
  %v1828 = vunpack.c.l.b16 %v292
  %v1829 = vunpack.c.l.b16 %v293
  %v1830 = vunpack.c.l.b16 %v294
  %v1831 = vunpack.c.l.b16 %v295
  %v1832 = vunpack.c.l.b16 %v296
  %v1833 = vunpack.c.l.b16 %v297
  %v1834 = vunpack.c.l.b16 %v298
  %v1835 = vunpack.c.l.b16 %v299
  %v1836 = vunpack.c.l.b16 %v300
  %v1837 = vunpack.c.l.b16 %v301
  %v1838 = vunpack.c.l.b16 %v302
  %v1839 = vunpack.c.l.b16 %v303
  %v1840 = vunpack.c.l.b16 %v304
  %v1841 = vunpack.c.l.b16 %v305
  %v1842 = vunpack.c.l.b16 %v306
  %v1843 = vunpack.c.l.b16 %v307
  %v1844 = vunpack.c.l.b16 %v308
  %v1845 = vunpack.c.l.b16 %v309
  %v1846 = vunpack.c.l.b16 %v310
  %v1847 = vunpack.c.l.b16 %v311
  %v1848 = vunpack.c.l.b16 %v312
  %v1849 = vunpack.c.l.b16 %v313
  %v1850 = vunpack.c.l.b16 %v314
  %v1851 = vunpack.c.l.b16 %v315
  %v1852 = vunpack.c.l.b16 %v316
  %v1853 = vunpack.c.l.b16 %v317
  %v1854 = vunpack.c.l.b16 %v318
  %v1855 = vunpack.c.l.b16 %v319
  %v1856 = vunpack.c.l.b16 %v320
  %v1857 = vunpack.c.l.b16 %v321
  %v1858 = vunpack.c.l.b16 %v322
  %v1859 = vunpack.c.l.b16 %v323
  %v1860 = vunpack.c.l.b16 %v324
  %v1861 = vunpack.c.l.b16 %v325
  %v1862 = vunpack.c.l.b16 %v326
  %v1863 = vunpack.c.l.b16 %v327
  %v1864 = vunpack.c.l.b16 %v328
  %v1865 = vunpack.c.l.b16 %v329
  %v1866 = vunpack.c.l.b16 %v330
  %v1867 = vunpack.c.l.b16 %v331
  %v1868 = vunpack.c.l.b16 %v332
  %v1869 = vunpack.c.l.b16 %v333
  %v1870 = vunpack.c.l.b16 %v334
  %v1871 = vunpack.c.l.b16 %v335
  %v1872 = vunpack.c.l.b16 %v336
  %v1873 = vunpack.c.l.b16 %v337
  %v1874 = vunpack.c.l.b16 %v338
  %v1875 = vunpack.c.l.b16 %v339
  %v1876 = vunpack.c.l.b16 %v340
  %v1877 = vunpack.c.l.b16 %v341
  %v1878 = vunpack.c.l.b16 %v342
  %v1879 = vunpack.c.l.b16 %v343
  %v1880 = vunpack.c.l.b16 %v344
  %v1881 = vunpack.c.l.b16 %v345
  %v1882 = vunpack.c.l.b16 %v346
  %v1883 = vunpack.c.l.b16 %v347
  %v1884 = vunpack.c.l.b16 %v348
  %v1885 = vunpack.c.l.b16 %v349
  %v1886 = vunpack.c.l.b16 %v350
  %v1887 = vunpack.c.l.b16 %v351
  %v1888 = vunpack.c.l.b16 %v352
  %v1889 = vunpack.c.l.b16 %v353
  %v1890 = vunpack.c.l.b16 %v354
  %v1891 = vunpack.c.l.b16 %v355
  %v1892 = vunpack.c.l.b16 %v356
  %v1893 = vunpack.c.l.b16 %v357
  %v1894 = vunpack.c.l.b16 %v358
  %v1895 = vunpack.c.l.b16 %v359
  %v1896 = vunpack.c.l.b16 %v360
  %v1897 = vunpack.c.l.b16 %v361
  %v1898 = vunpack.c.l.b16 %v362
  %v1899 = vunpack.c.l.b16 %v363
  %v1900 = vunpack.c.l.b16 %v364
  %v1901 = vunpack.c.l.b16 %v365
  %v1902 = vunpack.c.l.b16 %v366
  %v1903 = vunpack.c.l.b16 %v367
  %v1904 = vunpack.c.l.b16 %v368
  %v1905 = vunpack.c.l.b16 %v369
  %v1906 = vunpack.c.l.b16 %v370
  %v1907 = vunpack.c.l.b16 %v371
  %v1908 = vunpack.c.l.b16 %v372
  %v1909 = vunpack.c.l.b16 %v373
  %v1910 = vunpack.c.l.b16 %v374
  %v1911 = vunpack.c.l.b16 %v375
  %v1912 = vunpack.c.l.b16 %v376
  %v1913 = vunpack.c.l.b16 %v377
  %v1914 = vunpack.c.l.b16 %v378
  %v1915 = vunpack.c.l.b16 %v379
  %v1916 = vunpack.c.l.b16 %v380
  %v1917 = vunpack.c.l.b16 %v381
  %v1918 = vunpack.c.l.b16 %v382
  %v1919 = vunpack.c.l.b16 %v383
  %v1920 = vunpack.c.l.b16 %v384
  %v1921 = vunpack.c.l.b16 %v385
  %v1922 = vunpack.c.l.b16 %v386
  %v1923 = vunpack.c.l.b16 %v387
  %v1924 = vunpack.c.l.b16 %v388
  %v1925 = vunpack.c.l.b16 %v389
  %v1926 = vunpack.c.l.b16 %v390
  %v1927 = vunpack.c.l.b16 %v391
  %v1928 = vunpack.c.l.b16 %v392
  %v1929 = vunpack.c.l.b16 %v393
  %v1930 = vunpack.c.l.b16 %v394
  %v1931 = vunpack.c.l.b16 %v395
  %v1932 = vunpack.c.l.b16 %v396
  %v1933 = vunpack.c.l.b16 %v397
  %v1934 = vunpack.c.l.b16 %v398
  %v1935 = vpack.c.b16 %v1808, %v1807
  %v1936 = vpack.c.b16 %v1810, %v1809
  %v1937 = vpack.c.b16 %v1812, %v1811
  %v1938 = vpack.c.b16 %v1814, %v1813
  %v1939 = vpack.c.b16 %v1816, %v1815
  %v1940 = vpack.c.b16 %v1818, %v1817
  %v1941 = vpack.c.b16 %v1820, %v1819
  %v1942 = vpack.c.b16 %v1822, %v1821
  %v1943 = vpack.c.b16 %v1824, %v1823
  %v1944 = vpack.c.b16 %v1826, %v1825
  %v1945 = vpack.c.b16 %v1828, %v1827
  %v1946 = vpack.c.b16 %v1830, %v1829
  %v1947 = vpack.c.b16 %v1832, %v1831
  %v1948 = vpack.c.b16 %v1834, %v1833
  %v1949 = vpack.c.b16 %v1836, %v1835
  %v1950 = vpack.c.b16 %v1838, %v1837
  %v1951 = vpack.c.b16 %v1840, %v1839
  %v1952 = vpack.c.b16 %v1842, %v1841
  %v1953 = vpack.c.b16 %v1844, %v1843
  %v1954 = vpack.c.b16 %v1846, %v1845
  %v1955 = vpack.c.b16 %v1848, %v1847
  %v1956 = vpack.c.b16 %v1850, %v1849
  %v1957 = vpack.c.b16 %v1852, %v1851
  %v1958 = vpack.c.b16 %v1854, %v1853
  %v1959 = vpack.c.b16 %v1856, %v1855
  %v1960 = vpack.c.b16 %v1858, %v1857
  %v1961 = vpack.c.b16 %v1860, %v1859
  %v1962 = vpack.c.b16 %v1862, %v1861
  %v1963 = vpack.c.b16 %v1864, %v1863
  %v1964 = vpack.c.b16 %v1866, %v1865
  %v1965 = vpack.c.b16 %v1868, %v1867
  %v1966 = vpack.c.b16 %v1870, %v1869
  %v1967 = vpack.c.b16 %v1872, %v1871
  %v1968 = vpack.c.b16 %v1874, %v1873
  %v1969 = vpack.c.b16 %v1876, %v1875
  %v1970 = vpack.c.b16 %v1878, %v1877
  %v1971 = vpack.c.b16 %v1880, %v1879
  %v1972 = vpack.c.b16 %v1882, %v1881
  %v1973 = vpack.c.b16 %v1884, %v1883
  %v1974 = vpack.c.b16 %v1886, %v1885
  %v1975 = vpack.c.b16 %v1888, %v1887
  %v1976 = vpack.c.b16 %v1890, %v1889
  %v1977 = vpack.c.b16 %v1892, %v1891
  %v1978 = vpack.c.b16 %v1894, %v1893
  %v1979 = vpack.c.b16 %v1896, %v1895
  %v1980 = vpack.c.b16 %v1898, %v1897
  %v1981 = vpack.c.b16 %v1900, %v1899
  %v1982 = vpack.c.b16 %v1902, %v1901
  %v1983 = vpack.c.b16 %v1904, %v1903
  %v1984 = vpack.c.b16 %v1906, %v1905
  %v1985 = vpack.c.b16 %v1908, %v1907
  %v1986 = vpack.c.b16 %v1910, %v1909
  %v1987 = vpack.c.b16 %v1912, %v1911
  %v1988 = vpack.c.b16 %v1914, %v1913
  %v1989 = vpack.c.b16 %v1916, %v1915
  %v1990 = vpack.c.b16 %v1918, %v1917
  %v1991 = vpack.c.b16 %v1920, %v1919
  %v1992 = vpack.c.b16 %v1922, %v1921
  %v1993 = vpack.c.b16 %v1924, %v1923
  %v1994 = vpack.c.b16 %v1926, %v1925
  %v1995 = vpack.c.b16 %v1928, %v1927
  %v1996 = vpack.c.b16 %v1930, %v1929
  %v1997 = vpack.c.b16 %v1932, %v1931
  %v1998 = vpack.c.b16 %v1934, %v1933
  %2063 = vmatprep.subr.bf16.mxu0 0
  %2064 = vmatpush1.bf16.msra.mxu0 %v1935
  %2065 = vmatprep.subr.bf16.mxu0 0
  %2066 = vmatpush1.bf16.msra.mxu0 %v1936
  %2067 = vmatprep.subr.bf16.mxu0 0
  %2068 = vmatpush1.bf16.msra.mxu0 %v1937
  %2069 = vmatprep.subr.bf16.mxu0 0
  %2070 = vmatpush1.bf16.msra.mxu0 %v1938
  %2071 = vmatprep.subr.bf16.mxu0 0
  %2072 = vmatpush1.bf16.msra.mxu0 %v1939
  %2073 = vmatprep.subr.bf16.mxu0 0
  %2074 = vmatpush1.bf16.msra.mxu0 %v1940
  %2075 = vmatprep.subr.bf16.mxu0 0
  %2076 = vmatpush1.bf16.msra.mxu0 %v1941
  %2077 = vmatprep.subr.bf16.mxu0 0
  %2078 = vmatpush1.bf16.msra.mxu0 %v1942
  %2079 = vmatprep.subr.bf16.mxu0 0
  %2080 = vmatpush1.bf16.msra.mxu0 %v1943
  %2081 = vmatprep.subr.bf16.mxu0 0
  %2082 = vmatpush1.bf16.msra.mxu0 %v1944
  %2083 = vmatprep.subr.bf16.mxu0 0
  %2084 = vmatpush1.bf16.msra.mxu0 %v1945
  %2085 = vmatprep.subr.bf16.mxu0 0
  %2086 = vmatpush1.bf16.msra.mxu0 %v1946
  %2087 = vmatprep.subr.bf16.mxu0 0
  %2088 = vmatpush1.bf16.msra.mxu0 %v1947
  %2089 = vmatprep.subr.bf16.mxu0 0
  %2090 = vmatpush1.bf16.msra.mxu0 %v1948
  %2091 = vmatprep.subr.bf16.mxu0 0
  %2092 = vmatpush1.bf16.msra.mxu0 %v1949
  %2093 = vmatprep.subr.bf16.mxu0 0
  %2094 = vmatpush1.bf16.msra.mxu0 %v1950
  %2095 = vmatprep.mubr.bf16.mxu0 %v1168
  %2096 = vmatmul.mubr.bf16.gmra.mrb[0].mxu0 %v1167
  %v2097 = vpop.f32.mrb[0].mxu0
  %v2098 = vadd.f32 0.0, %v2097
  %v2099 = vpop.f32.mrb[0].mxu0
  %v2100 = vpop.f32.mrb[0].mxu0
  %v2101 = vadd.f32 0.0, %v2100
  %v2102 = vpop.f32.mrb[0].mxu0
  %2103 = vmatprep.mubr.bf16.mxu0 %v1176
  %2104 = vmatmul.mubr.bf16.gmra.mrb[0].mxu0 %v1175
  %v2105 = vpop.f32.mrb[0].mxu0
  %v2106 = vadd.f32 0.0, %v2105
  %v2107 = vpop.f32.mrb[0].mxu0
  %v2108 = vpop.f32.mrb[0].mxu0
  %v2109 = vadd.f32 0.0, %v2108
  %v2110 = vpop.f32.mrb[0].mxu0
  %2111 = vmatprep.mubr.bf16.mxu0 %v1184
  %2112 = vmatmul.mubr.bf16.gmra.mrb[0].mxu0 %v1183
  %v2113 = vpop.f32.mrb[0].mxu0
  %v2114 = vadd.f32 0.0, %v2113
  %v2115 = vpop.f32.mrb[0].mxu0
  %v2116 = vpop.f32.mrb[0].mxu0
  %v2117 = vadd.f32 0.0, %v2116
  %v2118 = vpop.f32.mrb[0].mxu0
  %2119 = vmatprep.mubr.bf16.mxu0 %v1192
  %2120 = vmatmul.mubr.bf16.gmra.mrb[0].mxu0 %v1191
  %v2121 = vpop.f32.mrb[0].mxu0
  %v2122 = vadd.f32 0.0, %v2121
  %v2123 = vpop.f32.mrb[0].mxu0
  %v2124 = vpop.f32.mrb[0].mxu0
  %v2125 = vadd.f32 0.0, %v2124
  %v2126 = vpop.f32.mrb[0].mxu0
  %2127 = vmatprep.mubr.bf16.mxu0 %v1200
  %2128 = vmatmul.mubr.bf16.gmra.mrb[0].mxu0 %v1199
  %v2129 = vpop.f32.mrb[0].mxu0
  %v2130 = vadd.f32 0.0, %v2129
  %v2131 = vpop.f32.mrb[0].mxu0
  %v2132 = vpop.f32.mrb[0].mxu0
  %v2133 = vadd.f32 0.0, %v2132
  %v2134 = vpop.f32.mrb[0].mxu0
  %2135 = vmatprep.mubr.bf16.mxu0 %v1208
  %2136 = vmatmul.mubr.bf16.gmra.mrb[0].mxu0 %v1207
  %v2137 = vpop.f32.mrb[0].mxu0
  %v2138 = vadd.f32 0.0, %v2137
  %v2139 = vpop.f32.mrb[0].mxu0
  %v2140 = vpop.f32.mrb[0].mxu0
  %v2141 = vadd.f32 0.0, %v2140
  %v2142 = vpop.f32.mrb[0].mxu0
  %2143 = vmatprep.mubr.bf16.mxu0 %v1216
  %2144 = vmatmul.mubr.bf16.gmra.mrb[0].mxu0 %v1215
  %v2145 = vpop.f32.mrb[0].mxu0
  %v2146 = vadd.f32 0.0, %v2145
  %v2147 = vpop.f32.mrb[0].mxu0
  %v2148 = vpop.f32.mrb[0].mxu0
  %v2149 = vadd.f32 0.0, %v2148
  %v2150 = vpop.f32.mrb[0].mxu0
  %2151 = vmatprep.mubr.bf16.mxu0 %v1224
  %2152 = vmatmul.mubr.bf16.gmra.mrb[0].mxu0 %v1223
  %v2153 = vpop.f32.mrb[0].mxu0
  %v2154 = vadd.f32 0.0, %v2153
  %v2155 = vpop.f32.mrb[0].mxu0
  %v2156 = vpop.f32.mrb[0].mxu0
  %v2157 = vadd.f32 0.0, %v2156
  %v2158 = vpop.f32.mrb[0].mxu0
  %2159 = vmatprep.mubr.bf16.mxu0 %v1232
  %2160 = vmatmul.mubr.bf16.gmra.mrb[0].mxu0 %v1231
  %v2161 = vpop.f32.mrb[0].mxu0
  %v2162 = vadd.f32 0.0, %v2161
  %v2163 = vpop.f32.mrb[0].mxu0
  %v2164 = vpop.f32.mrb[0].mxu0
  %v2165 = vadd.f32 0.0, %v2164
  %v2166 = vpop.f32.mrb[0].mxu0
  %2167 = vmatprep.mubr.bf16.mxu0 %v1240
  %2168 = vmatmul.mubr.bf16.gmra.mrb[0].mxu0 %v1239
  %v2169 = vpop.f32.mrb[0].mxu0
  %v2170 = vadd.f32 0.0, %v2169
  %v2171 = vpop.f32.mrb[0].mxu0
  %v2172 = vpop.f32.mrb[0].mxu0
  %v2173 = vadd.f32 0.0, %v2172
  %v2174 = vpop.f32.mrb[0].mxu0
  %2175 = vmatprep.mubr.bf16.mxu0 %v1248
  %2176 = vmatmul.mubr.bf16.gmra.mrb[0].mxu0 %v1247
  %v2177 = vpop.f32.mrb[0].mxu0
  %v2178 = vadd.f32 0.0, %v2177
  %v2179 = vpop.f32.mrb[0].mxu0
  %v2180 = vpop.f32.mrb[0].mxu0
  %v2181 = vadd.f32 0.0, %v2180
  %v2182 = vpop.f32.mrb[0].mxu0
  %2183 = vmatprep.mubr.bf16.mxu0 %v1256
  %2184 = vmatmul.mubr.bf16.gmra.mrb[0].mxu0 %v1255
  %v2185 = vpop.f32.mrb[0].mxu0
  %v2186 = vadd.f32 0.0, %v2185
  %v2187 = vpop.f32.mrb[0].mxu0
  %v2188 = vpop.f32.mrb[0].mxu0
  %v2189 = vadd.f32 0.0, %v2188
  %v2190 = vpop.f32.mrb[0].mxu0
  %2191 = vmatprep.mubr.bf16.mxu0 %v1264
  %2192 = vmatmul.mubr.bf16.gmra.mrb[0].mxu0 %v1263
  %v2193 = vpop.f32.mrb[0].mxu0
  %v2194 = vadd.f32 0.0, %v2193
  %v2195 = vpop.f32.mrb[0].mxu0
  %v2196 = vpop.f32.mrb[0].mxu0
  %v2197 = vadd.f32 0.0, %v2196
  %v2198 = vpop.f32.mrb[0].mxu0
  %2199 = vmatprep.mubr.bf16.mxu0 %v1272
  %2200 = vmatmul.mubr.bf16.gmra.mrb[0].mxu0 %v1271
  %v2201 = vpop.f32.mrb[0].mxu0
  %v2202 = vadd.f32 0.0, %v2201
  %v2203 = vpop.f32.mrb[0].mxu0
  %v2204 = vpop.f32.mrb[0].mxu0
  %v2205 = vadd.f32 0.0, %v2204
  %v2206 = vpop.f32.mrb[0].mxu0
  %2207 = vmatprep.mubr.bf16.mxu0 %v1280
  %2208 = vmatmul.mubr.bf16.gmra.mrb[0].mxu0 %v1279
  %v2209 = vpop.f32.mrb[0].mxu0
  %v2210 = vadd.f32 0.0, %v2209
  %v2211 = vpop.f32.mrb[0].mxu0
  %v2212 = vpop.f32.mrb[0].mxu0
  %v2213 = vadd.f32 0.0, %v2212
  %v2214 = vpop.f32.mrb[0].mxu0
  %2215 = vmatprep.mubr.bf16.mxu0 %v1288
  %2216 = vmatmul.mubr.bf16.gmra.mrb[0].mxu0 %v1287
  %v2217 = vpop.f32.mrb[0].mxu0
  %v2218 = vadd.f32 0.0, %v2217
  %v2219 = vpop.f32.mrb[0].mxu0
  %v2220 = vpop.f32.mrb[0].mxu0
  %v2221 = vadd.f32 0.0, %v2220
  %v2222 = vpop.f32.mrb[0].mxu0
  %2223 = vmatprep.mubr.bf16.mxu0 %v1296
  %2224 = vmatmul.mubr.bf16.gmra.mrb[0].mxu0 %v1295
  %v2225 = vpop.f32.mrb[0].mxu0
  %v2226 = vadd.f32 0.0, %v2225
  %v2227 = vpop.f32.mrb[0].mxu0
  %v2228 = vpop.f32.mrb[0].mxu0
  %v2229 = vadd.f32 0.0, %v2228
  %v2230 = vpop.f32.mrb[0].mxu0
  %2231 = vmatprep.mubr.bf16.mxu0 %v1304
  %2232 = vmatmul.mubr.bf16.gmra.mrb[0].mxu0 %v1303
  %v2233 = vpop.f32.mrb[0].mxu0
  %v2234 = vadd.f32 0.0, %v2233
  %v2235 = vpop.f32.mrb[0].mxu0
  %v2236 = vpop.f32.mrb[0].mxu0
  %v2237 = vadd.f32 0.0, %v2236
  %v2238 = vpop.f32.mrb[0].mxu0
  %2239 = vmatprep.mubr.bf16.mxu0 %v1312
  %2240 = vmatmul.mubr.bf16.gmra.mrb[0].mxu0 %v1311
  %v2241 = vpop.f32.mrb[0].mxu0
  %v2242 = vadd.f32 0.0, %v2241
  %v2243 = vpop.f32.mrb[0].mxu0
  %v2244 = vpop.f32.mrb[0].mxu0
  %v2245 = vadd.f32 0.0, %v2244
  %v2246 = vpop.f32.mrb[0].mxu0
  %2247 = vmatprep.mubr.bf16.mxu0 %v1320
  %2248 = vmatmul.mubr.bf16.gmra.mrb[0].mxu0 %v1319
  %v2249 = vpop.f32.mrb[0].mxu0
  %v2250 = vadd.f32 0.0, %v2249
  %v2251 = vpop.f32.mrb[0].mxu0
  %v2252 = vpop.f32.mrb[0].mxu0
  %v2253 = vadd.f32 0.0, %v2252
  %v2254 = vpop.f32.mrb[0].mxu0
  %2255 = vmatprep.mubr.bf16.mxu0 %v1328
  %2256 = vmatmul.mubr.bf16.gmra.mrb[0].mxu0 %v1327
  %v2257 = vpop.f32.mrb[0].mxu0
  %v2258 = vadd.f32 0.0, %v2257
  %v2259 = vpop.f32.mrb[0].mxu0
  %v2260 = vpop.f32.mrb[0].mxu0
  %v2261 = vadd.f32 0.0, %v2260
  %v2262 = vpop.f32.mrb[0].mxu0
  %2263 = vmatprep.mubr.bf16.mxu0 %v1336
  %2264 = vmatmul.mubr.bf16.gmra.mrb[0].mxu0 %v1335
  %v2265 = vpop.f32.mrb[0].mxu0
  %v2266 = vadd.f32 0.0, %v2265
  %v2267 = vpop.f32.mrb[0].mxu0
  %v2268 = vpop.f32.mrb[0].mxu0
  %v2269 = vadd.f32 0.0, %v2268
  %v2270 = vpop.f32.mrb[0].mxu0
  %2271 = vmatprep.mubr.bf16.mxu0 %v1344
  %2272 = vmatmul.mubr.bf16.gmra.mrb[0].mxu0 %v1343
  %v2273 = vpop.f32.mrb[0].mxu0
  %v2274 = vadd.f32 0.0, %v2273
  %v2275 = vpop.f32.mrb[0].mxu0
  %v2276 = vpop.f32.mrb[0].mxu0
  %v2277 = vadd.f32 0.0, %v2276
  %v2278 = vpop.f32.mrb[0].mxu0
  %2279 = vmatprep.mubr.bf16.mxu0 %v1352
  %2280 = vmatmul.mubr.bf16.gmra.mrb[0].mxu0 %v1351
  %v2281 = vpop.f32.mrb[0].mxu0
  %v2282 = vadd.f32 0.0, %v2281
  %v2283 = vpop.f32.mrb[0].mxu0
  %v2284 = vpop.f32.mrb[0].mxu0
  %v2285 = vadd.f32 0.0, %v2284
  %v2286 = vpop.f32.mrb[0].mxu0
  %2287 = vmatprep.mubr.bf16.mxu0 %v1360
  %2288 = vmatmul.mubr.bf16.gmra.mrb[0].mxu0 %v1359
  %v2289 = vpop.f32.mrb[0].mxu0
  %v2290 = vadd.f32 0.0, %v2289
  %v2291 = vpop.f32.mrb[0].mxu0
  %v2292 = vpop.f32.mrb[0].mxu0
  %v2293 = vadd.f32 0.0, %v2292
  %v2294 = vpop.f32.mrb[0].mxu0
  %2295 = vmatprep.mubr.bf16.mxu0 %v1368
  %2296 = vmatmul.mubr.bf16.gmra.mrb[0].mxu0 %v1367
  %v2297 = vpop.f32.mrb[0].mxu0
  %v2298 = vadd.f32 0.0, %v2297
  %v2299 = vpop.f32.mrb[0].mxu0
  %v2300 = vpop.f32.mrb[0].mxu0
  %v2301 = vadd.f32 0.0, %v2300
  %v2302 = vpop.f32.mrb[0].mxu0
  %2303 = vmatprep.mubr.bf16.mxu0 %v1376
  %2304 = vmatmul.mubr.bf16.gmra.mrb[0].mxu0 %v1375
  %v2305 = vpop.f32.mrb[0].mxu0
  %v2306 = vadd.f32 0.0, %v2305
  %v2307 = vpop.f32.mrb[0].mxu0
  %v2308 = vpop.f32.mrb[0].mxu0
  %v2309 = vadd.f32 0.0, %v2308
  %v2310 = vpop.f32.mrb[0].mxu0
  %2311 = vmatprep.mubr.bf16.mxu0 %v1384
  %2312 = vmatmul.mubr.bf16.gmra.mrb[0].mxu0 %v1383
  %v2313 = vpop.f32.mrb[0].mxu0
  %v2314 = vadd.f32 0.0, %v2313
  %v2315 = vpop.f32.mrb[0].mxu0
  %v2316 = vpop.f32.mrb[0].mxu0
  %v2317 = vadd.f32 0.0, %v2316
  %v2318 = vpop.f32.mrb[0].mxu0
  %2319 = vmatprep.mubr.bf16.mxu0 %v1392
  %2320 = vmatmul.mubr.bf16.gmra.mrb[0].mxu0 %v1391
  %v2321 = vpop.f32.mrb[0].mxu0
  %v2322 = vadd.f32 0.0, %v2321
  %v2323 = vpop.f32.mrb[0].mxu0
  %v2324 = vpop.f32.mrb[0].mxu0
  %v2325 = vadd.f32 0.0, %v2324
  %v2326 = vpop.f32.mrb[0].mxu0
  %2327 = vmatprep.mubr.bf16.mxu0 %v1400
  %2328 = vmatmul.mubr.bf16.gmra.mrb[0].mxu0 %v1399
  %v2329 = vpop.f32.mrb[0].mxu0
  %v2330 = vadd.f32 0.0, %v2329
  %v2331 = vpop.f32.mrb[0].mxu0
  %v2332 = vpop.f32.mrb[0].mxu0
  %v2333 = vadd.f32 0.0, %v2332
  %v2334 = vpop.f32.mrb[0].mxu0
  %2335 = vmatprep.mubr.bf16.mxu0 %v1408
  %2336 = vmatmul.mubr.bf16.gmra.mrb[0].mxu0 %v1407
  %v2337 = vpop.f32.mrb[0].mxu0
  %v2338 = vadd.f32 0.0, %v2337
  %v2339 = vpop.f32.mrb[0].mxu0
  %v2340 = vpop.f32.mrb[0].mxu0
  %v2341 = vadd.f32 0.0, %v2340
  %v2342 = vpop.f32.mrb[0].mxu0
  %2343 = vmatprep.mubr.bf16.mxu0 %v1416
  %2344 = vmatmul.mubr.bf16.gmra.mrb[0].mxu0 %v1415
  %v2345 = vpop.f32.mrb[0].mxu0
  %v2346 = vadd.f32 0.0, %v2345
  %v2347 = vpop.f32.mrb[0].mxu0
  %v2348 = vpop.f32.mrb[0].mxu0
  %v2349 = vadd.f32 0.0, %v2348
  %v2350 = vpop.f32.mrb[0].mxu0
  %2351 = vdwg.mxu0
  %2352 = vmatprep.subr.bf16.mxu0 0
  %2353 = vmatpush1.bf16.msra.mxu0 %v1951
  %2354 = vmatprep.subr.bf16.mxu0 0
  %2355 = vmatpush1.bf16.msra.mxu0 %v1952
  %2356 = vmatprep.subr.bf16.mxu0 0
  %2357 = vmatpush1.bf16.msra.mxu0 %v1953
  %2358 = vmatprep.subr.bf16.mxu0 0
  %2359 = vmatpush1.bf16.msra.mxu0 %v1954
  %2360 = vmatprep.subr.bf16.mxu0 0
  %2361 = vmatpush1.bf16.msra.mxu0 %v1955
  %2362 = vmatprep.subr.bf16.mxu0 0
  %2363 = vmatpush1.bf16.msra.mxu0 %v1956
  %2364 = vmatprep.subr.bf16.mxu0 0
  %2365 = vmatpush1.bf16.msra.mxu0 %v1957
  %2366 = vmatprep.subr.bf16.mxu0 0
  %2367 = vmatpush1.bf16.msra.mxu0 %v1958
  %2368 = vmatprep.subr.bf16.mxu0 0
  %2369 = vmatpush1.bf16.msra.mxu0 %v1959
  %2370 = vmatprep.subr.bf16.mxu0 0
  %2371 = vmatpush1.bf16.msra.mxu0 %v1960
  %2372 = vmatprep.subr.bf16.mxu0 0
  %2373 = vmatpush1.bf16.msra.mxu0 %v1961
  %2374 = vmatprep.subr.bf16.mxu0 0
  %2375 = vmatpush1.bf16.msra.mxu0 %v1962
  %2376 = vmatprep.subr.bf16.mxu0 0
  %2377 = vmatpush1.bf16.msra.mxu0 %v1963
  %2378 = vmatprep.subr.bf16.mxu0 0
  %2379 = vmatpush1.bf16.msra.mxu0 %v1964
  %2380 = vmatprep.subr.bf16.mxu0 0
  %2381 = vmatpush1.bf16.msra.mxu0 %v1965
  %2382 = vmatprep.subr.bf16.mxu0 0
  %2383 = vmatpush1.bf16.msra.mxu0 %v1966
  %2384 = vmatprep.mubr.bf16.mxu0 %v1170
  %2385 = vmatmul.mubr.bf16.gmra.mrb[0].mxu0 %v1169
  %v2386 = vpop.f32.mrb[0].mxu0
  %v2387 = vadd.f32 %v2098, %v2386
  %v2388 = vpop.f32.mrb[0].mxu0
  %v2389 = vpop.f32.mrb[0].mxu0
  %v2390 = vadd.f32 %v2101, %v2389
  %v2391 = vpop.f32.mrb[0].mxu0
  %2392 = vmatprep.mubr.bf16.mxu0 %v1178
  %2393 = vmatmul.mubr.bf16.gmra.mrb[0].mxu0 %v1177
  %v2394 = vpop.f32.mrb[0].mxu0
  %v2395 = vadd.f32 %v2106, %v2394
  %v2396 = vpop.f32.mrb[0].mxu0
  %v2397 = vpop.f32.mrb[0].mxu0
  %v2398 = vadd.f32 %v2109, %v2397
  %v2399 = vpop.f32.mrb[0].mxu0
  %2400 = vmatprep.mubr.bf16.mxu0 %v1186
  %2401 = vmatmul.mubr.bf16.gmra.mrb[0].mxu0 %v1185
  %v2402 = vpop.f32.mrb[0].mxu0
  %v2403 = vadd.f32 %v2114, %v2402
  %v2404 = vpop.f32.mrb[0].mxu0
  %v2405 = vpop.f32.mrb[0].mxu0
  %v2406 = vadd.f32 %v2117, %v2405
  %v2407 = vpop.f32.mrb[0].mxu0
  %2408 = vmatprep.mubr.bf16.mxu0 %v1194
  %2409 = vmatmul.mubr.bf16.gmra.mrb[0].mxu0 %v1193
  %v2410 = vpop.f32.mrb[0].mxu0
  %v2411 = vadd.f32 %v2122, %v2410
  %v2412 = vpop.f32.mrb[0].mxu0
  %v2413 = vpop.f32.mrb[0].mxu0
  %v2414 = vadd.f32 %v2125, %v2413
  %v2415 = vpop.f32.mrb[0].mxu0
  %2416 = vmatprep.mubr.bf16.mxu0 %v1202
  %2417 = vmatmul.mubr.bf16.gmra.mrb[0].mxu0 %v1201
  %v2418 = vpop.f32.mrb[0].mxu0
  %v2419 = vadd.f32 %v2130, %v2418
  %v2420 = vpop.f32.mrb[0].mxu0
  %v2421 = vpop.f32.mrb[0].mxu0
  %v2422 = vadd.f32 %v2133, %v2421
  %v2423 = vpop.f32.mrb[0].mxu0
  %2424 = vmatprep.mubr.bf16.mxu0 %v1210
  %2425 = vmatmul.mubr.bf16.gmra.mrb[0].mxu0 %v1209
  %v2426 = vpop.f32.mrb[0].mxu0
  %v2427 = vadd.f32 %v2138, %v2426
  %v2428 = vpop.f32.mrb[0].mxu0
  %v2429 = vpop.f32.mrb[0].mxu0
  %v2430 = vadd.f32 %v2141, %v2429
  %v2431 = vpop.f32.mrb[0].mxu0
  %2432 = vmatprep.mubr.bf16.mxu0 %v1218
  %2433 = vmatmul.mubr.bf16.gmra.mrb[0].mxu0 %v1217
  %v2434 = vpop.f32.mrb[0].mxu0
  %v2435 = vadd.f32 %v2146, %v2434
  %v2436 = vpop.f32.mrb[0].mxu0
  %v2437 = vpop.f32.mrb[0].mxu0
  %v2438 = vadd.f32 %v2149, %v2437
  %v2439 = vpop.f32.mrb[0].mxu0
  %2440 = vmatprep.mubr.bf16.mxu0 %v1226
  %2441 = vmatmul.mubr.bf16.gmra.mrb[0].mxu0 %v1225
  %v2442 = vpop.f32.mrb[0].mxu0
  %v2443 = vadd.f32 %v2154, %v2442
  %v2444 = vpop.f32.mrb[0].mxu0
  %v2445 = vpop.f32.mrb[0].mxu0
  %v2446 = vadd.f32 %v2157, %v2445
  %v2447 = vpop.f32.mrb[0].mxu0
  %2448 = vmatprep.mubr.bf16.mxu0 %v1234
  %2449 = vmatmul.mubr.bf16.gmra.mrb[0].mxu0 %v1233
  %v2450 = vpop.f32.mrb[0].mxu0
  %v2451 = vadd.f32 %v2162, %v2450
  %v2452 = vpop.f32.mrb[0].mxu0
  %v2453 = vpop.f32.mrb[0].mxu0
  %v2454 = vadd.f32 %v2165, %v2453
  %v2455 = vpop.f32.mrb[0].mxu0
  %2456 = vmatprep.mubr.bf16.mxu0 %v1242
  %2457 = vmatmul.mubr.bf16.gmra.mrb[0].mxu0 %v1241
  %v2458 = vpop.f32.mrb[0].mxu0
  %v2459 = vadd.f32 %v2170, %v2458
  %v2460 = vpop.f32.mrb[0].mxu0
  %v2461 = vpop.f32.mrb[0].mxu0
  %v2462 = vadd.f32 %v2173, %v2461
  %v2463 = vpop.f32.mrb[0].mxu0
  %2464 = vmatprep.mubr.bf16.mxu0 %v1250
  %2465 = vmatmul.mubr.bf16.gmra.mrb[0].mxu0 %v1249
  %v2466 = vpop.f32.mrb[0].mxu0
  %v2467 = vadd.f32 %v2178, %v2466
  %v2468 = vpop.f32.mrb[0].mxu0
  %v2469 = vpop.f32.mrb[0].mxu0
  %v2470 = vadd.f32 %v2181, %v2469
  %v2471 = vpop.f32.mrb[0].mxu0
  %2472 = vmatprep.mubr.bf16.mxu0 %v1258
  %2473 = vmatmul.mubr.bf16.gmra.mrb[0].mxu0 %v1257
  %v2474 = vpop.f32.mrb[0].mxu0
  %v2475 = vadd.f32 %v2186, %v2474
  %v2476 = vpop.f32.mrb[0].mxu0
  %v2477 = vpop.f32.mrb[0].mxu0
  %v2478 = vadd.f32 %v2189, %v2477
  %v2479 = vpop.f32.mrb[0].mxu0
  %2480 = vmatprep.mubr.bf16.mxu0 %v1266
  %2481 = vmatmul.mubr.bf16.gmra.mrb[0].mxu0 %v1265
  %v2482 = vpop.f32.mrb[0].mxu0
  %v2483 = vadd.f32 %v2194, %v2482
  %v2484 = vpop.f32.mrb[0].mxu0
  %v2485 = vpop.f32.mrb[0].mxu0
  %v2486 = vadd.f32 %v2197, %v2485
  %v2487 = vpop.f32.mrb[0].mxu0
  %2488 = vmatprep.mubr.bf16.mxu0 %v1274
  %2489 = vmatmul.mubr.bf16.gmra.mrb[0].mxu0 %v1273
  %v2490 = vpop.f32.mrb[0].mxu0
  %v2491 = vadd.f32 %v2202, %v2490
  %v2492 = vpop.f32.mrb[0].mxu0
  %v2493 = vpop.f32.mrb[0].mxu0
  %v2494 = vadd.f32 %v2205, %v2493
  %v2495 = vpop.f32.mrb[0].mxu0
  %2496 = vmatprep.mubr.bf16.mxu0 %v1282
  %2497 = vmatmul.mubr.bf16.gmra.mrb[0].mxu0 %v1281
  %v2498 = vpop.f32.mrb[0].mxu0
  %v2499 = vadd.f32 %v2210, %v2498
  %v2500 = vpop.f32.mrb[0].mxu0
  %v2501 = vpop.f32.mrb[0].mxu0
  %v2502 = vadd.f32 %v2213, %v2501
  %v2503 = vpop.f32.mrb[0].mxu0
  %2504 = vmatprep.mubr.bf16.mxu0 %v1290
  %2505 = vmatmul.mubr.bf16.gmra.mrb[0].mxu0 %v1289
  %v2506 = vpop.f32.mrb[0].mxu0
  %v2507 = vadd.f32 %v2218, %v2506
  %v2508 = vpop.f32.mrb[0].mxu0
  %v2509 = vpop.f32.mrb[0].mxu0
  %v2510 = vadd.f32 %v2221, %v2509
  %v2511 = vpop.f32.mrb[0].mxu0
  %2512 = vmatprep.mubr.bf16.mxu0 %v1298
  %2513 = vmatmul.mubr.bf16.gmra.mrb[0].mxu0 %v1297
  %v2514 = vpop.f32.mrb[0].mxu0
  %v2515 = vadd.f32 %v2226, %v2514
  %v2516 = vpop.f32.mrb[0].mxu0
  %v2517 = vpop.f32.mrb[0].mxu0
  %v2518 = vadd.f32 %v2229, %v2517
  %v2519 = vpop.f32.mrb[0].mxu0
  %2520 = vmatprep.mubr.bf16.mxu0 %v1306
  %2521 = vmatmul.mubr.bf16.gmra.mrb[0].mxu0 %v1305
  %v2522 = vpop.f32.mrb[0].mxu0
  %v2523 = vadd.f32 %v2234, %v2522
  %v2524 = vpop.f32.mrb[0].mxu0
  %v2525 = vpop.f32.mrb[0].mxu0
  %v2526 = vadd.f32 %v2237, %v2525
  %v2527 = vpop.f32.mrb[0].mxu0
  %2528 = vmatprep.mubr.bf16.mxu0 %v1314
  %2529 = vmatmul.mubr.bf16.gmra.mrb[0].mxu0 %v1313
  %v2530 = vpop.f32.mrb[0].mxu0
  %v2531 = vadd.f32 %v2242, %v2530
  %v2532 = vpop.f32.mrb[0].mxu0
  %v2533 = vpop.f32.mrb[0].mxu0
  %v2534 = vadd.f32 %v2245, %v2533
  %v2535 = vpop.f32.mrb[0].mxu0
  %2536 = vmatprep.mubr.bf16.mxu0 %v1322
  %2537 = vmatmul.mubr.bf16.gmra.mrb[0].mxu0 %v1321
  %v2538 = vpop.f32.mrb[0].mxu0
  %v2539 = vadd.f32 %v2250, %v2538
  %v2540 = vpop.f32.mrb[0].mxu0
  %v2541 = vpop.f32.mrb[0].mxu0
  %v2542 = vadd.f32 %v2253, %v2541
  %v2543 = vpop.f32.mrb[0].mxu0
  %2544 = vmatprep.mubr.bf16.mxu0 %v1330
  %2545 = vmatmul.mubr.bf16.gmra.mrb[0].mxu0 %v1329
  %v2546 = vpop.f32.mrb[0].mxu0
  %v2547 = vadd.f32 %v2258, %v2546
  %v2548 = vpop.f32.mrb[0].mxu0
  %v2549 = vpop.f32.mrb[0].mxu0
  %v2550 = vadd.f32 %v2261, %v2549
  %v2551 = vpop.f32.mrb[0].mxu0
  %2552 = vmatprep.mubr.bf16.mxu0 %v1338
  %2553 = vmatmul.mubr.bf16.gmra.mrb[0].mxu0 %v1337
  %v2554 = vpop.f32.mrb[0].mxu0
  %v2555 = vadd.f32 %v2266, %v2554
  %v2556 = vpop.f32.mrb[0].mxu0
  %v2557 = vpop.f32.mrb[0].mxu0
  %v2558 = vadd.f32 %v2269, %v2557
  %v2559 = vpop.f32.mrb[0].mxu0
  %2560 = vmatprep.mubr.bf16.mxu0 %v1346
  %2561 = vmatmul.mubr.bf16.gmra.mrb[0].mxu0 %v1345
  %v2562 = vpop.f32.mrb[0].mxu0
  %v2563 = vadd.f32 %v2274, %v2562
  %v2564 = vpop.f32.mrb[0].mxu0
  %v2565 = vpop.f32.mrb[0].mxu0
  %v2566 = vadd.f32 %v2277, %v2565
  %v2567 = vpop.f32.mrb[0].mxu0
  %2568 = vmatprep.mubr.bf16.mxu0 %v1354
  %2569 = vmatmul.mubr.bf16.gmra.mrb[0].mxu0 %v1353
  %v2570 = vpop.f32.mrb[0].mxu0
  %v2571 = vadd.f32 %v2282, %v2570
  %v2572 = vpop.f32.mrb[0].mxu0
  %v2573 = vpop.f32.mrb[0].mxu0
  %v2574 = vadd.f32 %v2285, %v2573
  %v2575 = vpop.f32.mrb[0].mxu0
  %2576 = vmatprep.mubr.bf16.mxu0 %v1362
  %2577 = vmatmul.mubr.bf16.gmra.mrb[0].mxu0 %v1361
  %v2578 = vpop.f32.mrb[0].mxu0
  %v2579 = vadd.f32 %v2290, %v2578
  %v2580 = vpop.f32.mrb[0].mxu0
  %v2581 = vpop.f32.mrb[0].mxu0
  %v2582 = vadd.f32 %v2293, %v2581
  %v2583 = vpop.f32.mrb[0].mxu0
  %2584 = vmatprep.mubr.bf16.mxu0 %v1370
  %2585 = vmatmul.mubr.bf16.gmra.mrb[0].mxu0 %v1369
  %v2586 = vpop.f32.mrb[0].mxu0
  %v2587 = vadd.f32 %v2298, %v2586
  %v2588 = vpop.f32.mrb[0].mxu0
  %v2589 = vpop.f32.mrb[0].mxu0
  %v2590 = vadd.f32 %v2301, %v2589
  %v2591 = vpop.f32.mrb[0].mxu0
  %2592 = vmatprep.mubr.bf16.mxu0 %v1378
  %2593 = vmatmul.mubr.bf16.gmra.mrb[0].mxu0 %v1377
  %v2594 = vpop.f32.mrb[0].mxu0
  %v2595 = vadd.f32 %v2306, %v2594
  %v2596 = vpop.f32.mrb[0].mxu0
  %v2597 = vpop.f32.mrb[0].mxu0
  %v2598 = vadd.f32 %v2309, %v2597
  %v2599 = vpop.f32.mrb[0].mxu0
  %2600 = vmatprep.mubr.bf16.mxu0 %v1386
  %2601 = vmatmul.mubr.bf16.gmra.mrb[0].mxu0 %v1385
  %v2602 = vpop.f32.mrb[0].mxu0
  %v2603 = vadd.f32 %v2314, %v2602
  %v2604 = vpop.f32.mrb[0].mxu0
  %v2605 = vpop.f32.mrb[0].mxu0
  %v2606 = vadd.f32 %v2317, %v2605
  %v2607 = vpop.f32.mrb[0].mxu0
  %2608 = vmatprep.mubr.bf16.mxu0 %v1394
  %2609 = vmatmul.mubr.bf16.gmra.mrb[0].mxu0 %v1393
  %v2610 = vpop.f32.mrb[0].mxu0
  %v2611 = vadd.f32 %v2322, %v2610
  %v2612 = vpop.f32.mrb[0].mxu0
  %v2613 = vpop.f32.mrb[0].mxu0
  %v2614 = vadd.f32 %v2325, %v2613
  %v2615 = vpop.f32.mrb[0].mxu0
  %2616 = vmatprep.mubr.bf16.mxu0 %v1402
  %2617 = vmatmul.mubr.bf16.gmra.mrb[0].mxu0 %v1401
  %v2618 = vpop.f32.mrb[0].mxu0
  %v2619 = vadd.f32 %v2330, %v2618
  %v2620 = vpop.f32.mrb[0].mxu0
  %v2621 = vpop.f32.mrb[0].mxu0
  %v2622 = vadd.f32 %v2333, %v2621
  %v2623 = vpop.f32.mrb[0].mxu0
  %2624 = vmatprep.mubr.bf16.mxu0 %v1410
  %2625 = vmatmul.mubr.bf16.gmra.mrb[0].mxu0 %v1409
  %v2626 = vpop.f32.mrb[0].mxu0
  %v2627 = vadd.f32 %v2338, %v2626
  %v2628 = vpop.f32.mrb[0].mxu0
  %v2629 = vpop.f32.mrb[0].mxu0
  %v2630 = vadd.f32 %v2341, %v2629
  %v2631 = vpop.f32.mrb[0].mxu0
  %2632 = vmatprep.mubr.bf16.mxu0 %v1418
  %2633 = vmatmul.mubr.bf16.gmra.mrb[0].mxu0 %v1417
  %v2634 = vpop.f32.mrb[0].mxu0
  %v2635 = vadd.f32 %v2346, %v2634
  %v2636 = vpop.f32.mrb[0].mxu0
  %v2637 = vpop.f32.mrb[0].mxu0
  %v2638 = vadd.f32 %v2349, %v2637
  %v2639 = vpop.f32.mrb[0].mxu0
  %2640 = vdwg.mxu0
  %2641 = vmatprep.subr.bf16.mxu0 0
  %2642 = vmatpush1.bf16.msra.mxu0 %v1967
  %2643 = vmatprep.subr.bf16.mxu0 0
  %2644 = vmatpush1.bf16.msra.mxu0 %v1968
  %2645 = vmatprep.subr.bf16.mxu0 0
  %2646 = vmatpush1.bf16.msra.mxu0 %v1969
  %2647 = vmatprep.subr.bf16.mxu0 0
  %2648 = vmatpush1.bf16.msra.mxu0 %v1970
  %2649 = vmatprep.subr.bf16.mxu0 0
  %2650 = vmatpush1.bf16.msra.mxu0 %v1971
  %2651 = vmatprep.subr.bf16.mxu0 0
  %2652 = vmatpush1.bf16.msra.mxu0 %v1972
  %2653 = vmatprep.subr.bf16.mxu0 0
  %2654 = vmatpush1.bf16.msra.mxu0 %v1973
  %2655 = vmatprep.subr.bf16.mxu0 0
  %2656 = vmatpush1.bf16.msra.mxu0 %v1974
  %2657 = vmatprep.subr.bf16.mxu0 0
  %2658 = vmatpush1.bf16.msra.mxu0 %v1975
  %2659 = vmatprep.subr.bf16.mxu0 0
  %2660 = vmatpush1.bf16.msra.mxu0 %v1976
  %2661 = vmatprep.subr.bf16.mxu0 0
  %2662 = vmatpush1.bf16.msra.mxu0 %v1977
  %2663 = vmatprep.subr.bf16.mxu0 0
  %2664 = vmatpush1.bf16.msra.mxu0 %v1978
  %2665 = vmatprep.subr.bf16.mxu0 0
  %2666 = vmatpush1.bf16.msra.mxu0 %v1979
  %2667 = vmatprep.subr.bf16.mxu0 0
  %2668 = vmatpush1.bf16.msra.mxu0 %v1980
  %2669 = vmatprep.subr.bf16.mxu0 0
  %2670 = vmatpush1.bf16.msra.mxu0 %v1981
  %2671 = vmatprep.subr.bf16.mxu0 0
  %2672 = vmatpush1.bf16.msra.mxu0 %v1982
  %2673 = vmatprep.mubr.bf16.mxu0 %v1172
  %2674 = vmatmul.mubr.bf16.gmra.mrb[0].mxu0 %v1171
  %v2675 = vpop.f32.mrb[0].mxu0
  %v2676 = vadd.f32 %v2387, %v2675
  %v2677 = vpop.f32.mrb[0].mxu0
  %v2678 = vpop.f32.mrb[0].mxu0
  %v2679 = vadd.f32 %v2390, %v2678
  %v2680 = vpop.f32.mrb[0].mxu0
  %2681 = vmatprep.mubr.bf16.mxu0 %v1180
  %2682 = vmatmul.mubr.bf16.gmra.mrb[0].mxu0 %v1179
  %v2683 = vpop.f32.mrb[0].mxu0
  %v2684 = vadd.f32 %v2395, %v2683
  %v2685 = vpop.f32.mrb[0].mxu0
  %v2686 = vpop.f32.mrb[0].mxu0
  %v2687 = vadd.f32 %v2398, %v2686
  %v2688 = vpop.f32.mrb[0].mxu0
  %2689 = vmatprep.mubr.bf16.mxu0 %v1188
  %2690 = vmatmul.mubr.bf16.gmra.mrb[0].mxu0 %v1187
  %v2691 = vpop.f32.mrb[0].mxu0
  %v2692 = vadd.f32 %v2403, %v2691
  %v2693 = vpop.f32.mrb[0].mxu0
  %v2694 = vpop.f32.mrb[0].mxu0
  %v2695 = vadd.f32 %v2406, %v2694
  %v2696 = vpop.f32.mrb[0].mxu0
  %2697 = vmatprep.mubr.bf16.mxu0 %v1196
  %2698 = vmatmul.mubr.bf16.gmra.mrb[0].mxu0 %v1195
  %v2699 = vpop.f32.mrb[0].mxu0
  %v2700 = vadd.f32 %v2411, %v2699
  %v2701 = vpop.f32.mrb[0].mxu0
  %v2702 = vpop.f32.mrb[0].mxu0
  %v2703 = vadd.f32 %v2414, %v2702
  %v2704 = vpop.f32.mrb[0].mxu0
  %2705 = vmatprep.mubr.bf16.mxu0 %v1204
  %2706 = vmatmul.mubr.bf16.gmra.mrb[0].mxu0 %v1203
  %v2707 = vpop.f32.mrb[0].mxu0
  %v2708 = vadd.f32 %v2419, %v2707
  %v2709 = vpop.f32.mrb[0].mxu0
  %v2710 = vpop.f32.mrb[0].mxu0
  %v2711 = vadd.f32 %v2422, %v2710
  %v2712 = vpop.f32.mrb[0].mxu0
  %2713 = vmatprep.mubr.bf16.mxu0 %v1212
  %2714 = vmatmul.mubr.bf16.gmra.mrb[0].mxu0 %v1211
  %v2715 = vpop.f32.mrb[0].mxu0
  %v2716 = vadd.f32 %v2427, %v2715
  %v2717 = vpop.f32.mrb[0].mxu0
  %v2718 = vpop.f32.mrb[0].mxu0
  %v2719 = vadd.f32 %v2430, %v2718
  %v2720 = vpop.f32.mrb[0].mxu0
  %2721 = vmatprep.mubr.bf16.mxu0 %v1220
  %2722 = vmatmul.mubr.bf16.gmra.mrb[0].mxu0 %v1219
  %v2723 = vpop.f32.mrb[0].mxu0
  %v2724 = vadd.f32 %v2435, %v2723
  %v2725 = vpop.f32.mrb[0].mxu0
  %v2726 = vpop.f32.mrb[0].mxu0
  %v2727 = vadd.f32 %v2438, %v2726
  %v2728 = vpop.f32.mrb[0].mxu0
  %2729 = vmatprep.mubr.bf16.mxu0 %v1228
  %2730 = vmatmul.mubr.bf16.gmra.mrb[0].mxu0 %v1227
  %v2731 = vpop.f32.mrb[0].mxu0
  %v2732 = vadd.f32 %v2443, %v2731
  %v2733 = vpop.f32.mrb[0].mxu0
  %v2734 = vpop.f32.mrb[0].mxu0
  %v2735 = vadd.f32 %v2446, %v2734
  %v2736 = vpop.f32.mrb[0].mxu0
  %2737 = vmatprep.mubr.bf16.mxu0 %v1236
  %2738 = vmatmul.mubr.bf16.gmra.mrb[0].mxu0 %v1235
  %v2739 = vpop.f32.mrb[0].mxu0
  %v2740 = vadd.f32 %v2451, %v2739
  %v2741 = vpop.f32.mrb[0].mxu0
  %v2742 = vpop.f32.mrb[0].mxu0
  %v2743 = vadd.f32 %v2454, %v2742
  %v2744 = vpop.f32.mrb[0].mxu0
  %2745 = vmatprep.mubr.bf16.mxu0 %v1244
  %2746 = vmatmul.mubr.bf16.gmra.mrb[0].mxu0 %v1243
  %v2747 = vpop.f32.mrb[0].mxu0
  %v2748 = vadd.f32 %v2459, %v2747
  %v2749 = vpop.f32.mrb[0].mxu0
  %v2750 = vpop.f32.mrb[0].mxu0
  %v2751 = vadd.f32 %v2462, %v2750
  %v2752 = vpop.f32.mrb[0].mxu0
  %2753 = vmatprep.mubr.bf16.mxu0 %v1252
  %2754 = vmatmul.mubr.bf16.gmra.mrb[0].mxu0 %v1251
  %v2755 = vpop.f32.mrb[0].mxu0
  %v2756 = vadd.f32 %v2467, %v2755
  %v2757 = vpop.f32.mrb[0].mxu0
  %v2758 = vpop.f32.mrb[0].mxu0
  %v2759 = vadd.f32 %v2470, %v2758
  %v2760 = vpop.f32.mrb[0].mxu0
  %2761 = vmatprep.mubr.bf16.mxu0 %v1260
  %2762 = vmatmul.mubr.bf16.gmra.mrb[0].mxu0 %v1259
  %v2763 = vpop.f32.mrb[0].mxu0
  %v2764 = vadd.f32 %v2475, %v2763
  %v2765 = vpop.f32.mrb[0].mxu0
  %v2766 = vpop.f32.mrb[0].mxu0
  %v2767 = vadd.f32 %v2478, %v2766
  %v2768 = vpop.f32.mrb[0].mxu0
  %2769 = vmatprep.mubr.bf16.mxu0 %v1268
  %2770 = vmatmul.mubr.bf16.gmra.mrb[0].mxu0 %v1267
  %v2771 = vpop.f32.mrb[0].mxu0
  %v2772 = vadd.f32 %v2483, %v2771
  %v2773 = vpop.f32.mrb[0].mxu0
  %v2774 = vpop.f32.mrb[0].mxu0
  %v2775 = vadd.f32 %v2486, %v2774
  %v2776 = vpop.f32.mrb[0].mxu0
  %2777 = vmatprep.mubr.bf16.mxu0 %v1276
  %2778 = vmatmul.mubr.bf16.gmra.mrb[0].mxu0 %v1275
  %v2779 = vpop.f32.mrb[0].mxu0
  %v2780 = vadd.f32 %v2491, %v2779
  %v2781 = vpop.f32.mrb[0].mxu0
  %v2782 = vpop.f32.mrb[0].mxu0
  %v2783 = vadd.f32 %v2494, %v2782
  %v2784 = vpop.f32.mrb[0].mxu0
  %2785 = vmatprep.mubr.bf16.mxu0 %v1284
  %2786 = vmatmul.mubr.bf16.gmra.mrb[0].mxu0 %v1283
  %v2787 = vpop.f32.mrb[0].mxu0
  %v2788 = vadd.f32 %v2499, %v2787
  %v2789 = vpop.f32.mrb[0].mxu0
  %v2790 = vpop.f32.mrb[0].mxu0
  %v2791 = vadd.f32 %v2502, %v2790
  %v2792 = vpop.f32.mrb[0].mxu0
  %2793 = vmatprep.mubr.bf16.mxu0 %v1292
  %2794 = vmatmul.mubr.bf16.gmra.mrb[0].mxu0 %v1291
  %v2795 = vpop.f32.mrb[0].mxu0
  %v2796 = vadd.f32 %v2507, %v2795
  %v2797 = vpop.f32.mrb[0].mxu0
  %v2798 = vpop.f32.mrb[0].mxu0
  %v2799 = vadd.f32 %v2510, %v2798
  %v2800 = vpop.f32.mrb[0].mxu0
  %2801 = vmatprep.mubr.bf16.mxu0 %v1300
  %2802 = vmatmul.mubr.bf16.gmra.mrb[0].mxu0 %v1299
  %v2803 = vpop.f32.mrb[0].mxu0
  %v2804 = vadd.f32 %v2515, %v2803
  %v2805 = vpop.f32.mrb[0].mxu0
  %v2806 = vpop.f32.mrb[0].mxu0
  %v2807 = vadd.f32 %v2518, %v2806
  %v2808 = vpop.f32.mrb[0].mxu0
  %2809 = vmatprep.mubr.bf16.mxu0 %v1308
  %2810 = vmatmul.mubr.bf16.gmra.mrb[0].mxu0 %v1307
  %v2811 = vpop.f32.mrb[0].mxu0
  %v2812 = vadd.f32 %v2523, %v2811
  %v2813 = vpop.f32.mrb[0].mxu0
  %v2814 = vpop.f32.mrb[0].mxu0
  %v2815 = vadd.f32 %v2526, %v2814
  %v2816 = vpop.f32.mrb[0].mxu0
  %2817 = vmatprep.mubr.bf16.mxu0 %v1316
  %2818 = vmatmul.mubr.bf16.gmra.mrb[0].mxu0 %v1315
  %v2819 = vpop.f32.mrb[0].mxu0
  %v2820 = vadd.f32 %v2531, %v2819
  %v2821 = vpop.f32.mrb[0].mxu0
  %v2822 = vpop.f32.mrb[0].mxu0
  %v2823 = vadd.f32 %v2534, %v2822
  %v2824 = vpop.f32.mrb[0].mxu0
  %2825 = vmatprep.mubr.bf16.mxu0 %v1324
  %2826 = vmatmul.mubr.bf16.gmra.mrb[0].mxu0 %v1323
  %v2827 = vpop.f32.mrb[0].mxu0
  %v2828 = vadd.f32 %v2539, %v2827
  %v2829 = vpop.f32.mrb[0].mxu0
  %v2830 = vpop.f32.mrb[0].mxu0
  %v2831 = vadd.f32 %v2542, %v2830
  %v2832 = vpop.f32.mrb[0].mxu0
  %2833 = vmatprep.mubr.bf16.mxu0 %v1332
  %2834 = vmatmul.mubr.bf16.gmra.mrb[0].mxu0 %v1331
  %v2835 = vpop.f32.mrb[0].mxu0
  %v2836 = vadd.f32 %v2547, %v2835
  %v2837 = vpop.f32.mrb[0].mxu0
  %v2838 = vpop.f32.mrb[0].mxu0
  %v2839 = vadd.f32 %v2550, %v2838
  %v2840 = vpop.f32.mrb[0].mxu0
  %2841 = vmatprep.mubr.bf16.mxu0 %v1340
  %2842 = vmatmul.mubr.bf16.gmra.mrb[0].mxu0 %v1339
  %v2843 = vpop.f32.mrb[0].mxu0
  %v2844 = vadd.f32 %v2555, %v2843
  %v2845 = vpop.f32.mrb[0].mxu0
  %v2846 = vpop.f32.mrb[0].mxu0
  %v2847 = vadd.f32 %v2558, %v2846
  %v2848 = vpop.f32.mrb[0].mxu0
  %2849 = vmatprep.mubr.bf16.mxu0 %v1348
  %2850 = vmatmul.mubr.bf16.gmra.mrb[0].mxu0 %v1347
  %v2851 = vpop.f32.mrb[0].mxu0
  %v2852 = vadd.f32 %v2563, %v2851
  %v2853 = vpop.f32.mrb[0].mxu0
  %v2854 = vpop.f32.mrb[0].mxu0
  %v2855 = vadd.f32 %v2566, %v2854
  %v2856 = vpop.f32.mrb[0].mxu0
  %2857 = vmatprep.mubr.bf16.mxu0 %v1356
  %2858 = vmatmul.mubr.bf16.gmra.mrb[0].mxu0 %v1355
  %v2859 = vpop.f32.mrb[0].mxu0
  %v2860 = vadd.f32 %v2571, %v2859
  %v2861 = vpop.f32.mrb[0].mxu0
  %v2862 = vpop.f32.mrb[0].mxu0
  %v2863 = vadd.f32 %v2574, %v2862
  %v2864 = vpop.f32.mrb[0].mxu0
  %2865 = vmatprep.mubr.bf16.mxu0 %v1364
  %2866 = vmatmul.mubr.bf16.gmra.mrb[0].mxu0 %v1363
  %v2867 = vpop.f32.mrb[0].mxu0
  %v2868 = vadd.f32 %v2579, %v2867
  %v2869 = vpop.f32.mrb[0].mxu0
  %v2870 = vpop.f32.mrb[0].mxu0
  %v2871 = vadd.f32 %v2582, %v2870
  %v2872 = vpop.f32.mrb[0].mxu0
  %2873 = vmatprep.mubr.bf16.mxu0 %v1372
  %2874 = vmatmul.mubr.bf16.gmra.mrb[0].mxu0 %v1371
  %v2875 = vpop.f32.mrb[0].mxu0
  %v2876 = vadd.f32 %v2587, %v2875
  %v2877 = vpop.f32.mrb[0].mxu0
  %v2878 = vpop.f32.mrb[0].mxu0
  %v2879 = vadd.f32 %v2590, %v2878
  %v2880 = vpop.f32.mrb[0].mxu0
  %2881 = vmatprep.mubr.bf16.mxu0 %v1380
  %2882 = vmatmul.mubr.bf16.gmra.mrb[0].mxu0 %v1379
  %v2883 = vpop.f32.mrb[0].mxu0
  %v2884 = vadd.f32 %v2595, %v2883
  %v2885 = vpop.f32.mrb[0].mxu0
  %v2886 = vpop.f32.mrb[0].mxu0
  %v2887 = vadd.f32 %v2598, %v2886
  %v2888 = vpop.f32.mrb[0].mxu0
  %2889 = vmatprep.mubr.bf16.mxu0 %v1388
  %2890 = vmatmul.mubr.bf16.gmra.mrb[0].mxu0 %v1387
  %v2891 = vpop.f32.mrb[0].mxu0
  %v2892 = vadd.f32 %v2603, %v2891
  %v2893 = vpop.f32.mrb[0].mxu0
  %v2894 = vpop.f32.mrb[0].mxu0
  %v2895 = vadd.f32 %v2606, %v2894
  %v2896 = vpop.f32.mrb[0].mxu0
  %2897 = vmatprep.mubr.bf16.mxu0 %v1396
  %2898 = vmatmul.mubr.bf16.gmra.mrb[0].mxu0 %v1395
  %v2899 = vpop.f32.mrb[0].mxu0
  %v2900 = vadd.f32 %v2611, %v2899
  %v2901 = vpop.f32.mrb[0].mxu0
  %v2902 = vpop.f32.mrb[0].mxu0
  %v2903 = vadd.f32 %v2614, %v2902
  %v2904 = vpop.f32.mrb[0].mxu0
  %2905 = vmatprep.mubr.bf16.mxu0 %v1404
  %2906 = vmatmul.mubr.bf16.gmra.mrb[0].mxu0 %v1403
  %v2907 = vpop.f32.mrb[0].mxu0
  %v2908 = vadd.f32 %v2619, %v2907
  %v2909 = vpop.f32.mrb[0].mxu0
  %v2910 = vpop.f32.mrb[0].mxu0
  %v2911 = vadd.f32 %v2622, %v2910
  %v2912 = vpop.f32.mrb[0].mxu0
  %2913 = vmatprep.mubr.bf16.mxu0 %v1412
  %2914 = vmatmul.mubr.bf16.gmra.mrb[0].mxu0 %v1411
  %v2915 = vpop.f32.mrb[0].mxu0
  %v2916 = vadd.f32 %v2627, %v2915
  %v2917 = vpop.f32.mrb[0].mxu0
  %v2918 = vpop.f32.mrb[0].mxu0
  %v2919 = vadd.f32 %v2630, %v2918
  %v2920 = vpop.f32.mrb[0].mxu0
  %2921 = vmatprep.mubr.bf16.mxu0 %v1420
  %2922 = vmatmul.mubr.bf16.gmra.mrb[0].mxu0 %v1419
  %v2923 = vpop.f32.mrb[0].mxu0
  %v2924 = vadd.f32 %v2635, %v2923
  %v2925 = vpop.f32.mrb[0].mxu0
  %v2926 = vpop.f32.mrb[0].mxu0
  %v2927 = vadd.f32 %v2638, %v2926
  %v2928 = vpop.f32.mrb[0].mxu0
  %2929 = vdwg.mxu0
  %2930 = vmatprep.subr.bf16.mxu0 0
  %2931 = vmatpush1.bf16.msra.mxu0 %v1983
  %2932 = vmatprep.subr.bf16.mxu0 0
  %2933 = vmatpush1.bf16.msra.mxu0 %v1984
  %2934 = vmatprep.subr.bf16.mxu0 0
  %2935 = vmatpush1.bf16.msra.mxu0 %v1985
  %2936 = vmatprep.subr.bf16.mxu0 0
  %2937 = vmatpush1.bf16.msra.mxu0 %v1986
  %2938 = vmatprep.subr.bf16.mxu0 0
  %2939 = vmatpush1.bf16.msra.mxu0 %v1987
  %2940 = vmatprep.subr.bf16.mxu0 0
  %2941 = vmatpush1.bf16.msra.mxu0 %v1988
  %2942 = vmatprep.subr.bf16.mxu0 0
  %2943 = vmatpush1.bf16.msra.mxu0 %v1989
  %2944 = vmatprep.subr.bf16.mxu0 0
  %2945 = vmatpush1.bf16.msra.mxu0 %v1990
  %2946 = vmatprep.subr.bf16.mxu0 0
  %2947 = vmatpush1.bf16.msra.mxu0 %v1991
  %2948 = vmatprep.subr.bf16.mxu0 0
  %2949 = vmatpush1.bf16.msra.mxu0 %v1992
  %2950 = vmatprep.subr.bf16.mxu0 0
  %2951 = vmatpush1.bf16.msra.mxu0 %v1993
  %2952 = vmatprep.subr.bf16.mxu0 0
  %2953 = vmatpush1.bf16.msra.mxu0 %v1994
  %2954 = vmatprep.subr.bf16.mxu0 0
  %2955 = vmatpush1.bf16.msra.mxu0 %v1995
  %2956 = vmatprep.subr.bf16.mxu0 0
  %2957 = vmatpush1.bf16.msra.mxu0 %v1996
  %2958 = vmatprep.subr.bf16.mxu0 0
  %2959 = vmatpush1.bf16.msra.mxu0 %v1997
  %2960 = vmatprep.subr.bf16.mxu0 0
  %2961 = vmatpush1.bf16.msra.mxu0 %v1998
  %2962 = vmatprep.mubr.bf16.mxu0 %v1174
  %2963 = vmatmul.mubr.bf16.gmra.mrb[0].mxu0 %v1173
  %v2964 = vpop.f32.mrb[0].mxu0
  %v2965 = vadd.f32 %v2676, %v2964
  %v2966 = vpop.f32.mrb[0].mxu0
  %v2967 = vpop.f32.mrb[0].mxu0
  %v2968 = vadd.f32 %v2679, %v2967
  %v2969 = vpop.f32.mrb[0].mxu0
  %2970 = vmatprep.mubr.bf16.mxu0 %v1182
  %2971 = vmatmul.mubr.bf16.gmra.mrb[0].mxu0 %v1181
  %v2972 = vpop.f32.mrb[0].mxu0
  %v2973 = vadd.f32 %v2684, %v2972
  %v2974 = vpop.f32.mrb[0].mxu0
  %v2975 = vpop.f32.mrb[0].mxu0
  %v2976 = vadd.f32 %v2687, %v2975
  %v2977 = vpop.f32.mrb[0].mxu0
  %2978 = vmatprep.mubr.bf16.mxu0 %v1190
  %2979 = vmatmul.mubr.bf16.gmra.mrb[0].mxu0 %v1189
  %v2980 = vpop.f32.mrb[0].mxu0
  %v2981 = vadd.f32 %v2692, %v2980
  %v2982 = vpop.f32.mrb[0].mxu0
  %v2983 = vpop.f32.mrb[0].mxu0
  %v2984 = vadd.f32 %v2695, %v2983
  %v2985 = vpop.f32.mrb[0].mxu0
  %2986 = vmatprep.mubr.bf16.mxu0 %v1198
  %2987 = vmatmul.mubr.bf16.gmra.mrb[0].mxu0 %v1197
  %v2988 = vpop.f32.mrb[0].mxu0
  %v2989 = vadd.f32 %v2700, %v2988
  %v2990 = vpop.f32.mrb[0].mxu0
  %v2991 = vpop.f32.mrb[0].mxu0
  %v2992 = vadd.f32 %v2703, %v2991
  %v2993 = vpop.f32.mrb[0].mxu0
  %2994 = vmatprep.mubr.bf16.mxu0 %v1206
  %2995 = vmatmul.mubr.bf16.gmra.mrb[0].mxu0 %v1205
  %v2996 = vpop.f32.mrb[0].mxu0
  %v2997 = vadd.f32 %v2708, %v2996
  %v2998 = vpop.f32.mrb[0].mxu0
  %v2999 = vpop.f32.mrb[0].mxu0
  %v3000 = vadd.f32 %v2711, %v2999
  %v3001 = vpop.f32.mrb[0].mxu0
  %3002 = vmatprep.mubr.bf16.mxu0 %v1214
  %3003 = vmatmul.mubr.bf16.gmra.mrb[0].mxu0 %v1213
  %v3004 = vpop.f32.mrb[0].mxu0
  %v3005 = vadd.f32 %v2716, %v3004
  %v3006 = vpop.f32.mrb[0].mxu0
  %v3007 = vpop.f32.mrb[0].mxu0
  %v3008 = vadd.f32 %v2719, %v3007
  %v3009 = vpop.f32.mrb[0].mxu0
  %3010 = vmatprep.mubr.bf16.mxu0 %v1222
  %3011 = vmatmul.mubr.bf16.gmra.mrb[0].mxu0 %v1221
  %v3012 = vpop.f32.mrb[0].mxu0
  %v3013 = vadd.f32 %v2724, %v3012
  %v3014 = vpop.f32.mrb[0].mxu0
  %v3015 = vpop.f32.mrb[0].mxu0
  %v3016 = vadd.f32 %v2727, %v3015
  %v3017 = vpop.f32.mrb[0].mxu0
  %3018 = vmatprep.mubr.bf16.mxu0 %v1230
  %3019 = vmatmul.mubr.bf16.gmra.mrb[0].mxu0 %v1229
  %v3020 = vpop.f32.mrb[0].mxu0
  %v3021 = vadd.f32 %v2732, %v3020
  %v3022 = vpop.f32.mrb[0].mxu0
  %v3023 = vpop.f32.mrb[0].mxu0
  %v3024 = vadd.f32 %v2735, %v3023
  %v3025 = vpop.f32.mrb[0].mxu0
  %3026 = vmatprep.mubr.bf16.mxu0 %v1238
  %3027 = vmatmul.mubr.bf16.gmra.mrb[0].mxu0 %v1237
  %v3028 = vpop.f32.mrb[0].mxu0
  %v3029 = vadd.f32 %v2740, %v3028
  %v3030 = vpop.f32.mrb[0].mxu0
  %v3031 = vpop.f32.mrb[0].mxu0
  %v3032 = vadd.f32 %v2743, %v3031
  %v3033 = vpop.f32.mrb[0].mxu0
  %3034 = vmatprep.mubr.bf16.mxu0 %v1246
  %3035 = vmatmul.mubr.bf16.gmra.mrb[0].mxu0 %v1245
  %v3036 = vpop.f32.mrb[0].mxu0
  %v3037 = vadd.f32 %v2748, %v3036
  %v3038 = vpop.f32.mrb[0].mxu0
  %v3039 = vpop.f32.mrb[0].mxu0
  %v3040 = vadd.f32 %v2751, %v3039
  %v3041 = vpop.f32.mrb[0].mxu0
  %3042 = vmatprep.mubr.bf16.mxu0 %v1254
  %3043 = vmatmul.mubr.bf16.gmra.mrb[0].mxu0 %v1253
  %v3044 = vpop.f32.mrb[0].mxu0
  %v3045 = vadd.f32 %v2756, %v3044
  %v3046 = vpop.f32.mrb[0].mxu0
  %v3047 = vpop.f32.mrb[0].mxu0
  %v3048 = vadd.f32 %v2759, %v3047
  %v3049 = vpop.f32.mrb[0].mxu0
  %3050 = vmatprep.mubr.bf16.mxu0 %v1262
  %3051 = vmatmul.mubr.bf16.gmra.mrb[0].mxu0 %v1261
  %v3052 = vpop.f32.mrb[0].mxu0
  %v3053 = vadd.f32 %v2764, %v3052
  %v3054 = vpop.f32.mrb[0].mxu0
  %v3055 = vpop.f32.mrb[0].mxu0
  %v3056 = vadd.f32 %v2767, %v3055
  %v3057 = vpop.f32.mrb[0].mxu0
  %3058 = vmatprep.mubr.bf16.mxu0 %v1270
  %3059 = vmatmul.mubr.bf16.gmra.mrb[0].mxu0 %v1269
  %v3060 = vpop.f32.mrb[0].mxu0
  %v3061 = vadd.f32 %v2772, %v3060
  %v3062 = vpop.f32.mrb[0].mxu0
  %v3063 = vpop.f32.mrb[0].mxu0
  %v3064 = vadd.f32 %v2775, %v3063
  %v3065 = vpop.f32.mrb[0].mxu0
  %3066 = vmatprep.mubr.bf16.mxu0 %v1278
  %3067 = vmatmul.mubr.bf16.gmra.mrb[0].mxu0 %v1277
  %v3068 = vpop.f32.mrb[0].mxu0
  %v3069 = vadd.f32 %v2780, %v3068
  %v3070 = vpop.f32.mrb[0].mxu0
  %v3071 = vpop.f32.mrb[0].mxu0
  %v3072 = vadd.f32 %v2783, %v3071
  %v3073 = vpop.f32.mrb[0].mxu0
  %3074 = vmatprep.mubr.bf16.mxu0 %v1286
  %3075 = vmatmul.mubr.bf16.gmra.mrb[0].mxu0 %v1285
  %v3076 = vpop.f32.mrb[0].mxu0
  %v3077 = vadd.f32 %v2788, %v3076
  %v3078 = vpop.f32.mrb[0].mxu0
  %v3079 = vpop.f32.mrb[0].mxu0
  %v3080 = vadd.f32 %v2791, %v3079
  %v3081 = vpop.f32.mrb[0].mxu0
  %3082 = vmatprep.mubr.bf16.mxu0 %v1294
  %3083 = vmatmul.mubr.bf16.gmra.mrb[0].mxu0 %v1293
  %v3084 = vpop.f32.mrb[0].mxu0
  %v3085 = vadd.f32 %v2796, %v3084
  %v3086 = vpop.f32.mrb[0].mxu0
  %v3087 = vpop.f32.mrb[0].mxu0
  %v3088 = vadd.f32 %v2799, %v3087
  %v3089 = vpop.f32.mrb[0].mxu0
  %3090 = vmatprep.mubr.bf16.mxu0 %v1302
  %3091 = vmatmul.mubr.bf16.gmra.mrb[0].mxu0 %v1301
  %v3092 = vpop.f32.mrb[0].mxu0
  %v3093 = vadd.f32 %v2804, %v3092
  %v3094 = vpop.f32.mrb[0].mxu0
  %v3095 = vpop.f32.mrb[0].mxu0
  %v3096 = vadd.f32 %v2807, %v3095
  %v3097 = vpop.f32.mrb[0].mxu0
  %3098 = vmatprep.mubr.bf16.mxu0 %v1310
  %3099 = vmatmul.mubr.bf16.gmra.mrb[0].mxu0 %v1309
  %v3100 = vpop.f32.mrb[0].mxu0
  %v3101 = vadd.f32 %v2812, %v3100
  %v3102 = vpop.f32.mrb[0].mxu0
  %v3103 = vpop.f32.mrb[0].mxu0
  %v3104 = vadd.f32 %v2815, %v3103
  %v3105 = vpop.f32.mrb[0].mxu0
  %3106 = vmatprep.mubr.bf16.mxu0 %v1318
  %3107 = vmatmul.mubr.bf16.gmra.mrb[0].mxu0 %v1317
  %v3108 = vpop.f32.mrb[0].mxu0
  %v3109 = vadd.f32 %v2820, %v3108
  %v3110 = vpop.f32.mrb[0].mxu0
  %v3111 = vpop.f32.mrb[0].mxu0
  %v3112 = vadd.f32 %v2823, %v3111
  %v3113 = vpop.f32.mrb[0].mxu0
  %3114 = vmatprep.mubr.bf16.mxu0 %v1326
  %3115 = vmatmul.mubr.bf16.gmra.mrb[0].mxu0 %v1325
  %v3116 = vpop.f32.mrb[0].mxu0
  %v3117 = vadd.f32 %v2828, %v3116
  %v3118 = vpop.f32.mrb[0].mxu0
  %v3119 = vpop.f32.mrb[0].mxu0
  %v3120 = vadd.f32 %v2831, %v3119
  %v3121 = vpop.f32.mrb[0].mxu0
  %3122 = vmatprep.mubr.bf16.mxu0 %v1334
  %3123 = vmatmul.mubr.bf16.gmra.mrb[0].mxu0 %v1333
  %v3124 = vpop.f32.mrb[0].mxu0
  %v3125 = vadd.f32 %v2836, %v3124
  %v3126 = vpop.f32.mrb[0].mxu0
  %v3127 = vpop.f32.mrb[0].mxu0
  %v3128 = vadd.f32 %v2839, %v3127
  %v3129 = vpop.f32.mrb[0].mxu0
  %3130 = vmatprep.mubr.bf16.mxu0 %v1342
  %3131 = vmatmul.mubr.bf16.gmra.mrb[0].mxu0 %v1341
  %v3132 = vpop.f32.mrb[0].mxu0
  %v3133 = vadd.f32 %v2844, %v3132
  %v3134 = vpop.f32.mrb[0].mxu0
  %v3135 = vpop.f32.mrb[0].mxu0
  %v3136 = vadd.f32 %v2847, %v3135
  %v3137 = vpop.f32.mrb[0].mxu0
  %3138 = vmatprep.mubr.bf16.mxu0 %v1350
  %3139 = vmatmul.mubr.bf16.gmra.mrb[0].mxu0 %v1349
  %v3140 = vpop.f32.mrb[0].mxu0
  %v3141 = vadd.f32 %v2852, %v3140
  %v3142 = vpop.f32.mrb[0].mxu0
  %v3143 = vpop.f32.mrb[0].mxu0
  %v3144 = vadd.f32 %v2855, %v3143
  %v3145 = vpop.f32.mrb[0].mxu0
  %3146 = vmatprep.mubr.bf16.mxu0 %v1358
  %3147 = vmatmul.mubr.bf16.gmra.mrb[0].mxu0 %v1357
  %v3148 = vpop.f32.mrb[0].mxu0
  %v3149 = vadd.f32 %v2860, %v3148
  %v3150 = vpop.f32.mrb[0].mxu0
  %v3151 = vpop.f32.mrb[0].mxu0
  %v3152 = vadd.f32 %v2863, %v3151
  %v3153 = vpop.f32.mrb[0].mxu0
  %3154 = vmatprep.mubr.bf16.mxu0 %v1366
  %3155 = vmatmul.mubr.bf16.gmra.mrb[0].mxu0 %v1365
  %v3156 = vpop.f32.mrb[0].mxu0
  %v3157 = vadd.f32 %v2868, %v3156
  %v3158 = vpop.f32.mrb[0].mxu0
  %v3159 = vpop.f32.mrb[0].mxu0
  %v3160 = vadd.f32 %v2871, %v3159
  %v3161 = vpop.f32.mrb[0].mxu0
  %3162 = vmatprep.mubr.bf16.mxu0 %v1374
  %3163 = vmatmul.mubr.bf16.gmra.mrb[0].mxu0 %v1373
  %v3164 = vpop.f32.mrb[0].mxu0
  %v3165 = vadd.f32 %v2876, %v3164
  %v3166 = vpop.f32.mrb[0].mxu0
  %v3167 = vpop.f32.mrb[0].mxu0
  %v3168 = vadd.f32 %v2879, %v3167
  %v3169 = vpop.f32.mrb[0].mxu0
  %3170 = vmatprep.mubr.bf16.mxu0 %v1382
  %3171 = vmatmul.mubr.bf16.gmra.mrb[0].mxu0 %v1381
  %v3172 = vpop.f32.mrb[0].mxu0
  %v3173 = vadd.f32 %v2884, %v3172
  %v3174 = vpop.f32.mrb[0].mxu0
  %v3175 = vpop.f32.mrb[0].mxu0
  %v3176 = vadd.f32 %v2887, %v3175
  %v3177 = vpop.f32.mrb[0].mxu0
  %3178 = vmatprep.mubr.bf16.mxu0 %v1390
  %3179 = vmatmul.mubr.bf16.gmra.mrb[0].mxu0 %v1389
  %v3180 = vpop.f32.mrb[0].mxu0
  %v3181 = vadd.f32 %v2892, %v3180
  %v3182 = vpop.f32.mrb[0].mxu0
  %v3183 = vpop.f32.mrb[0].mxu0
  %v3184 = vadd.f32 %v2895, %v3183
  %v3185 = vpop.f32.mrb[0].mxu0
  %3186 = vmatprep.mubr.bf16.mxu0 %v1398
  %3187 = vmatmul.mubr.bf16.gmra.mrb[0].mxu0 %v1397
  %v3188 = vpop.f32.mrb[0].mxu0
  %v3189 = vadd.f32 %v2900, %v3188
  %v3190 = vpop.f32.mrb[0].mxu0
  %v3191 = vpop.f32.mrb[0].mxu0
  %v3192 = vadd.f32 %v2903, %v3191
  %v3193 = vpop.f32.mrb[0].mxu0
  %3194 = vmatprep.mubr.bf16.mxu0 %v1406
  %3195 = vmatmul.mubr.bf16.gmra.mrb[0].mxu0 %v1405
  %v3196 = vpop.f32.mrb[0].mxu0
  %v3197 = vadd.f32 %v2908, %v3196
  %v3198 = vpop.f32.mrb[0].mxu0
  %v3199 = vpop.f32.mrb[0].mxu0
  %v3200 = vadd.f32 %v2911, %v3199
  %v3201 = vpop.f32.mrb[0].mxu0
  %3202 = vmatprep.mubr.bf16.mxu0 %v1414
  %3203 = vmatmul.mubr.bf16.gmra.mrb[0].mxu0 %v1413
  %v3204 = vpop.f32.mrb[0].mxu0
  %v3205 = vadd.f32 %v2916, %v3204
  %v3206 = vpop.f32.mrb[0].mxu0
  %v3207 = vpop.f32.mrb[0].mxu0
  %v3208 = vadd.f32 %v2919, %v3207
  %v3209 = vpop.f32.mrb[0].mxu0
  %3210 = vmatprep.mubr.bf16.mxu0 %v1422
  %3211 = vmatmul.mubr.bf16.gmra.mrb[0].mxu0 %v1421
  %v3212 = vpop.f32.mrb[0].mxu0
  %v3213 = vadd.f32 %v2924, %v3212
  %v3214 = vpop.f32.mrb[0].mxu0
  %v3215 = vpop.f32.mrb[0].mxu0
  %v3216 = vadd.f32 %v2927, %v3215
  %v3217 = vpop.f32.mrb[0].mxu0
  %3218 = vdwg.mxu0
  %3219 = vst [vmem:[%s2] sm:$0xff] %v2965
  %3220 = vst [vmem:[%s2 + $0x8] sm:$0xff] %v2968
  %3221 = vst [vmem:[%s2 + $0x10] sm:$0xff] %v2973
  %3222 = vst [vmem:[%s2 + $0x18] sm:$0xff] %v2976
  %3223 = vst [vmem:[%s2 + $0x20] sm:$0xff] %v2981
  %3224 = vst [vmem:[%s2 + $0x28] sm:$0xff] %v2984
  %3225 = vst [vmem:[%s2 + $0x30] sm:$0xff] %v2989
  %3226 = vst [vmem:[%s2 + $0x38] sm:$0xff] %v2992
  %3227 = vst [vmem:[%s2 + $0x40] sm:$0xff] %v2997
  %3228 = vst [vmem:[%s2 + $0x48] sm:$0xff] %v3000
  %3229 = vst [vmem:[%s2 + $0x50] sm:$0xff] %v3005
  %3230 = vst [vmem:[%s2 + $0x58] sm:$0xff] %v3008
  %3231 = vst [vmem:[%s2 + $0x60] sm:$0xff] %v3013
  %3232 = vst [vmem:[%s2 + $0x68] sm:$0xff] %v3016
  %3233 = vst [vmem:[%s2 + $0x70] sm:$0xff] %v3021
  %3234 = vst [vmem:[%s2 + $0x78] sm:$0xff] %v3024
  %3235 = vst [vmem:[%s2 + $0x80] sm:$0xff] %v3029
  %3236 = vst [vmem:[%s2 + $0x88] sm:$0xff] %v3032
  %3237 = vst [vmem:[%s2 + $0x90] sm:$0xff] %v3037
  %3238 = vst [vmem:[%s2 + $0x98] sm:$0xff] %v3040
  %3239 = vst [vmem:[%s2 + $0xa0] sm:$0xff] %v3045
  %3240 = vst [vmem:[%s2 + $0xa8] sm:$0xff] %v3048
  %3241 = vst [vmem:[%s2 + $0xb0] sm:$0xff] %v3053
  %3242 = vst [vmem:[%s2 + $0xb8] sm:$0xff] %v3056
  %3243 = vst [vmem:[%s2 + $0xc0] sm:$0xff] %v3061
  %3244 = vst [vmem:[%s2 + $0xc8] sm:$0xff] %v3064
  %3245 = vst [vmem:[%s2 + $0xd0] sm:$0xff] %v3069
  %3246 = vst [vmem:[%s2 + $0xd8] sm:$0xff] %v3072
  %3247 = vst [vmem:[%s2 + $0xe0] sm:$0xff] %v3077
  %3248 = vst [vmem:[%s2 + $0xe8] sm:$0xff] %v3080
  %3249 = vst [vmem:[%s2 + $0xf0] sm:$0xff] %v3085
  %3250 = vst [vmem:[%s2 + $0xf8] sm:$0xff] %v3088
  %3251 = vst [vmem:[%s2 + $0x100] sm:$0xff] %v3093
  %3252 = vst [vmem:[%s2 + $0x108] sm:$0xff] %v3096
  %3253 = vst [vmem:[%s2 + $0x110] sm:$0xff] %v3101
  %3254 = vst [vmem:[%s2 + $0x118] sm:$0xff] %v3104
  %3255 = vst [vmem:[%s2 + $0x120] sm:$0xff] %v3109
  %3256 = vst [vmem:[%s2 + $0x128] sm:$0xff] %v3112
  %3257 = vst [vmem:[%s2 + $0x130] sm:$0xff] %v3117
  %3258 = vst [vmem:[%s2 + $0x138] sm:$0xff] %v3120
  %3259 = vst [vmem:[%s2 + $0x140] sm:$0xff] %v3125
  %3260 = vst [vmem:[%s2 + $0x148] sm:$0xff] %v3128
  %3261 = vst [vmem:[%s2 + $0x150] sm:$0xff] %v3133
  %3262 = vst [vmem:[%s2 + $0x158] sm:$0xff] %v3136
  %3263 = vst [vmem:[%s2 + $0x160] sm:$0xff] %v3141
  %3264 = vst [vmem:[%s2 + $0x168] sm:$0xff] %v3144
  %3265 = vst [vmem:[%s2 + $0x170] sm:$0xff] %v3149
  %3266 = vst [vmem:[%s2 + $0x178] sm:$0xff] %v3152
  %3267 = vst [vmem:[%s2 + $0x180] sm:$0xff] %v3157
  %3268 = vst [vmem:[%s2 + $0x188] sm:$0xff] %v3160
  %3269 = vst [vmem:[%s2 + $0x190] sm:$0xff] %v3165
  %3270 = vst [vmem:[%s2 + $0x198] sm:$0xff] %v3168
  %3271 = vst [vmem:[%s2 + $0x1a0] sm:$0xff] %v3173
  %3272 = vst [vmem:[%s2 + $0x1a8] sm:$0xff] %v3176
  %3273 = vst [vmem:[%s2 + $0x1b0] sm:$0xff] %v3181
  %3274 = vst [vmem:[%s2 + $0x1b8] sm:$0xff] %v3184
  %3275 = vst [vmem:[%s2 + $0x1c0] sm:$0xff] %v3189
  %3276 = vst [vmem:[%s2 + $0x1c8] sm:$0xff] %v3192
  %3277 = vst [vmem:[%s2 + $0x1d0] sm:$0xff] %v3197
  %3278 = vst [vmem:[%s2 + $0x1d8] sm:$0xff] %v3200
  %3279 = vst [vmem:[%s2 + $0x1e0] sm:$0xff] %v3205
  %3280 = vst [vmem:[%s2 + $0x1e8] sm:$0xff] %v3208
  %3281 = vst [vmem:[%s2 + $0x1f0] sm:$0xff] %v3213
  %3282 = vst [vmem:[%s2 + $0x1f8] sm:$0xff] %v3216
  %v3283 = vadd.f32 %v2965, %v2968
  %v3284 = vadd.f32 %v3283, %v2973
  %v3285 = vadd.f32 %v3284, %v2976
  %v3286 = vadd.f32 %v3285, %v2981
  %v3287 = vadd.f32 %v3286, %v2984
  %v3288 = vadd.f32 %v3287, %v2989
  %v3289 = vadd.f32 %v3288, %v2992
  %v3290 = vadd.f32 %v3289, %v2997
  %v3291 = vadd.f32 %v3290, %v3000
  %v3292 = vadd.f32 %v3291, %v3005
  %v3293 = vadd.f32 %v3292, %v3008
  %v3294 = vadd.f32 %v3293, %v3013
  %v3295 = vadd.f32 %v3294, %v3016
  %v3296 = vadd.f32 %v3295, %v3021
  %v3297 = vadd.f32 %v3296, %v3024
  %v3298 = vadd.f32 %v3297, %v3029
  %v3299 = vadd.f32 %v3298, %v3032
  %v3300 = vadd.f32 %v3299, %v3037
  %v3301 = vadd.f32 %v3300, %v3040
  %v3302 = vadd.f32 %v3301, %v3045
  %v3303 = vadd.f32 %v3302, %v3048
  %v3304 = vadd.f32 %v3303, %v3053
  %v3305 = vadd.f32 %v3304, %v3056
  %v3306 = vadd.f32 %v3305, %v3061
  %v3307 = vadd.f32 %v3306, %v3064
  %v3308 = vadd.f32 %v3307, %v3069
  %v3309 = vadd.f32 %v3308, %v3072
  %v3310 = vadd.f32 %v3309, %v3077
  %v3311 = vadd.f32 %v3310, %v3080
  %v3312 = vadd.f32 %v3311, %v3085
  %v3313 = vadd.f32 %v3312, %v3088
  %v3314 = vadd.f32 %v3313, %v3093
  %v3315 = vadd.f32 %v3314, %v3096
  %v3316 = vadd.f32 %v3315, %v3101
  %v3317 = vadd.f32 %v3316, %v3104
  %v3318 = vadd.f32 %v3317, %v3109
  %v3319 = vadd.f32 %v3318, %v3112
  %v3320 = vadd.f32 %v3319, %v3117
  %v3321 = vadd.f32 %v3320, %v3120
  %v3322 = vadd.f32 %v3321, %v3125
  %v3323 = vadd.f32 %v3322, %v3128
  %v3324 = vadd.f32 %v3323, %v3133
  %v3325 = vadd.f32 %v3324, %v3136
  %v3326 = vadd.f32 %v3325, %v3141
  %v3327 = vadd.f32 %v3326, %v3144
  %v3328 = vadd.f32 %v3327, %v3149
  %v3329 = vadd.f32 %v3328, %v3152
  %v3330 = vadd.f32 %v3329, %v3157
  %v3331 = vadd.f32 %v3330, %v3160
  %v3332 = vadd.f32 %v3331, %v3165
  %v3333 = vadd.f32 %v3332, %v3168
  %v3334 = vadd.f32 %v3333, %v3173
  %v3335 = vadd.f32 %v3334, %v3176
  %v3336 = vadd.f32 %v3335, %v3181
  %v3337 = vadd.f32 %v3336, %v3184
  %v3338 = vadd.f32 %v3337, %v3189
  %v3339 = vadd.f32 %v3338, %v3192
  %v3340 = vadd.f32 %v3339, %v3197
  %v3341 = vadd.f32 %v3340, %v3200
  %v3342 = vadd.f32 %v3341, %v3205
  %v3343 = vadd.f32 %v3342, %v3208
  %v3344 = vadd.f32 %v3343, %v3213
  %v3345 = vadd.f32 %v3344, %v3216
  %3346 = vst [vmem:[%s3] sm:$0xff] %v3345
  %v3347 = vmul.f32 %v2965, %v2965
  %v3348 = vmul.f32 %v2968, %v2968
  %v3349 = vmul.f32 %v2973, %v2973
  %v3350 = vmul.f32 %v2976, %v2976
  %v3351 = vmul.f32 %v2981, %v2981
  %v3352 = vmul.f32 %v2984, %v2984
  %v3353 = vmul.f32 %v2989, %v2989
  %v3354 = vmul.f32 %v2992, %v2992
  %v3355 = vmul.f32 %v2997, %v2997
  %v3356 = vmul.f32 %v3000, %v3000
  %v3357 = vmul.f32 %v3005, %v3005
  %v3358 = vmul.f32 %v3008, %v3008
  %v3359 = vmul.f32 %v3013, %v3013
  %v3360 = vmul.f32 %v3016, %v3016
  %v3361 = vmul.f32 %v3021, %v3021
  %v3362 = vmul.f32 %v3024, %v3024
  %v3363 = vmul.f32 %v3029, %v3029
  %v3364 = vmul.f32 %v3032, %v3032
  %v3365 = vmul.f32 %v3037, %v3037
  %v3366 = vmul.f32 %v3040, %v3040
  %v3367 = vmul.f32 %v3045, %v3045
  %v3368 = vmul.f32 %v3048, %v3048
  %v3369 = vmul.f32 %v3053, %v3053
  %v3370 = vmul.f32 %v3056, %v3056
  %v3371 = vmul.f32 %v3061, %v3061
  %v3372 = vmul.f32 %v3064, %v3064
  %v3373 = vmul.f32 %v3069, %v3069
  %v3374 = vmul.f32 %v3072, %v3072
  %v3375 = vmul.f32 %v3077, %v3077
  %v3376 = vmul.f32 %v3080, %v3080
  %v3377 = vmul.f32 %v3085, %v3085
  %v3378 = vmul.f32 %v3088, %v3088
  %v3379 = vmul.f32 %v3093, %v3093
  %v3380 = vmul.f32 %v3096, %v3096
  %v3381 = vmul.f32 %v3101, %v3101
  %v3382 = vmul.f32 %v3104, %v3104
  %v3383 = vmul.f32 %v3109, %v3109
  %v3384 = vmul.f32 %v3112, %v3112
  %v3385 = vmul.f32 %v3117, %v3117
  %v3386 = vmul.f32 %v3120, %v3120
  %v3387 = vmul.f32 %v3125, %v3125
  %v3388 = vmul.f32 %v3128, %v3128
  %v3389 = vmul.f32 %v3133, %v3133
  %v3390 = vmul.f32 %v3136, %v3136
  %v3391 = vmul.f32 %v3141, %v3141
  %v3392 = vmul.f32 %v3144, %v3144
  %v3393 = vmul.f32 %v3149, %v3149
  %v3394 = vmul.f32 %v3152, %v3152
  %v3395 = vmul.f32 %v3157, %v3157
  %v3396 = vmul.f32 %v3160, %v3160
  %v3397 = vmul.f32 %v3165, %v3165
  %v3398 = vmul.f32 %v3168, %v3168
  %v3399 = vmul.f32 %v3173, %v3173
  %v3400 = vmul.f32 %v3176, %v3176
  %v3401 = vmul.f32 %v3181, %v3181
  %v3402 = vmul.f32 %v3184, %v3184
  %v3403 = vmul.f32 %v3189, %v3189
  %v3404 = vmul.f32 %v3192, %v3192
  %v3405 = vmul.f32 %v3197, %v3197
  %v3406 = vmul.f32 %v3200, %v3200
  %v3407 = vmul.f32 %v3205, %v3205
  %v3408 = vmul.f32 %v3208, %v3208
  %v3409 = vmul.f32 %v3213, %v3213
  %v3410 = vmul.f32 %v3216, %v3216
  %v3411 = vadd.f32 %v3347, %v3348
  %v3412 = vadd.f32 %v3411, %v3349
  %v3413 = vadd.f32 %v3412, %v3350
  %v3414 = vadd.f32 %v3413, %v3351
  %v3415 = vadd.f32 %v3414, %v3352
  %v3416 = vadd.f32 %v3415, %v3353
  %v3417 = vadd.f32 %v3416, %v3354
  %v3418 = vadd.f32 %v3417, %v3355
  %v3419 = vadd.f32 %v3418, %v3356
  %v3420 = vadd.f32 %v3419, %v3357
  %v3421 = vadd.f32 %v3420, %v3358
  %v3422 = vadd.f32 %v3421, %v3359
  %v3423 = vadd.f32 %v3422, %v3360
  %v3424 = vadd.f32 %v3423, %v3361
  %v3425 = vadd.f32 %v3424, %v3362
  %v3426 = vadd.f32 %v3425, %v3363
  %v3427 = vadd.f32 %v3426, %v3364
  %v3428 = vadd.f32 %v3427, %v3365
  %v3429 = vadd.f32 %v3428, %v3366
  %v3430 = vadd.f32 %v3429, %v3367
  %v3431 = vadd.f32 %v3430, %v3368
  %v3432 = vadd.f32 %v3431, %v3369
  %v3433 = vadd.f32 %v3432, %v3370
  %v3434 = vadd.f32 %v3433, %v3371
  %v3435 = vadd.f32 %v3434, %v3372
  %v3436 = vadd.f32 %v3435, %v3373
  %v3437 = vadd.f32 %v3436, %v3374
  %v3438 = vadd.f32 %v3437, %v3375
  %v3439 = vadd.f32 %v3438, %v3376
  %v3440 = vadd.f32 %v3439, %v3377
  %v3441 = vadd.f32 %v3440, %v3378
  %v3442 = vadd.f32 %v3441, %v3379
  %v3443 = vadd.f32 %v3442, %v3380
  %v3444 = vadd.f32 %v3443, %v3381
  %v3445 = vadd.f32 %v3444, %v3382
  %v3446 = vadd.f32 %v3445, %v3383
  %v3447 = vadd.f32 %v3446, %v3384
  %v3448 = vadd.f32 %v3447, %v3385
  %v3449 = vadd.f32 %v3448, %v3386
  %v3450 = vadd.f32 %v3449, %v3387
  %v3451 = vadd.f32 %v3450, %v3388
  %v3452 = vadd.f32 %v3451, %v3389
  %v3453 = vadd.f32 %v3452, %v3390
  %v3454 = vadd.f32 %v3453, %v3391
  %v3455 = vadd.f32 %v3454, %v3392
  %v3456 = vadd.f32 %v3455, %v3393
  %v3457 = vadd.f32 %v3456, %v3394
  %v3458 = vadd.f32 %v3457, %v3395
  %v3459 = vadd.f32 %v3458, %v3396
  %v3460 = vadd.f32 %v3459, %v3397
  %v3461 = vadd.f32 %v3460, %v3398
  %v3462 = vadd.f32 %v3461, %v3399
  %v3463 = vadd.f32 %v3462, %v3400
  %v3464 = vadd.f32 %v3463, %v3401
  %v3465 = vadd.f32 %v3464, %v3402
  %v3466 = vadd.f32 %v3465, %v3403
  %v3467 = vadd.f32 %v3466, %v3404
  %v3468 = vadd.f32 %v3467, %v3405
  %v3469 = vadd.f32 %v3468, %v3406
  %v3470 = vadd.f32 %v3469, %v3407
  %v3471 = vadd.f32 %v3470, %v3408
  %v3472 = vadd.f32 %v3471, %v3409
  %v3473 = vadd.f32 %v3472, %v3410
  %3474 = vst [vmem:[%s4] sm:$0xff] %v3473
  // Predicated region
  $region10: #{generator_forward.13} parent=0 // pred_check
    _
  $region11: #{generator_forward.13} parent=0 // pred_check_branch
    %3476 = sbr.rel (0) target = $region13
  $region12: #{generator_forward.13} parent=0 // pred_region
    _
  $region13: #{generator_forward.13} parent=0 // pred_fallthru
    _
  // Predicated region
  $region14: #{generator_forward.13} parent=0 // pred_check
    _
  $region15: #{generator_forward.13} parent=0 // pred_check_branch
    %3478 = sbr.rel (0) target = $region17
  $region16: #{generator_forward.13} parent=0 // pred_region
    _
  $region17: #{generator_forward.13} parent=0 // pred_fallthru
    _
  // Predicated region
  $region18: #{generator_forward.13} parent=0 // pred_check
    _
  $region19: #{generator_forward.13} parent=0 // pred_check_branch
    %3480 = sbr.rel (0) target = $region21
  $region20: #{generator_forward.13} parent=0 // pred_region
    _
  $region21: #{generator_forward.13} parent=0 // pred_fallthru
    _
  // Predicated region
  $region22: #{generator_forward.13} parent=0 // pred_check
    _
  $region23: #{generator_forward.13} parent=0 // pred_check_branch
    %3482 = sbr.rel (0) target = $region25
  $region24: #{generator_forward.13} parent=0 // pred_region
    _
  $region25: #{generator_forward.13} parent=0 // pred_fallthru
    _
  // Predicated region
  $region26: #{generator_forward.13} parent=0 // pred_check
    _
  $region27: #{generator_forward.13} parent=0 // pred_check_branch
    %3484 = sbr.rel (0) target = $region29
  $region28: #{generator_forward.13} parent=0 // pred_region
    _
  $region29: #{generator_forward.13} parent=0 // pred_fallthru
    _
  // Predicated region
  $region30: #{generator_forward.13} parent=0 // pred_check
    _
  $region31: #{generator_forward.13} parent=0 // pred_check_branch
    %3486 = sbr.rel (0) target = $region33
  $region32: #{generator_forward.13} parent=0 // pred_region
    _
  $region33: #{generator_forward.13} parent=0 // pred_fallthru
    _

// kernel: generator_forward.15
$region0: #{generator_forward.15}
  #allocation0 [shape = 'u32[]', space=smem, size = 0x4, offset = 0x4, fixed_abs, tag = 'smem constant byte address 0x4 - core index']
  #allocation1 [shape = 'u32[144,128]{1,0:T(1,128)}', space=vmem, size = 0x12000, scoped, tag = 'internal scratch']
  %s0 = inlined_call_operand.vmem [shape: bf16[2048,512], index: 0, kind: input, shape index: {}]
  %s1 = inlined_call_operand.vmem [shape: bf16[512,128], index: 1, kind: input, shape index: {}]
  %s2 = inlined_call_operand.vmem [shape: f32[2048,128], index: 2, kind: output, shape index: {0}]
  %s3 = inlined_call_operand.vmem [shape: f32[32,128], index: 3, kind: output, shape index: {1}]
  %s4 = inlined_call_operand.vmem [shape: f32[32,128], index: 4, kind: output, shape index: {2}]
  %5 = xla_tuple %s2, %s3, %s4
  %s6 = sld [smem:[#allocation0]]
  $region57: #{generator_forward.15} parent=0
    _
  %s8 = ssub.s32 1, %s6
  %s9 = scalar_select 0, %s8, %s6
  loop: start=0, step=1, limit=6
  $region2: #{generator_forward.15} parent=0 // loop_pre_header
    _
  $region3: #{generator_forward.15} parent=0 // loop_header
    %s11 = sphi 0, %s15
    %p12 = scmp.ge.s32.totalorder %s11, 6
    %s21 = sphi 0, %s23
    %s24 = sphi 0, %s21
    %s25 = sphi 0, %s24
    %s41 = sphi 0, %s25
    %s45 = sphi 0, %s45
    %s47 = sphi 0, %s45
    %s48 = sphi 0, %s47
    %s62 = sphi 0, %s48
    %s68 = sphi 0, %s70
    %s71 = sphi 0, %s68
    %s72 = sphi 0, %s71
    %s88 = sphi 0, %s72
    %s94 = sphi 0, %s96
    %s97 = sphi 0, %s94
    %s98 = sphi 0, %s97
    %s114 = sphi 0, %s98
    %s120 = sphi 0, %s122
    %s123 = sphi 0, %s120
    %s124 = sphi 0, %s123
    %s140 = sphi 0, %s124
  $region4: #{generator_forward.15} parent=0 // loop_header_branch
    %14 = sbr.rel (%p12) target = $region8
  $region5: #{generator_forward.15} parent=0 // loop_body
    %s16 = ssub.s32 %s11, 1
    %s17 = ssub.s32 %s11, 2
    %s18 = sadd.s32 %s11, 1
    %s19 = ssub.s32 %s11, %s18
    %p20 = scmp.eq.s32.totalorder %s19, 0
    %s22 = sadd.s32 %s21, 1
    %s23 = scalar_select %p20, %s21, %s22
    %p26 = pneg %p20
    %p27 = scmp.eq.s32.totalorder %s11, 3
    %p28 = por %p26, %p27
    %p29 = scmp.ne.s32.totalorder %s21, %s24
    %p30 = scmp.eq.s32.totalorder %s11, 0
    %p31 = por %p29, %p30
    %p32 = scmp.ne.s32.totalorder %s21, %s24
    %p33 = scmp.eq.s32.totalorder %s16, 3
    %p34 = por %p32, %p33
    %p35 = scmp.ne.s32.totalorder %s24, %s25
    %p36 = scmp.eq.s32.totalorder %s16, 0
    %p37 = por %p35, %p36
    %p38 = scmp.ne.s32.totalorder %s24, %s25
    %p39 = scmp.eq.s32.totalorder %s17, 3
    %p40 = por %p38, %p39
    %p42 = scmp.ne.s32.totalorder %s25, %s41
    %p43 = scmp.eq.s32.totalorder %s17, 0
    %p44 = por %p42, %p43
    %s46 = sadd.s32 %s45, 1
    %p49 = scmp.eq.s32.totalorder %s11, 3
    %p50 = scmp.ne.s32.totalorder %s45, %s47
    %p51 = scmp.eq.s32.totalorder %s11, 0
    %p52 = por %p50, %p51
    %p53 = scmp.ne.s32.totalorder %s45, %s47
    %p54 = scmp.eq.s32.totalorder %s16, 3
    %p55 = por %p53, %p54
    %p56 = scmp.ne.s32.totalorder %s47, %s48
    %p57 = scmp.eq.s32.totalorder %s16, 0
    %p58 = por %p56, %p57
    %p59 = scmp.ne.s32.totalorder %s47, %s48
    %p60 = scmp.eq.s32.totalorder %s17, 3
    %p61 = por %p59, %p60
    %p63 = scmp.ne.s32.totalorder %s48, %s62
    %p64 = scmp.eq.s32.totalorder %s17, 0
    %p65 = por %p63, %p64
    %s66 = ssub.s32 %s11, %s18
    %p67 = scmp.eq.s32.totalorder %s66, 0
    %s69 = sadd.s32 %s68, 1
    %s70 = scalar_select %p67, %s68, %s69
    %p73 = pneg %p67
    %p74 = scmp.eq.s32.totalorder %s11, 3
    %p75 = por %p73, %p74
    %p76 = scmp.ne.s32.totalorder %s68, %s71
    %p77 = scmp.eq.s32.totalorder %s11, 0
    %p78 = por %p76, %p77
    %p79 = scmp.ne.s32.totalorder %s68, %s71
    %p80 = scmp.eq.s32.totalorder %s16, 3
    %p81 = por %p79, %p80
    %p82 = scmp.ne.s32.totalorder %s71, %s72
    %p83 = scmp.eq.s32.totalorder %s16, 0
    %p84 = por %p82, %p83
    %p85 = scmp.ne.s32.totalorder %s71, %s72
    %p86 = scmp.eq.s32.totalorder %s17, 3
    %p87 = por %p85, %p86
    %p89 = scmp.ne.s32.totalorder %s72, %s88
    %p90 = scmp.eq.s32.totalorder %s17, 0
    %p91 = por %p89, %p90
    %s92 = ssub.s32 %s11, %s18
    %p93 = scmp.eq.s32.totalorder %s92, 0
    %s95 = sadd.s32 %s94, 1
    %s96 = scalar_select %p93, %s94, %s95
    %p99 = pneg %p93
    %p100 = scmp.eq.s32.totalorder %s11, 3
    %p101 = por %p99, %p100
    %p102 = scmp.ne.s32.totalorder %s94, %s97
    %p103 = scmp.eq.s32.totalorder %s11, 0
    %p104 = por %p102, %p103
    %p105 = scmp.ne.s32.totalorder %s94, %s97
    %p106 = scmp.eq.s32.totalorder %s16, 3
    %p107 = por %p105, %p106
    %p108 = scmp.ne.s32.totalorder %s97, %s98
    %p109 = scmp.eq.s32.totalorder %s16, 0
    %p110 = por %p108, %p109
    %p111 = scmp.ne.s32.totalorder %s97, %s98
    %p112 = scmp.eq.s32.totalorder %s17, 3
    %p113 = por %p111, %p112
    %p115 = scmp.ne.s32.totalorder %s98, %s114
    %p116 = scmp.eq.s32.totalorder %s17, 0
    %p117 = por %p115, %p116
    %s118 = ssub.s32 %s11, %s18
    %p119 = scmp.eq.s32.totalorder %s118, 0
    %s121 = sadd.s32 %s120, 1
    %s122 = scalar_select %p119, %s120, %s121
    %p125 = pneg %p119
    %p126 = scmp.eq.s32.totalorder %s11, 3
    %p127 = por %p125, %p126
    %p128 = scmp.ne.s32.totalorder %s120, %s123
    %p129 = scmp.eq.s32.totalorder %s11, 0
    %p130 = por %p128, %p129
    %p131 = scmp.ne.s32.totalorder %s120, %s123
    %p132 = scmp.eq.s32.totalorder %s16, 3
    %p133 = por %p131, %p132
    %p134 = scmp.ne.s32.totalorder %s123, %s124
    %p135 = scmp.eq.s32.totalorder %s16, 0
    %p136 = por %p134, %p135
    %p137 = scmp.ne.s32.totalorder %s123, %s124
    %p138 = scmp.eq.s32.totalorder %s17, 3
    %p139 = por %p137, %p138
    %p141 = scmp.ne.s32.totalorder %s124, %s140
    %p142 = scmp.eq.s32.totalorder %s17, 0
    %p143 = por %p141, %p142
    %p144 = scmp.le.s32.totalorder 1, %s11
    %p145 = scmp.lt.s32.totalorder %s11, 5
    %p146 = pnand %p144, %p145
    %p147 = pneg %p146
    // Predicated region
    $region9: #{generator_forward.15} parent=5 // pred_check
      _
    $region10: #{generator_forward.15} parent=5 // pred_check_branch
      %149 = sbr.rel (%p146) target = $region12
    $region11: #{generator_forward.15} parent=5 // pred_region
      %s150 = ssub.s32 %s11, 1
      // Predicated region
      $region13: #{generator_forward.15} parent=11 // pred_check
        %p151 = pneg %p58
      $region14: #{generator_forward.15} parent=11 // pred_check_branch
        %153 = sbr.rel (%p151) target = $region16
      $region15: #{generator_forward.15} parent=11 // pred_region
        _
      $region16: #{generator_forward.15} parent=11 // pred_fallthru
        _
    $region12: #{generator_forward.15} parent=5 // pred_fallthru
      _
    %p154 = scmp.lt.s32.totalorder %s11, 4
    // Predicated region
    $region17: #{generator_forward.15} parent=5 // pred_check
      %p155 = pneg %p154
    $region18: #{generator_forward.15} parent=5 // pred_check_branch
      %157 = sbr.rel (%p155) target = $region20
    $region19: #{generator_forward.15} parent=5 // pred_region
      // Predicated region
      $region21: #{generator_forward.15} parent=19 // pred_check
        %p158 = pneg %p31
      $region22: #{generator_forward.15} parent=19 // pred_check_branch
        %160 = sbr.rel (%p158) target = $region24
      $region23: #{generator_forward.15} parent=19 // pred_region
        %s161 = smul.u32 64, %s11
        %p162 = scmp.lt.s32.totalorder %s161, 255
        %s163 = scalar_select %p162, %s161, 255
        %s164 = smul.addr %s163, 4
        %s165 = smul.addr %s164, 4
        %s166 = scalar_lea.vmem %s0, %s165
        %s167 = smul.u32 64, %s11
      $region24: #{generator_forward.15} parent=19 // pred_fallthru
        _
    $region20: #{generator_forward.15} parent=5 // pred_fallthru
      _
    %p168 = scmp.le.s32.totalorder 1, %s11
    %p169 = scmp.lt.s32.totalorder %s11, 5
    %p170 = pnand %p168, %p169
    %p171 = pneg %p170
    // Predicated region
    $region25: #{generator_forward.15} parent=5 // pred_check
      _
    $region26: #{generator_forward.15} parent=5 // pred_check_branch
      %173 = sbr.rel (%p170) target = $region28
    $region27: #{generator_forward.15} parent=5 // pred_region
      %s174 = ssub.s32 %s11, 1
      %s175 = smul.u32 64, %s16
      %p176 = scmp.lt.s32.totalorder %s175, 255
      %s177 = scalar_select %p176, %s175, 255
      %s178 = smul.addr %s177, 4
      %s179 = smul.addr %s178, 4
      %s180 = scalar_lea.vmem %s0, %s179
      %p181 = pneg %p37
      %p182 = pneg %p34
      %p183 = pneg %p58
      %p184 = pneg %p55
      %p185 = pneg %p84
      %p186 = pneg %p81
      %s187 = smul.u32 64, %s16
      %p188 = scmp.lt.s32.totalorder %s187, 255
      %s189 = scalar_select %p188, %s187, 255
      %s190 = smul.addr %s189, 8
      %s191 = scalar_lea.vmem %s2, %s190
      %p192 = pneg %p110
      %p193 = pneg %p107
      %p194 = scmp.lt.s32.totalorder %s16, 3
      %s195 = scalar_select %p194, %s16, 3
      %s196 = smul.addr %s195, 8
      %s197 = scalar_lea.vmem %s3, %s196
      %p198 = pneg %p136
      %p199 = pneg %p133
      %p200 = scmp.lt.s32.totalorder %s16, 3
      %s201 = scalar_select %p200, %s16, 3
      %s202 = smul.addr %s201, 8
      %s203 = scalar_lea.vmem %s4, %s202
      %s204 = smul.u32 64, %s16
      %p205 = scmp.lt.s32.totalorder %s204, 255
      %s206 = scalar_select %p205, %s204, 255
      %s207 = smul.addr %s206, 4
      %s208 = smul.addr %s207, 4
      %s209 = scalar_lea.vmem %s0, %s208
      %s210 = smul.u32 64, %s16
      %s211 = smul.u32 64, %s16
      %p212 = scmp.lt.s32.totalorder %s211, 255
      %s213 = scalar_select %p212, %s211, 255
      %s214 = smul.addr %s213, 8
      %s215 = scalar_lea.vmem %s2, %s214
      %s216 = smul.u32 64, %s16
      %p217 = scmp.lt.s32.totalorder %s16, 3
      %s218 = scalar_select %p217, %s16, 3
      %s219 = smul.addr %s218, 8
      %s220 = scalar_lea.vmem %s3, %s219
      %p221 = scmp.lt.s32.totalorder %s16, 3
      %s222 = scalar_select %p221, %s16, 3
      %s223 = smul.addr %s222, 8
      %s224 = scalar_lea.vmem %s4, %s223
      %v226 = vld [vmem:[%s209] sm:$0xff]
      %v227 = vld [vmem:[%s209 + $0x8] sm:$0xff]
      %v228 = vld [vmem:[%s209 + $0x10] sm:$0xff]
      %v229 = vld [vmem:[%s209 + $0x18] sm:$0xff]
      %v230 = vld [vmem:[%s209 + $0x20] sm:$0xff]
      %v231 = vld [vmem:[%s209 + $0x28] sm:$0xff]
      %v232 = vld [vmem:[%s209 + $0x30] sm:$0xff]
      %v233 = vld [vmem:[%s209 + $0x38] sm:$0xff]
      %v234 = vld [vmem:[%s209 + $0x40] sm:$0xff]
      %v235 = vld [vmem:[%s209 + $0x48] sm:$0xff]
      %v236 = vld [vmem:[%s209 + $0x50] sm:$0xff]
      %v237 = vld [vmem:[%s209 + $0x58] sm:$0xff]
      %v238 = vld [vmem:[%s209 + $0x60] sm:$0xff]
      %v239 = vld [vmem:[%s209 + $0x68] sm:$0xff]
      %v240 = vld [vmem:[%s209 + $0x70] sm:$0xff]
      %v241 = vld [vmem:[%s209 + $0x78] sm:$0xff]
      %v242 = vld [vmem:[%s209 + $0x80] sm:$0xff]
      %v243 = vld [vmem:[%s209 + $0x88] sm:$0xff]
      %v244 = vld [vmem:[%s209 + $0x90] sm:$0xff]
      %v245 = vld [vmem:[%s209 + $0x98] sm:$0xff]
      %v246 = vld [vmem:[%s209 + $0xa0] sm:$0xff]
      %v247 = vld [vmem:[%s209 + $0xa8] sm:$0xff]
      %v248 = vld [vmem:[%s209 + $0xb0] sm:$0xff]
      %v249 = vld [vmem:[%s209 + $0xb8] sm:$0xff]
      %v250 = vld [vmem:[%s209 + $0xc0] sm:$0xff]
      %v251 = vld [vmem:[%s209 + $0xc8] sm:$0xff]
      %v252 = vld [vmem:[%s209 + $0xd0] sm:$0xff]
      %v253 = vld [vmem:[%s209 + $0xd8] sm:$0xff]
      %v254 = vld [vmem:[%s209 + $0xe0] sm:$0xff]
      %v255 = vld [vmem:[%s209 + $0xe8] sm:$0xff]
      %v256 = vld [vmem:[%s209 + $0xf0] sm:$0xff]
      %v257 = vld [vmem:[%s209 + $0xf8] sm:$0xff]
      %v258 = vld [vmem:[%s209 + $0x100] sm:$0xff]
      %v259 = vld [vmem:[%s209 + $0x108] sm:$0xff]
      %v260 = vld [vmem:[%s209 + $0x110] sm:$0xff]
      %v261 = vld [vmem:[%s209 + $0x118] sm:$0xff]
      %v262 = vld [vmem:[%s209 + $0x120] sm:$0xff]
      %v263 = vld [vmem:[%s209 + $0x128] sm:$0xff]
      %v264 = vld [vmem:[%s209 + $0x130] sm:$0xff]
      %v265 = vld [vmem:[%s209 + $0x138] sm:$0xff]
      %v266 = vld [vmem:[%s209 + $0x140] sm:$0xff]
      %v267 = vld [vmem:[%s209 + $0x148] sm:$0xff]
      %v268 = vld [vmem:[%s209 + $0x150] sm:$0xff]
      %v269 = vld [vmem:[%s209 + $0x158] sm:$0xff]
      %v270 = vld [vmem:[%s209 + $0x160] sm:$0xff]
      %v271 = vld [vmem:[%s209 + $0x168] sm:$0xff]
      %v272 = vld [vmem:[%s209 + $0x170] sm:$0xff]
      %v273 = vld [vmem:[%s209 + $0x178] sm:$0xff]
      %v274 = vld [vmem:[%s209 + $0x180] sm:$0xff]
      %v275 = vld [vmem:[%s209 + $0x188] sm:$0xff]
      %v276 = vld [vmem:[%s209 + $0x190] sm:$0xff]
      %v277 = vld [vmem:[%s209 + $0x198] sm:$0xff]
      %v278 = vld [vmem:[%s209 + $0x1a0] sm:$0xff]
      %v279 = vld [vmem:[%s209 + $0x1a8] sm:$0xff]
      %v280 = vld [vmem:[%s209 + $0x1b0] sm:$0xff]
      %v281 = vld [vmem:[%s209 + $0x1b8] sm:$0xff]
      %v282 = vld [vmem:[%s209 + $0x1c0] sm:$0xff]
      %v283 = vld [vmem:[%s209 + $0x1c8] sm:$0xff]
      %v284 = vld [vmem:[%s209 + $0x1d0] sm:$0xff]
      %v285 = vld [vmem:[%s209 + $0x1d8] sm:$0xff]
      %v286 = vld [vmem:[%s209 + $0x1e0] sm:$0xff]
      %v287 = vld [vmem:[%s209 + $0x1e8] sm:$0xff]
      %v288 = vld [vmem:[%s209 + $0x1f0] sm:$0xff]
      %v289 = vld [vmem:[%s209 + $0x1f8] sm:$0xff]
      %v290 = vld [vmem:[%s209 + $0x200] sm:$0xff]
      %v291 = vld [vmem:[%s209 + $0x208] sm:$0xff]
      %v292 = vld [vmem:[%s209 + $0x210] sm:$0xff]
      %v293 = vld [vmem:[%s209 + $0x218] sm:$0xff]
      %v294 = vld [vmem:[%s209 + $0x220] sm:$0xff]
      %v295 = vld [vmem:[%s209 + $0x228] sm:$0xff]
      %v296 = vld [vmem:[%s209 + $0x230] sm:$0xff]
      %v297 = vld [vmem:[%s209 + $0x238] sm:$0xff]
      %v298 = vld [vmem:[%s209 + $0x240] sm:$0xff]
      %v299 = vld [vmem:[%s209 + $0x248] sm:$0xff]
      %v300 = vld [vmem:[%s209 + $0x250] sm:$0xff]
      %v301 = vld [vmem:[%s209 + $0x258] sm:$0xff]
      %v302 = vld [vmem:[%s209 + $0x260] sm:$0xff]
      %v303 = vld [vmem:[%s209 + $0x268] sm:$0xff]
      %v304 = vld [vmem:[%s209 + $0x270] sm:$0xff]
      %v305 = vld [vmem:[%s209 + $0x278] sm:$0xff]
      %v306 = vld [vmem:[%s209 + $0x280] sm:$0xff]
      %v307 = vld [vmem:[%s209 + $0x288] sm:$0xff]
      %v308 = vld [vmem:[%s209 + $0x290] sm:$0xff]
      %v309 = vld [vmem:[%s209 + $0x298] sm:$0xff]
      %v310 = vld [vmem:[%s209 + $0x2a0] sm:$0xff]
      %v311 = vld [vmem:[%s209 + $0x2a8] sm:$0xff]
      %v312 = vld [vmem:[%s209 + $0x2b0] sm:$0xff]
      %v313 = vld [vmem:[%s209 + $0x2b8] sm:$0xff]
      %v314 = vld [vmem:[%s209 + $0x2c0] sm:$0xff]
      %v315 = vld [vmem:[%s209 + $0x2c8] sm:$0xff]
      %v316 = vld [vmem:[%s209 + $0x2d0] sm:$0xff]
      %v317 = vld [vmem:[%s209 + $0x2d8] sm:$0xff]
      %v318 = vld [vmem:[%s209 + $0x2e0] sm:$0xff]
      %v319 = vld [vmem:[%s209 + $0x2e8] sm:$0xff]
      %v320 = vld [vmem:[%s209 + $0x2f0] sm:$0xff]
      %v321 = vld [vmem:[%s209 + $0x2f8] sm:$0xff]
      %v322 = vld [vmem:[%s209 + $0x300] sm:$0xff]
      %v323 = vld [vmem:[%s209 + $0x308] sm:$0xff]
      %v324 = vld [vmem:[%s209 + $0x310] sm:$0xff]
      %v325 = vld [vmem:[%s209 + $0x318] sm:$0xff]
      %v326 = vld [vmem:[%s209 + $0x320] sm:$0xff]
      %v327 = vld [vmem:[%s209 + $0x328] sm:$0xff]
      %v328 = vld [vmem:[%s209 + $0x330] sm:$0xff]
      %v329 = vld [vmem:[%s209 + $0x338] sm:$0xff]
      %v330 = vld [vmem:[%s209 + $0x340] sm:$0xff]
      %v331 = vld [vmem:[%s209 + $0x348] sm:$0xff]
      %v332 = vld [vmem:[%s209 + $0x350] sm:$0xff]
      %v333 = vld [vmem:[%s209 + $0x358] sm:$0xff]
      %v334 = vld [vmem:[%s209 + $0x360] sm:$0xff]
      %v335 = vld [vmem:[%s209 + $0x368] sm:$0xff]
      %v336 = vld [vmem:[%s209 + $0x370] sm:$0xff]
      %v337 = vld [vmem:[%s209 + $0x378] sm:$0xff]
      %v338 = vld [vmem:[%s209 + $0x380] sm:$0xff]
      %v339 = vld [vmem:[%s209 + $0x388] sm:$0xff]
      %v340 = vld [vmem:[%s209 + $0x390] sm:$0xff]
      %v341 = vld [vmem:[%s209 + $0x398] sm:$0xff]
      %v342 = vld [vmem:[%s209 + $0x3a0] sm:$0xff]
      %v343 = vld [vmem:[%s209 + $0x3a8] sm:$0xff]
      %v344 = vld [vmem:[%s209 + $0x3b0] sm:$0xff]
      %v345 = vld [vmem:[%s209 + $0x3b8] sm:$0xff]
      %v346 = vld [vmem:[%s209 + $0x3c0] sm:$0xff]
      %v347 = vld [vmem:[%s209 + $0x3c8] sm:$0xff]
      %v348 = vld [vmem:[%s209 + $0x3d0] sm:$0xff]
      %v349 = vld [vmem:[%s209 + $0x3d8] sm:$0xff]
      %v350 = vld [vmem:[%s209 + $0x3e0] sm:$0xff]
      %v351 = vld [vmem:[%s209 + $0x3e8] sm:$0xff]
      %v352 = vld [vmem:[%s209 + $0x3f0] sm:$0xff]
      %v353 = vld [vmem:[%s209 + $0x3f8] sm:$0xff]
      %v354 = vld [vmem:[%s1] sm:$0xf]
      %v355 = vld [vmem:[%s1 + $0x4] sm:$0xf]
      %v356 = vld [vmem:[%s1 + $0x8] sm:$0xf]
      %v357 = vld [vmem:[%s1 + $0xc] sm:$0xf]
      %v358 = vld [vmem:[%s1 + $0x10] sm:$0xf]
      %v359 = vld [vmem:[%s1 + $0x14] sm:$0xf]
      %v360 = vld [vmem:[%s1 + $0x18] sm:$0xf]
      %v361 = vld [vmem:[%s1 + $0x1c] sm:$0xf]
      %v362 = vld [vmem:[%s1 + $0x20] sm:$0xf]
      %v363 = vld [vmem:[%s1 + $0x24] sm:$0xf]
      %v364 = vld [vmem:[%s1 + $0x28] sm:$0xf]
      %v365 = vld [vmem:[%s1 + $0x2c] sm:$0xf]
      %v366 = vld [vmem:[%s1 + $0x30] sm:$0xf]
      %v367 = vld [vmem:[%s1 + $0x34] sm:$0xf]
      %v368 = vld [vmem:[%s1 + $0x38] sm:$0xf]
      %v369 = vld [vmem:[%s1 + $0x3c] sm:$0xf]
      %v370 = vld [vmem:[%s1 + $0x40] sm:$0xf]
      %v371 = vld [vmem:[%s1 + $0x44] sm:$0xf]
      %v372 = vld [vmem:[%s1 + $0x48] sm:$0xf]
      %v373 = vld [vmem:[%s1 + $0x4c] sm:$0xf]
      %v374 = vld [vmem:[%s1 + $0x50] sm:$0xf]
      %v375 = vld [vmem:[%s1 + $0x54] sm:$0xf]
      %v376 = vld [vmem:[%s1 + $0x58] sm:$0xf]
      %v377 = vld [vmem:[%s1 + $0x5c] sm:$0xf]
      %v378 = vld [vmem:[%s1 + $0x60] sm:$0xf]
      %v379 = vld [vmem:[%s1 + $0x64] sm:$0xf]
      %v380 = vld [vmem:[%s1 + $0x68] sm:$0xf]
      %v381 = vld [vmem:[%s1 + $0x6c] sm:$0xf]
      %v382 = vld [vmem:[%s1 + $0x70] sm:$0xf]
      %v383 = vld [vmem:[%s1 + $0x74] sm:$0xf]
      %v384 = vld [vmem:[%s1 + $0x78] sm:$0xf]
      %v385 = vld [vmem:[%s1 + $0x7c] sm:$0xf]
      %v386 = vld [vmem:[%s1 + $0x80] sm:$0xf]
      %v387 = vld [vmem:[%s1 + $0x84] sm:$0xf]
      %v388 = vld [vmem:[%s1 + $0x88] sm:$0xf]
      %v389 = vld [vmem:[%s1 + $0x8c] sm:$0xf]
      %v390 = vld [vmem:[%s1 + $0x90] sm:$0xf]
      %v391 = vld [vmem:[%s1 + $0x94] sm:$0xf]
      %v392 = vld [vmem:[%s1 + $0x98] sm:$0xf]
      %v393 = vld [vmem:[%s1 + $0x9c] sm:$0xf]
      %v394 = vld [vmem:[%s1 + $0xa0] sm:$0xf]
      %v395 = vld [vmem:[%s1 + $0xa4] sm:$0xf]
      %v396 = vld [vmem:[%s1 + $0xa8] sm:$0xf]
      %v397 = vld [vmem:[%s1 + $0xac] sm:$0xf]
      %v398 = vld [vmem:[%s1 + $0xb0] sm:$0xf]
      %v399 = vld [vmem:[%s1 + $0xb4] sm:$0xf]
      %v400 = vld [vmem:[%s1 + $0xb8] sm:$0xf]
      %v401 = vld [vmem:[%s1 + $0xbc] sm:$0xf]
      %v402 = vld [vmem:[%s1 + $0xc0] sm:$0xf]
      %v403 = vld [vmem:[%s1 + $0xc4] sm:$0xf]
      %v404 = vld [vmem:[%s1 + $0xc8] sm:$0xf]
      %v405 = vld [vmem:[%s1 + $0xcc] sm:$0xf]
      %v406 = vld [vmem:[%s1 + $0xd0] sm:$0xf]
      %v407 = vld [vmem:[%s1 + $0xd4] sm:$0xf]
      %v408 = vld [vmem:[%s1 + $0xd8] sm:$0xf]
      %v409 = vld [vmem:[%s1 + $0xdc] sm:$0xf]
      %v410 = vld [vmem:[%s1 + $0xe0] sm:$0xf]
      %v411 = vld [vmem:[%s1 + $0xe4] sm:$0xf]
      %v412 = vld [vmem:[%s1 + $0xe8] sm:$0xf]
      %v413 = vld [vmem:[%s1 + $0xec] sm:$0xf]
      %v414 = vld [vmem:[%s1 + $0xf0] sm:$0xf]
      %v415 = vld [vmem:[%s1 + $0xf4] sm:$0xf]
      %v416 = vld [vmem:[%s1 + $0xf8] sm:$0xf]
      %v417 = vld [vmem:[%s1 + $0xfc] sm:$0xf]
      %v546 = vunpack.c.l.b16 %v226
      %v547 = vunpack.c.h.b16 %v226
      %v548 = vunpack.c.l.b16 %v227
      %v549 = vunpack.c.h.b16 %v227
      %v550 = vunpack.c.l.b16 %v228
      %v551 = vunpack.c.h.b16 %v228
      %v552 = vunpack.c.l.b16 %v229
      %v553 = vunpack.c.h.b16 %v229
      %v554 = vunpack.c.l.b16 %v230
      %v555 = vunpack.c.h.b16 %v230
      %v556 = vunpack.c.l.b16 %v231
      %v557 = vunpack.c.h.b16 %v231
      %v558 = vunpack.c.l.b16 %v232
      %v559 = vunpack.c.h.b16 %v232
      %v560 = vunpack.c.l.b16 %v233
      %v561 = vunpack.c.h.b16 %v233
      %v562 = vunpack.c.l.b16 %v234
      %v563 = vunpack.c.h.b16 %v234
      %v564 = vunpack.c.l.b16 %v235
      %v565 = vunpack.c.h.b16 %v235
      %v566 = vunpack.c.l.b16 %v236
      %v567 = vunpack.c.h.b16 %v236
      %v568 = vunpack.c.l.b16 %v237
      %v569 = vunpack.c.h.b16 %v237
      %v570 = vunpack.c.l.b16 %v238
      %v571 = vunpack.c.h.b16 %v238
      %v572 = vunpack.c.l.b16 %v239
      %v573 = vunpack.c.h.b16 %v239
      %v574 = vunpack.c.l.b16 %v240
      %v575 = vunpack.c.h.b16 %v240
      %v576 = vunpack.c.l.b16 %v241
      %v577 = vunpack.c.h.b16 %v241
      %v578 = vunpack.c.l.b16 %v242
      %v579 = vunpack.c.h.b16 %v242
      %v580 = vunpack.c.l.b16 %v243
      %v581 = vunpack.c.h.b16 %v243
      %v582 = vunpack.c.l.b16 %v244
      %v583 = vunpack.c.h.b16 %v244
      %v584 = vunpack.c.l.b16 %v245
      %v585 = vunpack.c.h.b16 %v245
      %v586 = vunpack.c.l.b16 %v246
      %v587 = vunpack.c.h.b16 %v246
      %v588 = vunpack.c.l.b16 %v247
      %v589 = vunpack.c.h.b16 %v247
      %v590 = vunpack.c.l.b16 %v248
      %v591 = vunpack.c.h.b16 %v248
      %v592 = vunpack.c.l.b16 %v249
      %v593 = vunpack.c.h.b16 %v249
      %v594 = vunpack.c.l.b16 %v250
      %v595 = vunpack.c.h.b16 %v250
      %v596 = vunpack.c.l.b16 %v251
      %v597 = vunpack.c.h.b16 %v251
      %v598 = vunpack.c.l.b16 %v252
      %v599 = vunpack.c.h.b16 %v252
      %v600 = vunpack.c.l.b16 %v253
      %v601 = vunpack.c.h.b16 %v253
      %v602 = vunpack.c.l.b16 %v254
      %v603 = vunpack.c.h.b16 %v254
      %v604 = vunpack.c.l.b16 %v255
      %v605 = vunpack.c.h.b16 %v255
      %v606 = vunpack.c.l.b16 %v256
      %v607 = vunpack.c.h.b16 %v256
      %v608 = vunpack.c.l.b16 %v257
      %v609 = vunpack.c.h.b16 %v257
      %v610 = vunpack.c.l.b16 %v258
      %v611 = vunpack.c.h.b16 %v258
      %v612 = vunpack.c.l.b16 %v259
      %v613 = vunpack.c.h.b16 %v259
      %v614 = vunpack.c.l.b16 %v260
      %v615 = vunpack.c.h.b16 %v260
      %v616 = vunpack.c.l.b16 %v261
      %v617 = vunpack.c.h.b16 %v261
      %v618 = vunpack.c.l.b16 %v262
      %v619 = vunpack.c.h.b16 %v262
      %v620 = vunpack.c.l.b16 %v263
      %v621 = vunpack.c.h.b16 %v263
      %v622 = vunpack.c.l.b16 %v264
      %v623 = vunpack.c.h.b16 %v264
      %v624 = vunpack.c.l.b16 %v265
      %v625 = vunpack.c.h.b16 %v265
      %v626 = vunpack.c.l.b16 %v266
      %v627 = vunpack.c.h.b16 %v266
      %v628 = vunpack.c.l.b16 %v267
      %v629 = vunpack.c.h.b16 %v267
      %v630 = vunpack.c.l.b16 %v268
      %v631 = vunpack.c.h.b16 %v268
      %v632 = vunpack.c.l.b16 %v269
      %v633 = vunpack.c.h.b16 %v269
      %v634 = vunpack.c.l.b16 %v270
      %v635 = vunpack.c.h.b16 %v270
      %v636 = vunpack.c.l.b16 %v271
      %v637 = vunpack.c.h.b16 %v271
      %v638 = vunpack.c.l.b16 %v272
      %v639 = vunpack.c.h.b16 %v272
      %v640 = vunpack.c.l.b16 %v273
      %v641 = vunpack.c.h.b16 %v273
      %v642 = vunpack.c.l.b16 %v274
      %v643 = vunpack.c.h.b16 %v274
      %v644 = vunpack.c.l.b16 %v275
      %v645 = vunpack.c.h.b16 %v275
      %v646 = vunpack.c.l.b16 %v276
      %v647 = vunpack.c.h.b16 %v276
      %v648 = vunpack.c.l.b16 %v277
      %v649 = vunpack.c.h.b16 %v277
      %v650 = vunpack.c.l.b16 %v278
      %v651 = vunpack.c.h.b16 %v278
      %v652 = vunpack.c.l.b16 %v279
      %v653 = vunpack.c.h.b16 %v279
      %v654 = vunpack.c.l.b16 %v280
      %v655 = vunpack.c.h.b16 %v280
      %v656 = vunpack.c.l.b16 %v281
      %v657 = vunpack.c.h.b16 %v281
      %v658 = vunpack.c.l.b16 %v282
      %v659 = vunpack.c.h.b16 %v282
      %v660 = vunpack.c.l.b16 %v283
      %v661 = vunpack.c.h.b16 %v283
      %v662 = vunpack.c.l.b16 %v284
      %v663 = vunpack.c.h.b16 %v284
      %v664 = vunpack.c.l.b16 %v285
      %v665 = vunpack.c.h.b16 %v285
      %v666 = vunpack.c.l.b16 %v286
      %v667 = vunpack.c.h.b16 %v286
      %v668 = vunpack.c.l.b16 %v287
      %v669 = vunpack.c.h.b16 %v287
      %v670 = vunpack.c.l.b16 %v288
      %v671 = vunpack.c.h.b16 %v288
      %v672 = vunpack.c.l.b16 %v289
      %v673 = vunpack.c.h.b16 %v289
      %v674 = vunpack.c.l.b16 %v290
      %v675 = vunpack.c.h.b16 %v290
      %v676 = vunpack.c.l.b16 %v291
      %v677 = vunpack.c.h.b16 %v291
      %v678 = vunpack.c.l.b16 %v292
      %v679 = vunpack.c.h.b16 %v292
      %v680 = vunpack.c.l.b16 %v293
      %v681 = vunpack.c.h.b16 %v293
      %v682 = vunpack.c.l.b16 %v294
      %v683 = vunpack.c.h.b16 %v294
      %v684 = vunpack.c.l.b16 %v295
      %v685 = vunpack.c.h.b16 %v295
      %v686 = vunpack.c.l.b16 %v296
      %v687 = vunpack.c.h.b16 %v296
      %v688 = vunpack.c.l.b16 %v297
      %v689 = vunpack.c.h.b16 %v297
      %v690 = vunpack.c.l.b16 %v298
      %v691 = vunpack.c.h.b16 %v298
      %v692 = vunpack.c.l.b16 %v299
      %v693 = vunpack.c.h.b16 %v299
      %v694 = vunpack.c.l.b16 %v300
      %v695 = vunpack.c.h.b16 %v300
      %v696 = vunpack.c.l.b16 %v301
      %v697 = vunpack.c.h.b16 %v301
      %v698 = vunpack.c.l.b16 %v302
      %v699 = vunpack.c.h.b16 %v302
      %v700 = vunpack.c.l.b16 %v303
      %v701 = vunpack.c.h.b16 %v303
      %v702 = vunpack.c.l.b16 %v304
      %v703 = vunpack.c.h.b16 %v304
      %v704 = vunpack.c.l.b16 %v305
      %v705 = vunpack.c.h.b16 %v305
      %v706 = vunpack.c.l.b16 %v306
      %v707 = vunpack.c.h.b16 %v306
      %v708 = vunpack.c.l.b16 %v307
      %v709 = vunpack.c.h.b16 %v307
      %v710 = vunpack.c.l.b16 %v308
      %v711 = vunpack.c.h.b16 %v308
      %v712 = vunpack.c.l.b16 %v309
      %v713 = vunpack.c.h.b16 %v309
      %v714 = vunpack.c.l.b16 %v310
      %v715 = vunpack.c.h.b16 %v310
      %v716 = vunpack.c.l.b16 %v311
      %v717 = vunpack.c.h.b16 %v311
      %v718 = vunpack.c.l.b16 %v312
      %v719 = vunpack.c.h.b16 %v312
      %v720 = vunpack.c.l.b16 %v313
      %v721 = vunpack.c.h.b16 %v313
      %v722 = vunpack.c.l.b16 %v314
      %v723 = vunpack.c.h.b16 %v314
      %v724 = vunpack.c.l.b16 %v315
      %v725 = vunpack.c.h.b16 %v315
      %v726 = vunpack.c.l.b16 %v316
      %v727 = vunpack.c.h.b16 %v316
      %v728 = vunpack.c.l.b16 %v317
      %v729 = vunpack.c.h.b16 %v317
      %v730 = vunpack.c.l.b16 %v318
      %v731 = vunpack.c.h.b16 %v318
      %v732 = vunpack.c.l.b16 %v319
      %v733 = vunpack.c.h.b16 %v319
      %v734 = vunpack.c.l.b16 %v320
      %v735 = vunpack.c.h.b16 %v320
      %v736 = vunpack.c.l.b16 %v321
      %v737 = vunpack.c.h.b16 %v321
      %v738 = vunpack.c.l.b16 %v322
      %v739 = vunpack.c.h.b16 %v322
      %v740 = vunpack.c.l.b16 %v323
      %v741 = vunpack.c.h.b16 %v323
      %v742 = vunpack.c.l.b16 %v324
      %v743 = vunpack.c.h.b16 %v324
      %v744 = vunpack.c.l.b16 %v325
      %v745 = vunpack.c.h.b16 %v325
      %v746 = vunpack.c.l.b16 %v326
      %v747 = vunpack.c.h.b16 %v326
      %v748 = vunpack.c.l.b16 %v327
      %v749 = vunpack.c.h.b16 %v327
      %v750 = vunpack.c.l.b16 %v328
      %v751 = vunpack.c.h.b16 %v328
      %v752 = vunpack.c.l.b16 %v329
      %v753 = vunpack.c.h.b16 %v329
      %v754 = vunpack.c.l.b16 %v330
      %v755 = vunpack.c.h.b16 %v330
      %v756 = vunpack.c.l.b16 %v331
      %v757 = vunpack.c.h.b16 %v331
      %v758 = vunpack.c.l.b16 %v332
      %v759 = vunpack.c.h.b16 %v332
      %v760 = vunpack.c.l.b16 %v333
      %v761 = vunpack.c.h.b16 %v333
      %v762 = vunpack.c.l.b16 %v334
      %v763 = vunpack.c.h.b16 %v334
      %v764 = vunpack.c.l.b16 %v335
      %v765 = vunpack.c.h.b16 %v335
      %v766 = vunpack.c.l.b16 %v336
      %v767 = vunpack.c.h.b16 %v336
      %v768 = vunpack.c.l.b16 %v337
      %v769 = vunpack.c.h.b16 %v337
      %v770 = vunpack.c.l.b16 %v338
      %v771 = vunpack.c.h.b16 %v338
      %v772 = vunpack.c.l.b16 %v339
      %v773 = vunpack.c.h.b16 %v339
      %v774 = vunpack.c.l.b16 %v340
      %v775 = vunpack.c.h.b16 %v340
      %v776 = vunpack.c.l.b16 %v341
      %v777 = vunpack.c.h.b16 %v341
      %v778 = vunpack.c.l.b16 %v342
      %v779 = vunpack.c.h.b16 %v342
      %v780 = vunpack.c.l.b16 %v343
      %v781 = vunpack.c.h.b16 %v343
      %v782 = vunpack.c.l.b16 %v344
      %v783 = vunpack.c.h.b16 %v344
      %v784 = vunpack.c.l.b16 %v345
      %v785 = vunpack.c.h.b16 %v345
      %v786 = vunpack.c.l.b16 %v346
      %v787 = vunpack.c.h.b16 %v346
      %v788 = vunpack.c.l.b16 %v347
      %v789 = vunpack.c.h.b16 %v347
      %v790 = vunpack.c.l.b16 %v348
      %v791 = vunpack.c.h.b16 %v348
      %v792 = vunpack.c.l.b16 %v349
      %v793 = vunpack.c.h.b16 %v349
      %v794 = vunpack.c.l.b16 %v350
      %v795 = vunpack.c.h.b16 %v350
      %v796 = vunpack.c.l.b16 %v351
      %v797 = vunpack.c.h.b16 %v351
      %v798 = vunpack.c.l.b16 %v352
      %v799 = vunpack.c.h.b16 %v352
      %v800 = vunpack.c.l.b16 %v353
      %v801 = vunpack.c.h.b16 %v353
      %v802 = vpack.c.b16 %v550, %v546
      %v803 = vpack.c.b16 %v551, %v547
      %v804 = vpack.c.b16 %v552, %v548
      %v805 = vpack.c.b16 %v553, %v549
      %v806 = vpack.c.b16 %v558, %v554
      %v807 = vpack.c.b16 %v559, %v555
      %v808 = vpack.c.b16 %v560, %v556
      %v809 = vpack.c.b16 %v561, %v557
      %v810 = vpack.c.b16 %v566, %v562
      %v811 = vpack.c.b16 %v567, %v563
      %v812 = vpack.c.b16 %v568, %v564
      %v813 = vpack.c.b16 %v569, %v565
      %v814 = vpack.c.b16 %v574, %v570
      %v815 = vpack.c.b16 %v575, %v571
      %v816 = vpack.c.b16 %v576, %v572
      %v817 = vpack.c.b16 %v577, %v573
      %v818 = vpack.c.b16 %v582, %v578
      %v819 = vpack.c.b16 %v583, %v579
      %v820 = vpack.c.b16 %v584, %v580
      %v821 = vpack.c.b16 %v585, %v581
      %v822 = vpack.c.b16 %v590, %v586
      %v823 = vpack.c.b16 %v591, %v587
      %v824 = vpack.c.b16 %v592, %v588
      %v825 = vpack.c.b16 %v593, %v589
      %v826 = vpack.c.b16 %v598, %v594
      %v827 = vpack.c.b16 %v599, %v595
      %v828 = vpack.c.b16 %v600, %v596
      %v829 = vpack.c.b16 %v601, %v597
      %v830 = vpack.c.b16 %v606, %v602
      %v831 = vpack.c.b16 %v607, %v603
      %v832 = vpack.c.b16 %v608, %v604
      %v833 = vpack.c.b16 %v609, %v605
      %v834 = vpack.c.b16 %v614, %v610
      %v835 = vpack.c.b16 %v615, %v611
      %v836 = vpack.c.b16 %v616, %v612
      %v837 = vpack.c.b16 %v617, %v613
      %v838 = vpack.c.b16 %v622, %v618
      %v839 = vpack.c.b16 %v623, %v619
      %v840 = vpack.c.b16 %v624, %v620
      %v841 = vpack.c.b16 %v625, %v621
      %v842 = vpack.c.b16 %v630, %v626
      %v843 = vpack.c.b16 %v631, %v627
      %v844 = vpack.c.b16 %v632, %v628
      %v845 = vpack.c.b16 %v633, %v629
      %v846 = vpack.c.b16 %v638, %v634
      %v847 = vpack.c.b16 %v639, %v635
      %v848 = vpack.c.b16 %v640, %v636
      %v849 = vpack.c.b16 %v641, %v637
      %v850 = vpack.c.b16 %v646, %v642
      %v851 = vpack.c.b16 %v647, %v643
      %v852 = vpack.c.b16 %v648, %v644
      %v853 = vpack.c.b16 %v649, %v645
      %v854 = vpack.c.b16 %v654, %v650
      %v855 = vpack.c.b16 %v655, %v651
      %v856 = vpack.c.b16 %v656, %v652
      %v857 = vpack.c.b16 %v657, %v653
      %v858 = vpack.c.b16 %v662, %v658
      %v859 = vpack.c.b16 %v663, %v659
      %v860 = vpack.c.b16 %v664, %v660
      %v861 = vpack.c.b16 %v665, %v661
      %v862 = vpack.c.b16 %v670, %v666
      %v863 = vpack.c.b16 %v671, %v667
      %v864 = vpack.c.b16 %v672, %v668
      %v865 = vpack.c.b16 %v673, %v669
      %v866 = vpack.c.b16 %v678, %v674
      %v867 = vpack.c.b16 %v679, %v675
      %v868 = vpack.c.b16 %v680, %v676
      %v869 = vpack.c.b16 %v681, %v677
      %v870 = vpack.c.b16 %v686, %v682
      %v871 = vpack.c.b16 %v687, %v683
      %v872 = vpack.c.b16 %v688, %v684
      %v873 = vpack.c.b16 %v689, %v685
      %v874 = vpack.c.b16 %v694, %v690
      %v875 = vpack.c.b16 %v695, %v691
      %v876 = vpack.c.b16 %v696, %v692
      %v877 = vpack.c.b16 %v697, %v693
      %v878 = vpack.c.b16 %v702, %v698
      %v879 = vpack.c.b16 %v703, %v699
      %v880 = vpack.c.b16 %v704, %v700
      %v881 = vpack.c.b16 %v705, %v701
      %v882 = vpack.c.b16 %v710, %v706
      %v883 = vpack.c.b16 %v711, %v707
      %v884 = vpack.c.b16 %v712, %v708
      %v885 = vpack.c.b16 %v713, %v709
      %v886 = vpack.c.b16 %v718, %v714
      %v887 = vpack.c.b16 %v719, %v715
      %v888 = vpack.c.b16 %v720, %v716
      %v889 = vpack.c.b16 %v721, %v717
      %v890 = vpack.c.b16 %v726, %v722
      %v891 = vpack.c.b16 %v727, %v723
      %v892 = vpack.c.b16 %v728, %v724
      %v893 = vpack.c.b16 %v729, %v725
      %v894 = vpack.c.b16 %v734, %v730
      %v895 = vpack.c.b16 %v735, %v731
      %v896 = vpack.c.b16 %v736, %v732
      %v897 = vpack.c.b16 %v737, %v733
      %v898 = vpack.c.b16 %v742, %v738
      %v899 = vpack.c.b16 %v743, %v739
      %v900 = vpack.c.b16 %v744, %v740
      %v901 = vpack.c.b16 %v745, %v741
      %v902 = vpack.c.b16 %v750, %v746
      %v903 = vpack.c.b16 %v751, %v747
      %v904 = vpack.c.b16 %v752, %v748
      %v905 = vpack.c.b16 %v753, %v749
      %v906 = vpack.c.b16 %v758, %v754
      %v907 = vpack.c.b16 %v759, %v755
      %v908 = vpack.c.b16 %v760, %v756
      %v909 = vpack.c.b16 %v761, %v757
      %v910 = vpack.c.b16 %v766, %v762
      %v911 = vpack.c.b16 %v767, %v763
      %v912 = vpack.c.b16 %v768, %v764
      %v913 = vpack.c.b16 %v769, %v765
      %v914 = vpack.c.b16 %v774, %v770
      %v915 = vpack.c.b16 %v775, %v771
      %v916 = vpack.c.b16 %v776, %v772
      %v917 = vpack.c.b16 %v777, %v773
      %v918 = vpack.c.b16 %v782, %v778
      %v919 = vpack.c.b16 %v783, %v779
      %v920 = vpack.c.b16 %v784, %v780
      %v921 = vpack.c.b16 %v785, %v781
      %v922 = vpack.c.b16 %v790, %v786
      %v923 = vpack.c.b16 %v791, %v787
      %v924 = vpack.c.b16 %v792, %v788
      %v925 = vpack.c.b16 %v793, %v789
      %v926 = vpack.c.b16 %v798, %v794
      %v927 = vpack.c.b16 %v799, %v795
      %v928 = vpack.c.b16 %v800, %v796
      %v929 = vpack.c.b16 %v801, %v797
      %v1122 = vunpack.c.l.b16 %v354
      %v1123 = vunpack.c.l.b16 %v355
      %v1124 = vunpack.c.l.b16 %v356
      %v1125 = vunpack.c.l.b16 %v357
      %v1126 = vunpack.c.l.b16 %v358
      %v1127 = vunpack.c.l.b16 %v359
      %v1128 = vunpack.c.l.b16 %v360
      %v1129 = vunpack.c.l.b16 %v361
      %v1130 = vunpack.c.l.b16 %v362
      %v1131 = vunpack.c.l.b16 %v363
      %v1132 = vunpack.c.l.b16 %v364
      %v1133 = vunpack.c.l.b16 %v365
      %v1134 = vunpack.c.l.b16 %v366
      %v1135 = vunpack.c.l.b16 %v367
      %v1136 = vunpack.c.l.b16 %v368
      %v1137 = vunpack.c.l.b16 %v369
      %v1138 = vunpack.c.l.b16 %v370
      %v1139 = vunpack.c.l.b16 %v371
      %v1140 = vunpack.c.l.b16 %v372
      %v1141 = vunpack.c.l.b16 %v373
      %v1142 = vunpack.c.l.b16 %v374
      %v1143 = vunpack.c.l.b16 %v375
      %v1144 = vunpack.c.l.b16 %v376
      %v1145 = vunpack.c.l.b16 %v377
      %v1146 = vunpack.c.l.b16 %v378
      %v1147 = vunpack.c.l.b16 %v379
      %v1148 = vunpack.c.l.b16 %v380
      %v1149 = vunpack.c.l.b16 %v381
      %v1150 = vunpack.c.l.b16 %v382
      %v1151 = vunpack.c.l.b16 %v383
      %v1152 = vunpack.c.l.b16 %v384
      %v1153 = vunpack.c.l.b16 %v385
      %v1154 = vunpack.c.l.b16 %v386
      %v1155 = vunpack.c.l.b16 %v387
      %v1156 = vunpack.c.l.b16 %v388
      %v1157 = vunpack.c.l.b16 %v389
      %v1158 = vunpack.c.l.b16 %v390
      %v1159 = vunpack.c.l.b16 %v391
      %v1160 = vunpack.c.l.b16 %v392
      %v1161 = vunpack.c.l.b16 %v393
      %v1162 = vunpack.c.l.b16 %v394
      %v1163 = vunpack.c.l.b16 %v395
      %v1164 = vunpack.c.l.b16 %v396
      %v1165 = vunpack.c.l.b16 %v397
      %v1166 = vunpack.c.l.b16 %v398
      %v1167 = vunpack.c.l.b16 %v399
      %v1168 = vunpack.c.l.b16 %v400
      %v1169 = vunpack.c.l.b16 %v401
      %v1170 = vunpack.c.l.b16 %v402
      %v1171 = vunpack.c.l.b16 %v403
      %v1172 = vunpack.c.l.b16 %v404
      %v1173 = vunpack.c.l.b16 %v405
      %v1174 = vunpack.c.l.b16 %v406
      %v1175 = vunpack.c.l.b16 %v407
      %v1176 = vunpack.c.l.b16 %v408
      %v1177 = vunpack.c.l.b16 %v409
      %v1178 = vunpack.c.l.b16 %v410
      %v1179 = vunpack.c.l.b16 %v411
      %v1180 = vunpack.c.l.b16 %v412
      %v1181 = vunpack.c.l.b16 %v413
      %v1182 = vunpack.c.l.b16 %v414
      %v1183 = vunpack.c.l.b16 %v415
      %v1184 = vunpack.c.l.b16 %v416
      %v1185 = vunpack.c.l.b16 %v417
      %v1186 = vpack.c.b16 %v1123, %v1122
      %v1187 = vpack.c.b16 %v1125, %v1124
      %v1188 = vpack.c.b16 %v1127, %v1126
      %v1189 = vpack.c.b16 %v1129, %v1128
      %v1190 = vpack.c.b16 %v1131, %v1130
      %v1191 = vpack.c.b16 %v1133, %v1132
      %v1192 = vpack.c.b16 %v1135, %v1134
      %v1193 = vpack.c.b16 %v1137, %v1136
      %v1194 = vpack.c.b16 %v1139, %v1138
      %v1195 = vpack.c.b16 %v1141, %v1140
      %v1196 = vpack.c.b16 %v1143, %v1142
      %v1197 = vpack.c.b16 %v1145, %v1144
      %v1198 = vpack.c.b16 %v1147, %v1146
      %v1199 = vpack.c.b16 %v1149, %v1148
      %v1200 = vpack.c.b16 %v1151, %v1150
      %v1201 = vpack.c.b16 %v1153, %v1152
      %v1202 = vpack.c.b16 %v1155, %v1154
      %v1203 = vpack.c.b16 %v1157, %v1156
      %v1204 = vpack.c.b16 %v1159, %v1158
      %v1205 = vpack.c.b16 %v1161, %v1160
      %v1206 = vpack.c.b16 %v1163, %v1162
      %v1207 = vpack.c.b16 %v1165, %v1164
      %v1208 = vpack.c.b16 %v1167, %v1166
      %v1209 = vpack.c.b16 %v1169, %v1168
      %v1210 = vpack.c.b16 %v1171, %v1170
      %v1211 = vpack.c.b16 %v1173, %v1172
      %v1212 = vpack.c.b16 %v1175, %v1174
      %v1213 = vpack.c.b16 %v1177, %v1176
      %v1214 = vpack.c.b16 %v1179, %v1178
      %v1215 = vpack.c.b16 %v1181, %v1180
      %v1216 = vpack.c.b16 %v1183, %v1182
      %v1217 = vpack.c.b16 %v1185, %v1184
      %1250 = vmatprep.subr.bf16.mxu0 0
      %1251 = vmatpush1.bf16.msra.mxu0 %v1186
      %1252 = vmatprep.subr.bf16.mxu0 0
      %1253 = vmatpush1.bf16.msra.mxu0 %v1187
      %1254 = vmatprep.subr.bf16.mxu0 0
      %1255 = vmatpush1.bf16.msra.mxu0 %v1188
      %1256 = vmatprep.subr.bf16.mxu0 0
      %1257 = vmatpush1.bf16.msra.mxu0 %v1189
      %1258 = vmatprep.subr.bf16.mxu0 0
      %1259 = vmatpush1.bf16.msra.mxu0 %v1190
      %1260 = vmatprep.subr.bf16.mxu0 0
      %1261 = vmatpush1.bf16.msra.mxu0 %v1191
      %1262 = vmatprep.subr.bf16.mxu0 0
      %1263 = vmatpush1.bf16.msra.mxu0 %v1192
      %1264 = vmatprep.subr.bf16.mxu0 0
      %1265 = vmatpush1.bf16.msra.mxu0 %v1193
      %1266 = vmatprep.subr.bf16.mxu0 0
      %1267 = vmatpush1.bf16.msra.mxu0 %v1194
      %1268 = vmatprep.subr.bf16.mxu0 0
      %1269 = vmatpush1.bf16.msra.mxu0 %v1195
      %1270 = vmatprep.subr.bf16.mxu0 0
      %1271 = vmatpush1.bf16.msra.mxu0 %v1196
      %1272 = vmatprep.subr.bf16.mxu0 0
      %1273 = vmatpush1.bf16.msra.mxu0 %v1197
      %1274 = vmatprep.subr.bf16.mxu0 0
      %1275 = vmatpush1.bf16.msra.mxu0 %v1198
      %1276 = vmatprep.subr.bf16.mxu0 0
      %1277 = vmatpush1.bf16.msra.mxu0 %v1199
      %1278 = vmatprep.subr.bf16.mxu0 0
      %1279 = vmatpush1.bf16.msra.mxu0 %v1200
      %1280 = vmatprep.subr.bf16.mxu0 0
      %1281 = vmatpush1.bf16.msra.mxu0 %v1201
      %1282 = vmatprep.mubr.bf16.mxu0 %v803
      %1283 = vmatmul.mubr.bf16.gmra.mrb[0].mxu0 %v802
      %v1284 = vpop.f32.mrb[0].mxu0
      %v1285 = vadd.f32 0.0, %v1284
      %v1286 = vpop.f32.mrb[0].mxu0
      %v1287 = vpop.f32.mrb[0].mxu0
      %v1288 = vadd.f32 0.0, %v1287
      %v1289 = vpop.f32.mrb[0].mxu0
      %1290 = vmatprep.mubr.bf16.mxu0 %v807
      %1291 = vmatmul.mubr.bf16.gmra.mrb[0].mxu0 %v806
      %v1292 = vpop.f32.mrb[0].mxu0
      %v1293 = vadd.f32 0.0, %v1292
      %v1294 = vpop.f32.mrb[0].mxu0
      %v1295 = vpop.f32.mrb[0].mxu0
      %v1296 = vadd.f32 0.0, %v1295
      %v1297 = vpop.f32.mrb[0].mxu0
      %1298 = vmatprep.mubr.bf16.mxu0 %v811
      %1299 = vmatmul.mubr.bf16.gmra.mrb[0].mxu0 %v810
      %v1300 = vpop.f32.mrb[0].mxu0
      %v1301 = vadd.f32 0.0, %v1300
      %v1302 = vpop.f32.mrb[0].mxu0
      %v1303 = vpop.f32.mrb[0].mxu0
      %v1304 = vadd.f32 0.0, %v1303
      %v1305 = vpop.f32.mrb[0].mxu0
      %1306 = vmatprep.mubr.bf16.mxu0 %v815
      %1307 = vmatmul.mubr.bf16.gmra.mrb[0].mxu0 %v814
      %v1308 = vpop.f32.mrb[0].mxu0
      %v1309 = vadd.f32 0.0, %v1308
      %v1310 = vpop.f32.mrb[0].mxu0
      %v1311 = vpop.f32.mrb[0].mxu0
      %v1312 = vadd.f32 0.0, %v1311
      %v1313 = vpop.f32.mrb[0].mxu0
      %1314 = vmatprep.mubr.bf16.mxu0 %v819
      %1315 = vmatmul.mubr.bf16.gmra.mrb[0].mxu0 %v818
      %v1316 = vpop.f32.mrb[0].mxu0
      %v1317 = vadd.f32 0.0, %v1316
      %v1318 = vpop.f32.mrb[0].mxu0
      %v1319 = vpop.f32.mrb[0].mxu0
      %v1320 = vadd.f32 0.0, %v1319
      %v1321 = vpop.f32.mrb[0].mxu0
      %1322 = vmatprep.mubr.bf16.mxu0 %v823
      %1323 = vmatmul.mubr.bf16.gmra.mrb[0].mxu0 %v822
      %v1324 = vpop.f32.mrb[0].mxu0
      %v1325 = vadd.f32 0.0, %v1324
      %v1326 = vpop.f32.mrb[0].mxu0
      %v1327 = vpop.f32.mrb[0].mxu0
      %v1328 = vadd.f32 0.0, %v1327
      %v1329 = vpop.f32.mrb[0].mxu0
      %1330 = vmatprep.mubr.bf16.mxu0 %v827
      %1331 = vmatmul.mubr.bf16.gmra.mrb[0].mxu0 %v826
      %v1332 = vpop.f32.mrb[0].mxu0
      %v1333 = vadd.f32 0.0, %v1332
      %v1334 = vpop.f32.mrb[0].mxu0
      %v1335 = vpop.f32.mrb[0].mxu0
      %v1336 = vadd.f32 0.0, %v1335
      %v1337 = vpop.f32.mrb[0].mxu0
      %1338 = vmatprep.mubr.bf16.mxu0 %v831
      %1339 = vmatmul.mubr.bf16.gmra.mrb[0].mxu0 %v830
      %v1340 = vpop.f32.mrb[0].mxu0
      %v1341 = vadd.f32 0.0, %v1340
      %v1342 = vpop.f32.mrb[0].mxu0
      %v1343 = vpop.f32.mrb[0].mxu0
      %v1344 = vadd.f32 0.0, %v1343
      %v1345 = vpop.f32.mrb[0].mxu0
      %1346 = vmatprep.mubr.bf16.mxu0 %v835
      %1347 = vmatmul.mubr.bf16.gmra.mrb[0].mxu0 %v834
      %v1348 = vpop.f32.mrb[0].mxu0
      %v1349 = vadd.f32 0.0, %v1348
      %v1350 = vpop.f32.mrb[0].mxu0
      %v1351 = vpop.f32.mrb[0].mxu0
      %v1352 = vadd.f32 0.0, %v1351
      %v1353 = vpop.f32.mrb[0].mxu0
      %1354 = vmatprep.mubr.bf16.mxu0 %v839
      %1355 = vmatmul.mubr.bf16.gmra.mrb[0].mxu0 %v838
      %v1356 = vpop.f32.mrb[0].mxu0
      %v1357 = vadd.f32 0.0, %v1356
      %v1358 = vpop.f32.mrb[0].mxu0
      %v1359 = vpop.f32.mrb[0].mxu0
      %v1360 = vadd.f32 0.0, %v1359
      %v1361 = vpop.f32.mrb[0].mxu0
      %1362 = vmatprep.mubr.bf16.mxu0 %v843
      %1363 = vmatmul.mubr.bf16.gmra.mrb[0].mxu0 %v842
      %v1364 = vpop.f32.mrb[0].mxu0
      %v1365 = vadd.f32 0.0, %v1364
      %v1366 = vpop.f32.mrb[0].mxu0
      %v1367 = vpop.f32.mrb[0].mxu0
      %v1368 = vadd.f32 0.0, %v1367
      %v1369 = vpop.f32.mrb[0].mxu0
      %1370 = vmatprep.mubr.bf16.mxu0 %v847
      %1371 = vmatmul.mubr.bf16.gmra.mrb[0].mxu0 %v846
      %v1372 = vpop.f32.mrb[0].mxu0
      %v1373 = vadd.f32 0.0, %v1372
      %v1374 = vpop.f32.mrb[0].mxu0
      %v1375 = vpop.f32.mrb[0].mxu0
      %v1376 = vadd.f32 0.0, %v1375
      %v1377 = vpop.f32.mrb[0].mxu0
      %1378 = vmatprep.mubr.bf16.mxu0 %v851
      %1379 = vmatmul.mubr.bf16.gmra.mrb[0].mxu0 %v850
      %v1380 = vpop.f32.mrb[0].mxu0
      %v1381 = vadd.f32 0.0, %v1380
      %v1382 = vpop.f32.mrb[0].mxu0
      %v1383 = vpop.f32.mrb[0].mxu0
      %v1384 = vadd.f32 0.0, %v1383
      %v1385 = vpop.f32.mrb[0].mxu0
      %1386 = vmatprep.mubr.bf16.mxu0 %v855
      %1387 = vmatmul.mubr.bf16.gmra.mrb[0].mxu0 %v854
      %v1388 = vpop.f32.mrb[0].mxu0
      %v1389 = vadd.f32 0.0, %v1388
      %v1390 = vpop.f32.mrb[0].mxu0
      %v1391 = vpop.f32.mrb[0].mxu0
      %v1392 = vadd.f32 0.0, %v1391
      %v1393 = vpop.f32.mrb[0].mxu0
      %1394 = vmatprep.mubr.bf16.mxu0 %v859
      %1395 = vmatmul.mubr.bf16.gmra.mrb[0].mxu0 %v858
      %v1396 = vpop.f32.mrb[0].mxu0
      %v1397 = vadd.f32 0.0, %v1396
      %v1398 = vpop.f32.mrb[0].mxu0
      %v1399 = vpop.f32.mrb[0].mxu0
      %v1400 = vadd.f32 0.0, %v1399
      %v1401 = vpop.f32.mrb[0].mxu0
      %1402 = vmatprep.mubr.bf16.mxu0 %v863
      %1403 = vmatmul.mubr.bf16.gmra.mrb[0].mxu0 %v862
      %v1404 = vpop.f32.mrb[0].mxu0
      %v1405 = vadd.f32 0.0, %v1404
      %v1406 = vpop.f32.mrb[0].mxu0
      %v1407 = vpop.f32.mrb[0].mxu0
      %v1408 = vadd.f32 0.0, %v1407
      %v1409 = vpop.f32.mrb[0].mxu0
      %1410 = vmatprep.mubr.bf16.mxu0 %v867
      %1411 = vmatmul.mubr.bf16.gmra.mrb[0].mxu0 %v866
      %v1412 = vpop.f32.mrb[0].mxu0
      %v1413 = vadd.f32 0.0, %v1412
      %v1414 = vpop.f32.mrb[0].mxu0
      %v1415 = vpop.f32.mrb[0].mxu0
      %v1416 = vadd.f32 0.0, %v1415
      %v1417 = vpop.f32.mrb[0].mxu0
      %1418 = vmatprep.mubr.bf16.mxu0 %v871
      %1419 = vmatmul.mubr.bf16.gmra.mrb[0].mxu0 %v870
      %v1420 = vpop.f32.mrb[0].mxu0
      %v1421 = vadd.f32 0.0, %v1420
      %v1422 = vpop.f32.mrb[0].mxu0
      %v1423 = vpop.f32.mrb[0].mxu0
      %v1424 = vadd.f32 0.0, %v1423
      %v1425 = vpop.f32.mrb[0].mxu0
      %1426 = vmatprep.mubr.bf16.mxu0 %v875
      %1427 = vmatmul.mubr.bf16.gmra.mrb[0].mxu0 %v874
      %v1428 = vpop.f32.mrb[0].mxu0
      %v1429 = vadd.f32 0.0, %v1428
      %v1430 = vpop.f32.mrb[0].mxu0
      %v1431 = vpop.f32.mrb[0].mxu0
      %v1432 = vadd.f32 0.0, %v1431
      %v1433 = vpop.f32.mrb[0].mxu0
      %1434 = vmatprep.mubr.bf16.mxu0 %v879
      %1435 = vmatmul.mubr.bf16.gmra.mrb[0].mxu0 %v878
      %v1436 = vpop.f32.mrb[0].mxu0
      %v1437 = vadd.f32 0.0, %v1436
      %v1438 = vpop.f32.mrb[0].mxu0
      %v1439 = vpop.f32.mrb[0].mxu0
      %v1440 = vadd.f32 0.0, %v1439
      %v1441 = vpop.f32.mrb[0].mxu0
      %1442 = vmatprep.mubr.bf16.mxu0 %v883
      %1443 = vmatmul.mubr.bf16.gmra.mrb[0].mxu0 %v882
      %v1444 = vpop.f32.mrb[0].mxu0
      %v1445 = vadd.f32 0.0, %v1444
      %v1446 = vpop.f32.mrb[0].mxu0
      %v1447 = vpop.f32.mrb[0].mxu0
      %v1448 = vadd.f32 0.0, %v1447
      %v1449 = vpop.f32.mrb[0].mxu0
      %1450 = vmatprep.mubr.bf16.mxu0 %v887
      %1451 = vmatmul.mubr.bf16.gmra.mrb[0].mxu0 %v886
      %v1452 = vpop.f32.mrb[0].mxu0
      %v1453 = vadd.f32 0.0, %v1452
      %v1454 = vpop.f32.mrb[0].mxu0
      %v1455 = vpop.f32.mrb[0].mxu0
      %v1456 = vadd.f32 0.0, %v1455
      %v1457 = vpop.f32.mrb[0].mxu0
      %1458 = vmatprep.mubr.bf16.mxu0 %v891
      %1459 = vmatmul.mubr.bf16.gmra.mrb[0].mxu0 %v890
      %v1460 = vpop.f32.mrb[0].mxu0
      %v1461 = vadd.f32 0.0, %v1460
      %v1462 = vpop.f32.mrb[0].mxu0
      %v1463 = vpop.f32.mrb[0].mxu0
      %v1464 = vadd.f32 0.0, %v1463
      %v1465 = vpop.f32.mrb[0].mxu0
      %1466 = vmatprep.mubr.bf16.mxu0 %v895
      %1467 = vmatmul.mubr.bf16.gmra.mrb[0].mxu0 %v894
      %v1468 = vpop.f32.mrb[0].mxu0
      %v1469 = vadd.f32 0.0, %v1468
      %v1470 = vpop.f32.mrb[0].mxu0
      %v1471 = vpop.f32.mrb[0].mxu0
      %v1472 = vadd.f32 0.0, %v1471
      %v1473 = vpop.f32.mrb[0].mxu0
      %1474 = vmatprep.mubr.bf16.mxu0 %v899
      %1475 = vmatmul.mubr.bf16.gmra.mrb[0].mxu0 %v898
      %v1476 = vpop.f32.mrb[0].mxu0
      %v1477 = vadd.f32 0.0, %v1476
      %v1478 = vpop.f32.mrb[0].mxu0
      %v1479 = vpop.f32.mrb[0].mxu0
      %v1480 = vadd.f32 0.0, %v1479
      %v1481 = vpop.f32.mrb[0].mxu0
      %1482 = vmatprep.mubr.bf16.mxu0 %v903
      %1483 = vmatmul.mubr.bf16.gmra.mrb[0].mxu0 %v902
      %v1484 = vpop.f32.mrb[0].mxu0
      %v1485 = vadd.f32 0.0, %v1484
      %v1486 = vpop.f32.mrb[0].mxu0
      %v1487 = vpop.f32.mrb[0].mxu0
      %v1488 = vadd.f32 0.0, %v1487
      %v1489 = vpop.f32.mrb[0].mxu0
      %1490 = vmatprep.mubr.bf16.mxu0 %v907
      %1491 = vmatmul.mubr.bf16.gmra.mrb[0].mxu0 %v906
      %v1492 = vpop.f32.mrb[0].mxu0
      %v1493 = vadd.f32 0.0, %v1492
      %v1494 = vpop.f32.mrb[0].mxu0
      %v1495 = vpop.f32.mrb[0].mxu0
      %v1496 = vadd.f32 0.0, %v1495
      %v1497 = vpop.f32.mrb[0].mxu0
      %1498 = vmatprep.mubr.bf16.mxu0 %v911
      %1499 = vmatmul.mubr.bf16.gmra.mrb[0].mxu0 %v910
      %v1500 = vpop.f32.mrb[0].mxu0
      %v1501 = vadd.f32 0.0, %v1500
      %v1502 = vpop.f32.mrb[0].mxu0
      %v1503 = vpop.f32.mrb[0].mxu0
      %v1504 = vadd.f32 0.0, %v1503
      %v1505 = vpop.f32.mrb[0].mxu0
      %1506 = vmatprep.mubr.bf16.mxu0 %v915
      %1507 = vmatmul.mubr.bf16.gmra.mrb[0].mxu0 %v914
      %v1508 = vpop.f32.mrb[0].mxu0
      %v1509 = vadd.f32 0.0, %v1508
      %v1510 = vpop.f32.mrb[0].mxu0
      %v1511 = vpop.f32.mrb[0].mxu0
      %v1512 = vadd.f32 0.0, %v1511
      %v1513 = vpop.f32.mrb[0].mxu0
      %1514 = vmatprep.mubr.bf16.mxu0 %v919
      %1515 = vmatmul.mubr.bf16.gmra.mrb[0].mxu0 %v918
      %v1516 = vpop.f32.mrb[0].mxu0
      %v1517 = vadd.f32 0.0, %v1516
      %v1518 = vpop.f32.mrb[0].mxu0
      %v1519 = vpop.f32.mrb[0].mxu0
      %v1520 = vadd.f32 0.0, %v1519
      %v1521 = vpop.f32.mrb[0].mxu0
      %1522 = vmatprep.mubr.bf16.mxu0 %v923
      %1523 = vmatmul.mubr.bf16.gmra.mrb[0].mxu0 %v922
      %v1524 = vpop.f32.mrb[0].mxu0
      %v1525 = vadd.f32 0.0, %v1524
      %v1526 = vpop.f32.mrb[0].mxu0
      %v1527 = vpop.f32.mrb[0].mxu0
      %v1528 = vadd.f32 0.0, %v1527
      %v1529 = vpop.f32.mrb[0].mxu0
      %1530 = vmatprep.mubr.bf16.mxu0 %v927
      %1531 = vmatmul.mubr.bf16.gmra.mrb[0].mxu0 %v926
      %v1532 = vpop.f32.mrb[0].mxu0
      %v1533 = vadd.f32 0.0, %v1532
      %v1534 = vpop.f32.mrb[0].mxu0
      %v1535 = vpop.f32.mrb[0].mxu0
      %v1536 = vadd.f32 0.0, %v1535
      %v1537 = vpop.f32.mrb[0].mxu0
      %1538 = vdwg.mxu0
      %1539 = vmatprep.subr.bf16.mxu0 0
      %1540 = vmatpush1.bf16.msra.mxu0 %v1202
      %1541 = vmatprep.subr.bf16.mxu0 0
      %1542 = vmatpush1.bf16.msra.mxu0 %v1203
      %1543 = vmatprep.subr.bf16.mxu0 0
      %1544 = vmatpush1.bf16.msra.mxu0 %v1204
      %1545 = vmatprep.subr.bf16.mxu0 0
      %1546 = vmatpush1.bf16.msra.mxu0 %v1205
      %1547 = vmatprep.subr.bf16.mxu0 0
      %1548 = vmatpush1.bf16.msra.mxu0 %v1206
      %1549 = vmatprep.subr.bf16.mxu0 0
      %1550 = vmatpush1.bf16.msra.mxu0 %v1207
      %1551 = vmatprep.subr.bf16.mxu0 0
      %1552 = vmatpush1.bf16.msra.mxu0 %v1208
      %1553 = vmatprep.subr.bf16.mxu0 0
      %1554 = vmatpush1.bf16.msra.mxu0 %v1209
      %1555 = vmatprep.subr.bf16.mxu0 0
      %1556 = vmatpush1.bf16.msra.mxu0 %v1210
      %1557 = vmatprep.subr.bf16.mxu0 0
      %1558 = vmatpush1.bf16.msra.mxu0 %v1211
      %1559 = vmatprep.subr.bf16.mxu0 0
      %1560 = vmatpush1.bf16.msra.mxu0 %v1212
      %1561 = vmatprep.subr.bf16.mxu0 0
      %1562 = vmatpush1.bf16.msra.mxu0 %v1213
      %1563 = vmatprep.subr.bf16.mxu0 0
      %1564 = vmatpush1.bf16.msra.mxu0 %v1214
      %1565 = vmatprep.subr.bf16.mxu0 0
      %1566 = vmatpush1.bf16.msra.mxu0 %v1215
      %1567 = vmatprep.subr.bf16.mxu0 0
      %1568 = vmatpush1.bf16.msra.mxu0 %v1216
      %1569 = vmatprep.subr.bf16.mxu0 0
      %1570 = vmatpush1.bf16.msra.mxu0 %v1217
      %1571 = vmatprep.mubr.bf16.mxu0 %v805
      %1572 = vmatmul.mubr.bf16.gmra.mrb[0].mxu0 %v804
      %v1573 = vpop.f32.mrb[0].mxu0
      %v1574 = vadd.f32 %v1285, %v1573
      %v1575 = vpop.f32.mrb[0].mxu0
      %v1576 = vpop.f32.mrb[0].mxu0
      %v1577 = vadd.f32 %v1288, %v1576
      %v1578 = vpop.f32.mrb[0].mxu0
      %1579 = vmatprep.mubr.bf16.mxu0 %v809
      %1580 = vmatmul.mubr.bf16.gmra.mrb[0].mxu0 %v808
      %v1581 = vpop.f32.mrb[0].mxu0
      %v1582 = vadd.f32 %v1293, %v1581
      %v1583 = vpop.f32.mrb[0].mxu0
      %v1584 = vpop.f32.mrb[0].mxu0
      %v1585 = vadd.f32 %v1296, %v1584
      %v1586 = vpop.f32.mrb[0].mxu0
      %1587 = vmatprep.mubr.bf16.mxu0 %v813
      %1588 = vmatmul.mubr.bf16.gmra.mrb[0].mxu0 %v812
      %v1589 = vpop.f32.mrb[0].mxu0
      %v1590 = vadd.f32 %v1301, %v1589
      %v1591 = vpop.f32.mrb[0].mxu0
      %v1592 = vpop.f32.mrb[0].mxu0
      %v1593 = vadd.f32 %v1304, %v1592
      %v1594 = vpop.f32.mrb[0].mxu0
      %1595 = vmatprep.mubr.bf16.mxu0 %v817
      %1596 = vmatmul.mubr.bf16.gmra.mrb[0].mxu0 %v816
      %v1597 = vpop.f32.mrb[0].mxu0
      %v1598 = vadd.f32 %v1309, %v1597
      %v1599 = vpop.f32.mrb[0].mxu0
      %v1600 = vpop.f32.mrb[0].mxu0
      %v1601 = vadd.f32 %v1312, %v1600
      %v1602 = vpop.f32.mrb[0].mxu0
      %1603 = vmatprep.mubr.bf16.mxu0 %v821
      %1604 = vmatmul.mubr.bf16.gmra.mrb[0].mxu0 %v820
      %v1605 = vpop.f32.mrb[0].mxu0
      %v1606 = vadd.f32 %v1317, %v1605
      %v1607 = vpop.f32.mrb[0].mxu0
      %v1608 = vpop.f32.mrb[0].mxu0
      %v1609 = vadd.f32 %v1320, %v1608
      %v1610 = vpop.f32.mrb[0].mxu0
      %1611 = vmatprep.mubr.bf16.mxu0 %v825
      %1612 = vmatmul.mubr.bf16.gmra.mrb[0].mxu0 %v824
      %v1613 = vpop.f32.mrb[0].mxu0
      %v1614 = vadd.f32 %v1325, %v1613
      %v1615 = vpop.f32.mrb[0].mxu0
      %v1616 = vpop.f32.mrb[0].mxu0
      %v1617 = vadd.f32 %v1328, %v1616
      %v1618 = vpop.f32.mrb[0].mxu0
      %1619 = vmatprep.mubr.bf16.mxu0 %v829
      %1620 = vmatmul.mubr.bf16.gmra.mrb[0].mxu0 %v828
      %v1621 = vpop.f32.mrb[0].mxu0
      %v1622 = vadd.f32 %v1333, %v1621
      %v1623 = vpop.f32.mrb[0].mxu0
      %v1624 = vpop.f32.mrb[0].mxu0
      %v1625 = vadd.f32 %v1336, %v1624
      %v1626 = vpop.f32.mrb[0].mxu0
      %1627 = vmatprep.mubr.bf16.mxu0 %v833
      %1628 = vmatmul.mubr.bf16.gmra.mrb[0].mxu0 %v832
      %v1629 = vpop.f32.mrb[0].mxu0
      %v1630 = vadd.f32 %v1341, %v1629
      %v1631 = vpop.f32.mrb[0].mxu0
      %v1632 = vpop.f32.mrb[0].mxu0
      %v1633 = vadd.f32 %v1344, %v1632
      %v1634 = vpop.f32.mrb[0].mxu0
      %1635 = vmatprep.mubr.bf16.mxu0 %v837
      %1636 = vmatmul.mubr.bf16.gmra.mrb[0].mxu0 %v836
      %v1637 = vpop.f32.mrb[0].mxu0
      %v1638 = vadd.f32 %v1349, %v1637
      %v1639 = vpop.f32.mrb[0].mxu0
      %v1640 = vpop.f32.mrb[0].mxu0
      %v1641 = vadd.f32 %v1352, %v1640
      %v1642 = vpop.f32.mrb[0].mxu0
      %1643 = vmatprep.mubr.bf16.mxu0 %v841
      %1644 = vmatmul.mubr.bf16.gmra.mrb[0].mxu0 %v840
      %v1645 = vpop.f32.mrb[0].mxu0
      %v1646 = vadd.f32 %v1357, %v1645
      %v1647 = vpop.f32.mrb[0].mxu0
      %v1648 = vpop.f32.mrb[0].mxu0
      %v1649 = vadd.f32 %v1360, %v1648
      %v1650 = vpop.f32.mrb[0].mxu0
      %1651 = vmatprep.mubr.bf16.mxu0 %v845
      %1652 = vmatmul.mubr.bf16.gmra.mrb[0].mxu0 %v844
      %v1653 = vpop.f32.mrb[0].mxu0
      %v1654 = vadd.f32 %v1365, %v1653
      %v1655 = vpop.f32.mrb[0].mxu0
      %v1656 = vpop.f32.mrb[0].mxu0
      %v1657 = vadd.f32 %v1368, %v1656
      %v1658 = vpop.f32.mrb[0].mxu0
      %1659 = vmatprep.mubr.bf16.mxu0 %v849
      %1660 = vmatmul.mubr.bf16.gmra.mrb[0].mxu0 %v848
      %v1661 = vpop.f32.mrb[0].mxu0
      %v1662 = vadd.f32 %v1373, %v1661
      %v1663 = vpop.f32.mrb[0].mxu0
      %v1664 = vpop.f32.mrb[0].mxu0
      %v1665 = vadd.f32 %v1376, %v1664
      %v1666 = vpop.f32.mrb[0].mxu0
      %1667 = vmatprep.mubr.bf16.mxu0 %v853
      %1668 = vmatmul.mubr.bf16.gmra.mrb[0].mxu0 %v852
      %v1669 = vpop.f32.mrb[0].mxu0
      %v1670 = vadd.f32 %v1381, %v1669
      %v1671 = vpop.f32.mrb[0].mxu0
      %v1672 = vpop.f32.mrb[0].mxu0
      %v1673 = vadd.f32 %v1384, %v1672
      %v1674 = vpop.f32.mrb[0].mxu0
      %1675 = vmatprep.mubr.bf16.mxu0 %v857
      %1676 = vmatmul.mubr.bf16.gmra.mrb[0].mxu0 %v856
      %v1677 = vpop.f32.mrb[0].mxu0
      %v1678 = vadd.f32 %v1389, %v1677
      %v1679 = vpop.f32.mrb[0].mxu0
      %v1680 = vpop.f32.mrb[0].mxu0
      %v1681 = vadd.f32 %v1392, %v1680
      %v1682 = vpop.f32.mrb[0].mxu0
      %1683 = vmatprep.mubr.bf16.mxu0 %v861
      %1684 = vmatmul.mubr.bf16.gmra.mrb[0].mxu0 %v860
      %v1685 = vpop.f32.mrb[0].mxu0
      %v1686 = vadd.f32 %v1397, %v1685
      %v1687 = vpop.f32.mrb[0].mxu0
      %v1688 = vpop.f32.mrb[0].mxu0
      %v1689 = vadd.f32 %v1400, %v1688
      %v1690 = vpop.f32.mrb[0].mxu0
      %1691 = vmatprep.mubr.bf16.mxu0 %v865
      %1692 = vmatmul.mubr.bf16.gmra.mrb[0].mxu0 %v864
      %v1693 = vpop.f32.mrb[0].mxu0
      %v1694 = vadd.f32 %v1405, %v1693
      %v1695 = vpop.f32.mrb[0].mxu0
      %v1696 = vpop.f32.mrb[0].mxu0
      %v1697 = vadd.f32 %v1408, %v1696
      %v1698 = vpop.f32.mrb[0].mxu0
      %1699 = vmatprep.mubr.bf16.mxu0 %v869
      %1700 = vmatmul.mubr.bf16.gmra.mrb[0].mxu0 %v868
      %v1701 = vpop.f32.mrb[0].mxu0
      %v1702 = vadd.f32 %v1413, %v1701
      %v1703 = vpop.f32.mrb[0].mxu0
      %v1704 = vpop.f32.mrb[0].mxu0
      %v1705 = vadd.f32 %v1416, %v1704
      %v1706 = vpop.f32.mrb[0].mxu0
      %1707 = vmatprep.mubr.bf16.mxu0 %v873
      %1708 = vmatmul.mubr.bf16.gmra.mrb[0].mxu0 %v872
      %v1709 = vpop.f32.mrb[0].mxu0
      %v1710 = vadd.f32 %v1421, %v1709
      %v1711 = vpop.f32.mrb[0].mxu0
      %v1712 = vpop.f32.mrb[0].mxu0
      %v1713 = vadd.f32 %v1424, %v1712
      %v1714 = vpop.f32.mrb[0].mxu0
      %1715 = vmatprep.mubr.bf16.mxu0 %v877
      %1716 = vmatmul.mubr.bf16.gmra.mrb[0].mxu0 %v876
      %v1717 = vpop.f32.mrb[0].mxu0
      %v1718 = vadd.f32 %v1429, %v1717
      %v1719 = vpop.f32.mrb[0].mxu0
      %v1720 = vpop.f32.mrb[0].mxu0
      %v1721 = vadd.f32 %v1432, %v1720
      %v1722 = vpop.f32.mrb[0].mxu0
      %1723 = vmatprep.mubr.bf16.mxu0 %v881
      %1724 = vmatmul.mubr.bf16.gmra.mrb[0].mxu0 %v880
      %v1725 = vpop.f32.mrb[0].mxu0
      %v1726 = vadd.f32 %v1437, %v1725
      %v1727 = vpop.f32.mrb[0].mxu0
      %v1728 = vpop.f32.mrb[0].mxu0
      %v1729 = vadd.f32 %v1440, %v1728
      %v1730 = vpop.f32.mrb[0].mxu0
      %1731 = vmatprep.mubr.bf16.mxu0 %v885
      %1732 = vmatmul.mubr.bf16.gmra.mrb[0].mxu0 %v884
      %v1733 = vpop.f32.mrb[0].mxu0
      %v1734 = vadd.f32 %v1445, %v1733
      %v1735 = vpop.f32.mrb[0].mxu0
      %v1736 = vpop.f32.mrb[0].mxu0
      %v1737 = vadd.f32 %v1448, %v1736
      %v1738 = vpop.f32.mrb[0].mxu0
      %1739 = vmatprep.mubr.bf16.mxu0 %v889
      %1740 = vmatmul.mubr.bf16.gmra.mrb[0].mxu0 %v888
      %v1741 = vpop.f32.mrb[0].mxu0
      %v1742 = vadd.f32 %v1453, %v1741
      %v1743 = vpop.f32.mrb[0].mxu0
      %v1744 = vpop.f32.mrb[0].mxu0
      %v1745 = vadd.f32 %v1456, %v1744
      %v1746 = vpop.f32.mrb[0].mxu0
      %1747 = vmatprep.mubr.bf16.mxu0 %v893
      %1748 = vmatmul.mubr.bf16.gmra.mrb[0].mxu0 %v892
      %v1749 = vpop.f32.mrb[0].mxu0
      %v1750 = vadd.f32 %v1461, %v1749
      %v1751 = vpop.f32.mrb[0].mxu0
      %v1752 = vpop.f32.mrb[0].mxu0
      %v1753 = vadd.f32 %v1464, %v1752
      %v1754 = vpop.f32.mrb[0].mxu0
      %1755 = vmatprep.mubr.bf16.mxu0 %v897
      %1756 = vmatmul.mubr.bf16.gmra.mrb[0].mxu0 %v896
      %v1757 = vpop.f32.mrb[0].mxu0
      %v1758 = vadd.f32 %v1469, %v1757
      %v1759 = vpop.f32.mrb[0].mxu0
      %v1760 = vpop.f32.mrb[0].mxu0
      %v1761 = vadd.f32 %v1472, %v1760
      %v1762 = vpop.f32.mrb[0].mxu0
      %1763 = vmatprep.mubr.bf16.mxu0 %v901
      %1764 = vmatmul.mubr.bf16.gmra.mrb[0].mxu0 %v900
      %v1765 = vpop.f32.mrb[0].mxu0
      %v1766 = vadd.f32 %v1477, %v1765
      %v1767 = vpop.f32.mrb[0].mxu0
      %v1768 = vpop.f32.mrb[0].mxu0
      %v1769 = vadd.f32 %v1480, %v1768
      %v1770 = vpop.f32.mrb[0].mxu0
      %1771 = vmatprep.mubr.bf16.mxu0 %v905
      %1772 = vmatmul.mubr.bf16.gmra.mrb[0].mxu0 %v904
      %v1773 = vpop.f32.mrb[0].mxu0
      %v1774 = vadd.f32 %v1485, %v1773
      %v1775 = vpop.f32.mrb[0].mxu0
      %v1776 = vpop.f32.mrb[0].mxu0
      %v1777 = vadd.f32 %v1488, %v1776
      %v1778 = vpop.f32.mrb[0].mxu0
      %1779 = vmatprep.mubr.bf16.mxu0 %v909
      %1780 = vmatmul.mubr.bf16.gmra.mrb[0].mxu0 %v908
      %v1781 = vpop.f32.mrb[0].mxu0
      %v1782 = vadd.f32 %v1493, %v1781
      %v1783 = vpop.f32.mrb[0].mxu0
      %v1784 = vpop.f32.mrb[0].mxu0
      %v1785 = vadd.f32 %v1496, %v1784
      %v1786 = vpop.f32.mrb[0].mxu0
      %1787 = vmatprep.mubr.bf16.mxu0 %v913
      %1788 = vmatmul.mubr.bf16.gmra.mrb[0].mxu0 %v912
      %v1789 = vpop.f32.mrb[0].mxu0
      %v1790 = vadd.f32 %v1501, %v1789
      %v1791 = vpop.f32.mrb[0].mxu0
      %v1792 = vpop.f32.mrb[0].mxu0
      %v1793 = vadd.f32 %v1504, %v1792
      %v1794 = vpop.f32.mrb[0].mxu0
      %1795 = vmatprep.mubr.bf16.mxu0 %v917
      %1796 = vmatmul.mubr.bf16.gmra.mrb[0].mxu0 %v916
      %v1797 = vpop.f32.mrb[0].mxu0
      %v1798 = vadd.f32 %v1509, %v1797
      %v1799 = vpop.f32.mrb[0].mxu0
      %v1800 = vpop.f32.mrb[0].mxu0
      %v1801 = vadd.f32 %v1512, %v1800
      %v1802 = vpop.f32.mrb[0].mxu0
      %1803 = vmatprep.mubr.bf16.mxu0 %v921
      %1804 = vmatmul.mubr.bf16.gmra.mrb[0].mxu0 %v920
      %v1805 = vpop.f32.mrb[0].mxu0
      %v1806 = vadd.f32 %v1517, %v1805
      %v1807 = vpop.f32.mrb[0].mxu0
      %v1808 = vpop.f32.mrb[0].mxu0
      %v1809 = vadd.f32 %v1520, %v1808
      %v1810 = vpop.f32.mrb[0].mxu0
      %1811 = vmatprep.mubr.bf16.mxu0 %v925
      %1812 = vmatmul.mubr.bf16.gmra.mrb[0].mxu0 %v924
      %v1813 = vpop.f32.mrb[0].mxu0
      %v1814 = vadd.f32 %v1525, %v1813
      %v1815 = vpop.f32.mrb[0].mxu0
      %v1816 = vpop.f32.mrb[0].mxu0
      %v1817 = vadd.f32 %v1528, %v1816
      %v1818 = vpop.f32.mrb[0].mxu0
      %1819 = vmatprep.mubr.bf16.mxu0 %v929
      %1820 = vmatmul.mubr.bf16.gmra.mrb[0].mxu0 %v928
      %v1821 = vpop.f32.mrb[0].mxu0
      %v1822 = vadd.f32 %v1533, %v1821
      %v1823 = vpop.f32.mrb[0].mxu0
      %v1824 = vpop.f32.mrb[0].mxu0
      %v1825 = vadd.f32 %v1536, %v1824
      %v1826 = vpop.f32.mrb[0].mxu0
      %1827 = vdwg.mxu0
      %1828 = vst [vmem:[%s215] sm:$0xff] %v1574
      %1829 = vst [vmem:[%s215 + $0x8] sm:$0xff] %v1577
      %1830 = vst [vmem:[%s215 + $0x10] sm:$0xff] %v1582
      %1831 = vst [vmem:[%s215 + $0x18] sm:$0xff] %v1585
      %1832 = vst [vmem:[%s215 + $0x20] sm:$0xff] %v1590
      %1833 = vst [vmem:[%s215 + $0x28] sm:$0xff] %v1593
      %1834 = vst [vmem:[%s215 + $0x30] sm:$0xff] %v1598
      %1835 = vst [vmem:[%s215 + $0x38] sm:$0xff] %v1601
      %1836 = vst [vmem:[%s215 + $0x40] sm:$0xff] %v1606
      %1837 = vst [vmem:[%s215 + $0x48] sm:$0xff] %v1609
      %1838 = vst [vmem:[%s215 + $0x50] sm:$0xff] %v1614
      %1839 = vst [vmem:[%s215 + $0x58] sm:$0xff] %v1617
      %1840 = vst [vmem:[%s215 + $0x60] sm:$0xff] %v1622
      %1841 = vst [vmem:[%s215 + $0x68] sm:$0xff] %v1625
      %1842 = vst [vmem:[%s215 + $0x70] sm:$0xff] %v1630
      %1843 = vst [vmem:[%s215 + $0x78] sm:$0xff] %v1633
      %1844 = vst [vmem:[%s215 + $0x80] sm:$0xff] %v1638
      %1845 = vst [vmem:[%s215 + $0x88] sm:$0xff] %v1641
      %1846 = vst [vmem:[%s215 + $0x90] sm:$0xff] %v1646
      %1847 = vst [vmem:[%s215 + $0x98] sm:$0xff] %v1649
      %1848 = vst [vmem:[%s215 + $0xa0] sm:$0xff] %v1654
      %1849 = vst [vmem:[%s215 + $0xa8] sm:$0xff] %v1657
      %1850 = vst [vmem:[%s215 + $0xb0] sm:$0xff] %v1662
      %1851 = vst [vmem:[%s215 + $0xb8] sm:$0xff] %v1665
      %1852 = vst [vmem:[%s215 + $0xc0] sm:$0xff] %v1670
      %1853 = vst [vmem:[%s215 + $0xc8] sm:$0xff] %v1673
      %1854 = vst [vmem:[%s215 + $0xd0] sm:$0xff] %v1678
      %1855 = vst [vmem:[%s215 + $0xd8] sm:$0xff] %v1681
      %1856 = vst [vmem:[%s215 + $0xe0] sm:$0xff] %v1686
      %1857 = vst [vmem:[%s215 + $0xe8] sm:$0xff] %v1689
      %1858 = vst [vmem:[%s215 + $0xf0] sm:$0xff] %v1694
      %1859 = vst [vmem:[%s215 + $0xf8] sm:$0xff] %v1697
      %1860 = vst [vmem:[%s215 + $0x100] sm:$0xff] %v1702
      %1861 = vst [vmem:[%s215 + $0x108] sm:$0xff] %v1705
      %1862 = vst [vmem:[%s215 + $0x110] sm:$0xff] %v1710
      %1863 = vst [vmem:[%s215 + $0x118] sm:$0xff] %v1713
      %1864 = vst [vmem:[%s215 + $0x120] sm:$0xff] %v1718
      %1865 = vst [vmem:[%s215 + $0x128] sm:$0xff] %v1721
      %1866 = vst [vmem:[%s215 + $0x130] sm:$0xff] %v1726
      %1867 = vst [vmem:[%s215 + $0x138] sm:$0xff] %v1729
      %1868 = vst [vmem:[%s215 + $0x140] sm:$0xff] %v1734
      %1869 = vst [vmem:[%s215 + $0x148] sm:$0xff] %v1737
      %1870 = vst [vmem:[%s215 + $0x150] sm:$0xff] %v1742
      %1871 = vst [vmem:[%s215 + $0x158] sm:$0xff] %v1745
      %1872 = vst [vmem:[%s215 + $0x160] sm:$0xff] %v1750
      %1873 = vst [vmem:[%s215 + $0x168] sm:$0xff] %v1753
      %1874 = vst [vmem:[%s215 + $0x170] sm:$0xff] %v1758
      %1875 = vst [vmem:[%s215 + $0x178] sm:$0xff] %v1761
      %1876 = vst [vmem:[%s215 + $0x180] sm:$0xff] %v1766
      %1877 = vst [vmem:[%s215 + $0x188] sm:$0xff] %v1769
      %1878 = vst [vmem:[%s215 + $0x190] sm:$0xff] %v1774
      %1879 = vst [vmem:[%s215 + $0x198] sm:$0xff] %v1777
      %1880 = vst [vmem:[%s215 + $0x1a0] sm:$0xff] %v1782
      %1881 = vst [vmem:[%s215 + $0x1a8] sm:$0xff] %v1785
      %1882 = vst [vmem:[%s215 + $0x1b0] sm:$0xff] %v1790
      %1883 = vst [vmem:[%s215 + $0x1b8] sm:$0xff] %v1793
      %1884 = vst [vmem:[%s215 + $0x1c0] sm:$0xff] %v1798
      %1885 = vst [vmem:[%s215 + $0x1c8] sm:$0xff] %v1801
      %1886 = vst [vmem:[%s215 + $0x1d0] sm:$0xff] %v1806
      %1887 = vst [vmem:[%s215 + $0x1d8] sm:$0xff] %v1809
      %1888 = vst [vmem:[%s215 + $0x1e0] sm:$0xff] %v1814
      %1889 = vst [vmem:[%s215 + $0x1e8] sm:$0xff] %v1817
      %1890 = vst [vmem:[%s215 + $0x1f0] sm:$0xff] %v1822
      %1891 = vst [vmem:[%s215 + $0x1f8] sm:$0xff] %v1825
      %v1892 = vadd.f32 %v1574, %v1577
      %v1893 = vadd.f32 %v1892, %v1582
      %v1894 = vadd.f32 %v1893, %v1585
      %v1895 = vadd.f32 %v1894, %v1590
      %v1896 = vadd.f32 %v1895, %v1593
      %v1897 = vadd.f32 %v1896, %v1598
      %v1898 = vadd.f32 %v1897, %v1601
      %v1899 = vadd.f32 %v1898, %v1606
      %v1900 = vadd.f32 %v1899, %v1609
      %v1901 = vadd.f32 %v1900, %v1614
      %v1902 = vadd.f32 %v1901, %v1617
      %v1903 = vadd.f32 %v1902, %v1622
      %v1904 = vadd.f32 %v1903, %v1625
      %v1905 = vadd.f32 %v1904, %v1630
      %v1906 = vadd.f32 %v1905, %v1633
      %v1907 = vadd.f32 %v1906, %v1638
      %v1908 = vadd.f32 %v1907, %v1641
      %v1909 = vadd.f32 %v1908, %v1646
      %v1910 = vadd.f32 %v1909, %v1649
      %v1911 = vadd.f32 %v1910, %v1654
      %v1912 = vadd.f32 %v1911, %v1657
      %v1913 = vadd.f32 %v1912, %v1662
      %v1914 = vadd.f32 %v1913, %v1665
      %v1915 = vadd.f32 %v1914, %v1670
      %v1916 = vadd.f32 %v1915, %v1673
      %v1917 = vadd.f32 %v1916, %v1678
      %v1918 = vadd.f32 %v1917, %v1681
      %v1919 = vadd.f32 %v1918, %v1686
      %v1920 = vadd.f32 %v1919, %v1689
      %v1921 = vadd.f32 %v1920, %v1694
      %v1922 = vadd.f32 %v1921, %v1697
      %v1923 = vadd.f32 %v1922, %v1702
      %v1924 = vadd.f32 %v1923, %v1705
      %v1925 = vadd.f32 %v1924, %v1710
      %v1926 = vadd.f32 %v1925, %v1713
      %v1927 = vadd.f32 %v1926, %v1718
      %v1928 = vadd.f32 %v1927, %v1721
      %v1929 = vadd.f32 %v1928, %v1726
      %v1930 = vadd.f32 %v1929, %v1729
      %v1931 = vadd.f32 %v1930, %v1734
      %v1932 = vadd.f32 %v1931, %v1737
      %v1933 = vadd.f32 %v1932, %v1742
      %v1934 = vadd.f32 %v1933, %v1745
      %v1935 = vadd.f32 %v1934, %v1750
      %v1936 = vadd.f32 %v1935, %v1753
      %v1937 = vadd.f32 %v1936, %v1758
      %v1938 = vadd.f32 %v1937, %v1761
      %v1939 = vadd.f32 %v1938, %v1766
      %v1940 = vadd.f32 %v1939, %v1769
      %v1941 = vadd.f32 %v1940, %v1774
      %v1942 = vadd.f32 %v1941, %v1777
      %v1943 = vadd.f32 %v1942, %v1782
      %v1944 = vadd.f32 %v1943, %v1785
      %v1945 = vadd.f32 %v1944, %v1790
      %v1946 = vadd.f32 %v1945, %v1793
      %v1947 = vadd.f32 %v1946, %v1798
      %v1948 = vadd.f32 %v1947, %v1801
      %v1949 = vadd.f32 %v1948, %v1806
      %v1950 = vadd.f32 %v1949, %v1809
      %v1951 = vadd.f32 %v1950, %v1814
      %v1952 = vadd.f32 %v1951, %v1817
      %v1953 = vadd.f32 %v1952, %v1822
      %v1954 = vadd.f32 %v1953, %v1825
      %1955 = vst [vmem:[%s220] sm:$0xff] %v1954
      %v1956 = vmul.f32 %v1574, %v1574
      %v1957 = vmul.f32 %v1577, %v1577
      %v1958 = vmul.f32 %v1582, %v1582
      %v1959 = vmul.f32 %v1585, %v1585
      %v1960 = vmul.f32 %v1590, %v1590
      %v1961 = vmul.f32 %v1593, %v1593
      %v1962 = vmul.f32 %v1598, %v1598
      %v1963 = vmul.f32 %v1601, %v1601
      %v1964 = vmul.f32 %v1606, %v1606
      %v1965 = vmul.f32 %v1609, %v1609
      %v1966 = vmul.f32 %v1614, %v1614
      %v1967 = vmul.f32 %v1617, %v1617
      %v1968 = vmul.f32 %v1622, %v1622
      %v1969 = vmul.f32 %v1625, %v1625
      %v1970 = vmul.f32 %v1630, %v1630
      %v1971 = vmul.f32 %v1633, %v1633
      %v1972 = vmul.f32 %v1638, %v1638
      %v1973 = vmul.f32 %v1641, %v1641
      %v1974 = vmul.f32 %v1646, %v1646
      %v1975 = vmul.f32 %v1649, %v1649
      %v1976 = vmul.f32 %v1654, %v1654
      %v1977 = vmul.f32 %v1657, %v1657
      %v1978 = vmul.f32 %v1662, %v1662
      %v1979 = vmul.f32 %v1665, %v1665
      %v1980 = vmul.f32 %v1670, %v1670
      %v1981 = vmul.f32 %v1673, %v1673
      %v1982 = vmul.f32 %v1678, %v1678
      %v1983 = vmul.f32 %v1681, %v1681
      %v1984 = vmul.f32 %v1686, %v1686
      %v1985 = vmul.f32 %v1689, %v1689
      %v1986 = vmul.f32 %v1694, %v1694
      %v1987 = vmul.f32 %v1697, %v1697
      %v1988 = vmul.f32 %v1702, %v1702
      %v1989 = vmul.f32 %v1705, %v1705
      %v1990 = vmul.f32 %v1710, %v1710
      %v1991 = vmul.f32 %v1713, %v1713
      %v1992 = vmul.f32 %v1718, %v1718
      %v1993 = vmul.f32 %v1721, %v1721
      %v1994 = vmul.f32 %v1726, %v1726
      %v1995 = vmul.f32 %v1729, %v1729
      %v1996 = vmul.f32 %v1734, %v1734
      %v1997 = vmul.f32 %v1737, %v1737
      %v1998 = vmul.f32 %v1742, %v1742
      %v1999 = vmul.f32 %v1745, %v1745
      %v2000 = vmul.f32 %v1750, %v1750
      %v2001 = vmul.f32 %v1753, %v1753
      %v2002 = vmul.f32 %v1758, %v1758
      %v2003 = vmul.f32 %v1761, %v1761
      %v2004 = vmul.f32 %v1766, %v1766
      %v2005 = vmul.f32 %v1769, %v1769
      %v2006 = vmul.f32 %v1774, %v1774
      %v2007 = vmul.f32 %v1777, %v1777
      %v2008 = vmul.f32 %v1782, %v1782
      %v2009 = vmul.f32 %v1785, %v1785
      %v2010 = vmul.f32 %v1790, %v1790
      %v2011 = vmul.f32 %v1793, %v1793
      %v2012 = vmul.f32 %v1798, %v1798
      %v2013 = vmul.f32 %v1801, %v1801
      %v2014 = vmul.f32 %v1806, %v1806
      %v2015 = vmul.f32 %v1809, %v1809
      %v2016 = vmul.f32 %v1814, %v1814
      %v2017 = vmul.f32 %v1817, %v1817
      %v2018 = vmul.f32 %v1822, %v1822
      %v2019 = vmul.f32 %v1825, %v1825
      %v2020 = vadd.f32 %v1956, %v1957
      %v2021 = vadd.f32 %v2020, %v1958
      %v2022 = vadd.f32 %v2021, %v1959
      %v2023 = vadd.f32 %v2022, %v1960
      %v2024 = vadd.f32 %v2023, %v1961
      %v2025 = vadd.f32 %v2024, %v1962
      %v2026 = vadd.f32 %v2025, %v1963
      %v2027 = vadd.f32 %v2026, %v1964
      %v2028 = vadd.f32 %v2027, %v1965
      %v2029 = vadd.f32 %v2028, %v1966
      %v2030 = vadd.f32 %v2029, %v1967
      %v2031 = vadd.f32 %v2030, %v1968
      %v2032 = vadd.f32 %v2031, %v1969
      %v2033 = vadd.f32 %v2032, %v1970
      %v2034 = vadd.f32 %v2033, %v1971
      %v2035 = vadd.f32 %v2034, %v1972
      %v2036 = vadd.f32 %v2035, %v1973
      %v2037 = vadd.f32 %v2036, %v1974
      %v2038 = vadd.f32 %v2037, %v1975
      %v2039 = vadd.f32 %v2038, %v1976
      %v2040 = vadd.f32 %v2039, %v1977
      %v2041 = vadd.f32 %v2040, %v1978
      %v2042 = vadd.f32 %v2041, %v1979
      %v2043 = vadd.f32 %v2042, %v1980
      %v2044 = vadd.f32 %v2043, %v1981
      %v2045 = vadd.f32 %v2044, %v1982
      %v2046 = vadd.f32 %v2045, %v1983
      %v2047 = vadd.f32 %v2046, %v1984
      %v2048 = vadd.f32 %v2047, %v1985
      %v2049 = vadd.f32 %v2048, %v1986
      %v2050 = vadd.f32 %v2049, %v1987
      %v2051 = vadd.f32 %v2050, %v1988
      %v2052 = vadd.f32 %v2051, %v1989
      %v2053 = vadd.f32 %v2052, %v1990
      %v2054 = vadd.f32 %v2053, %v1991
      %v2055 = vadd.f32 %v2054, %v1992
      %v2056 = vadd.f32 %v2055, %v1993
      %v2057 = vadd.f32 %v2056, %v1994
      %v2058 = vadd.f32 %v2057, %v1995
      %v2059 = vadd.f32 %v2058, %v1996
      %v2060 = vadd.f32 %v2059, %v1997
      %v2061 = vadd.f32 %v2060, %v1998
      %v2062 = vadd.f32 %v2061, %v1999
      %v2063 = vadd.f32 %v2062, %v2000
      %v2064 = vadd.f32 %v2063, %v2001
      %v2065 = vadd.f32 %v2064, %v2002
      %v2066 = vadd.f32 %v2065, %v2003
      %v2067 = vadd.f32 %v2066, %v2004
      %v2068 = vadd.f32 %v2067, %v2005
      %v2069 = vadd.f32 %v2068, %v2006
      %v2070 = vadd.f32 %v2069, %v2007
      %v2071 = vadd.f32 %v2070, %v2008
      %v2072 = vadd.f32 %v2071, %v2009
      %v2073 = vadd.f32 %v2072, %v2010
      %v2074 = vadd.f32 %v2073, %v2011
      %v2075 = vadd.f32 %v2074, %v2012
      %v2076 = vadd.f32 %v2075, %v2013
      %v2077 = vadd.f32 %v2076, %v2014
      %v2078 = vadd.f32 %v2077, %v2015
      %v2079 = vadd.f32 %v2078, %v2016
      %v2080 = vadd.f32 %v2079, %v2017
      %v2081 = vadd.f32 %v2080, %v2018
      %v2082 = vadd.f32 %v2081, %v2019
      %2083 = vst [vmem:[%s224] sm:$0xff] %v2082
      %s2084 = smul.u32 64, %s16
      %p2085 = scmp.lt.s32.totalorder %s2084, 255
      %s2086 = scalar_select %p2085, %s2084, 255
      %s2087 = smul.addr %s2086, 8
      %s2088 = scalar_lea.vmem %s2, %s2087
      %p2089 = scmp.lt.s32.totalorder %s16, 3
      %s2090 = scalar_select %p2089, %s16, 3
      %s2091 = smul.addr %s2090, 8
      %s2092 = scalar_lea.vmem %s3, %s2091
      %p2093 = scmp.lt.s32.totalorder %s16, 3
      %s2094 = scalar_select %p2093, %s16, 3
      %s2095 = smul.addr %s2094, 8
      %s2096 = scalar_lea.vmem %s4, %s2095
      // Predicated region
      $region29: #{generator_forward.15} parent=27 // pred_check
        %p2097 = pneg %p81
      $region30: #{generator_forward.15} parent=27 // pred_check_branch
        %2099 = sbr.rel (%p2097) target = $region32
      $region31: #{generator_forward.15} parent=27 // pred_region
        %s2100 = smul.u32 64, %s16
      $region32: #{generator_forward.15} parent=27 // pred_fallthru
        _
      // Predicated region
      $region33: #{generator_forward.15} parent=27 // pred_check
        %p2101 = pneg %p107
      $region34: #{generator_forward.15} parent=27 // pred_check_branch
        %2103 = sbr.rel (%p2101) target = $region36
      $region35: #{generator_forward.15} parent=27 // pred_region
        _
      $region36: #{generator_forward.15} parent=27 // pred_fallthru
        _
      // Predicated region
      $region37: #{generator_forward.15} parent=27 // pred_check
        %p2104 = pneg %p133
      $region38: #{generator_forward.15} parent=27 // pred_check_branch
        %2106 = sbr.rel (%p2104) target = $region40
      $region39: #{generator_forward.15} parent=27 // pred_region
        _
      $region40: #{generator_forward.15} parent=27 // pred_fallthru
        _
    $region28: #{generator_forward.15} parent=5 // pred_fallthru
      _
    %p2107 = scmp.le.s32.totalorder 2, %s11
    // Predicated region
    $region41: #{generator_forward.15} parent=5 // pred_check
      %p2108 = pneg %p2107
    $region42: #{generator_forward.15} parent=5 // pred_check_branch
      %2110 = sbr.rel (%p2108) target = $region44
    $region43: #{generator_forward.15} parent=5 // pred_region
      %s2111 = ssub.s32 %s11, 2
      // Predicated region
      $region45: #{generator_forward.15} parent=43 // pred_check
        %p2112 = pneg %p87
      $region46: #{generator_forward.15} parent=43 // pred_check_branch
        %2114 = sbr.rel (%p2112) target = $region48
      $region47: #{generator_forward.15} parent=43 // pred_region
        %s2115 = smul.u32 64, %s17
        %p2116 = scmp.lt.s32.totalorder %s2115, 255
        %s2117 = scalar_select %p2116, %s2115, 255
        %s2118 = smul.addr %s2117, 8
        %s2119 = scalar_lea.vmem %s2, %s2118
      $region48: #{generator_forward.15} parent=43 // pred_fallthru
        _
      // Predicated region
      $region49: #{generator_forward.15} parent=43 // pred_check
        %p2120 = pneg %p113
      $region50: #{generator_forward.15} parent=43 // pred_check_branch
        %2122 = sbr.rel (%p2120) target = $region52
      $region51: #{generator_forward.15} parent=43 // pred_region
        %p2123 = scmp.lt.s32.totalorder %s17, 3
        %s2124 = scalar_select %p2123, %s17, 3
        %s2125 = smul.addr %s2124, 8
        %s2126 = scalar_lea.vmem %s3, %s2125
      $region52: #{generator_forward.15} parent=43 // pred_fallthru
        _
      // Predicated region
      $region53: #{generator_forward.15} parent=43 // pred_check
        %p2127 = pneg %p139
      $region54: #{generator_forward.15} parent=43 // pred_check_branch
        %2129 = sbr.rel (%p2127) target = $region56
      $region55: #{generator_forward.15} parent=43 // pred_region
        %p2130 = scmp.lt.s32.totalorder %s17, 3
        %s2131 = scalar_select %p2130, %s17, 3
        %s2132 = smul.addr %s2131, 8
        %s2133 = scalar_lea.vmem %s4, %s2132
      $region56: #{generator_forward.15} parent=43 // pred_fallthru
        _
    $region44: #{generator_forward.15} parent=5 // pred_fallthru
      _
  $region6: #{generator_forward.15} parent=0 // loop_footer
    %s15 = sadd.s32 1, %s11
  $region7: #{generator_forward.15} parent=0 // loop_footer_branch
    %10 = sbr.rel target = $region3
  $region8: #{generator_forward.15} parent=0 // loop_exit
    _

// kernel: generator_forward.16
$region0: #{generator_forward.16}
  #allocation0 [shape = 'u32[]', space=smem, size = 0x4, offset = 0x4, fixed_abs, tag = 'smem constant byte address 0x4 - core index']
  #allocation1 [shape = 'u32[144,128]{1,0:T(1,128)}', space=vmem, size = 0x12000, scoped, tag = 'internal scratch']
  %s0 = inlined_call_operand.vmem [shape: f32[2048,128], index: 0, kind: input, shape index: {}]
  %s1 = inlined_call_operand.vmem [shape: f32[1,128], index: 1, kind: input, shape index: {}]
  %s2 = inlined_call_operand.vmem [shape: f32[1,128], index: 2, kind: input, shape index: {}]
  %s3 = inlined_call_operand.vmem [shape: bf16[2048,128], index: 3, kind: output, shape index: {}]
  %s4 = sld [smem:[#allocation0]]
  $region45: #{generator_forward.16} parent=0
    _
  %s6 = ssub.s32 1, %s4
  %s7 = scalar_select 0, %s6, %s4
  loop: start=0, step=1, limit=6
  $region2: #{generator_forward.16} parent=0 // loop_pre_header
    _
  $region3: #{generator_forward.16} parent=0 // loop_header
    %s9 = sphi 0, %s13
    %p10 = scmp.ge.s32.totalorder %s9, 6
    %s19 = sphi 0, %s21
    %s22 = sphi 0, %s19
    %s23 = sphi 0, %s22
    %s39 = sphi 0, %s23
    %s43 = sphi 0, %s43
    %s45 = sphi 0, %s43
    %s46 = sphi 0, %s45
    %s60 = sphi 0, %s46
    %s64 = sphi 0, %s64
    %s66 = sphi 0, %s64
    %s67 = sphi 0, %s66
    %s81 = sphi 0, %s67
    %s87 = sphi 0, %s89
    %s90 = sphi 0, %s87
    %s91 = sphi 0, %s90
    %s107 = sphi 0, %s91
  $region4: #{generator_forward.16} parent=0 // loop_header_branch
    %12 = sbr.rel (%p10) target = $region8
  $region5: #{generator_forward.16} parent=0 // loop_body
    %s14 = ssub.s32 %s9, 1
    %s15 = ssub.s32 %s9, 2
    %s16 = sadd.s32 %s9, 1
    %s17 = ssub.s32 %s9, %s16
    %p18 = scmp.eq.s32.totalorder %s17, 0
    %s20 = sadd.s32 %s19, 1
    %s21 = scalar_select %p18, %s19, %s20
    %p24 = pneg %p18
    %p25 = scmp.eq.s32.totalorder %s9, 3
    %p26 = por %p24, %p25
    %p27 = scmp.ne.s32.totalorder %s19, %s22
    %p28 = scmp.eq.s32.totalorder %s9, 0
    %p29 = por %p27, %p28
    %p30 = scmp.ne.s32.totalorder %s19, %s22
    %p31 = scmp.eq.s32.totalorder %s14, 3
    %p32 = por %p30, %p31
    %p33 = scmp.ne.s32.totalorder %s22, %s23
    %p34 = scmp.eq.s32.totalorder %s14, 0
    %p35 = por %p33, %p34
    %p36 = scmp.ne.s32.totalorder %s22, %s23
    %p37 = scmp.eq.s32.totalorder %s15, 3
    %p38 = por %p36, %p37
    %p40 = scmp.ne.s32.totalorder %s23, %s39
    %p41 = scmp.eq.s32.totalorder %s15, 0
    %p42 = por %p40, %p41
    %s44 = sadd.s32 %s43, 1
    %p47 = scmp.eq.s32.totalorder %s9, 3
    %p48 = scmp.ne.s32.totalorder %s43, %s45
    %p49 = scmp.eq.s32.totalorder %s9, 0
    %p50 = por %p48, %p49
    %p51 = scmp.ne.s32.totalorder %s43, %s45
    %p52 = scmp.eq.s32.totalorder %s14, 3
    %p53 = por %p51, %p52
    %p54 = scmp.ne.s32.totalorder %s45, %s46
    %p55 = scmp.eq.s32.totalorder %s14, 0
    %p56 = por %p54, %p55
    %p57 = scmp.ne.s32.totalorder %s45, %s46
    %p58 = scmp.eq.s32.totalorder %s15, 3
    %p59 = por %p57, %p58
    %p61 = scmp.ne.s32.totalorder %s46, %s60
    %p62 = scmp.eq.s32.totalorder %s15, 0
    %p63 = por %p61, %p62
    %s65 = sadd.s32 %s64, 1
    %p68 = scmp.eq.s32.totalorder %s9, 3
    %p69 = scmp.ne.s32.totalorder %s64, %s66
    %p70 = scmp.eq.s32.totalorder %s9, 0
    %p71 = por %p69, %p70
    %p72 = scmp.ne.s32.totalorder %s64, %s66
    %p73 = scmp.eq.s32.totalorder %s14, 3
    %p74 = por %p72, %p73
    %p75 = scmp.ne.s32.totalorder %s66, %s67
    %p76 = scmp.eq.s32.totalorder %s14, 0
    %p77 = por %p75, %p76
    %p78 = scmp.ne.s32.totalorder %s66, %s67
    %p79 = scmp.eq.s32.totalorder %s15, 3
    %p80 = por %p78, %p79
    %p82 = scmp.ne.s32.totalorder %s67, %s81
    %p83 = scmp.eq.s32.totalorder %s15, 0
    %p84 = por %p82, %p83
    %s85 = ssub.s32 %s9, %s16
    %p86 = scmp.eq.s32.totalorder %s85, 0
    %s88 = sadd.s32 %s87, 1
    %s89 = scalar_select %p86, %s87, %s88
    %p92 = pneg %p86
    %p93 = scmp.eq.s32.totalorder %s9, 3
    %p94 = por %p92, %p93
    %p95 = scmp.ne.s32.totalorder %s87, %s90
    %p96 = scmp.eq.s32.totalorder %s9, 0
    %p97 = por %p95, %p96
    %p98 = scmp.ne.s32.totalorder %s87, %s90
    %p99 = scmp.eq.s32.totalorder %s14, 3
    %p100 = por %p98, %p99
    %p101 = scmp.ne.s32.totalorder %s90, %s91
    %p102 = scmp.eq.s32.totalorder %s14, 0
    %p103 = por %p101, %p102
    %p104 = scmp.ne.s32.totalorder %s90, %s91
    %p105 = scmp.eq.s32.totalorder %s15, 3
    %p106 = por %p104, %p105
    %p108 = scmp.ne.s32.totalorder %s91, %s107
    %p109 = scmp.eq.s32.totalorder %s15, 0
    %p110 = por %p108, %p109
    %p111 = scmp.le.s32.totalorder 1, %s9
    %p112 = scmp.lt.s32.totalorder %s9, 5
    %p113 = pnand %p111, %p112
    %p114 = pneg %p113
    // Predicated region
    $region9: #{generator_forward.16} parent=5 // pred_check
      _
    $region10: #{generator_forward.16} parent=5 // pred_check_branch
      %116 = sbr.rel (%p113) target = $region12
    $region11: #{generator_forward.16} parent=5 // pred_region
      %s117 = ssub.s32 %s9, 1
      // Predicated region
      $region13: #{generator_forward.16} parent=11 // pred_check
        %p118 = pneg %p56
      $region14: #{generator_forward.16} parent=11 // pred_check_branch
        %120 = sbr.rel (%p118) target = $region16
      $region15: #{generator_forward.16} parent=11 // pred_region
        _
      $region16: #{generator_forward.16} parent=11 // pred_fallthru
        _
      // Predicated region
      $region17: #{generator_forward.16} parent=11 // pred_check
        %p121 = pneg %p77
      $region18: #{generator_forward.16} parent=11 // pred_check_branch
        %123 = sbr.rel (%p121) target = $region20
      $region19: #{generator_forward.16} parent=11 // pred_region
        _
      $region20: #{generator_forward.16} parent=11 // pred_fallthru
        _
    $region12: #{generator_forward.16} parent=5 // pred_fallthru
      _
    %p124 = scmp.lt.s32.totalorder %s9, 4
    // Predicated region
    $region21: #{generator_forward.16} parent=5 // pred_check
      %p125 = pneg %p124
    $region22: #{generator_forward.16} parent=5 // pred_check_branch
      %127 = sbr.rel (%p125) target = $region24
    $region23: #{generator_forward.16} parent=5 // pred_region
      // Predicated region
      $region25: #{generator_forward.16} parent=23 // pred_check
        %p128 = pneg %p29
      $region26: #{generator_forward.16} parent=23 // pred_check_branch
        %130 = sbr.rel (%p128) target = $region28
      $region27: #{generator_forward.16} parent=23 // pred_region
        %s131 = smul.u32 64, %s9
        %p132 = scmp.lt.s32.totalorder %s131, 255
        %s133 = scalar_select %p132, %s131, 255
        %s134 = smul.addr %s133, 8
        %s135 = scalar_lea.vmem %s0, %s134
        %s136 = smul.u32 64, %s9
      $region28: #{generator_forward.16} parent=23 // pred_fallthru
        _
    $region24: #{generator_forward.16} parent=5 // pred_fallthru
      _
    %p137 = scmp.le.s32.totalorder 1, %s9
    %p138 = scmp.lt.s32.totalorder %s9, 5
    %p139 = pnand %p137, %p138
    %p140 = pneg %p139
    // Predicated region
    $region29: #{generator_forward.16} parent=5 // pred_check
      _
    $region30: #{generator_forward.16} parent=5 // pred_check_branch
      %142 = sbr.rel (%p139) target = $region32
    $region31: #{generator_forward.16} parent=5 // pred_region
      %s143 = ssub.s32 %s9, 1
      %s144 = smul.u32 64, %s14
      %p145 = scmp.lt.s32.totalorder %s144, 255
      %s146 = scalar_select %p145, %s144, 255
      %s147 = smul.addr %s146, 8
      %s148 = scalar_lea.vmem %s0, %s147
      %p149 = pneg %p35
      %p150 = pneg %p32
      %p151 = pneg %p56
      %p152 = pneg %p53
      %p153 = pneg %p77
      %p154 = pneg %p74
      %p155 = pneg %p103
      %p156 = pneg %p100
      %s157 = smul.u32 64, %s14
      %p158 = scmp.lt.s32.totalorder %s157, 255
      %s159 = scalar_select %p158, %s157, 255
      %s160 = smul.addr %s159, 4
      %s161 = scalar_lea.vmem %s3, %s160
      %s162 = smul.u32 64, %s14
      %p163 = scmp.lt.s32.totalorder %s162, 255
      %s164 = scalar_select %p163, %s162, 255
      %s165 = smul.addr %s164, 8
      %s166 = scalar_lea.vmem %s0, %s165
      %s167 = smul.u32 64, %s14
      %s168 = smul.u32 64, %s14
      %p169 = scmp.lt.s32.totalorder %s168, 255
      %s170 = scalar_select %p169, %s168, 255
      %s171 = smul.addr %s170, 4
      %s172 = scalar_lea.vmem %s3, %s171
      %s173 = smul.u32 64, %s14
      %v174 = vld [vmem:[%s166] sm:$0xff]
      %v175 = vld [vmem:[%s166 + $0x8] sm:$0xff]
      %v176 = vld [vmem:[%s166 + $0x10] sm:$0xff]
      %v177 = vld [vmem:[%s166 + $0x18] sm:$0xff]
      %v178 = vld [vmem:[%s166 + $0x20] sm:$0xff]
      %v179 = vld [vmem:[%s166 + $0x28] sm:$0xff]
      %v180 = vld [vmem:[%s166 + $0x30] sm:$0xff]
      %v181 = vld [vmem:[%s166 + $0x38] sm:$0xff]
      %v182 = vld [vmem:[%s166 + $0x40] sm:$0xff]
      %v183 = vld [vmem:[%s166 + $0x48] sm:$0xff]
      %v184 = vld [vmem:[%s166 + $0x50] sm:$0xff]
      %v185 = vld [vmem:[%s166 + $0x58] sm:$0xff]
      %v186 = vld [vmem:[%s166 + $0x60] sm:$0xff]
      %v187 = vld [vmem:[%s166 + $0x68] sm:$0xff]
      %v188 = vld [vmem:[%s166 + $0x70] sm:$0xff]
      %v189 = vld [vmem:[%s166 + $0x78] sm:$0xff]
      %v190 = vld [vmem:[%s166 + $0x80] sm:$0xff]
      %v191 = vld [vmem:[%s166 + $0x88] sm:$0xff]
      %v192 = vld [vmem:[%s166 + $0x90] sm:$0xff]
      %v193 = vld [vmem:[%s166 + $0x98] sm:$0xff]
      %v194 = vld [vmem:[%s166 + $0xa0] sm:$0xff]
      %v195 = vld [vmem:[%s166 + $0xa8] sm:$0xff]
      %v196 = vld [vmem:[%s166 + $0xb0] sm:$0xff]
      %v197 = vld [vmem:[%s166 + $0xb8] sm:$0xff]
      %v198 = vld [vmem:[%s166 + $0xc0] sm:$0xff]
      %v199 = vld [vmem:[%s166 + $0xc8] sm:$0xff]
      %v200 = vld [vmem:[%s166 + $0xd0] sm:$0xff]
      %v201 = vld [vmem:[%s166 + $0xd8] sm:$0xff]
      %v202 = vld [vmem:[%s166 + $0xe0] sm:$0xff]
      %v203 = vld [vmem:[%s166 + $0xe8] sm:$0xff]
      %v204 = vld [vmem:[%s166 + $0xf0] sm:$0xff]
      %v205 = vld [vmem:[%s166 + $0xf8] sm:$0xff]
      %v206 = vld [vmem:[%s166 + $0x100] sm:$0xff]
      %v207 = vld [vmem:[%s166 + $0x108] sm:$0xff]
      %v208 = vld [vmem:[%s166 + $0x110] sm:$0xff]
      %v209 = vld [vmem:[%s166 + $0x118] sm:$0xff]
      %v210 = vld [vmem:[%s166 + $0x120] sm:$0xff]
      %v211 = vld [vmem:[%s166 + $0x128] sm:$0xff]
      %v212 = vld [vmem:[%s166 + $0x130] sm:$0xff]
      %v213 = vld [vmem:[%s166 + $0x138] sm:$0xff]
      %v214 = vld [vmem:[%s166 + $0x140] sm:$0xff]
      %v215 = vld [vmem:[%s166 + $0x148] sm:$0xff]
      %v216 = vld [vmem:[%s166 + $0x150] sm:$0xff]
      %v217 = vld [vmem:[%s166 + $0x158] sm:$0xff]
      %v218 = vld [vmem:[%s166 + $0x160] sm:$0xff]
      %v219 = vld [vmem:[%s166 + $0x168] sm:$0xff]
      %v220 = vld [vmem:[%s166 + $0x170] sm:$0xff]
      %v221 = vld [vmem:[%s166 + $0x178] sm:$0xff]
      %v222 = vld [vmem:[%s166 + $0x180] sm:$0xff]
      %v223 = vld [vmem:[%s166 + $0x188] sm:$0xff]
      %v224 = vld [vmem:[%s166 + $0x190] sm:$0xff]
      %v225 = vld [vmem:[%s166 + $0x198] sm:$0xff]
      %v226 = vld [vmem:[%s166 + $0x1a0] sm:$0xff]
      %v227 = vld [vmem:[%s166 + $0x1a8] sm:$0xff]
      %v228 = vld [vmem:[%s166 + $0x1b0] sm:$0xff]
      %v229 = vld [vmem:[%s166 + $0x1b8] sm:$0xff]
      %v230 = vld [vmem:[%s166 + $0x1c0] sm:$0xff]
      %v231 = vld [vmem:[%s166 + $0x1c8] sm:$0xff]
      %v232 = vld [vmem:[%s166 + $0x1d0] sm:$0xff]
      %v233 = vld [vmem:[%s166 + $0x1d8] sm:$0xff]
      %v234 = vld [vmem:[%s166 + $0x1e0] sm:$0xff]
      %v235 = vld [vmem:[%s166 + $0x1e8] sm:$0xff]
      %v236 = vld [vmem:[%s166 + $0x1f0] sm:$0xff]
      %v237 = vld [vmem:[%s166 + $0x1f8] sm:$0xff]
      %v238 = vld [vmem:[%s1] sm:$0x1]
      %v240 = vlaneseq
      %v241 = vshrl.u32 %v240, 7
      %v242 = vsub.s32 0, %v241
      %v243 = vrot.slane %v238, %v242
      %v245 = vmul.f32 %v174, %v243
      %v246 = vmul.f32 %v175, %v243
      %v247 = vmul.f32 %v176, %v243
      %v248 = vmul.f32 %v177, %v243
      %v249 = vmul.f32 %v178, %v243
      %v250 = vmul.f32 %v179, %v243
      %v251 = vmul.f32 %v180, %v243
      %v252 = vmul.f32 %v181, %v243
      %v253 = vmul.f32 %v182, %v243
      %v254 = vmul.f32 %v183, %v243
      %v255 = vmul.f32 %v184, %v243
      %v256 = vmul.f32 %v185, %v243
      %v257 = vmul.f32 %v186, %v243
      %v258 = vmul.f32 %v187, %v243
      %v259 = vmul.f32 %v188, %v243
      %v260 = vmul.f32 %v189, %v243
      %v261 = vmul.f32 %v190, %v243
      %v262 = vmul.f32 %v191, %v243
      %v263 = vmul.f32 %v192, %v243
      %v264 = vmul.f32 %v193, %v243
      %v265 = vmul.f32 %v194, %v243
      %v266 = vmul.f32 %v195, %v243
      %v267 = vmul.f32 %v196, %v243
      %v268 = vmul.f32 %v197, %v243
      %v269 = vmul.f32 %v198, %v243
      %v270 = vmul.f32 %v199, %v243
      %v271 = vmul.f32 %v200, %v243
      %v272 = vmul.f32 %v201, %v243
      %v273 = vmul.f32 %v202, %v243
      %v274 = vmul.f32 %v203, %v243
      %v275 = vmul.f32 %v204, %v243
      %v276 = vmul.f32 %v205, %v243
      %v277 = vmul.f32 %v206, %v243
      %v278 = vmul.f32 %v207, %v243
      %v279 = vmul.f32 %v208, %v243
      %v280 = vmul.f32 %v209, %v243
      %v281 = vmul.f32 %v210, %v243
      %v282 = vmul.f32 %v211, %v243
      %v283 = vmul.f32 %v212, %v243
      %v284 = vmul.f32 %v213, %v243
      %v285 = vmul.f32 %v214, %v243
      %v286 = vmul.f32 %v215, %v243
      %v287 = vmul.f32 %v216, %v243
      %v288 = vmul.f32 %v217, %v243
      %v289 = vmul.f32 %v218, %v243
      %v290 = vmul.f32 %v219, %v243
      %v291 = vmul.f32 %v220, %v243
      %v292 = vmul.f32 %v221, %v243
      %v293 = vmul.f32 %v222, %v243
      %v294 = vmul.f32 %v223, %v243
      %v295 = vmul.f32 %v224, %v243
      %v296 = vmul.f32 %v225, %v243
      %v297 = vmul.f32 %v226, %v243
      %v298 = vmul.f32 %v227, %v243
      %v299 = vmul.f32 %v228, %v243
      %v300 = vmul.f32 %v229, %v243
      %v301 = vmul.f32 %v230, %v243
      %v302 = vmul.f32 %v231, %v243
      %v303 = vmul.f32 %v232, %v243
      %v304 = vmul.f32 %v233, %v243
      %v305 = vmul.f32 %v234, %v243
      %v306 = vmul.f32 %v235, %v243
      %v307 = vmul.f32 %v236, %v243
      %v308 = vmul.f32 %v237, %v243
      %v309 = vld [vmem:[%s2] sm:$0x1]
      %v311 = vlaneseq
      %v312 = vshrl.u32 %v311, 7
      %v313 = vsub.s32 0, %v312
      %v314 = vrot.slane %v309, %v313
      %v316 = vadd.f32 %v245, %v314
      %v317 = vadd.f32 %v246, %v314
      %v318 = vadd.f32 %v247, %v314
      %v319 = vadd.f32 %v248, %v314
      %v320 = vadd.f32 %v249, %v314
      %v321 = vadd.f32 %v250, %v314
      %v322 = vadd.f32 %v251, %v314
      %v323 = vadd.f32 %v252, %v314
      %v324 = vadd.f32 %v253, %v314
      %v325 = vadd.f32 %v254, %v314
      %v326 = vadd.f32 %v255, %v314
      %v327 = vadd.f32 %v256, %v314
      %v328 = vadd.f32 %v257, %v314
      %v329 = vadd.f32 %v258, %v314
      %v330 = vadd.f32 %v259, %v314
      %v331 = vadd.f32 %v260, %v314
      %v332 = vadd.f32 %v261, %v314
      %v333 = vadd.f32 %v262, %v314
      %v334 = vadd.f32 %v263, %v314
      %v335 = vadd.f32 %v264, %v314
      %v336 = vadd.f32 %v265, %v314
      %v337 = vadd.f32 %v266, %v314
      %v338 = vadd.f32 %v267, %v314
      %v339 = vadd.f32 %v268, %v314
      %v340 = vadd.f32 %v269, %v314
      %v341 = vadd.f32 %v270, %v314
      %v342 = vadd.f32 %v271, %v314
      %v343 = vadd.f32 %v272, %v314
      %v344 = vadd.f32 %v273, %v314
      %v345 = vadd.f32 %v274, %v314
      %v346 = vadd.f32 %v275, %v314
      %v347 = vadd.f32 %v276, %v314
      %v348 = vadd.f32 %v277, %v314
      %v349 = vadd.f32 %v278, %v314
      %v350 = vadd.f32 %v279, %v314
      %v351 = vadd.f32 %v280, %v314
      %v352 = vadd.f32 %v281, %v314
      %v353 = vadd.f32 %v282, %v314
      %v354 = vadd.f32 %v283, %v314
      %v355 = vadd.f32 %v284, %v314
      %v356 = vadd.f32 %v285, %v314
      %v357 = vadd.f32 %v286, %v314
      %v358 = vadd.f32 %v287, %v314
      %v359 = vadd.f32 %v288, %v314
      %v360 = vadd.f32 %v289, %v314
      %v361 = vadd.f32 %v290, %v314
      %v362 = vadd.f32 %v291, %v314
      %v363 = vadd.f32 %v292, %v314
      %v364 = vadd.f32 %v293, %v314
      %v365 = vadd.f32 %v294, %v314
      %v366 = vadd.f32 %v295, %v314
      %v367 = vadd.f32 %v296, %v314
      %v368 = vadd.f32 %v297, %v314
      %v369 = vadd.f32 %v298, %v314
      %v370 = vadd.f32 %v299, %v314
      %v371 = vadd.f32 %v300, %v314
      %v372 = vadd.f32 %v301, %v314
      %v373 = vadd.f32 %v302, %v314
      %v374 = vadd.f32 %v303, %v314
      %v375 = vadd.f32 %v304, %v314
      %v376 = vadd.f32 %v305, %v314
      %v377 = vadd.f32 %v306, %v314
      %v378 = vadd.f32 %v307, %v314
      %v379 = vadd.f32 %v308, %v314
      %v380 = vmax.f32 %v316, 0.0
      %v381 = vmax.f32 %v317, 0.0
      %v382 = vmax.f32 %v318, 0.0
      %v383 = vmax.f32 %v319, 0.0
      %v384 = vmax.f32 %v320, 0.0
      %v385 = vmax.f32 %v321, 0.0
      %v386 = vmax.f32 %v322, 0.0
      %v387 = vmax.f32 %v323, 0.0
      %v388 = vmax.f32 %v324, 0.0
      %v389 = vmax.f32 %v325, 0.0
      %v390 = vmax.f32 %v326, 0.0
      %v391 = vmax.f32 %v327, 0.0
      %v392 = vmax.f32 %v328, 0.0
      %v393 = vmax.f32 %v329, 0.0
      %v394 = vmax.f32 %v330, 0.0
      %v395 = vmax.f32 %v331, 0.0
      %v396 = vmax.f32 %v332, 0.0
      %v397 = vmax.f32 %v333, 0.0
      %v398 = vmax.f32 %v334, 0.0
      %v399 = vmax.f32 %v335, 0.0
      %v400 = vmax.f32 %v336, 0.0
      %v401 = vmax.f32 %v337, 0.0
      %v402 = vmax.f32 %v338, 0.0
      %v403 = vmax.f32 %v339, 0.0
      %v404 = vmax.f32 %v340, 0.0
      %v405 = vmax.f32 %v341, 0.0
      %v406 = vmax.f32 %v342, 0.0
      %v407 = vmax.f32 %v343, 0.0
      %v408 = vmax.f32 %v344, 0.0
      %v409 = vmax.f32 %v345, 0.0
      %v410 = vmax.f32 %v346, 0.0
      %v411 = vmax.f32 %v347, 0.0
      %v412 = vmax.f32 %v348, 0.0
      %v413 = vmax.f32 %v349, 0.0
      %v414 = vmax.f32 %v350, 0.0
      %v415 = vmax.f32 %v351, 0.0
      %v416 = vmax.f32 %v352, 0.0
      %v417 = vmax.f32 %v353, 0.0
      %v418 = vmax.f32 %v354, 0.0
      %v419 = vmax.f32 %v355, 0.0
      %v420 = vmax.f32 %v356, 0.0
      %v421 = vmax.f32 %v357, 0.0
      %v422 = vmax.f32 %v358, 0.0
      %v423 = vmax.f32 %v359, 0.0
      %v424 = vmax.f32 %v360, 0.0
      %v425 = vmax.f32 %v361, 0.0
      %v426 = vmax.f32 %v362, 0.0
      %v427 = vmax.f32 %v363, 0.0
      %v428 = vmax.f32 %v364, 0.0
      %v429 = vmax.f32 %v365, 0.0
      %v430 = vmax.f32 %v366, 0.0
      %v431 = vmax.f32 %v367, 0.0
      %v432 = vmax.f32 %v368, 0.0
      %v433 = vmax.f32 %v369, 0.0
      %v434 = vmax.f32 %v370, 0.0
      %v435 = vmax.f32 %v371, 0.0
      %v436 = vmax.f32 %v372, 0.0
      %v437 = vmax.f32 %v373, 0.0
      %v438 = vmax.f32 %v374, 0.0
      %v439 = vmax.f32 %v375, 0.0
      %v440 = vmax.f32 %v376, 0.0
      %v441 = vmax.f32 %v377, 0.0
      %v442 = vmax.f32 %v378, 0.0
      %v443 = vmax.f32 %v379, 0.0
      %v444 = vpack.c.bf16 %v381, %v380
      %v445 = vpack.c.bf16 %v383, %v382
      %v446 = vpack.c.bf16 %v385, %v384
      %v447 = vpack.c.bf16 %v387, %v386
      %v448 = vpack.c.bf16 %v389, %v388
      %v449 = vpack.c.bf16 %v391, %v390
      %v450 = vpack.c.bf16 %v393, %v392
      %v451 = vpack.c.bf16 %v395, %v394
      %v452 = vpack.c.bf16 %v397, %v396
      %v453 = vpack.c.bf16 %v399, %v398
      %v454 = vpack.c.bf16 %v401, %v400
      %v455 = vpack.c.bf16 %v403, %v402
      %v456 = vpack.c.bf16 %v405, %v404
      %v457 = vpack.c.bf16 %v407, %v406
      %v458 = vpack.c.bf16 %v409, %v408
      %v459 = vpack.c.bf16 %v411, %v410
      %v460 = vpack.c.bf16 %v413, %v412
      %v461 = vpack.c.bf16 %v415, %v414
      %v462 = vpack.c.bf16 %v417, %v416
      %v463 = vpack.c.bf16 %v419, %v418
      %v464 = vpack.c.bf16 %v421, %v420
      %v465 = vpack.c.bf16 %v423, %v422
      %v466 = vpack.c.bf16 %v425, %v424
      %v467 = vpack.c.bf16 %v427, %v426
      %v468 = vpack.c.bf16 %v429, %v428
      %v469 = vpack.c.bf16 %v431, %v430
      %v470 = vpack.c.bf16 %v433, %v432
      %v471 = vpack.c.bf16 %v435, %v434
      %v472 = vpack.c.bf16 %v437, %v436
      %v473 = vpack.c.bf16 %v439, %v438
      %v474 = vpack.c.bf16 %v441, %v440
      %v475 = vpack.c.bf16 %v443, %v442
      %v508 = vunpack.c.l.b16 %v444
      %v509 = vunpack.c.h.b16 %v444
      %v510 = vunpack.c.l.b16 %v445
      %v511 = vunpack.c.h.b16 %v445
      %v512 = vunpack.c.l.b16 %v446
      %v513 = vunpack.c.h.b16 %v446
      %v514 = vunpack.c.l.b16 %v447
      %v515 = vunpack.c.h.b16 %v447
      %v516 = vunpack.c.l.b16 %v448
      %v517 = vunpack.c.h.b16 %v448
      %v518 = vunpack.c.l.b16 %v449
      %v519 = vunpack.c.h.b16 %v449
      %v520 = vunpack.c.l.b16 %v450
      %v521 = vunpack.c.h.b16 %v450
      %v522 = vunpack.c.l.b16 %v451
      %v523 = vunpack.c.h.b16 %v451
      %v524 = vunpack.c.l.b16 %v452
      %v525 = vunpack.c.h.b16 %v452
      %v526 = vunpack.c.l.b16 %v453
      %v527 = vunpack.c.h.b16 %v453
      %v528 = vunpack.c.l.b16 %v454
      %v529 = vunpack.c.h.b16 %v454
      %v530 = vunpack.c.l.b16 %v455
      %v531 = vunpack.c.h.b16 %v455
      %v532 = vunpack.c.l.b16 %v456
      %v533 = vunpack.c.h.b16 %v456
      %v534 = vunpack.c.l.b16 %v457
      %v535 = vunpack.c.h.b16 %v457
      %v536 = vunpack.c.l.b16 %v458
      %v537 = vunpack.c.h.b16 %v458
      %v538 = vunpack.c.l.b16 %v459
      %v539 = vunpack.c.h.b16 %v459
      %v540 = vunpack.c.l.b16 %v460
      %v541 = vunpack.c.h.b16 %v460
      %v542 = vunpack.c.l.b16 %v461
      %v543 = vunpack.c.h.b16 %v461
      %v544 = vunpack.c.l.b16 %v462
      %v545 = vunpack.c.h.b16 %v462
      %v546 = vunpack.c.l.b16 %v463
      %v547 = vunpack.c.h.b16 %v463
      %v548 = vunpack.c.l.b16 %v464
      %v549 = vunpack.c.h.b16 %v464
      %v550 = vunpack.c.l.b16 %v465
      %v551 = vunpack.c.h.b16 %v465
      %v552 = vunpack.c.l.b16 %v466
      %v553 = vunpack.c.h.b16 %v466
      %v554 = vunpack.c.l.b16 %v467
      %v555 = vunpack.c.h.b16 %v467
      %v556 = vunpack.c.l.b16 %v468
      %v557 = vunpack.c.h.b16 %v468
      %v558 = vunpack.c.l.b16 %v469
      %v559 = vunpack.c.h.b16 %v469
      %v560 = vunpack.c.l.b16 %v470
      %v561 = vunpack.c.h.b16 %v470
      %v562 = vunpack.c.l.b16 %v471
      %v563 = vunpack.c.h.b16 %v471
      %v564 = vunpack.c.l.b16 %v472
      %v565 = vunpack.c.h.b16 %v472
      %v566 = vunpack.c.l.b16 %v473
      %v567 = vunpack.c.h.b16 %v473
      %v568 = vunpack.c.l.b16 %v474
      %v569 = vunpack.c.h.b16 %v474
      %v570 = vunpack.c.l.b16 %v475
      %v571 = vunpack.c.h.b16 %v475
      %v572 = vpack.c.b16 %v508, %v508
      %v573 = vpack.c.b16 %v509, %v509
      %v574 = vpack.c.b16 %v510, %v510
      %v575 = vpack.c.b16 %v511, %v511
      %v576 = vpack.c.b16 %v512, %v512
      %v577 = vpack.c.b16 %v513, %v513
      %v578 = vpack.c.b16 %v514, %v514
      %v579 = vpack.c.b16 %v515, %v515
      %v580 = vpack.c.b16 %v516, %v516
      %v581 = vpack.c.b16 %v517, %v517
      %v582 = vpack.c.b16 %v518, %v518
      %v583 = vpack.c.b16 %v519, %v519
      %v584 = vpack.c.b16 %v520, %v520
      %v585 = vpack.c.b16 %v521, %v521
      %v586 = vpack.c.b16 %v522, %v522
      %v587 = vpack.c.b16 %v523, %v523
      %v588 = vpack.c.b16 %v524, %v524
      %v589 = vpack.c.b16 %v525, %v525
      %v590 = vpack.c.b16 %v526, %v526
      %v591 = vpack.c.b16 %v527, %v527
      %v592 = vpack.c.b16 %v528, %v528
      %v593 = vpack.c.b16 %v529, %v529
      %v594 = vpack.c.b16 %v530, %v530
      %v595 = vpack.c.b16 %v531, %v531
      %v596 = vpack.c.b16 %v532, %v532
      %v597 = vpack.c.b16 %v533, %v533
      %v598 = vpack.c.b16 %v534, %v534
      %v599 = vpack.c.b16 %v535, %v535
      %v600 = vpack.c.b16 %v536, %v536
      %v601 = vpack.c.b16 %v537, %v537
      %v602 = vpack.c.b16 %v538, %v538
      %v603 = vpack.c.b16 %v539, %v539
      %v604 = vpack.c.b16 %v540, %v540
      %v605 = vpack.c.b16 %v541, %v541
      %v606 = vpack.c.b16 %v542, %v542
      %v607 = vpack.c.b16 %v543, %v543
      %v608 = vpack.c.b16 %v544, %v544
      %v609 = vpack.c.b16 %v545, %v545
      %v610 = vpack.c.b16 %v546, %v546
      %v611 = vpack.c.b16 %v547, %v547
      %v612 = vpack.c.b16 %v548, %v548
      %v613 = vpack.c.b16 %v549, %v549
      %v614 = vpack.c.b16 %v550, %v550
      %v615 = vpack.c.b16 %v551, %v551
      %v616 = vpack.c.b16 %v552, %v552
      %v617 = vpack.c.b16 %v553, %v553
      %v618 = vpack.c.b16 %v554, %v554
      %v619 = vpack.c.b16 %v555, %v555
      %v620 = vpack.c.b16 %v556, %v556
      %v621 = vpack.c.b16 %v557, %v557
      %v622 = vpack.c.b16 %v558, %v558
      %v623 = vpack.c.b16 %v559, %v559
      %v624 = vpack.c.b16 %v560, %v560
      %v625 = vpack.c.b16 %v561, %v561
      %v626 = vpack.c.b16 %v562, %v562
      %v627 = vpack.c.b16 %v563, %v563
      %v628 = vpack.c.b16 %v564, %v564
      %v629 = vpack.c.b16 %v565, %v565
      %v630 = vpack.c.b16 %v566, %v566
      %v631 = vpack.c.b16 %v567, %v567
      %v632 = vpack.c.b16 %v568, %v568
      %v633 = vpack.c.b16 %v569, %v569
      %v634 = vpack.c.b16 %v570, %v570
      %v635 = vpack.c.b16 %v571, %v571
      %700 = vst [vmem:[%s172] sm:$0xf] %v572
      %701 = vst [vmem:[%s172 + $0x4] sm:$0xf] %v573
      %702 = vst [vmem:[%s172 + $0x8] sm:$0xf] %v574
      %703 = vst [vmem:[%s172 + $0xc] sm:$0xf] %v575
      %704 = vst [vmem:[%s172 + $0x10] sm:$0xf] %v576
      %705 = vst [vmem:[%s172 + $0x14] sm:$0xf] %v577
      %706 = vst [vmem:[%s172 + $0x18] sm:$0xf] %v578
      %707 = vst [vmem:[%s172 + $0x1c] sm:$0xf] %v579
      %708 = vst [vmem:[%s172 + $0x20] sm:$0xf] %v580
      %709 = vst [vmem:[%s172 + $0x24] sm:$0xf] %v581
      %710 = vst [vmem:[%s172 + $0x28] sm:$0xf] %v582
      %711 = vst [vmem:[%s172 + $0x2c] sm:$0xf] %v583
      %712 = vst [vmem:[%s172 + $0x30] sm:$0xf] %v584
      %713 = vst [vmem:[%s172 + $0x34] sm:$0xf] %v585
      %714 = vst [vmem:[%s172 + $0x38] sm:$0xf] %v586
      %715 = vst [vmem:[%s172 + $0x3c] sm:$0xf] %v587
      %716 = vst [vmem:[%s172 + $0x40] sm:$0xf] %v588
      %717 = vst [vmem:[%s172 + $0x44] sm:$0xf] %v589
      %718 = vst [vmem:[%s172 + $0x48] sm:$0xf] %v590
      %719 = vst [vmem:[%s172 + $0x4c] sm:$0xf] %v591
      %720 = vst [vmem:[%s172 + $0x50] sm:$0xf] %v592
      %721 = vst [vmem:[%s172 + $0x54] sm:$0xf] %v593
      %722 = vst [vmem:[%s172 + $0x58] sm:$0xf] %v594
      %723 = vst [vmem:[%s172 + $0x5c] sm:$0xf] %v595
      %724 = vst [vmem:[%s172 + $0x60] sm:$0xf] %v596
      %725 = vst [vmem:[%s172 + $0x64] sm:$0xf] %v597
      %726 = vst [vmem:[%s172 + $0x68] sm:$0xf] %v598
      %727 = vst [vmem:[%s172 + $0x6c] sm:$0xf] %v599
      %728 = vst [vmem:[%s172 + $0x70] sm:$0xf] %v600
      %729 = vst [vmem:[%s172 + $0x74] sm:$0xf] %v601
      %730 = vst [vmem:[%s172 + $0x78] sm:$0xf] %v602
      %731 = vst [vmem:[%s172 + $0x7c] sm:$0xf] %v603
      %732 = vst [vmem:[%s172 + $0x80] sm:$0xf] %v604
      %733 = vst [vmem:[%s172 + $0x84] sm:$0xf] %v605
      %734 = vst [vmem:[%s172 + $0x88] sm:$0xf] %v606
      %735 = vst [vmem:[%s172 + $0x8c] sm:$0xf] %v607
      %736 = vst [vmem:[%s172 + $0x90] sm:$0xf] %v608
      %737 = vst [vmem:[%s172 + $0x94] sm:$0xf] %v609
      %738 = vst [vmem:[%s172 + $0x98] sm:$0xf] %v610
      %739 = vst [vmem:[%s172 + $0x9c] sm:$0xf] %v611
      %740 = vst [vmem:[%s172 + $0xa0] sm:$0xf] %v612
      %741 = vst [vmem:[%s172 + $0xa4] sm:$0xf] %v613
      %742 = vst [vmem:[%s172 + $0xa8] sm:$0xf] %v614
      %743 = vst [vmem:[%s172 + $0xac] sm:$0xf] %v615
      %744 = vst [vmem:[%s172 + $0xb0] sm:$0xf] %v616
      %745 = vst [vmem:[%s172 + $0xb4] sm:$0xf] %v617
      %746 = vst [vmem:[%s172 + $0xb8] sm:$0xf] %v618
      %747 = vst [vmem:[%s172 + $0xbc] sm:$0xf] %v619
      %748 = vst [vmem:[%s172 + $0xc0] sm:$0xf] %v620
      %749 = vst [vmem:[%s172 + $0xc4] sm:$0xf] %v621
      %750 = vst [vmem:[%s172 + $0xc8] sm:$0xf] %v622
      %751 = vst [vmem:[%s172 + $0xcc] sm:$0xf] %v623
      %752 = vst [vmem:[%s172 + $0xd0] sm:$0xf] %v624
      %753 = vst [vmem:[%s172 + $0xd4] sm:$0xf] %v625
      %754 = vst [vmem:[%s172 + $0xd8] sm:$0xf] %v626
      %755 = vst [vmem:[%s172 + $0xdc] sm:$0xf] %v627
      %756 = vst [vmem:[%s172 + $0xe0] sm:$0xf] %v628
      %757 = vst [vmem:[%s172 + $0xe4] sm:$0xf] %v629
      %758 = vst [vmem:[%s172 + $0xe8] sm:$0xf] %v630
      %759 = vst [vmem:[%s172 + $0xec] sm:$0xf] %v631
      %760 = vst [vmem:[%s172 + $0xf0] sm:$0xf] %v632
      %761 = vst [vmem:[%s172 + $0xf4] sm:$0xf] %v633
      %762 = vst [vmem:[%s172 + $0xf8] sm:$0xf] %v634
      %763 = vst [vmem:[%s172 + $0xfc] sm:$0xf] %v635
      %s764 = smul.u32 64, %s14
      %p765 = scmp.lt.s32.totalorder %s764, 255
      %s766 = scalar_select %p765, %s764, 255
      %s767 = smul.addr %s766, 4
      %s768 = scalar_lea.vmem %s3, %s767
      // Predicated region
      $region33: #{generator_forward.16} parent=31 // pred_check
        %p769 = pneg %p100
      $region34: #{generator_forward.16} parent=31 // pred_check_branch
        %771 = sbr.rel (%p769) target = $region36
      $region35: #{generator_forward.16} parent=31 // pred_region
        %s772 = smul.u32 64, %s14
      $region36: #{generator_forward.16} parent=31 // pred_fallthru
        _
    $region32: #{generator_forward.16} parent=5 // pred_fallthru
      _
    %p773 = scmp.le.s32.totalorder 2, %s9
    // Predicated region
    $region37: #{generator_forward.16} parent=5 // pred_check
      %p774 = pneg %p773
    $region38: #{generator_forward.16} parent=5 // pred_check_branch
      %776 = sbr.rel (%p774) target = $region40
    $region39: #{generator_forward.16} parent=5 // pred_region
      %s777 = ssub.s32 %s9, 2
      // Predicated region
      $region41: #{generator_forward.16} parent=39 // pred_check
        %p778 = pneg %p106
      $region42: #{generator_forward.16} parent=39 // pred_check_branch
        %780 = sbr.rel (%p778) target = $region44
      $region43: #{generator_forward.16} parent=39 // pred_region
        %s781 = smul.u32 64, %s15
        %p782 = scmp.lt.s32.totalorder %s781, 255
        %s783 = scalar_select %p782, %s781, 255
        %s784 = smul.addr %s783, 4
        %s785 = scalar_lea.vmem %s3, %s784
      $region44: #{generator_forward.16} parent=39 // pred_fallthru
        _
    $region40: #{generator_forward.16} parent=5 // pred_fallthru
      _
  $region6: #{generator_forward.16} parent=0 // loop_footer
    %s13 = sadd.s32 1, %s9
  $region7: #{generator_forward.16} parent=0 // loop_footer_branch
    %8 = sbr.rel target = $region3
  $region8: #{generator_forward.16} parent=0 // loop_exit
    _

// kernel: generator_forward.17
$region0: #{generator_forward.17}
  #allocation0 [shape = 'u32[]', space=smem, size = 0x4, offset = 0x4, fixed_abs, tag = 'smem constant byte address 0x4 - core index']
  #allocation1 [shape = 'u32[144,128]{1,0:T(1,128)}', space=vmem, size = 0x12000, scoped, tag = 'internal scratch']
  %s0 = inlined_call_operand.vmem [shape: bf16[8192,256], index: 0, kind: input, shape index: {}]
  %s1 = inlined_call_operand.vmem [shape: bf16[256,128], index: 1, kind: input, shape index: {}]
  %s2 = inlined_call_operand.vmem [shape: f32[8192,128], index: 2, kind: output, shape index: {}]
  %s3 = sld [smem:[#allocation0]]
  $region41: #{generator_forward.17} parent=0
    _
  %s5 = ssub.s32 1, %s3
  %s6 = scalar_select 0, %s5, %s3
  loop: start=0, step=1, limit=18
  $region2: #{generator_forward.17} parent=0 // loop_pre_header
    _
  $region3: #{generator_forward.17} parent=0 // loop_header
    %s8 = sphi 0, %s12
    %p9 = scmp.ge.s32.totalorder %s8, 18
    %s18 = sphi 0, %s20
    %s21 = sphi 0, %s18
    %s22 = sphi 0, %s21
    %s38 = sphi 0, %s22
    %s42 = sphi 0, %s42
    %s44 = sphi 0, %s42
    %s45 = sphi 0, %s44
    %s59 = sphi 0, %s45
    %s65 = sphi 0, %s67
    %s68 = sphi 0, %s65
    %s69 = sphi 0, %s68
    %s85 = sphi 0, %s69
  $region4: #{generator_forward.17} parent=0 // loop_header_branch
    %11 = sbr.rel (%p9) target = $region8
  $region5: #{generator_forward.17} parent=0 // loop_body
    %s13 = ssub.s32 %s8, 1
    %s14 = ssub.s32 %s8, 2
    %s15 = sadd.s32 %s8, 1
    %s16 = ssub.s32 %s8, %s15
    %p17 = scmp.eq.s32.totalorder %s16, 0
    %s19 = sadd.s32 %s18, 1
    %s20 = scalar_select %p17, %s18, %s19
    %p23 = pneg %p17
    %p24 = scmp.eq.s32.totalorder %s8, 15
    %p25 = por %p23, %p24
    %p26 = scmp.ne.s32.totalorder %s18, %s21
    %p27 = scmp.eq.s32.totalorder %s8, 0
    %p28 = por %p26, %p27
    %p29 = scmp.ne.s32.totalorder %s18, %s21
    %p30 = scmp.eq.s32.totalorder %s13, 15
    %p31 = por %p29, %p30
    %p32 = scmp.ne.s32.totalorder %s21, %s22
    %p33 = scmp.eq.s32.totalorder %s13, 0
    %p34 = por %p32, %p33
    %p35 = scmp.ne.s32.totalorder %s21, %s22
    %p36 = scmp.eq.s32.totalorder %s14, 15
    %p37 = por %p35, %p36
    %p39 = scmp.ne.s32.totalorder %s22, %s38
    %p40 = scmp.eq.s32.totalorder %s14, 0
    %p41 = por %p39, %p40
    %s43 = sadd.s32 %s42, 1
    %p46 = scmp.eq.s32.totalorder %s8, 15
    %p47 = scmp.ne.s32.totalorder %s42, %s44
    %p48 = scmp.eq.s32.totalorder %s8, 0
    %p49 = por %p47, %p48
    %p50 = scmp.ne.s32.totalorder %s42, %s44
    %p51 = scmp.eq.s32.totalorder %s13, 15
    %p52 = por %p50, %p51
    %p53 = scmp.ne.s32.totalorder %s44, %s45
    %p54 = scmp.eq.s32.totalorder %s13, 0
    %p55 = por %p53, %p54
    %p56 = scmp.ne.s32.totalorder %s44, %s45
    %p57 = scmp.eq.s32.totalorder %s14, 15
    %p58 = por %p56, %p57
    %p60 = scmp.ne.s32.totalorder %s45, %s59
    %p61 = scmp.eq.s32.totalorder %s14, 0
    %p62 = por %p60, %p61
    %s63 = ssub.s32 %s8, %s15
    %p64 = scmp.eq.s32.totalorder %s63, 0
    %s66 = sadd.s32 %s65, 1
    %s67 = scalar_select %p64, %s65, %s66
    %p70 = pneg %p64
    %p71 = scmp.eq.s32.totalorder %s8, 15
    %p72 = por %p70, %p71
    %p73 = scmp.ne.s32.totalorder %s65, %s68
    %p74 = scmp.eq.s32.totalorder %s8, 0
    %p75 = por %p73, %p74
    %p76 = scmp.ne.s32.totalorder %s65, %s68
    %p77 = scmp.eq.s32.totalorder %s13, 15
    %p78 = por %p76, %p77
    %p79 = scmp.ne.s32.totalorder %s68, %s69
    %p80 = scmp.eq.s32.totalorder %s13, 0
    %p81 = por %p79, %p80
    %p82 = scmp.ne.s32.totalorder %s68, %s69
    %p83 = scmp.eq.s32.totalorder %s14, 15
    %p84 = por %p82, %p83
    %p86 = scmp.ne.s32.totalorder %s69, %s85
    %p87 = scmp.eq.s32.totalorder %s14, 0
    %p88 = por %p86, %p87
    %p89 = scmp.le.s32.totalorder 1, %s8
    %p90 = scmp.lt.s32.totalorder %s8, 17
    %p91 = pnand %p89, %p90
    %p92 = pneg %p91
    // Predicated region
    $region9: #{generator_forward.17} parent=5 // pred_check
      _
    $region10: #{generator_forward.17} parent=5 // pred_check_branch
      %94 = sbr.rel (%p91) target = $region12
    $region11: #{generator_forward.17} parent=5 // pred_region
      %s95 = ssub.s32 %s8, 1
      // Predicated region
      $region13: #{generator_forward.17} parent=11 // pred_check
        %p96 = pneg %p55
      $region14: #{generator_forward.17} parent=11 // pred_check_branch
        %98 = sbr.rel (%p96) target = $region16
      $region15: #{generator_forward.17} parent=11 // pred_region
        _
      $region16: #{generator_forward.17} parent=11 // pred_fallthru
        _
    $region12: #{generator_forward.17} parent=5 // pred_fallthru
      _
    %p99 = scmp.lt.s32.totalorder %s8, 16
    // Predicated region
    $region17: #{generator_forward.17} parent=5 // pred_check
      %p100 = pneg %p99
    $region18: #{generator_forward.17} parent=5 // pred_check_branch
      %102 = sbr.rel (%p100) target = $region20
    $region19: #{generator_forward.17} parent=5 // pred_region
      // Predicated region
      $region21: #{generator_forward.17} parent=19 // pred_check
        %p103 = pneg %p28
      $region22: #{generator_forward.17} parent=19 // pred_check_branch
        %105 = sbr.rel (%p103) target = $region24
      $region23: #{generator_forward.17} parent=19 // pred_region
        %s106 = smul.u32 64, %s8
        %p107 = scmp.lt.s32.totalorder %s106, 1023
        %s108 = scalar_select %p107, %s106, 1023
        %s109 = smul.addr %s108, 2
        %s110 = smul.addr %s109, 4
        %s111 = scalar_lea.vmem %s0, %s110
        %s112 = smul.u32 64, %s8
      $region24: #{generator_forward.17} parent=19 // pred_fallthru
        _
    $region20: #{generator_forward.17} parent=5 // pred_fallthru
      _
    %p113 = scmp.le.s32.totalorder 1, %s8
    %p114 = scmp.lt.s32.totalorder %s8, 17
    %p115 = pnand %p113, %p114
    %p116 = pneg %p115
    // Predicated region
    $region25: #{generator_forward.17} parent=5 // pred_check
      _
    $region26: #{generator_forward.17} parent=5 // pred_check_branch
      %118 = sbr.rel (%p115) target = $region28
    $region27: #{generator_forward.17} parent=5 // pred_region
      %s119 = ssub.s32 %s8, 1
      %s120 = smul.u32 64, %s13
      %p121 = scmp.lt.s32.totalorder %s120, 1023
      %s122 = scalar_select %p121, %s120, 1023
      %s123 = smul.addr %s122, 2
      %s124 = smul.addr %s123, 4
      %s125 = scalar_lea.vmem %s0, %s124
      %p126 = pneg %p34
      %p127 = pneg %p31
      %p128 = pneg %p55
      %p129 = pneg %p52
      %p130 = pneg %p81
      %p131 = pneg %p78
      %s132 = smul.u32 64, %s13
      %p133 = scmp.lt.s32.totalorder %s132, 1023
      %s134 = scalar_select %p133, %s132, 1023
      %s135 = smul.addr %s134, 8
      %s136 = scalar_lea.vmem %s2, %s135
      %s137 = smul.u32 64, %s13
      %p138 = scmp.lt.s32.totalorder %s137, 1023
      %s139 = scalar_select %p138, %s137, 1023
      %s140 = smul.addr %s139, 2
      %s141 = smul.addr %s140, 4
      %s142 = scalar_lea.vmem %s0, %s141
      %s143 = smul.u32 64, %s13
      %s144 = smul.u32 64, %s13
      %p145 = scmp.lt.s32.totalorder %s144, 1023
      %s146 = scalar_select %p145, %s144, 1023
      %s147 = smul.addr %s146, 8
      %s148 = scalar_lea.vmem %s2, %s147
      %s149 = smul.u32 64, %s13
      %v151 = vld [vmem:[%s142] sm:$0xff]
      %v152 = vld [vmem:[%s142 + $0x8] sm:$0xff]
      %v153 = vld [vmem:[%s142 + $0x10] sm:$0xff]
      %v154 = vld [vmem:[%s142 + $0x18] sm:$0xff]
      %v155 = vld [vmem:[%s142 + $0x20] sm:$0xff]
      %v156 = vld [vmem:[%s142 + $0x28] sm:$0xff]
      %v157 = vld [vmem:[%s142 + $0x30] sm:$0xff]
      %v158 = vld [vmem:[%s142 + $0x38] sm:$0xff]
      %v159 = vld [vmem:[%s142 + $0x40] sm:$0xff]
      %v160 = vld [vmem:[%s142 + $0x48] sm:$0xff]
      %v161 = vld [vmem:[%s142 + $0x50] sm:$0xff]
      %v162 = vld [vmem:[%s142 + $0x58] sm:$0xff]
      %v163 = vld [vmem:[%s142 + $0x60] sm:$0xff]
      %v164 = vld [vmem:[%s142 + $0x68] sm:$0xff]
      %v165 = vld [vmem:[%s142 + $0x70] sm:$0xff]
      %v166 = vld [vmem:[%s142 + $0x78] sm:$0xff]
      %v167 = vld [vmem:[%s142 + $0x80] sm:$0xff]
      %v168 = vld [vmem:[%s142 + $0x88] sm:$0xff]
      %v169 = vld [vmem:[%s142 + $0x90] sm:$0xff]
      %v170 = vld [vmem:[%s142 + $0x98] sm:$0xff]
      %v171 = vld [vmem:[%s142 + $0xa0] sm:$0xff]
      %v172 = vld [vmem:[%s142 + $0xa8] sm:$0xff]
      %v173 = vld [vmem:[%s142 + $0xb0] sm:$0xff]
      %v174 = vld [vmem:[%s142 + $0xb8] sm:$0xff]
      %v175 = vld [vmem:[%s142 + $0xc0] sm:$0xff]
      %v176 = vld [vmem:[%s142 + $0xc8] sm:$0xff]
      %v177 = vld [vmem:[%s142 + $0xd0] sm:$0xff]
      %v178 = vld [vmem:[%s142 + $0xd8] sm:$0xff]
      %v179 = vld [vmem:[%s142 + $0xe0] sm:$0xff]
      %v180 = vld [vmem:[%s142 + $0xe8] sm:$0xff]
      %v181 = vld [vmem:[%s142 + $0xf0] sm:$0xff]
      %v182 = vld [vmem:[%s142 + $0xf8] sm:$0xff]
      %v183 = vld [vmem:[%s142 + $0x100] sm:$0xff]
      %v184 = vld [vmem:[%s142 + $0x108] sm:$0xff]
      %v185 = vld [vmem:[%s142 + $0x110] sm:$0xff]
      %v186 = vld [vmem:[%s142 + $0x118] sm:$0xff]
      %v187 = vld [vmem:[%s142 + $0x120] sm:$0xff]
      %v188 = vld [vmem:[%s142 + $0x128] sm:$0xff]
      %v189 = vld [vmem:[%s142 + $0x130] sm:$0xff]
      %v190 = vld [vmem:[%s142 + $0x138] sm:$0xff]
      %v191 = vld [vmem:[%s142 + $0x140] sm:$0xff]
      %v192 = vld [vmem:[%s142 + $0x148] sm:$0xff]
      %v193 = vld [vmem:[%s142 + $0x150] sm:$0xff]
      %v194 = vld [vmem:[%s142 + $0x158] sm:$0xff]
      %v195 = vld [vmem:[%s142 + $0x160] sm:$0xff]
      %v196 = vld [vmem:[%s142 + $0x168] sm:$0xff]
      %v197 = vld [vmem:[%s142 + $0x170] sm:$0xff]
      %v198 = vld [vmem:[%s142 + $0x178] sm:$0xff]
      %v199 = vld [vmem:[%s142 + $0x180] sm:$0xff]
      %v200 = vld [vmem:[%s142 + $0x188] sm:$0xff]
      %v201 = vld [vmem:[%s142 + $0x190] sm:$0xff]
      %v202 = vld [vmem:[%s142 + $0x198] sm:$0xff]
      %v203 = vld [vmem:[%s142 + $0x1a0] sm:$0xff]
      %v204 = vld [vmem:[%s142 + $0x1a8] sm:$0xff]
      %v205 = vld [vmem:[%s142 + $0x1b0] sm:$0xff]
      %v206 = vld [vmem:[%s142 + $0x1b8] sm:$0xff]
      %v207 = vld [vmem:[%s142 + $0x1c0] sm:$0xff]
      %v208 = vld [vmem:[%s142 + $0x1c8] sm:$0xff]
      %v209 = vld [vmem:[%s142 + $0x1d0] sm:$0xff]
      %v210 = vld [vmem:[%s142 + $0x1d8] sm:$0xff]
      %v211 = vld [vmem:[%s142 + $0x1e0] sm:$0xff]
      %v212 = vld [vmem:[%s142 + $0x1e8] sm:$0xff]
      %v213 = vld [vmem:[%s142 + $0x1f0] sm:$0xff]
      %v214 = vld [vmem:[%s142 + $0x1f8] sm:$0xff]
      %v215 = vld [vmem:[%s1] sm:$0xf]
      %v216 = vld [vmem:[%s1 + $0x4] sm:$0xf]
      %v217 = vld [vmem:[%s1 + $0x8] sm:$0xf]
      %v218 = vld [vmem:[%s1 + $0xc] sm:$0xf]
      %v219 = vld [vmem:[%s1 + $0x10] sm:$0xf]
      %v220 = vld [vmem:[%s1 + $0x14] sm:$0xf]
      %v221 = vld [vmem:[%s1 + $0x18] sm:$0xf]
      %v222 = vld [vmem:[%s1 + $0x1c] sm:$0xf]
      %v223 = vld [vmem:[%s1 + $0x20] sm:$0xf]
      %v224 = vld [vmem:[%s1 + $0x24] sm:$0xf]
      %v225 = vld [vmem:[%s1 + $0x28] sm:$0xf]
      %v226 = vld [vmem:[%s1 + $0x2c] sm:$0xf]
      %v227 = vld [vmem:[%s1 + $0x30] sm:$0xf]
      %v228 = vld [vmem:[%s1 + $0x34] sm:$0xf]
      %v229 = vld [vmem:[%s1 + $0x38] sm:$0xf]
      %v230 = vld [vmem:[%s1 + $0x3c] sm:$0xf]
      %v231 = vld [vmem:[%s1 + $0x40] sm:$0xf]
      %v232 = vld [vmem:[%s1 + $0x44] sm:$0xf]
      %v233 = vld [vmem:[%s1 + $0x48] sm:$0xf]
      %v234 = vld [vmem:[%s1 + $0x4c] sm:$0xf]
      %v235 = vld [vmem:[%s1 + $0x50] sm:$0xf]
      %v236 = vld [vmem:[%s1 + $0x54] sm:$0xf]
      %v237 = vld [vmem:[%s1 + $0x58] sm:$0xf]
      %v238 = vld [vmem:[%s1 + $0x5c] sm:$0xf]
      %v239 = vld [vmem:[%s1 + $0x60] sm:$0xf]
      %v240 = vld [vmem:[%s1 + $0x64] sm:$0xf]
      %v241 = vld [vmem:[%s1 + $0x68] sm:$0xf]
      %v242 = vld [vmem:[%s1 + $0x6c] sm:$0xf]
      %v243 = vld [vmem:[%s1 + $0x70] sm:$0xf]
      %v244 = vld [vmem:[%s1 + $0x74] sm:$0xf]
      %v245 = vld [vmem:[%s1 + $0x78] sm:$0xf]
      %v246 = vld [vmem:[%s1 + $0x7c] sm:$0xf]
      %v311 = vunpack.c.l.b16 %v151
      %v312 = vunpack.c.h.b16 %v151
      %v313 = vunpack.c.l.b16 %v152
      %v314 = vunpack.c.h.b16 %v152
      %v315 = vunpack.c.l.b16 %v153
      %v316 = vunpack.c.h.b16 %v153
      %v317 = vunpack.c.l.b16 %v154
      %v318 = vunpack.c.h.b16 %v154
      %v319 = vunpack.c.l.b16 %v155
      %v320 = vunpack.c.h.b16 %v155
      %v321 = vunpack.c.l.b16 %v156
      %v322 = vunpack.c.h.b16 %v156
      %v323 = vunpack.c.l.b16 %v157
      %v324 = vunpack.c.h.b16 %v157
      %v325 = vunpack.c.l.b16 %v158
      %v326 = vunpack.c.h.b16 %v158
      %v327 = vunpack.c.l.b16 %v159
      %v328 = vunpack.c.h.b16 %v159
      %v329 = vunpack.c.l.b16 %v160
      %v330 = vunpack.c.h.b16 %v160
      %v331 = vunpack.c.l.b16 %v161
      %v332 = vunpack.c.h.b16 %v161
      %v333 = vunpack.c.l.b16 %v162
      %v334 = vunpack.c.h.b16 %v162
      %v335 = vunpack.c.l.b16 %v163
      %v336 = vunpack.c.h.b16 %v163
      %v337 = vunpack.c.l.b16 %v164
      %v338 = vunpack.c.h.b16 %v164
      %v339 = vunpack.c.l.b16 %v165
      %v340 = vunpack.c.h.b16 %v165
      %v341 = vunpack.c.l.b16 %v166
      %v342 = vunpack.c.h.b16 %v166
      %v343 = vunpack.c.l.b16 %v167
      %v344 = vunpack.c.h.b16 %v167
      %v345 = vunpack.c.l.b16 %v168
      %v346 = vunpack.c.h.b16 %v168
      %v347 = vunpack.c.l.b16 %v169
      %v348 = vunpack.c.h.b16 %v169
      %v349 = vunpack.c.l.b16 %v170
      %v350 = vunpack.c.h.b16 %v170
      %v351 = vunpack.c.l.b16 %v171
      %v352 = vunpack.c.h.b16 %v171
      %v353 = vunpack.c.l.b16 %v172
      %v354 = vunpack.c.h.b16 %v172
      %v355 = vunpack.c.l.b16 %v173
      %v356 = vunpack.c.h.b16 %v173
      %v357 = vunpack.c.l.b16 %v174
      %v358 = vunpack.c.h.b16 %v174
      %v359 = vunpack.c.l.b16 %v175
      %v360 = vunpack.c.h.b16 %v175
      %v361 = vunpack.c.l.b16 %v176
      %v362 = vunpack.c.h.b16 %v176
      %v363 = vunpack.c.l.b16 %v177
      %v364 = vunpack.c.h.b16 %v177
      %v365 = vunpack.c.l.b16 %v178
      %v366 = vunpack.c.h.b16 %v178
      %v367 = vunpack.c.l.b16 %v179
      %v368 = vunpack.c.h.b16 %v179
      %v369 = vunpack.c.l.b16 %v180
      %v370 = vunpack.c.h.b16 %v180
      %v371 = vunpack.c.l.b16 %v181
      %v372 = vunpack.c.h.b16 %v181
      %v373 = vunpack.c.l.b16 %v182
      %v374 = vunpack.c.h.b16 %v182
      %v375 = vunpack.c.l.b16 %v183
      %v376 = vunpack.c.h.b16 %v183
      %v377 = vunpack.c.l.b16 %v184
      %v378 = vunpack.c.h.b16 %v184
      %v379 = vunpack.c.l.b16 %v185
      %v380 = vunpack.c.h.b16 %v185
      %v381 = vunpack.c.l.b16 %v186
      %v382 = vunpack.c.h.b16 %v186
      %v383 = vunpack.c.l.b16 %v187
      %v384 = vunpack.c.h.b16 %v187
      %v385 = vunpack.c.l.b16 %v188
      %v386 = vunpack.c.h.b16 %v188
      %v387 = vunpack.c.l.b16 %v189
      %v388 = vunpack.c.h.b16 %v189
      %v389 = vunpack.c.l.b16 %v190
      %v390 = vunpack.c.h.b16 %v190
      %v391 = vunpack.c.l.b16 %v191
      %v392 = vunpack.c.h.b16 %v191
      %v393 = vunpack.c.l.b16 %v192
      %v394 = vunpack.c.h.b16 %v192
      %v395 = vunpack.c.l.b16 %v193
      %v396 = vunpack.c.h.b16 %v193
      %v397 = vunpack.c.l.b16 %v194
      %v398 = vunpack.c.h.b16 %v194
      %v399 = vunpack.c.l.b16 %v195
      %v400 = vunpack.c.h.b16 %v195
      %v401 = vunpack.c.l.b16 %v196
      %v402 = vunpack.c.h.b16 %v196
      %v403 = vunpack.c.l.b16 %v197
      %v404 = vunpack.c.h.b16 %v197
      %v405 = vunpack.c.l.b16 %v198
      %v406 = vunpack.c.h.b16 %v198
      %v407 = vunpack.c.l.b16 %v199
      %v408 = vunpack.c.h.b16 %v199
      %v409 = vunpack.c.l.b16 %v200
      %v410 = vunpack.c.h.b16 %v200
      %v411 = vunpack.c.l.b16 %v201
      %v412 = vunpack.c.h.b16 %v201
      %v413 = vunpack.c.l.b16 %v202
      %v414 = vunpack.c.h.b16 %v202
      %v415 = vunpack.c.l.b16 %v203
      %v416 = vunpack.c.h.b16 %v203
      %v417 = vunpack.c.l.b16 %v204
      %v418 = vunpack.c.h.b16 %v204
      %v419 = vunpack.c.l.b16 %v205
      %v420 = vunpack.c.h.b16 %v205
      %v421 = vunpack.c.l.b16 %v206
      %v422 = vunpack.c.h.b16 %v206
      %v423 = vunpack.c.l.b16 %v207
      %v424 = vunpack.c.h.b16 %v207
      %v425 = vunpack.c.l.b16 %v208
      %v426 = vunpack.c.h.b16 %v208
      %v427 = vunpack.c.l.b16 %v209
      %v428 = vunpack.c.h.b16 %v209
      %v429 = vunpack.c.l.b16 %v210
      %v430 = vunpack.c.h.b16 %v210
      %v431 = vunpack.c.l.b16 %v211
      %v432 = vunpack.c.h.b16 %v211
      %v433 = vunpack.c.l.b16 %v212
      %v434 = vunpack.c.h.b16 %v212
      %v435 = vunpack.c.l.b16 %v213
      %v436 = vunpack.c.h.b16 %v213
      %v437 = vunpack.c.l.b16 %v214
      %v438 = vunpack.c.h.b16 %v214
      %v439 = vpack.c.b16 %v313, %v311
      %v440 = vpack.c.b16 %v314, %v312
      %v441 = vpack.c.b16 %v317, %v315
      %v442 = vpack.c.b16 %v318, %v316
      %v443 = vpack.c.b16 %v321, %v319
      %v444 = vpack.c.b16 %v322, %v320
      %v445 = vpack.c.b16 %v325, %v323
      %v446 = vpack.c.b16 %v326, %v324
      %v447 = vpack.c.b16 %v329, %v327
      %v448 = vpack.c.b16 %v330, %v328
      %v449 = vpack.c.b16 %v333, %v331
      %v450 = vpack.c.b16 %v334, %v332
      %v451 = vpack.c.b16 %v337, %v335
      %v452 = vpack.c.b16 %v338, %v336
      %v453 = vpack.c.b16 %v341, %v339
      %v454 = vpack.c.b16 %v342, %v340
      %v455 = vpack.c.b16 %v345, %v343
      %v456 = vpack.c.b16 %v346, %v344
      %v457 = vpack.c.b16 %v349, %v347
      %v458 = vpack.c.b16 %v350, %v348
      %v459 = vpack.c.b16 %v353, %v351
      %v460 = vpack.c.b16 %v354, %v352
      %v461 = vpack.c.b16 %v357, %v355
      %v462 = vpack.c.b16 %v358, %v356
      %v463 = vpack.c.b16 %v361, %v359
      %v464 = vpack.c.b16 %v362, %v360
      %v465 = vpack.c.b16 %v365, %v363
      %v466 = vpack.c.b16 %v366, %v364
      %v467 = vpack.c.b16 %v369, %v367
      %v468 = vpack.c.b16 %v370, %v368
      %v469 = vpack.c.b16 %v373, %v371
      %v470 = vpack.c.b16 %v374, %v372
      %v471 = vpack.c.b16 %v377, %v375
      %v472 = vpack.c.b16 %v378, %v376
      %v473 = vpack.c.b16 %v381, %v379
      %v474 = vpack.c.b16 %v382, %v380
      %v475 = vpack.c.b16 %v385, %v383
      %v476 = vpack.c.b16 %v386, %v384
      %v477 = vpack.c.b16 %v389, %v387
      %v478 = vpack.c.b16 %v390, %v388
      %v479 = vpack.c.b16 %v393, %v391
      %v480 = vpack.c.b16 %v394, %v392
      %v481 = vpack.c.b16 %v397, %v395
      %v482 = vpack.c.b16 %v398, %v396
      %v483 = vpack.c.b16 %v401, %v399
      %v484 = vpack.c.b16 %v402, %v400
      %v485 = vpack.c.b16 %v405, %v403
      %v486 = vpack.c.b16 %v406, %v404
      %v487 = vpack.c.b16 %v409, %v407
      %v488 = vpack.c.b16 %v410, %v408
      %v489 = vpack.c.b16 %v413, %v411
      %v490 = vpack.c.b16 %v414, %v412
      %v491 = vpack.c.b16 %v417, %v415
      %v492 = vpack.c.b16 %v418, %v416
      %v493 = vpack.c.b16 %v421, %v419
      %v494 = vpack.c.b16 %v422, %v420
      %v495 = vpack.c.b16 %v425, %v423
      %v496 = vpack.c.b16 %v426, %v424
      %v497 = vpack.c.b16 %v429, %v427
      %v498 = vpack.c.b16 %v430, %v428
      %v499 = vpack.c.b16 %v433, %v431
      %v500 = vpack.c.b16 %v434, %v432
      %v501 = vpack.c.b16 %v437, %v435
      %v502 = vpack.c.b16 %v438, %v436
      %v599 = vunpack.c.l.b16 %v215
      %v600 = vunpack.c.l.b16 %v216
      %v601 = vunpack.c.l.b16 %v217
      %v602 = vunpack.c.l.b16 %v218
      %v603 = vunpack.c.l.b16 %v219
      %v604 = vunpack.c.l.b16 %v220
      %v605 = vunpack.c.l.b16 %v221
      %v606 = vunpack.c.l.b16 %v222
      %v607 = vunpack.c.l.b16 %v223
      %v608 = vunpack.c.l.b16 %v224
      %v609 = vunpack.c.l.b16 %v225
      %v610 = vunpack.c.l.b16 %v226
      %v611 = vunpack.c.l.b16 %v227
      %v612 = vunpack.c.l.b16 %v228
      %v613 = vunpack.c.l.b16 %v229
      %v614 = vunpack.c.l.b16 %v230
      %v615 = vunpack.c.l.b16 %v231
      %v616 = vunpack.c.l.b16 %v232
      %v617 = vunpack.c.l.b16 %v233
      %v618 = vunpack.c.l.b16 %v234
      %v619 = vunpack.c.l.b16 %v235
      %v620 = vunpack.c.l.b16 %v236
      %v621 = vunpack.c.l.b16 %v237
      %v622 = vunpack.c.l.b16 %v238
      %v623 = vunpack.c.l.b16 %v239
      %v624 = vunpack.c.l.b16 %v240
      %v625 = vunpack.c.l.b16 %v241
      %v626 = vunpack.c.l.b16 %v242
      %v627 = vunpack.c.l.b16 %v243
      %v628 = vunpack.c.l.b16 %v244
      %v629 = vunpack.c.l.b16 %v245
      %v630 = vunpack.c.l.b16 %v246
      %v631 = vpack.c.b16 %v600, %v599
      %v632 = vpack.c.b16 %v602, %v601
      %v633 = vpack.c.b16 %v604, %v603
      %v634 = vpack.c.b16 %v606, %v605
      %v635 = vpack.c.b16 %v608, %v607
      %v636 = vpack.c.b16 %v610, %v609
      %v637 = vpack.c.b16 %v612, %v611
      %v638 = vpack.c.b16 %v614, %v613
      %v639 = vpack.c.b16 %v616, %v615
      %v640 = vpack.c.b16 %v618, %v617
      %v641 = vpack.c.b16 %v620, %v619
      %v642 = vpack.c.b16 %v622, %v621
      %v643 = vpack.c.b16 %v624, %v623
      %v644 = vpack.c.b16 %v626, %v625
      %v645 = vpack.c.b16 %v628, %v627
      %v646 = vpack.c.b16 %v630, %v629
      %663 = vmatprep.subr.bf16.mxu0 0
      %664 = vmatpush1.bf16.msra.mxu0 %v631
      %665 = vmatprep.subr.bf16.mxu0 0
      %666 = vmatpush1.bf16.msra.mxu0 %v632
      %667 = vmatprep.subr.bf16.mxu0 0
      %668 = vmatpush1.bf16.msra.mxu0 %v633
      %669 = vmatprep.subr.bf16.mxu0 0
      %670 = vmatpush1.bf16.msra.mxu0 %v634
      %671 = vmatprep.subr.bf16.mxu0 0
      %672 = vmatpush1.bf16.msra.mxu0 %v635
      %673 = vmatprep.subr.bf16.mxu0 0
      %674 = vmatpush1.bf16.msra.mxu0 %v636
      %675 = vmatprep.subr.bf16.mxu0 0
      %676 = vmatpush1.bf16.msra.mxu0 %v637
      %677 = vmatprep.subr.bf16.mxu0 0
      %678 = vmatpush1.bf16.msra.mxu0 %v638
      %679 = vmatprep.subr.bf16.mxu0 0
      %680 = vmatpush1.bf16.msra.mxu0 %v639
      %681 = vmatprep.subr.bf16.mxu0 0
      %682 = vmatpush1.bf16.msra.mxu0 %v640
      %683 = vmatprep.subr.bf16.mxu0 0
      %684 = vmatpush1.bf16.msra.mxu0 %v641
      %685 = vmatprep.subr.bf16.mxu0 0
      %686 = vmatpush1.bf16.msra.mxu0 %v642
      %687 = vmatprep.subr.bf16.mxu0 0
      %688 = vmatpush1.bf16.msra.mxu0 %v643
      %689 = vmatprep.subr.bf16.mxu0 0
      %690 = vmatpush1.bf16.msra.mxu0 %v644
      %691 = vmatprep.subr.bf16.mxu0 0
      %692 = vmatpush1.bf16.msra.mxu0 %v645
      %693 = vmatprep.subr.bf16.mxu0 0
      %694 = vmatpush1.bf16.msra.mxu0 %v646
      %695 = vmatprep.mubr.bf16.mxu0 %v440
      %696 = vmatmul.mubr.bf16.gmra.mrb[0].mxu0 %v439
      %v697 = vpop.f32.mrb[0].mxu0
      %v698 = vadd.f32 0.0, %v697
      %v699 = vpop.f32.mrb[0].mxu0
      %v700 = vpop.f32.mrb[0].mxu0
      %v701 = vadd.f32 0.0, %v700
      %v702 = vpop.f32.mrb[0].mxu0
      %703 = vmatprep.mubr.bf16.mxu0 %v442
      %704 = vmatmul.mubr.bf16.gmra.mrb[0].mxu0 %v441
      %v705 = vpop.f32.mrb[0].mxu0
      %v706 = vadd.f32 0.0, %v705
      %v707 = vpop.f32.mrb[0].mxu0
      %v708 = vpop.f32.mrb[0].mxu0
      %v709 = vadd.f32 0.0, %v708
      %v710 = vpop.f32.mrb[0].mxu0
      %711 = vmatprep.mubr.bf16.mxu0 %v444
      %712 = vmatmul.mubr.bf16.gmra.mrb[0].mxu0 %v443
      %v713 = vpop.f32.mrb[0].mxu0
      %v714 = vadd.f32 0.0, %v713
      %v715 = vpop.f32.mrb[0].mxu0
      %v716 = vpop.f32.mrb[0].mxu0
      %v717 = vadd.f32 0.0, %v716
      %v718 = vpop.f32.mrb[0].mxu0
      %719 = vmatprep.mubr.bf16.mxu0 %v446
      %720 = vmatmul.mubr.bf16.gmra.mrb[0].mxu0 %v445
      %v721 = vpop.f32.mrb[0].mxu0
      %v722 = vadd.f32 0.0, %v721
      %v723 = vpop.f32.mrb[0].mxu0
      %v724 = vpop.f32.mrb[0].mxu0
      %v725 = vadd.f32 0.0, %v724
      %v726 = vpop.f32.mrb[0].mxu0
      %727 = vmatprep.mubr.bf16.mxu0 %v448
      %728 = vmatmul.mubr.bf16.gmra.mrb[0].mxu0 %v447
      %v729 = vpop.f32.mrb[0].mxu0
      %v730 = vadd.f32 0.0, %v729
      %v731 = vpop.f32.mrb[0].mxu0
      %v732 = vpop.f32.mrb[0].mxu0
      %v733 = vadd.f32 0.0, %v732
      %v734 = vpop.f32.mrb[0].mxu0
      %735 = vmatprep.mubr.bf16.mxu0 %v450
      %736 = vmatmul.mubr.bf16.gmra.mrb[0].mxu0 %v449
      %v737 = vpop.f32.mrb[0].mxu0
      %v738 = vadd.f32 0.0, %v737
      %v739 = vpop.f32.mrb[0].mxu0
      %v740 = vpop.f32.mrb[0].mxu0
      %v741 = vadd.f32 0.0, %v740
      %v742 = vpop.f32.mrb[0].mxu0
      %743 = vmatprep.mubr.bf16.mxu0 %v452
      %744 = vmatmul.mubr.bf16.gmra.mrb[0].mxu0 %v451
      %v745 = vpop.f32.mrb[0].mxu0
      %v746 = vadd.f32 0.0, %v745
      %v747 = vpop.f32.mrb[0].mxu0
      %v748 = vpop.f32.mrb[0].mxu0
      %v749 = vadd.f32 0.0, %v748
      %v750 = vpop.f32.mrb[0].mxu0
      %751 = vmatprep.mubr.bf16.mxu0 %v454
      %752 = vmatmul.mubr.bf16.gmra.mrb[0].mxu0 %v453
      %v753 = vpop.f32.mrb[0].mxu0
      %v754 = vadd.f32 0.0, %v753
      %v755 = vpop.f32.mrb[0].mxu0
      %v756 = vpop.f32.mrb[0].mxu0
      %v757 = vadd.f32 0.0, %v756
      %v758 = vpop.f32.mrb[0].mxu0
      %759 = vmatprep.mubr.bf16.mxu0 %v456
      %760 = vmatmul.mubr.bf16.gmra.mrb[0].mxu0 %v455
      %v761 = vpop.f32.mrb[0].mxu0
      %v762 = vadd.f32 0.0, %v761
      %v763 = vpop.f32.mrb[0].mxu0
      %v764 = vpop.f32.mrb[0].mxu0
      %v765 = vadd.f32 0.0, %v764
      %v766 = vpop.f32.mrb[0].mxu0
      %767 = vmatprep.mubr.bf16.mxu0 %v458
      %768 = vmatmul.mubr.bf16.gmra.mrb[0].mxu0 %v457
      %v769 = vpop.f32.mrb[0].mxu0
      %v770 = vadd.f32 0.0, %v769
      %v771 = vpop.f32.mrb[0].mxu0
      %v772 = vpop.f32.mrb[0].mxu0
      %v773 = vadd.f32 0.0, %v772
      %v774 = vpop.f32.mrb[0].mxu0
      %775 = vmatprep.mubr.bf16.mxu0 %v460
      %776 = vmatmul.mubr.bf16.gmra.mrb[0].mxu0 %v459
      %v777 = vpop.f32.mrb[0].mxu0
      %v778 = vadd.f32 0.0, %v777
      %v779 = vpop.f32.mrb[0].mxu0
      %v780 = vpop.f32.mrb[0].mxu0
      %v781 = vadd.f32 0.0, %v780
      %v782 = vpop.f32.mrb[0].mxu0
      %783 = vmatprep.mubr.bf16.mxu0 %v462
      %784 = vmatmul.mubr.bf16.gmra.mrb[0].mxu0 %v461
      %v785 = vpop.f32.mrb[0].mxu0
      %v786 = vadd.f32 0.0, %v785
      %v787 = vpop.f32.mrb[0].mxu0
      %v788 = vpop.f32.mrb[0].mxu0
      %v789 = vadd.f32 0.0, %v788
      %v790 = vpop.f32.mrb[0].mxu0
      %791 = vmatprep.mubr.bf16.mxu0 %v464
      %792 = vmatmul.mubr.bf16.gmra.mrb[0].mxu0 %v463
      %v793 = vpop.f32.mrb[0].mxu0
      %v794 = vadd.f32 0.0, %v793
      %v795 = vpop.f32.mrb[0].mxu0
      %v796 = vpop.f32.mrb[0].mxu0
      %v797 = vadd.f32 0.0, %v796
      %v798 = vpop.f32.mrb[0].mxu0
      %799 = vmatprep.mubr.bf16.mxu0 %v466
      %800 = vmatmul.mubr.bf16.gmra.mrb[0].mxu0 %v465
      %v801 = vpop.f32.mrb[0].mxu0
      %v802 = vadd.f32 0.0, %v801
      %v803 = vpop.f32.mrb[0].mxu0
      %v804 = vpop.f32.mrb[0].mxu0
      %v805 = vadd.f32 0.0, %v804
      %v806 = vpop.f32.mrb[0].mxu0
      %807 = vmatprep.mubr.bf16.mxu0 %v468
      %808 = vmatmul.mubr.bf16.gmra.mrb[0].mxu0 %v467
      %v809 = vpop.f32.mrb[0].mxu0
      %v810 = vadd.f32 0.0, %v809
      %v811 = vpop.f32.mrb[0].mxu0
      %v812 = vpop.f32.mrb[0].mxu0
      %v813 = vadd.f32 0.0, %v812
      %v814 = vpop.f32.mrb[0].mxu0
      %815 = vmatprep.mubr.bf16.mxu0 %v470
      %816 = vmatmul.mubr.bf16.gmra.mrb[0].mxu0 %v469
      %v817 = vpop.f32.mrb[0].mxu0
      %v818 = vadd.f32 0.0, %v817
      %v819 = vpop.f32.mrb[0].mxu0
      %v820 = vpop.f32.mrb[0].mxu0
      %v821 = vadd.f32 0.0, %v820
      %v822 = vpop.f32.mrb[0].mxu0
      %823 = vmatprep.mubr.bf16.mxu0 %v472
      %824 = vmatmul.mubr.bf16.gmra.mrb[0].mxu0 %v471
      %v825 = vpop.f32.mrb[0].mxu0
      %v826 = vadd.f32 0.0, %v825
      %v827 = vpop.f32.mrb[0].mxu0
      %v828 = vpop.f32.mrb[0].mxu0
      %v829 = vadd.f32 0.0, %v828
      %v830 = vpop.f32.mrb[0].mxu0
      %831 = vmatprep.mubr.bf16.mxu0 %v474
      %832 = vmatmul.mubr.bf16.gmra.mrb[0].mxu0 %v473
      %v833 = vpop.f32.mrb[0].mxu0
      %v834 = vadd.f32 0.0, %v833
      %v835 = vpop.f32.mrb[0].mxu0
      %v836 = vpop.f32.mrb[0].mxu0
      %v837 = vadd.f32 0.0, %v836
      %v838 = vpop.f32.mrb[0].mxu0
      %839 = vmatprep.mubr.bf16.mxu0 %v476
      %840 = vmatmul.mubr.bf16.gmra.mrb[0].mxu0 %v475
      %v841 = vpop.f32.mrb[0].mxu0
      %v842 = vadd.f32 0.0, %v841
      %v843 = vpop.f32.mrb[0].mxu0
      %v844 = vpop.f32.mrb[0].mxu0
      %v845 = vadd.f32 0.0, %v844
      %v846 = vpop.f32.mrb[0].mxu0
      %847 = vmatprep.mubr.bf16.mxu0 %v478
      %848 = vmatmul.mubr.bf16.gmra.mrb[0].mxu0 %v477
      %v849 = vpop.f32.mrb[0].mxu0
      %v850 = vadd.f32 0.0, %v849
      %v851 = vpop.f32.mrb[0].mxu0
      %v852 = vpop.f32.mrb[0].mxu0
      %v853 = vadd.f32 0.0, %v852
      %v854 = vpop.f32.mrb[0].mxu0
      %855 = vmatprep.mubr.bf16.mxu0 %v480
      %856 = vmatmul.mubr.bf16.gmra.mrb[0].mxu0 %v479
      %v857 = vpop.f32.mrb[0].mxu0
      %v858 = vadd.f32 0.0, %v857
      %v859 = vpop.f32.mrb[0].mxu0
      %v860 = vpop.f32.mrb[0].mxu0
      %v861 = vadd.f32 0.0, %v860
      %v862 = vpop.f32.mrb[0].mxu0
      %863 = vmatprep.mubr.bf16.mxu0 %v482
      %864 = vmatmul.mubr.bf16.gmra.mrb[0].mxu0 %v481
      %v865 = vpop.f32.mrb[0].mxu0
      %v866 = vadd.f32 0.0, %v865
      %v867 = vpop.f32.mrb[0].mxu0
      %v868 = vpop.f32.mrb[0].mxu0
      %v869 = vadd.f32 0.0, %v868
      %v870 = vpop.f32.mrb[0].mxu0
      %871 = vmatprep.mubr.bf16.mxu0 %v484
      %872 = vmatmul.mubr.bf16.gmra.mrb[0].mxu0 %v483
      %v873 = vpop.f32.mrb[0].mxu0
      %v874 = vadd.f32 0.0, %v873
      %v875 = vpop.f32.mrb[0].mxu0
      %v876 = vpop.f32.mrb[0].mxu0
      %v877 = vadd.f32 0.0, %v876
      %v878 = vpop.f32.mrb[0].mxu0
      %879 = vmatprep.mubr.bf16.mxu0 %v486
      %880 = vmatmul.mubr.bf16.gmra.mrb[0].mxu0 %v485
      %v881 = vpop.f32.mrb[0].mxu0
      %v882 = vadd.f32 0.0, %v881
      %v883 = vpop.f32.mrb[0].mxu0
      %v884 = vpop.f32.mrb[0].mxu0
      %v885 = vadd.f32 0.0, %v884
      %v886 = vpop.f32.mrb[0].mxu0
      %887 = vmatprep.mubr.bf16.mxu0 %v488
      %888 = vmatmul.mubr.bf16.gmra.mrb[0].mxu0 %v487
      %v889 = vpop.f32.mrb[0].mxu0
      %v890 = vadd.f32 0.0, %v889
      %v891 = vpop.f32.mrb[0].mxu0
      %v892 = vpop.f32.mrb[0].mxu0
      %v893 = vadd.f32 0.0, %v892
      %v894 = vpop.f32.mrb[0].mxu0
      %895 = vmatprep.mubr.bf16.mxu0 %v490
      %896 = vmatmul.mubr.bf16.gmra.mrb[0].mxu0 %v489
      %v897 = vpop.f32.mrb[0].mxu0
      %v898 = vadd.f32 0.0, %v897
      %v899 = vpop.f32.mrb[0].mxu0
      %v900 = vpop.f32.mrb[0].mxu0
      %v901 = vadd.f32 0.0, %v900
      %v902 = vpop.f32.mrb[0].mxu0
      %903 = vmatprep.mubr.bf16.mxu0 %v492
      %904 = vmatmul.mubr.bf16.gmra.mrb[0].mxu0 %v491
      %v905 = vpop.f32.mrb[0].mxu0
      %v906 = vadd.f32 0.0, %v905
      %v907 = vpop.f32.mrb[0].mxu0
      %v908 = vpop.f32.mrb[0].mxu0
      %v909 = vadd.f32 0.0, %v908
      %v910 = vpop.f32.mrb[0].mxu0
      %911 = vmatprep.mubr.bf16.mxu0 %v494
      %912 = vmatmul.mubr.bf16.gmra.mrb[0].mxu0 %v493
      %v913 = vpop.f32.mrb[0].mxu0
      %v914 = vadd.f32 0.0, %v913
      %v915 = vpop.f32.mrb[0].mxu0
      %v916 = vpop.f32.mrb[0].mxu0
      %v917 = vadd.f32 0.0, %v916
      %v918 = vpop.f32.mrb[0].mxu0
      %919 = vmatprep.mubr.bf16.mxu0 %v496
      %920 = vmatmul.mubr.bf16.gmra.mrb[0].mxu0 %v495
      %v921 = vpop.f32.mrb[0].mxu0
      %v922 = vadd.f32 0.0, %v921
      %v923 = vpop.f32.mrb[0].mxu0
      %v924 = vpop.f32.mrb[0].mxu0
      %v925 = vadd.f32 0.0, %v924
      %v926 = vpop.f32.mrb[0].mxu0
      %927 = vmatprep.mubr.bf16.mxu0 %v498
      %928 = vmatmul.mubr.bf16.gmra.mrb[0].mxu0 %v497
      %v929 = vpop.f32.mrb[0].mxu0
      %v930 = vadd.f32 0.0, %v929
      %v931 = vpop.f32.mrb[0].mxu0
      %v932 = vpop.f32.mrb[0].mxu0
      %v933 = vadd.f32 0.0, %v932
      %v934 = vpop.f32.mrb[0].mxu0
      %935 = vmatprep.mubr.bf16.mxu0 %v500
      %936 = vmatmul.mubr.bf16.gmra.mrb[0].mxu0 %v499
      %v937 = vpop.f32.mrb[0].mxu0
      %v938 = vadd.f32 0.0, %v937
      %v939 = vpop.f32.mrb[0].mxu0
      %v940 = vpop.f32.mrb[0].mxu0
      %v941 = vadd.f32 0.0, %v940
      %v942 = vpop.f32.mrb[0].mxu0
      %943 = vmatprep.mubr.bf16.mxu0 %v502
      %944 = vmatmul.mubr.bf16.gmra.mrb[0].mxu0 %v501
      %v945 = vpop.f32.mrb[0].mxu0
      %v946 = vadd.f32 0.0, %v945
      %v947 = vpop.f32.mrb[0].mxu0
      %v948 = vpop.f32.mrb[0].mxu0
      %v949 = vadd.f32 0.0, %v948
      %v950 = vpop.f32.mrb[0].mxu0
      %951 = vdwg.mxu0
      %v952 = vtanh.pop %v698
      %v953 = vtanh.pop %v701
      %v954 = vtanh.pop %v706
      %v955 = vtanh.pop %v709
      %v956 = vtanh.pop %v714
      %v957 = vtanh.pop %v717
      %v958 = vtanh.pop %v722
      %v959 = vtanh.pop %v725
      %v960 = vtanh.pop %v730
      %v961 = vtanh.pop %v733
      %v962 = vtanh.pop %v738
      %v963 = vtanh.pop %v741
      %v964 = vtanh.pop %v746
      %v965 = vtanh.pop %v749
      %v966 = vtanh.pop %v754
      %v967 = vtanh.pop %v757
      %v968 = vtanh.pop %v762
      %v969 = vtanh.pop %v765
      %v970 = vtanh.pop %v770
      %v971 = vtanh.pop %v773
      %v972 = vtanh.pop %v778
      %v973 = vtanh.pop %v781
      %v974 = vtanh.pop %v786
      %v975 = vtanh.pop %v789
      %v976 = vtanh.pop %v794
      %v977 = vtanh.pop %v797
      %v978 = vtanh.pop %v802
      %v979 = vtanh.pop %v805
      %v980 = vtanh.pop %v810
      %v981 = vtanh.pop %v813
      %v982 = vtanh.pop %v818
      %v983 = vtanh.pop %v821
      %v984 = vtanh.pop %v826
      %v985 = vtanh.pop %v829
      %v986 = vtanh.pop %v834
      %v987 = vtanh.pop %v837
      %v988 = vtanh.pop %v842
      %v989 = vtanh.pop %v845
      %v990 = vtanh.pop %v850
      %v991 = vtanh.pop %v853
      %v992 = vtanh.pop %v858
      %v993 = vtanh.pop %v861
      %v994 = vtanh.pop %v866
      %v995 = vtanh.pop %v869
      %v996 = vtanh.pop %v874
      %v997 = vtanh.pop %v877
      %v998 = vtanh.pop %v882
      %v999 = vtanh.pop %v885
      %v1000 = vtanh.pop %v890
      %v1001 = vtanh.pop %v893
      %v1002 = vtanh.pop %v898
      %v1003 = vtanh.pop %v901
      %v1004 = vtanh.pop %v906
      %v1005 = vtanh.pop %v909
      %v1006 = vtanh.pop %v914
      %v1007 = vtanh.pop %v917
      %v1008 = vtanh.pop %v922
      %v1009 = vtanh.pop %v925
      %v1010 = vtanh.pop %v930
      %v1011 = vtanh.pop %v933
      %v1012 = vtanh.pop %v938
      %v1013 = vtanh.pop %v941
      %v1014 = vtanh.pop %v946
      %v1015 = vtanh.pop %v949
      %1016 = vst [vmem:[%s148] sm:$0xff] %v952
      %1017 = vst [vmem:[%s148 + $0x8] sm:$0xff] %v953
      %1018 = vst [vmem:[%s148 + $0x10] sm:$0xff] %v954
      %1019 = vst [vmem:[%s148 + $0x18] sm:$0xff] %v955
      %1020 = vst [vmem:[%s148 + $0x20] sm:$0xff] %v956
      %1021 = vst [vmem:[%s148 + $0x28] sm:$0xff] %v957
      %1022 = vst [vmem:[%s148 + $0x30] sm:$0xff] %v958
      %1023 = vst [vmem:[%s148 + $0x38] sm:$0xff] %v959
      %1024 = vst [vmem:[%s148 + $0x40] sm:$0xff] %v960
      %1025 = vst [vmem:[%s148 + $0x48] sm:$0xff] %v961
      %1026 = vst [vmem:[%s148 + $0x50] sm:$0xff] %v962
      %1027 = vst [vmem:[%s148 + $0x58] sm:$0xff] %v963
      %1028 = vst [vmem:[%s148 + $0x60] sm:$0xff] %v964
      %1029 = vst [vmem:[%s148 + $0x68] sm:$0xff] %v965
      %1030 = vst [vmem:[%s148 + $0x70] sm:$0xff] %v966
      %1031 = vst [vmem:[%s148 + $0x78] sm:$0xff] %v967
      %1032 = vst [vmem:[%s148 + $0x80] sm:$0xff] %v968
      %1033 = vst [vmem:[%s148 + $0x88] sm:$0xff] %v969
      %1034 = vst [vmem:[%s148 + $0x90] sm:$0xff] %v970
      %1035 = vst [vmem:[%s148 + $0x98] sm:$0xff] %v971
      %1036 = vst [vmem:[%s148 + $0xa0] sm:$0xff] %v972
      %1037 = vst [vmem:[%s148 + $0xa8] sm:$0xff] %v973
      %1038 = vst [vmem:[%s148 + $0xb0] sm:$0xff] %v974
      %1039 = vst [vmem:[%s148 + $0xb8] sm:$0xff] %v975
      %1040 = vst [vmem:[%s148 + $0xc0] sm:$0xff] %v976
      %1041 = vst [vmem:[%s148 + $0xc8] sm:$0xff] %v977
      %1042 = vst [vmem:[%s148 + $0xd0] sm:$0xff] %v978
      %1043 = vst [vmem:[%s148 + $0xd8] sm:$0xff] %v979
      %1044 = vst [vmem:[%s148 + $0xe0] sm:$0xff] %v980
      %1045 = vst [vmem:[%s148 + $0xe8] sm:$0xff] %v981
      %1046 = vst [vmem:[%s148 + $0xf0] sm:$0xff] %v982
      %1047 = vst [vmem:[%s148 + $0xf8] sm:$0xff] %v983
      %1048 = vst [vmem:[%s148 + $0x100] sm:$0xff] %v984
      %1049 = vst [vmem:[%s148 + $0x108] sm:$0xff] %v985
      %1050 = vst [vmem:[%s148 + $0x110] sm:$0xff] %v986
      %1051 = vst [vmem:[%s148 + $0x118] sm:$0xff] %v987
      %1052 = vst [vmem:[%s148 + $0x120] sm:$0xff] %v988
      %1053 = vst [vmem:[%s148 + $0x128] sm:$0xff] %v989
      %1054 = vst [vmem:[%s148 + $0x130] sm:$0xff] %v990
      %1055 = vst [vmem:[%s148 + $0x138] sm:$0xff] %v991
      %1056 = vst [vmem:[%s148 + $0x140] sm:$0xff] %v992
      %1057 = vst [vmem:[%s148 + $0x148] sm:$0xff] %v993
      %1058 = vst [vmem:[%s148 + $0x150] sm:$0xff] %v994
      %1059 = vst [vmem:[%s148 + $0x158] sm:$0xff] %v995
      %1060 = vst [vmem:[%s148 + $0x160] sm:$0xff] %v996
      %1061 = vst [vmem:[%s148 + $0x168] sm:$0xff] %v997
      %1062 = vst [vmem:[%s148 + $0x170] sm:$0xff] %v998
      %1063 = vst [vmem:[%s148 + $0x178] sm:$0xff] %v999
      %1064 = vst [vmem:[%s148 + $0x180] sm:$0xff] %v1000
      %1065 = vst [vmem:[%s148 + $0x188] sm:$0xff] %v1001
      %1066 = vst [vmem:[%s148 + $0x190] sm:$0xff] %v1002
      %1067 = vst [vmem:[%s148 + $0x198] sm:$0xff] %v1003
      %1068 = vst [vmem:[%s148 + $0x1a0] sm:$0xff] %v1004
      %1069 = vst [vmem:[%s148 + $0x1a8] sm:$0xff] %v1005
      %1070 = vst [vmem:[%s148 + $0x1b0] sm:$0xff] %v1006
      %1071 = vst [vmem:[%s148 + $0x1b8] sm:$0xff] %v1007
      %1072 = vst [vmem:[%s148 + $0x1c0] sm:$0xff] %v1008
      %1073 = vst [vmem:[%s148 + $0x1c8] sm:$0xff] %v1009
      %1074 = vst [vmem:[%s148 + $0x1d0] sm:$0xff] %v1010
      %1075 = vst [vmem:[%s148 + $0x1d8] sm:$0xff] %v1011
      %1076 = vst [vmem:[%s148 + $0x1e0] sm:$0xff] %v1012
      %1077 = vst [vmem:[%s148 + $0x1e8] sm:$0xff] %v1013
      %1078 = vst [vmem:[%s148 + $0x1f0] sm:$0xff] %v1014
      %1079 = vst [vmem:[%s148 + $0x1f8] sm:$0xff] %v1015
      %s1080 = smul.u32 64, %s13
      %p1081 = scmp.lt.s32.totalorder %s1080, 1023
      %s1082 = scalar_select %p1081, %s1080, 1023
      %s1083 = smul.addr %s1082, 8
      %s1084 = scalar_lea.vmem %s2, %s1083
      // Predicated region
      $region29: #{generator_forward.17} parent=27 // pred_check
        %p1085 = pneg %p78
      $region30: #{generator_forward.17} parent=27 // pred_check_branch
        %1087 = sbr.rel (%p1085) target = $region32
      $region31: #{generator_forward.17} parent=27 // pred_region
        %s1088 = smul.u32 64, %s13
      $region32: #{generator_forward.17} parent=27 // pred_fallthru
        _
    $region28: #{generator_forward.17} parent=5 // pred_fallthru
      _
    %p1089 = scmp.le.s32.totalorder 2, %s8
    // Predicated region
    $region33: #{generator_forward.17} parent=5 // pred_check
      %p1090 = pneg %p1089
    $region34: #{generator_forward.17} parent=5 // pred_check_branch
      %1092 = sbr.rel (%p1090) target = $region36
    $region35: #{generator_forward.17} parent=5 // pred_region
      %s1093 = ssub.s32 %s8, 2
      // Predicated region
      $region37: #{generator_forward.17} parent=35 // pred_check
        %p1094 = pneg %p84
      $region38: #{generator_forward.17} parent=35 // pred_check_branch
        %1096 = sbr.rel (%p1094) target = $region40
      $region39: #{generator_forward.17} parent=35 // pred_region
        %s1097 = smul.u32 64, %s14
        %p1098 = scmp.lt.s32.totalorder %s1097, 1023
        %s1099 = scalar_select %p1098, %s1097, 1023
        %s1100 = smul.addr %s1099, 8
        %s1101 = scalar_lea.vmem %s2, %s1100
      $region40: #{generator_forward.17} parent=35 // pred_fallthru
        _
    $region36: #{generator_forward.17} parent=5 // pred_fallthru
      _
  $region6: #{generator_forward.17} parent=0 // loop_footer
    %s12 = sadd.s32 1, %s8
  $region7: #{generator_forward.17} parent=0 // loop_footer_branch
    %7 = sbr.rel target = $region3
  $region8: #{generator_forward.17} parent=0 // loop_exit
    _

</llo_original>
